<compile_context>
chip_gen: v5e
topology: v5e:2x2
jax: 0.10.0
libtpu: 0.0.40
codegen_flags: <defaults>
</compile_context>

<pallas_src>
import functools

import numpy as np

import jax
import jax.numpy as jnp
from jax.experimental import pallas as pl
from jax.experimental.pallas import tpu as pltpu


# --------------------------------------------------------------------------
# Pallas kernel: the entire ETM for Nb batch samples per grid step
# --------------------------------------------------------------------------
def _etm_kernel(x_ref, w4_ref, w8_ref, wcat_ref, b_ref, o_ref,
                bx, bcat, ta, tb, xres, *, plan, H, Nb, M0):
    rows = H + 2 * M0              # per-sample row footprint (valid rows + margins)
    T = Nb * rows                  # stacked scratch rows
    L = T - 2 * M0                 # matmul M extent (covers every valid row)
    CW = ta.shape[-1]              # Cout * W (one lane group)
    mxu_dt = w8_ref.dtype          # bfloat16

    bufs = {"x": bx, "a": ta, "b": tb}

    # ---- zero only the margin rows of buffers that are read with dy != 0.
    def zero_margins(buf):
        width = buf.shape[-1]
        buf[0:M0, :] = jnp.zeros((M0, width), buf.dtype)
        buf[T - M0:T, :] = jnp.zeros((M0, width), buf.dtype)
        for b in range(Nb - 1):
            s = b * rows + M0 + H          # bottom margin of sample b + top of b+1
            buf[s:s + 2 * M0, :] = jnp.zeros((2 * M0, width), buf.dtype)

    for name in sorted(plan["zero_margin_bufs"]):
        zero_margins(bufs[name])

    # ---- load this step's Nb samples into the stacked, margined layout.
    for b in range(Nb):
        r = b * rows + M0
        bx[r:r + H, :] = x_ref[b].astype(bx.dtype)

    # ---- validity mask over the L stacked rows: 1 on valid image rows, 0 on the
    #      inter-sample margin rows that the big matmul also produces (hoisted once).
    if Nb > 1:
        row = jax.lax.broadcasted_iota(jnp.int32, (L, 1), 0) + M0
        valid = jnp.logical_and(row >= M0, row < M0 + H)
        for b in range(1, Nb):
            lo = b * rows + M0
            valid = jnp.logical_or(valid,
                                   jnp.logical_and(row >= lo, row < lo + H))
        mask = jnp.broadcast_to(valid.astype(jnp.float32), (L, CW))
    else:
        mask = None

    def read(name, dy):
        """(L, Cin*W-or-CW) f32 view of buffer `name`, vertically shifted by dy."""
        if name in bufs:
            return bufs[name][M0 + dy:M0 + dy + L, :]
        g = int(name)                              # "0".."3" -> lane slice of bcat
        return bcat[M0 + dy:M0 + dy + L, g * CW:(g + 1) * CW]

    def write(name, y):
        """Store a post-ReLU f32 (L, CW) tile; mask kills inter-sample margin rows."""
        if mask is not None and name in plan["zero_margin_bufs"]:
            y = y * mask
        if name in bufs:
            bufs[name][M0:M0 + L, :] = y
        else:
            g = int(name)
            bcat[M0:M0 + L, g * CW:(g + 1) * CW] = y

    def conv(in_name, w_ref, start, dys):
        """Sum of per-vertical-tap matmuls; bf16 operands, f32 accumulation."""
        acc = jnp.dot(read(in_name, dys[0]).astype(mxu_dt), w_ref[start],
                      preferred_element_type=jnp.float32)
        for t in range(1, len(dys)):
            acc = acc + jnp.dot(read(in_name, dys[t]).astype(mxu_dt),
                                w_ref[start + t],
                                preferred_element_type=jnp.float32)
        return acc
    # TODO(synk): optional K-stacking (fold all kh taps into one K=kh*CW matmul)
    # left out; only worth it if the MXU push slot is far from saturation.

    # ---- fused branch0 + conv_res: one (L, Cin*W) @ (Cin*W, 2*CW) matmul per tap.
    f_dys, f_b0, f_bres = plan["fused0"]
    acc = conv("x", w4_ref, 0, f_dys)
    write("0", jnp.maximum(acc[:, :CW] + b_ref[f_b0:f_b0 + 1, :], 0.0))
    xres[...] = jnp.maximum(acc[:, CW:] + b_ref[f_bres:f_bres + 1, :], 0.0)

    # ---- the three sequential 5-conv branch chains (15 layers, K = CW).
    for (start, dys, bias_idx, in_name, out_name) in plan["layers"]:
        acc = conv(in_name, w8_ref, start, dys)
        write(out_name, jnp.maximum(acc + b_ref[bias_idx:bias_idx + 1, :], 0.0))

    # ---- conv_cat over concat(x0..x3): ONE K = 4*CW matmul (lane-contiguous).
    cat_acc = jnp.dot(bcat[M0:M0 + L, :].astype(mxu_dt), wcat_ref[...],
                      preferred_element_type=jnp.float32)
    cat_bias = plan["cat_bias"]
    x_cat = jnp.maximum(cat_acc + b_ref[cat_bias:cat_bias + 1, :], 0.0)

    # ---- final residual add + ReLU; emit only the valid rows of each sample.
    out = jnp.maximum(x_cat + xres[...], 0.0)
    for b in range(Nb):
        o_ref[b] = out[b * rows:b * rows + H, :]


# --------------------------------------------------------------------------
# Wrapper
# --------------------------------------------------------------------------
def _pick_samples_per_step(N, requested=None, cap=8):
    if requested is not None:
        assert N % requested == 0, (N, requested)
        return requested
    nb = min(N, cap)
    while N % nb:
        nb -= 1
    return nb


def _vmem_limit_bytes(packed, Nb, H, cin_w):
    CW, M0 = packed["cw"], packed["margin"]
    T = Nb * (H + 2 * M0)
    L = T - 2 * M0
    weights = sum(int(a.size) * a.dtype.itemsize
                  for a in (packed["w4"], packed["w8"], packed["wcat"], packed["bias"]))
    blocks = Nb * H * (cin_w * packed["w4"].dtype.itemsize + CW * 4)
    scratch = 4 * (T * cin_w + T * 4 * CW + 2 * T * CW + L * CW)
    est = 2 * (weights + blocks) + scratch + (4 << 20)   # x2: double-buffer slack
    return int(min(max(est, 16 << 20), 64 << 20))


def etm_forward(x_l, packed, *, samples_per_step=None):
    """ETM forward.  `x_l` is the channels-in-lane layout (N, H, Cin*W); the result
    keeps that layout with Cout*W lanes.  Keeping this layout end-to-end avoids
    HBM-side NCHW transposes around the kernel."""
    N, H, cin_w = x_l.shape
    assert cin_w == packed["cin_w"]
    CW, M0 = packed["cw"], packed["margin"]
    Nb = _pick_samples_per_step(N, samples_per_step)
    rows = H + 2 * M0

    x_l = x_l.astype(packed["w4"].dtype)            # bf16 input DMA
    kern = functools.partial(_etm_kernel, plan=packed["plan"], H=H, Nb=Nb, M0=M0)
    return pl.pallas_call(
        kern,
        out_shape=jax.ShapeDtypeStruct((N, H, CW), jnp.float32),
        grid=(N // Nb,),
        in_specs=[
            pl.BlockSpec((Nb, H, cin_w), lambda n: (n, 0, 0)),
            pl.BlockSpec(packed["w4"].shape, lambda n: (0, 0, 0)),   # resident
            pl.BlockSpec(packed["w8"].shape, lambda n: (0, 0, 0)),   # resident
            pl.BlockSpec(packed["wcat"].shape, lambda n: (0, 0)),    # resident
            pl.BlockSpec(packed["bias"].shape, lambda n: (0, 0)),    # resident
        ],
        out_specs=pl.BlockSpec((Nb, H, CW), lambda n: (n, 0, 0)),
        scratch_shapes=[
            pltpu.VMEM((Nb * rows, cin_w), jnp.float32),        # bx   (margined input)
            pltpu.VMEM((Nb * rows, 4 * CW), jnp.float32),       # bcat (x0..x3 lane-stacked)
            pltpu.VMEM((Nb * rows, CW), jnp.float32),           # ta   (ping)
            pltpu.VMEM((Nb * rows, CW), jnp.float32),           # tb   (pong)
            pltpu.VMEM((Nb * rows - 2 * M0, CW), jnp.float32),  # x_res
        ],
        compiler_params=pltpu.CompilerParams(
            dimension_semantics=("parallel",),
            vmem_limit_bytes=_vmem_limit_bytes(packed, Nb, H, cin_w),
        ),
    )(x_l, packed["w4"], packed["w8"], packed["wcat"], packed["bias"])


# --------------------------------------------------------------------------
# Parameter construction (deterministic) + BN folding + weight expansion
# --------------------------------------------------------------------------
def make_conv_params(key, cin, cout, ksize, pad):
    kh, kw = (ksize, ksize) if isinstance(ksize, int) else ksize
    ph, pw = (pad, pad) if isinstance(pad, int) else pad
    kw_, kg, kb, km, kv = jax.random.split(key, 5)
    fan_in = cin * kh * kw
    w = jax.random.normal(kw_, (kh, kw, cin, cout), jnp.float32) * (2.0 / fan_in) ** 0.5
    gamma = 1.0 + 0.1 * jax.random.normal(kg, (cout,), jnp.float32)
    beta = 0.1 * jax.random.normal(kb, (cout,), jnp.float32)
    rmean = 0.1 * jax.random.normal(km, (cout,), jnp.float32)
    rvar = jax.random.uniform(kv, (cout,), jnp.float32, minval=0.5, maxval=1.5)
    scale = gamma * jax.lax.rsqrt(rvar + 1e-5)      # eps of nn.BatchNorm2d
    bias = beta - rmean * scale
    return {"w": np.asarray(w), "scale": np.asarray(scale),
            "bias": np.asarray(bias), "pad": (ph, pw)}


def build_etm_params(key, in_channels, out_channels):
    keys = iter(jax.random.split(key, 18))
    p = {}
    p["branch0"] = make_conv_params(next(keys), in_channels, out_channels, 3, 1)
    p["branch1"] = [
        make_conv_params(next(keys), out_channels, out_channels, 1, 0),
        make_conv_params(next(keys), out_channels, out_channels, (1, 3), (0, 1)),
        make_conv_params(next(keys), out_channels, out_channels, (3, 1), (1, 0)),
        make_conv_params(next(keys), out_channels, out_channels, (1, 5), (0, 2)),
        make_conv_params(next(keys), out_channels, out_channels, (5, 1), (2, 0)),
    ]
    p["branch2"] = [
        make_conv_params(next(keys), out_channels, out_channels, 1, 0),
        make_conv_params(next(keys), out_channels, out_channels, (1, 5), (0, 2)),
        make_conv_params(next(keys), out_channels, out_channels, (5, 1), (2, 0)),
        make_conv_params(next(keys), out_channels, out_channels, (1, 7), (0, 3)),
        make_conv_params(next(keys), out_channels, out_channels, (7, 1), (3, 0)),
    ]
    p["branch3"] = [
        make_conv_params(next(keys), out_channels, out_channels, 1, 0),
        make_conv_params(next(keys), out_channels, out_channels, (1, 7), (0, 3)),
        make_conv_params(next(keys), out_channels, out_channels, (7, 1), (3, 0)),
        make_conv_params(next(keys), out_channels, out_channels, (1, 9), (0, 4)),
        make_conv_params(next(keys), out_channels, out_channels, (9, 1), (4, 0)),
    ]
    p["conv_cat"] = make_conv_params(next(keys), 4 * out_channels, out_channels, 1, 0)
    p["conv_res"] = make_conv_params(next(keys), in_channels, out_channels, 3, 1)
    return p


def pack_etm(params, W, mxu_dtype=jnp.bfloat16):
    in_channels = params["branch0"]["w"].shape[2]
    out_channels = params["conv_cat"]["w"].shape[-1]
    CW = out_channels * W

    def folded(p):
        return (np.asarray(p["w"], np.float32)
                * np.asarray(p["scale"], np.float32)[None, None, None, :])

    def expand(p):
        """Per-vertical-tap banded weights: horizontal taps + W zero-padding baked in."""
        w = folded(p)
        kh, kw, cin, cout = w.shape
        ph, pw = p["pad"]
        taps, dys = [], []
        for i in range(kh):
            e = np.zeros((cin, W, cout, W), np.float32)
            for j in range(kw):
                for wo in range(W):
                    wi = wo + j - pw
                    if 0 <= wi < W:
                        e[:, wi, :, wo] = w[i, j]
            taps.append(e.reshape(cin * W, cout * W))
            dys.append(i - ph)
        return taps, tuple(dys)

    biases = []

    def add_bias(p):
        biases.append(np.repeat(np.asarray(p["bias"], np.float32), W))
        return len(biases) - 1

    # fused branch0 + conv_res: both are 3x3 convs on the original input.
    t0, d0 = expand(params["branch0"])
    tr, dr = expand(params["conv_res"])
    assert d0 == dr
    w4 = np.stack([np.concatenate([a, b], axis=1) for a, b in zip(t0, tr)])
    b0_idx, bres_idx = add_bias(params["branch0"]), add_bias(params["conv_res"])

    # the three sequential branch chains (ping-pong between "a" and "b";
    # branch outputs land in lane slices "0".."3" of the concat buffer).
    w8_taps, layers = [], []
    for branch, (src, dst) in zip(("branch1", "branch2", "branch3"),
                                  (("0", "1"), ("1", "2"), ("2", "3"))):
        io = [(src, "a"), ("a", "b"), ("b", "a"), ("a", "b"), ("b", dst)]
        for p, (i_n, o_n) in zip(params[branch], io):
            taps, dys = expand(p)
            start = len(w8_taps)
            w8_taps.extend(taps)
            layers.append((start, dys, add_bias(p), i_n, o_n))

    # conv_cat: single 1x1 over the 4*Cout concatenation -> one K=4*CW matmul.
    cat_taps, cat_dys = expand(params["conv_cat"])
    assert cat_dys == (0,)
    wcat = cat_taps[0]
    cat_bias = add_bias(params["conv_cat"])

    # Buffers read with a nonzero vertical offset need zero margins + masked writes.
    zero_margin_bufs = {"x"} if any(d != 0 for d in d0) else set()
    for (_, dys, _, i_n, _) in layers:
        if any(d != 0 for d in dys):
            zero_margin_bufs.add(i_n)
    # The concat-buffer lane slices ("0".."3") must only ever be read at dy == 0;
    # their margin rows are never zeroed (they are only consumed by 1x1 convs).
    assert not (zero_margin_bufs & set("0123")), zero_margin_bufs

    margin = max([max(abs(d) for d in d0)]
                 + [max(abs(d) for d in dys) for (_, dys, _, _, _) in layers])

    return {
        "w4": jnp.asarray(w4, mxu_dtype),
        "w8": jnp.asarray(np.stack(w8_taps), mxu_dtype),
        "wcat": jnp.asarray(wcat, mxu_dtype),
        "bias": jnp.asarray(np.stack(biases), jnp.float32),
        "plan": {
            "fused0": (d0, b0_idx, bres_idx),
            "layers": tuple(layers),
            "cat_bias": cat_bias,
            "zero_margin_bufs": frozenset(zero_margin_bufs),
        },
        "margin": int(margin),
        "cw": CW,
        "cin_w": in_channels * W,
        "W": W,
        "out_channels": out_channels,
    }


# --------------------------------------------------------------------------
# Pure-JAX reference (for a tolerance self-check).  `dtype` is the precision
# at which conv inputs / BN-folded weights are rounded (bf16 mirrors the
# kernel's MXU path); accumulation and the bias/ReLU epilogue stay f32.
# --------------------------------------------------------------------------
def etm_reference(x, params, dtype=jnp.float32):
    def bc(x_in, p):
        ph, pw = p["pad"]
        w_eff = (jnp.asarray(p["w"], jnp.float32)
                 * jnp.asarray(p["scale"], jnp.float32)[None, None, None, :])
        y = jax.lax.conv_general_dilated(
            x_in.astype(dtype), w_eff.astype(dtype), window_strides=(1, 1),
            padding=[(ph, ph), (pw, pw)],
            dimension_numbers=("NCHW", "HWIO", "NCHW"),
            preferred_element_type=jnp.float32)
        y = y + jnp.asarray(p["bias"], jnp.float32)[None, :, None, None]
        return jnp.maximum(y, 0.0)

    x0 = bc(x, params["branch0"])
    x1 = x0
    for p in params["branch1"]:
        x1 = bc(x1, p)
    x2 = x1
    for p in params["branch2"]:
        x2 = bc(x2, p)
    x3 = x2
    for p in params["branch3"]:
        x3 = bc(x3, p)
    x_cat = bc(jnp.concatenate([x0, x1, x2, x3], axis=1), params["conv_cat"])
    return jnp.maximum(x_cat + bc(x, params["conv_res"]), 0.0)


# --------------------------------------------------------------------------
if __name__ == "__main__":
    key = jax.random.PRNGKey(0)
    k_x, k_p = jax.random.split(key)

    N, Cin, H, W = 2, 4, 16, 16
    Cout = 8

    x = jax.random.normal(k_x, (N, Cin, H, W), jnp.float32)
    params = build_etm_params(k_p, Cin, Cout)
    packed = pack_etm(params, W)

    # One-time relayout to the kernel's channels-in-lane layout (N, H, Cin*W);
    # in a real pipeline activations stay in this layout end-to-end so the kernel
    # needs no HBM-side NCHW transposes.
    x_l = jnp.transpose(x, (0, 2, 1, 3)).reshape(N, H, Cin * W)

    out_l = jax.block_until_ready(etm_forward(x_l, packed))
    assert out_l.shape == (N, H, Cout * W), out_l.shape
    assert bool(jnp.all(jnp.isfinite(out_l)))

    # NCHW view only for the correctness check against the XLA reference.
    out = jnp.transpose(out_l.reshape(N, H, Cout, W), (0, 2, 1, 3))
    ref = jax.block_until_ready(etm_reference(x, params, dtype=jnp.bfloat16))
    err = float(jnp.max(jnp.abs(out - ref)))
    assert err < 2e-2 * (1.0 + float(jnp.max(jnp.abs(ref)))), err

    print("KERNEL_OK")
</pallas_src>

<mosaic_0001>
module attributes {stable_mosaic.version = 11 : i64} {
  func.func @_etm_kernel(%arg0: i32, %arg1: memref<2x16x64xbf16, #tpu.memory_space<vmem>>, %arg2: memref<3x64x256xbf16, #tpu.memory_space<vmem>>, %arg3: memref<45x128x128xbf16, #tpu.memory_space<vmem>>, %arg4: memref<512x128xbf16, #tpu.memory_space<vmem>>, %arg5: memref<18x128xf32, #tpu.memory_space<vmem>>, %arg6: memref<2x16x128xf32, #tpu.memory_space<vmem>>, %arg7: memref<48x64xf32, #tpu.memory_space<vmem>>, %arg8: memref<48x512xf32, #tpu.memory_space<vmem>>, %arg9: memref<48x128xf32, #tpu.memory_space<vmem>>, %arg10: memref<48x128xf32, #tpu.memory_space<vmem>>, %arg11: memref<40x128xf32, #tpu.memory_space<vmem>>) attributes {dimension_semantics = [#tpu.dimension_semantics<parallel>], iteration_bounds = array<i64: 1>, scalar_prefetch = 0 : i64, scratch_operands = 5 : i64, tpu.core_type = #tpu.core_type<tc>, window_params = [{transform_indices = @transform_0, window_bounds = array<i64: 2, 16, 64>}, {pipeline_mode = #tpu.pipeline_mode<synchronous>, transform_indices = @transform_1, window_bounds = array<i64: 3, 64, 256>}, {pipeline_mode = #tpu.pipeline_mode<synchronous>, transform_indices = @transform_2, window_bounds = array<i64: 45, 128, 128>}, {pipeline_mode = #tpu.pipeline_mode<synchronous>, transform_indices = @transform_3, window_bounds = array<i64: 512, 128>}, {pipeline_mode = #tpu.pipeline_mode<synchronous>, transform_indices = @transform_4, window_bounds = array<i64: 18, 128>}, {transform_indices = @transform_5, window_bounds = array<i64: 2, 16, 128>}]} {
    %cst = arith.constant 0.000000e+00 : f32
    %0 = vector.broadcast %cst : f32 to vector<4x128xf32>
    %c0 = arith.constant 0 : index
    %c0_0 = arith.constant 0 : index
    %1 = vector.load %arg10[%c0, %c0_0] : memref<48x128xf32, #tpu.memory_space<vmem>>, vector<4x128xf32>
    tpu.vector_store %arg10[%c0, %c0_0], %0 {strides = array<i32>} : memref<48x128xf32, #tpu.memory_space<vmem>>, vector<4x128xf32>,
    %cst_1 = arith.constant 0.000000e+00 : f32
    %2 = vector.broadcast %cst_1 : f32 to vector<4x128xf32>
    %c44 = arith.constant 44 : index
    %c0_2 = arith.constant 0 : index
    %3 = vector.load %arg10[%c44, %c0_2] : memref<48x128xf32, #tpu.memory_space<vmem>>, vector<4x128xf32>
    tpu.vector_store %arg10[%c44, %c0_2], %2 {strides = array<i32>} : memref<48x128xf32, #tpu.memory_space<vmem>>, vector<4x128xf32>,
    %cst_3 = arith.constant 0.000000e+00 : f32
    %4 = vector.broadcast %cst_3 : f32 to vector<8x128xf32>
    %c20 = arith.constant 20 : index
    %c0_4 = arith.constant 0 : index
    %5 = vector.load %arg10[%c20, %c0_4] : memref<48x128xf32, #tpu.memory_space<vmem>>, vector<8x128xf32>
    tpu.vector_store %arg10[%c20, %c0_4], %4 {strides = array<i32>} : memref<48x128xf32, #tpu.memory_space<vmem>>, vector<8x128xf32>,
    %cst_5 = arith.constant 0.000000e+00 : f32
    %6 = vector.broadcast %cst_5 : f32 to vector<4x64xf32>
    %c0_6 = arith.constant 0 : index
    %c0_7 = arith.constant 0 : index
    %7 = vector.load %arg7[%c0_6, %c0_7] : memref<48x64xf32, #tpu.memory_space<vmem>>, vector<4x64xf32>
    tpu.vector_store %arg7[%c0_6, %c0_7], %6 {strides = array<i32>} : memref<48x64xf32, #tpu.memory_space<vmem>>, vector<4x64xf32>,
    %cst_8 = arith.constant 0.000000e+00 : f32
    %8 = vector.broadcast %cst_8 : f32 to vector<4x64xf32>
    %c44_9 = arith.constant 44 : index
    %c0_10 = arith.constant 0 : index
    %9 = vector.load %arg7[%c44_9, %c0_10] : memref<48x64xf32, #tpu.memory_space<vmem>>, vector<4x64xf32>
    tpu.vector_store %arg7[%c44_9, %c0_10], %8 {strides = array<i32>} : memref<48x64xf32, #tpu.memory_space<vmem>>, vector<4x64xf32>,
    %cst_11 = arith.constant 0.000000e+00 : f32
    %10 = vector.broadcast %cst_11 : f32 to vector<8x64xf32>
    %c20_12 = arith.constant 20 : index
    %c0_13 = arith.constant 0 : index
    %11 = vector.load %arg7[%c20_12, %c0_13] : memref<48x64xf32, #tpu.memory_space<vmem>>, vector<8x64xf32>
    tpu.vector_store %arg7[%c20_12, %c0_13], %10 {strides = array<i32>} : memref<48x64xf32, #tpu.memory_space<vmem>>, vector<8x64xf32>,
    %c0_14 = arith.constant 0 : index
    %c0_15 = arith.constant 0 : index
    %c0_16 = arith.constant 0 : index
    %12 = vector.load %arg1[%c0_14, %c0_15, %c0_16] : memref<2x16x64xbf16, #tpu.memory_space<vmem>>, vector<1x16x64xbf16>
    %13 = vector.shape_cast %12 : vector<1x16x64xbf16> to vector<16x64xbf16>
    %14 = arith.extf %13 : vector<16x64xbf16> to vector<16x64xf32>
    %c4 = arith.constant 4 : index
    %c0_17 = arith.constant 0 : index
    %15 = vector.load %arg7[%c4, %c0_17] : memref<48x64xf32, #tpu.memory_space<vmem>>, vector<16x64xf32>
    tpu.vector_store %arg7[%c4, %c0_17], %14 {strides = array<i32>} : memref<48x64xf32, #tpu.memory_space<vmem>>, vector<16x64xf32>,
    %c1 = arith.constant 1 : index
    %c0_18 = arith.constant 0 : index
    %c0_19 = arith.constant 0 : index
    %16 = vector.load %arg1[%c1, %c0_18, %c0_19] : memref<2x16x64xbf16, #tpu.memory_space<vmem>>, vector<1x16x64xbf16>
    %17 = vector.shape_cast %16 : vector<1x16x64xbf16> to vector<16x64xbf16>
    %18 = arith.extf %17 : vector<16x64xbf16> to vector<16x64xf32>
    %c28 = arith.constant 28 : index
    %c0_20 = arith.constant 0 : index
    %19 = vector.load %arg7[%c28, %c0_20] : memref<48x64xf32, #tpu.memory_space<vmem>>, vector<16x64xf32>
    tpu.vector_store %arg7[%c28, %c0_20], %18 {strides = array<i32>} : memref<48x64xf32, #tpu.memory_space<vmem>>, vector<16x64xf32>,
    %20 = tpu.iota {dimensions = array<i32: 0>} : vector<40x1xi32>
    %c4_i32 = arith.constant 4 : i32
    %21 = vector.broadcast %c4_i32 : i32 to vector<40x1xi32>
    %22 = arith.addi %20, %21 : vector<40x1xi32>
    %c4_i32_21 = arith.constant 4 : i32
    %23 = vector.broadcast %c4_i32_21 : i32 to vector<40x1xi32>
    %24 = arith.cmpi sge, %22, %23 : vector<40x1xi32>
    %c20_i32 = arith.constant 20 : i32
    %25 = vector.broadcast %c20_i32 : i32 to vector<40x1xi32>
    %26 = arith.cmpi slt, %22, %25 : vector<40x1xi32>
    %27 = arith.andi %24, %26 : vector<40x1xi1>
    %c28_i32 = arith.constant 28 : i32
    %28 = vector.broadcast %c28_i32 : i32 to vector<40x1xi32>
    %29 = arith.cmpi sge, %22, %28 : vector<40x1xi32>
    %c44_i32 = arith.constant 44 : i32
    %30 = vector.broadcast %c44_i32 : i32 to vector<40x1xi32>
    %31 = arith.cmpi slt, %22, %30 : vector<40x1xi32>
    %32 = arith.andi %29, %31 : vector<40x1xi1>
    %33 = arith.ori %27, %32 : vector<40x1xi1>
    %34 = arith.extui %33 : vector<40x1xi1> to vector<40x1xi32>
    %35 = arith.sitofp %34 : vector<40x1xi32> to vector<40x1xf32>
    %36 = vector.shape_cast %35 : vector<40x1xf32> to vector<40x1xf32>
    %37 = vector.broadcast %36 : vector<40x1xf32> to vector<40x128xf32>
    %c3 = arith.constant 3 : index
    %c0_22 = arith.constant 0 : index
    %38 = vector.load %arg7[%c3, %c0_22] : memref<48x64xf32, #tpu.memory_space<vmem>>, vector<40x64xf32>
    %39 = arith.truncf %38 : vector<40x64xf32> to vector<40x64xbf16>
    %c0_23 = arith.constant 0 : index
    %c0_24 = arith.constant 0 : index
    %c0_25 = arith.constant 0 : index
    %40 = vector.load %arg2[%c0_23, %c0_24, %c0_25] : memref<3x64x256xbf16, #tpu.memory_space<vmem>>, vector<1x64x256xbf16>
    %41 = vector.shape_cast %40 : vector<1x64x256xbf16> to vector<64x256xbf16>
    %cst_26 = arith.constant dense<0.000000e+00> : vector<40x256xf32>
    %42 = tpu.matmul %39, %41, %cst_26 {dimension_numbers = #tpu.dot_dimension_numbers<[1], [0], [0], [1], [0, 0, 1, 1], [], []>} : vector<40x64xbf16>, vector<64x256xbf16>, vector<40x256xf32> -> vector<40x256xf32>
    %c4_27 = arith.constant 4 : index
    %c0_28 = arith.constant 0 : index
    %43 = vector.load %arg7[%c4_27, %c0_28] : memref<48x64xf32, #tpu.memory_space<vmem>>, vector<40x64xf32>
    %44 = arith.truncf %43 : vector<40x64xf32> to vector<40x64xbf16>
    %c1_29 = arith.constant 1 : index
    %c0_30 = arith.constant 0 : index
    %c0_31 = arith.constant 0 : index
    %45 = vector.load %arg2[%c1_29, %c0_30, %c0_31] : memref<3x64x256xbf16, #tpu.memory_space<vmem>>, vector<1x64x256xbf16>
    %46 = vector.shape_cast %45 : vector<1x64x256xbf16> to vector<64x256xbf16>
    %cst_32 = arith.constant dense<0.000000e+00> : vector<40x256xf32>
    %47 = tpu.matmul %44, %46, %cst_32 {dimension_numbers = #tpu.dot_dimension_numbers<[1], [0], [0], [1], [0, 0, 1, 1], [], []>} : vector<40x64xbf16>, vector<64x256xbf16>, vector<40x256xf32> -> vector<40x256xf32>
    %48 = arith.addf %42, %47 : vector<40x256xf32>
    %c5 = arith.constant 5 : index
    %c0_33 = arith.constant 0 : index
    %49 = vector.load %arg7[%c5, %c0_33] : memref<48x64xf32, #tpu.memory_space<vmem>>, vector<40x64xf32>
    %50 = arith.truncf %49 : vector<40x64xf32> to vector<40x64xbf16>
    %c2 = arith.constant 2 : index
    %c0_34 = arith.constant 0 : index
    %c0_35 = arith.constant 0 : index
    %51 = vector.load %arg2[%c2, %c0_34, %c0_35] : memref<3x64x256xbf16, #tpu.memory_space<vmem>>, vector<1x64x256xbf16>
    %52 = vector.shape_cast %51 : vector<1x64x256xbf16> to vector<64x256xbf16>
    %cst_36 = arith.constant dense<0.000000e+00> : vector<40x256xf32>
    %53 = tpu.matmul %50, %52, %cst_36 {dimension_numbers = #tpu.dot_dimension_numbers<[1], [0], [0], [1], [0, 0, 1, 1], [], []>} : vector<40x64xbf16>, vector<64x256xbf16>, vector<40x256xf32> -> vector<40x256xf32>
    %54 = arith.addf %48, %53 : vector<40x256xf32>
    %55 = vector.extract_strided_slice %54 {offsets = [0, 0], sizes = [40, 128], strides = [1, 1]} : vector<40x256xf32> to vector<40x128xf32>
    %c0_37 = arith.constant 0 : index
    %c0_38 = arith.constant 0 : index
    %56 = vector.load %arg5[%c0_37, %c0_38] : memref<18x128xf32, #tpu.memory_space<vmem>>, vector<1x128xf32>
    %57 = vector.broadcast %56 : vector<1x128xf32> to vector<40x128xf32>
    %58 = arith.addf %55, %57 : vector<40x128xf32>
    %cst_39 = arith.constant 0.000000e+00 : f32
    %59 = vector.broadcast %cst_39 : f32 to vector<40x128xf32>
    %60 = arith.maximumf %58, %59 : vector<40x128xf32>
    %c4_40 = arith.constant 4 : index
    %c0_41 = arith.constant 0 : index
    %61 = vector.load %arg8[%c4_40, %c0_41] : memref<48x512xf32, #tpu.memory_space<vmem>>, vector<40x128xf32>
    tpu.vector_store %arg8[%c4_40, %c0_41], %60 {strides = array<i32>} : memref<48x512xf32, #tpu.memory_space<vmem>>, vector<40x128xf32>,
    %62 = vector.extract_strided_slice %54 {offsets = [0, 128], sizes = [40, 128], strides = [1, 1]} : vector<40x256xf32> to vector<40x128xf32>
    %c1_42 = arith.constant 1 : index
    %c0_43 = arith.constant 0 : index
    %63 = vector.load %arg5[%c1_42, %c0_43] : memref<18x128xf32, #tpu.memory_space<vmem>>, vector<1x128xf32>
    %64 = vector.broadcast %63 : vector<1x128xf32> to vector<40x128xf32>
    %65 = arith.addf %62, %64 : vector<40x128xf32>
    %cst_44 = arith.constant 0.000000e+00 : f32
    %66 = vector.broadcast %cst_44 : f32 to vector<40x128xf32>
    %67 = arith.maximumf %65, %66 : vector<40x128xf32>
    %c0_45 = arith.constant 0 : index
    %c0_46 = arith.constant 0 : index
    %68 = vector.load %arg11[%c0_45, %c0_46] : memref<40x128xf32, #tpu.memory_space<vmem>>, vector<40x128xf32>
    tpu.vector_store %arg11[%c0_45, %c0_46], %67 {strides = array<i32>} : memref<40x128xf32, #tpu.memory_space<vmem>>, vector<40x128xf32>,
    %c4_47 = arith.constant 4 : index
    %c0_48 = arith.constant 0 : index
    %69 = vector.load %arg8[%c4_47, %c0_48] : memref<48x512xf32, #tpu.memory_space<vmem>>, vector<40x128xf32>
    %70 = arith.truncf %69 : vector<40x128xf32> to vector<40x128xbf16>
    %c0_49 = arith.constant 0 : index
    %c0_50 = arith.constant 0 : index
    %c0_51 = arith.constant 0 : index
    %71 = vector.load %arg3[%c0_49, %c0_50, %c0_51] : memref<45x128x128xbf16, #tpu.memory_space<vmem>>, vector<1x128x128xbf16>
    %72 = vector.shape_cast %71 : vector<1x128x128xbf16> to vector<128x128xbf16>
    %cst_52 = arith.constant dense<0.000000e+00> : vector<40x128xf32>
    %73 = tpu.matmul %70, %72, %cst_52 {dimension_numbers = #tpu.dot_dimension_numbers<[1], [0], [0], [1], [0, 0, 1, 1], [], []>} : vector<40x128xbf16>, vector<128x128xbf16>, vector<40x128xf32> -> vector<40x128xf32>
    %c2_53 = arith.constant 2 : index
    %c0_54 = arith.constant 0 : index
    %74 = vector.load %arg5[%c2_53, %c0_54] : memref<18x128xf32, #tpu.memory_space<vmem>>, vector<1x128xf32>
    %75 = vector.broadcast %74 : vector<1x128xf32> to vector<40x128xf32>
    %76 = arith.addf %73, %75 : vector<40x128xf32>
    %cst_55 = arith.constant 0.000000e+00 : f32
    %77 = vector.broadcast %cst_55 : f32 to vector<40x128xf32>
    %78 = arith.maximumf %76, %77 : vector<40x128xf32>
    %c4_56 = arith.constant 4 : index
    %c0_57 = arith.constant 0 : index
    %79 = vector.load %arg9[%c4_56, %c0_57] : memref<48x128xf32, #tpu.memory_space<vmem>>, vector<40x128xf32>
    tpu.vector_store %arg9[%c4_56, %c0_57], %78 {strides = array<i32>} : memref<48x128xf32, #tpu.memory_space<vmem>>, vector<40x128xf32>,
    %c4_58 = arith.constant 4 : index
    %c0_59 = arith.constant 0 : index
    %80 = vector.load %arg9[%c4_58, %c0_59] : memref<48x128xf32, #tpu.memory_space<vmem>>, vector<40x128xf32>
    %81 = arith.truncf %80 : vector<40x128xf32> to vector<40x128xbf16>
    %c1_60 = arith.constant 1 : index
    %c0_61 = arith.constant 0 : index
    %c0_62 = arith.constant 0 : index
    %82 = vector.load %arg3[%c1_60, %c0_61, %c0_62] : memref<45x128x128xbf16, #tpu.memory_space<vmem>>, vector<1x128x128xbf16>
    %83 = vector.shape_cast %82 : vector<1x128x128xbf16> to vector<128x128xbf16>
    %cst_63 = arith.constant dense<0.000000e+00> : vector<40x128xf32>
    %84 = tpu.matmul %81, %83, %cst_63 {dimension_numbers = #tpu.dot_dimension_numbers<[1], [0], [0], [1], [0, 0, 1, 1], [], []>} : vector<40x128xbf16>, vector<128x128xbf16>, vector<40x128xf32> -> vector<40x128xf32>
    %c3_64 = arith.constant 3 : index
    %c0_65 = arith.constant 0 : index
    %85 = vector.load %arg5[%c3_64, %c0_65] : memref<18x128xf32, #tpu.memory_space<vmem>>, vector<1x128xf32>
    %86 = vector.broadcast %85 : vector<1x128xf32> to vector<40x128xf32>
    %87 = arith.addf %84, %86 : vector<40x128xf32>
    %cst_66 = arith.constant 0.000000e+00 : f32
    %88 = vector.broadcast %cst_66 : f32 to vector<40x128xf32>
    %89 = arith.maximumf %87, %88 : vector<40x128xf32>
    %90 = arith.mulf %89, %37 : vector<40x128xf32>
    %c4_67 = arith.constant 4 : index
    %c0_68 = arith.constant 0 : index
    %91 = vector.load %arg10[%c4_67, %c0_68] : memref<48x128xf32, #tpu.memory_space<vmem>>, vector<40x128xf32>
    tpu.vector_store %arg10[%c4_67, %c0_68], %90 {strides = array<i32>} : memref<48x128xf32, #tpu.memory_space<vmem>>, vector<40x128xf32>,
    %c3_69 = arith.constant 3 : index
    %c0_70 = arith.constant 0 : index
    %92 = vector.load %arg10[%c3_69, %c0_70] : memref<48x128xf32, #tpu.memory_space<vmem>>, vector<40x128xf32>
    %93 = arith.truncf %92 : vector<40x128xf32> to vector<40x128xbf16>
    %c2_71 = arith.constant 2 : index
    %c0_72 = arith.constant 0 : index
    %c0_73 = arith.constant 0 : index
    %94 = vector.load %arg3[%c2_71, %c0_72, %c0_73] : memref<45x128x128xbf16, #tpu.memory_space<vmem>>, vector<1x128x128xbf16>
    %95 = vector.shape_cast %94 : vector<1x128x128xbf16> to vector<128x128xbf16>
    %cst_74 = arith.constant dense<0.000000e+00> : vector<40x128xf32>
    %96 = tpu.matmul %93, %95, %cst_74 {dimension_numbers = #tpu.dot_dimension_numbers<[1], [0], [0], [1], [0, 0, 1, 1], [], []>} : vector<40x128xbf16>, vector<128x128xbf16>, vector<40x128xf32> -> vector<40x128xf32>
    %c4_75 = arith.constant 4 : index
    %c0_76 = arith.constant 0 : index
    %97 = vector.load %arg10[%c4_75, %c0_76] : memref<48x128xf32, #tpu.memory_space<vmem>>, vector<40x128xf32>
    %98 = arith.truncf %97 : vector<40x128xf32> to vector<40x128xbf16>
    %c3_77 = arith.constant 3 : index
    %c0_78 = arith.constant 0 : index
    %c0_79 = arith.constant 0 : index
    %99 = vector.load %arg3[%c3_77, %c0_78, %c0_79] : memref<45x128x128xbf16, #tpu.memory_space<vmem>>, vector<1x128x128xbf16>
    %100 = vector.shape_cast %99 : vector<1x128x128xbf16> to vector<128x128xbf16>
    %cst_80 = arith.constant dense<0.000000e+00> : vector<40x128xf32>
    %101 = tpu.matmul %98, %100, %cst_80 {dimension_numbers = #tpu.dot_dimension_numbers<[1], [0], [0], [1], [0, 0, 1, 1], [], []>} : vector<40x128xbf16>, vector<128x128xbf16>, vector<40x128xf32> -> vector<40x128xf32>
    %102 = arith.addf %96, %101 : vector<40x128xf32>
    %c5_81 = arith.constant 5 : index
    %c0_82 = arith.constant 0 : index
    %103 = vector.load %arg10[%c5_81, %c0_82] : memref<48x128xf32, #tpu.memory_space<vmem>>, vector<40x128xf32>
    %104 = arith.truncf %103 : vector<40x128xf32> to vector<40x128xbf16>
    %c4_83 = arith.constant 4 : index
    %c0_84 = arith.constant 0 : index
    %c0_85 = arith.constant 0 : index
    %105 = vector.load %arg3[%c4_83, %c0_84, %c0_85] : memref<45x128x128xbf16, #tpu.memory_space<vmem>>, vector<1x128x128xbf16>
    %106 = vector.shape_cast %105 : vector<1x128x128xbf16> to vector<128x128xbf16>
    %cst_86 = arith.constant dense<0.000000e+00> : vector<40x128xf32>
    %107 = tpu.matmul %104, %106, %cst_86 {dimension_numbers = #tpu.dot_dimension_numbers<[1], [0], [0], [1], [0, 0, 1, 1], [], []>} : vector<40x128xbf16>, vector<128x128xbf16>, vector<40x128xf32> -> vector<40x128xf32>
    %108 = arith.addf %102, %107 : vector<40x128xf32>
    %c4_87 = arith.constant 4 : index
    %c0_88 = arith.constant 0 : index
    %109 = vector.load %arg5[%c4_87, %c0_88] : memref<18x128xf32, #tpu.memory_space<vmem>>, vector<1x128xf32>
    %110 = vector.broadcast %109 : vector<1x128xf32> to vector<40x128xf32>
    %111 = arith.addf %108, %110 : vector<40x128xf32>
    %cst_89 = arith.constant 0.000000e+00 : f32
    %112 = vector.broadcast %cst_89 : f32 to vector<40x128xf32>
    %113 = arith.maximumf %111, %112 : vector<40x128xf32>
    %c4_90 = arith.constant 4 : index
    %c0_91 = arith.constant 0 : index
    %114 = vector.load %arg9[%c4_90, %c0_91] : memref<48x128xf32, #tpu.memory_space<vmem>>, vector<40x128xf32>
    tpu.vector_store %arg9[%c4_90, %c0_91], %113 {strides = array<i32>} : memref<48x128xf32, #tpu.memory_space<vmem>>, vector<40x128xf32>,
    %c4_92 = arith.constant 4 : index
    %c0_93 = arith.constant 0 : index
    %115 = vector.load %arg9[%c4_92, %c0_93] : memref<48x128xf32, #tpu.memory_space<vmem>>, vector<40x128xf32>
    %116 = arith.truncf %115 : vector<40x128xf32> to vector<40x128xbf16>
    %c5_94 = arith.constant 5 : index
    %c0_95 = arith.constant 0 : index
    %c0_96 = arith.constant 0 : index
    %117 = vector.load %arg3[%c5_94, %c0_95, %c0_96] : memref<45x128x128xbf16, #tpu.memory_space<vmem>>, vector<1x128x128xbf16>
    %118 = vector.shape_cast %117 : vector<1x128x128xbf16> to vector<128x128xbf16>
    %cst_97 = arith.constant dense<0.000000e+00> : vector<40x128xf32>
    %119 = tpu.matmul %116, %118, %cst_97 {dimension_numbers = #tpu.dot_dimension_numbers<[1], [0], [0], [1], [0, 0, 1, 1], [], []>} : vector<40x128xbf16>, vector<128x128xbf16>, vector<40x128xf32> -> vector<40x128xf32>
    %c5_98 = arith.constant 5 : index
    %c0_99 = arith.constant 0 : index
    %120 = vector.load %arg5[%c5_98, %c0_99] : memref<18x128xf32, #tpu.memory_space<vmem>>, vector<1x128xf32>
    %121 = vector.broadcast %120 : vector<1x128xf32> to vector<40x128xf32>
    %122 = arith.addf %119, %121 : vector<40x128xf32>
    %cst_100 = arith.constant 0.000000e+00 : f32
    %123 = vector.broadcast %cst_100 : f32 to vector<40x128xf32>
    %124 = arith.maximumf %122, %123 : vector<40x128xf32>
    %125 = arith.mulf %124, %37 : vector<40x128xf32>
    %c4_101 = arith.constant 4 : index
    %c0_102 = arith.constant 0 : index
    %126 = vector.load %arg10[%c4_101, %c0_102] : memref<48x128xf32, #tpu.memory_space<vmem>>, vector<40x128xf32>
    tpu.vector_store %arg10[%c4_101, %c0_102], %125 {strides = array<i32>} : memref<48x128xf32, #tpu.memory_space<vmem>>, vector<40x128xf32>,
    %c2_103 = arith.constant 2 : index
    %c0_104 = arith.constant 0 : index
    %127 = vector.load %arg10[%c2_103, %c0_104] : memref<48x128xf32, #tpu.memory_space<vmem>>, vector<40x128xf32>
    %128 = arith.truncf %127 : vector<40x128xf32> to vector<40x128xbf16>
    %c6 = arith.constant 6 : index
    %c0_105 = arith.constant 0 : index
    %c0_106 = arith.constant 0 : index
    %129 = vector.load %arg3[%c6, %c0_105, %c0_106] : memref<45x128x128xbf16, #tpu.memory_space<vmem>>, vector<1x128x128xbf16>
    %130 = vector.shape_cast %129 : vector<1x128x128xbf16> to vector<128x128xbf16>
    %cst_107 = arith.constant dense<0.000000e+00> : vector<40x128xf32>
    %131 = tpu.matmul %128, %130, %cst_107 {dimension_numbers = #tpu.dot_dimension_numbers<[1], [0], [0], [1], [0, 0, 1, 1], [], []>} : vector<40x128xbf16>, vector<128x128xbf16>, vector<40x128xf32> -> vector<40x128xf32>
    %c3_108 = arith.constant 3 : index
    %c0_109 = arith.constant 0 : index
    %132 = vector.load %arg10[%c3_108, %c0_109] : memref<48x128xf32, #tpu.memory_space<vmem>>, vector<40x128xf32>
    %133 = arith.truncf %132 : vector<40x128xf32> to vector<40x128xbf16>
    %c7 = arith.constant 7 : index
    %c0_110 = arith.constant 0 : index
    %c0_111 = arith.constant 0 : index
    %134 = vector.load %arg3[%c7, %c0_110, %c0_111] : memref<45x128x128xbf16, #tpu.memory_space<vmem>>, vector<1x128x128xbf16>
    %135 = vector.shape_cast %134 : vector<1x128x128xbf16> to vector<128x128xbf16>
    %cst_112 = arith.constant dense<0.000000e+00> : vector<40x128xf32>
    %136 = tpu.matmul %133, %135, %cst_112 {dimension_numbers = #tpu.dot_dimension_numbers<[1], [0], [0], [1], [0, 0, 1, 1], [], []>} : vector<40x128xbf16>, vector<128x128xbf16>, vector<40x128xf32> -> vector<40x128xf32>
    %137 = arith.addf %131, %136 : vector<40x128xf32>
    %c4_113 = arith.constant 4 : index
    %c0_114 = arith.constant 0 : index
    %138 = vector.load %arg10[%c4_113, %c0_114] : memref<48x128xf32, #tpu.memory_space<vmem>>, vector<40x128xf32>
    %139 = arith.truncf %138 : vector<40x128xf32> to vector<40x128xbf16>
    %c8 = arith.constant 8 : index
    %c0_115 = arith.constant 0 : index
    %c0_116 = arith.constant 0 : index
    %140 = vector.load %arg3[%c8, %c0_115, %c0_116] : memref<45x128x128xbf16, #tpu.memory_space<vmem>>, vector<1x128x128xbf16>
    %141 = vector.shape_cast %140 : vector<1x128x128xbf16> to vector<128x128xbf16>
    %cst_117 = arith.constant dense<0.000000e+00> : vector<40x128xf32>
    %142 = tpu.matmul %139, %141, %cst_117 {dimension_numbers = #tpu.dot_dimension_numbers<[1], [0], [0], [1], [0, 0, 1, 1], [], []>} : vector<40x128xbf16>, vector<128x128xbf16>, vector<40x128xf32> -> vector<40x128xf32>
    %143 = arith.addf %137, %142 : vector<40x128xf32>
    %c5_118 = arith.constant 5 : index
    %c0_119 = arith.constant 0 : index
    %144 = vector.load %arg10[%c5_118, %c0_119] : memref<48x128xf32, #tpu.memory_space<vmem>>, vector<40x128xf32>
    %145 = arith.truncf %144 : vector<40x128xf32> to vector<40x128xbf16>
    %c9 = arith.constant 9 : index
    %c0_120 = arith.constant 0 : index
    %c0_121 = arith.constant 0 : index
    %146 = vector.load %arg3[%c9, %c0_120, %c0_121] : memref<45x128x128xbf16, #tpu.memory_space<vmem>>, vector<1x128x128xbf16>
    %147 = vector.shape_cast %146 : vector<1x128x128xbf16> to vector<128x128xbf16>
    %cst_122 = arith.constant dense<0.000000e+00> : vector<40x128xf32>
    %148 = tpu.matmul %145, %147, %cst_122 {dimension_numbers = #tpu.dot_dimension_numbers<[1], [0], [0], [1], [0, 0, 1, 1], [], []>} : vector<40x128xbf16>, vector<128x128xbf16>, vector<40x128xf32> -> vector<40x128xf32>
    %149 = arith.addf %143, %148 : vector<40x128xf32>
    %c6_123 = arith.constant 6 : index
    %c0_124 = arith.constant 0 : index
    %150 = vector.load %arg10[%c6_123, %c0_124] : memref<48x128xf32, #tpu.memory_space<vmem>>, vector<40x128xf32>
    %151 = arith.truncf %150 : vector<40x128xf32> to vector<40x128xbf16>
    %c10 = arith.constant 10 : index
    %c0_125 = arith.constant 0 : index
    %c0_126 = arith.constant 0 : index
    %152 = vector.load %arg3[%c10, %c0_125, %c0_126] : memref<45x128x128xbf16, #tpu.memory_space<vmem>>, vector<1x128x128xbf16>
    %153 = vector.shape_cast %152 : vector<1x128x128xbf16> to vector<128x128xbf16>
    %cst_127 = arith.constant dense<0.000000e+00> : vector<40x128xf32>
    %154 = tpu.matmul %151, %153, %cst_127 {dimension_numbers = #tpu.dot_dimension_numbers<[1], [0], [0], [1], [0, 0, 1, 1], [], []>} : vector<40x128xbf16>, vector<128x128xbf16>, vector<40x128xf32> -> vector<40x128xf32>
    %155 = arith.addf %149, %154 : vector<40x128xf32>
    %c6_128 = arith.constant 6 : index
    %c0_129 = arith.constant 0 : index
    %156 = vector.load %arg5[%c6_128, %c0_129] : memref<18x128xf32, #tpu.memory_space<vmem>>, vector<1x128xf32>
    %157 = vector.broadcast %156 : vector<1x128xf32> to vector<40x128xf32>
    %158 = arith.addf %155, %157 : vector<40x128xf32>
    %cst_130 = arith.constant 0.000000e+00 : f32
    %159 = vector.broadcast %cst_130 : f32 to vector<40x128xf32>
    %160 = arith.maximumf %158, %159 : vector<40x128xf32>
    %c4_131 = arith.constant 4 : index
    %c128 = arith.constant 128 : index
    %161 = vector.load %arg8[%c4_131, %c128] : memref<48x512xf32, #tpu.memory_space<vmem>>, vector<40x128xf32>
    tpu.vector_store %arg8[%c4_131, %c128], %160 {strides = array<i32>} : memref<48x512xf32, #tpu.memory_space<vmem>>, vector<40x128xf32>,
    %c4_132 = arith.constant 4 : index
    %c128_133 = arith.constant 128 : index
    %162 = vector.load %arg8[%c4_132, %c128_133] : memref<48x512xf32, #tpu.memory_space<vmem>>, vector<40x128xf32>
    %163 = arith.truncf %162 : vector<40x128xf32> to vector<40x128xbf16>
    %c11 = arith.constant 11 : index
    %c0_134 = arith.constant 0 : index
    %c0_135 = arith.constant 0 : index
    %164 = vector.load %arg3[%c11, %c0_134, %c0_135] : memref<45x128x128xbf16, #tpu.memory_space<vmem>>, vector<1x128x128xbf16>
    %165 = vector.shape_cast %164 : vector<1x128x128xbf16> to vector<128x128xbf16>
    %cst_136 = arith.constant dense<0.000000e+00> : vector<40x128xf32>
    %166 = tpu.matmul %163, %165, %cst_136 {dimension_numbers = #tpu.dot_dimension_numbers<[1], [0], [0], [1], [0, 0, 1, 1], [], []>} : vector<40x128xbf16>, vector<128x128xbf16>, vector<40x128xf32> -> vector<40x128xf32>
    %c7_137 = arith.constant 7 : index
    %c0_138 = arith.constant 0 : index
    %167 = vector.load %arg5[%c7_137, %c0_138] : memref<18x128xf32, #tpu.memory_space<vmem>>, vector<1x128xf32>
    %168 = vector.broadcast %167 : vector<1x128xf32> to vector<40x128xf32>
    %169 = arith.addf %166, %168 : vector<40x128xf32>
    %cst_139 = arith.constant 0.000000e+00 : f32
    %170 = vector.broadcast %cst_139 : f32 to vector<40x128xf32>
    %171 = arith.maximumf %169, %170 : vector<40x128xf32>
    %c4_140 = arith.constant 4 : index
    %c0_141 = arith.constant 0 : index
    %172 = vector.load %arg9[%c4_140, %c0_141] : memref<48x128xf32, #tpu.memory_space<vmem>>, vector<40x128xf32>
    tpu.vector_store %arg9[%c4_140, %c0_141], %171 {strides = array<i32>} : memref<48x128xf32, #tpu.memory_space<vmem>>, vector<40x128xf32>,
    %c4_142 = arith.constant 4 : index
    %c0_143 = arith.constant 0 : index
    %173 = vector.load %arg9[%c4_142, %c0_143] : memref<48x128xf32, #tpu.memory_space<vmem>>, vector<40x128xf32>
    %174 = arith.truncf %173 : vector<40x128xf32> to vector<40x128xbf16>
    %c12 = arith.constant 12 : index
    %c0_144 = arith.constant 0 : index
    %c0_145 = arith.constant 0 : index
    %175 = vector.load %arg3[%c12, %c0_144, %c0_145] : memref<45x128x128xbf16, #tpu.memory_space<vmem>>, vector<1x128x128xbf16>
    %176 = vector.shape_cast %175 : vector<1x128x128xbf16> to vector<128x128xbf16>
    %cst_146 = arith.constant dense<0.000000e+00> : vector<40x128xf32>
    %177 = tpu.matmul %174, %176, %cst_146 {dimension_numbers = #tpu.dot_dimension_numbers<[1], [0], [0], [1], [0, 0, 1, 1], [], []>} : vector<40x128xbf16>, vector<128x128xbf16>, vector<40x128xf32> -> vector<40x128xf32>
    %c8_147 = arith.constant 8 : index
    %c0_148 = arith.constant 0 : index
    %178 = vector.load %arg5[%c8_147, %c0_148] : memref<18x128xf32, #tpu.memory_space<vmem>>, vector<1x128xf32>
    %179 = vector.broadcast %178 : vector<1x128xf32> to vector<40x128xf32>
    %180 = arith.addf %177, %179 : vector<40x128xf32>
    %cst_149 = arith.constant 0.000000e+00 : f32
    %181 = vector.broadcast %cst_149 : f32 to vector<40x128xf32>
    %182 = arith.maximumf %180, %181 : vector<40x128xf32>
    %183 = arith.mulf %182, %37 : vector<40x128xf32>
    %c4_150 = arith.constant 4 : index
    %c0_151 = arith.constant 0 : index
    %184 = vector.load %arg10[%c4_150, %c0_151] : memref<48x128xf32, #tpu.memory_space<vmem>>, vector<40x128xf32>
    tpu.vector_store %arg10[%c4_150, %c0_151], %183 {strides = array<i32>} : memref<48x128xf32, #tpu.memory_space<vmem>>, vector<40x128xf32>,
    %c2_152 = arith.constant 2 : index
    %c0_153 = arith.constant 0 : index
    %185 = vector.load %arg10[%c2_152, %c0_153] : memref<48x128xf32, #tpu.memory_space<vmem>>, vector<40x128xf32>
    %186 = arith.truncf %185 : vector<40x128xf32> to vector<40x128xbf16>
    %c13 = arith.constant 13 : index
    %c0_154 = arith.constant 0 : index
    %c0_155 = arith.constant 0 : index
    %187 = vector.load %arg3[%c13, %c0_154, %c0_155] : memref<45x128x128xbf16, #tpu.memory_space<vmem>>, vector<1x128x128xbf16>
    %188 = vector.shape_cast %187 : vector<1x128x128xbf16> to vector<128x128xbf16>
    %cst_156 = arith.constant dense<0.000000e+00> : vector<40x128xf32>
    %189 = tpu.matmul %186, %188, %cst_156 {dimension_numbers = #tpu.dot_dimension_numbers<[1], [0], [0], [1], [0, 0, 1, 1], [], []>} : vector<40x128xbf16>, vector<128x128xbf16>, vector<40x128xf32> -> vector<40x128xf32>
    %c3_157 = arith.constant 3 : index
    %c0_158 = arith.constant 0 : index
    %190 = vector.load %arg10[%c3_157, %c0_158] : memref<48x128xf32, #tpu.memory_space<vmem>>, vector<40x128xf32>
    %191 = arith.truncf %190 : vector<40x128xf32> to vector<40x128xbf16>
    %c14 = arith.constant 14 : index
    %c0_159 = arith.constant 0 : index
    %c0_160 = arith.constant 0 : index
    %192 = vector.load %arg3[%c14, %c0_159, %c0_160] : memref<45x128x128xbf16, #tpu.memory_space<vmem>>, vector<1x128x128xbf16>
    %193 = vector.shape_cast %192 : vector<1x128x128xbf16> to vector<128x128xbf16>
    %cst_161 = arith.constant dense<0.000000e+00> : vector<40x128xf32>
    %194 = tpu.matmul %191, %193, %cst_161 {dimension_numbers = #tpu.dot_dimension_numbers<[1], [0], [0], [1], [0, 0, 1, 1], [], []>} : vector<40x128xbf16>, vector<128x128xbf16>, vector<40x128xf32> -> vector<40x128xf32>
    %195 = arith.addf %189, %194 : vector<40x128xf32>
    %c4_162 = arith.constant 4 : index
    %c0_163 = arith.constant 0 : index
    %196 = vector.load %arg10[%c4_162, %c0_163] : memref<48x128xf32, #tpu.memory_space<vmem>>, vector<40x128xf32>
    %197 = arith.truncf %196 : vector<40x128xf32> to vector<40x128xbf16>
    %c15 = arith.constant 15 : index
    %c0_164 = arith.constant 0 : index
    %c0_165 = arith.constant 0 : index
    %198 = vector.load %arg3[%c15, %c0_164, %c0_165] : memref<45x128x128xbf16, #tpu.memory_space<vmem>>, vector<1x128x128xbf16>
    %199 = vector.shape_cast %198 : vector<1x128x128xbf16> to vector<128x128xbf16>
    %cst_166 = arith.constant dense<0.000000e+00> : vector<40x128xf32>
    %200 = tpu.matmul %197, %199, %cst_166 {dimension_numbers = #tpu.dot_dimension_numbers<[1], [0], [0], [1], [0, 0, 1, 1], [], []>} : vector<40x128xbf16>, vector<128x128xbf16>, vector<40x128xf32> -> vector<40x128xf32>
    %201 = arith.addf %195, %200 : vector<40x128xf32>
    %c5_167 = arith.constant 5 : index
    %c0_168 = arith.constant 0 : index
    %202 = vector.load %arg10[%c5_167, %c0_168] : memref<48x128xf32, #tpu.memory_space<vmem>>, vector<40x128xf32>
    %203 = arith.truncf %202 : vector<40x128xf32> to vector<40x128xbf16>
    %c16 = arith.constant 16 : index
    %c0_169 = arith.constant 0 : index
    %c0_170 = arith.constant 0 : index
    %204 = vector.load %arg3[%c16, %c0_169, %c0_170] : memref<45x128x128xbf16, #tpu.memory_space<vmem>>, vector<1x128x128xbf16>
    %205 = vector.shape_cast %204 : vector<1x128x128xbf16> to vector<128x128xbf16>
    %cst_171 = arith.constant dense<0.000000e+00> : vector<40x128xf32>
    %206 = tpu.matmul %203, %205, %cst_171 {dimension_numbers = #tpu.dot_dimension_numbers<[1], [0], [0], [1], [0, 0, 1, 1], [], []>} : vector<40x128xbf16>, vector<128x128xbf16>, vector<40x128xf32> -> vector<40x128xf32>
    %207 = arith.addf %201, %206 : vector<40x128xf32>
    %c6_172 = arith.constant 6 : index
    %c0_173 = arith.constant 0 : index
    %208 = vector.load %arg10[%c6_172, %c0_173] : memref<48x128xf32, #tpu.memory_space<vmem>>, vector<40x128xf32>
    %209 = arith.truncf %208 : vector<40x128xf32> to vector<40x128xbf16>
    %c17 = arith.constant 17 : index
    %c0_174 = arith.constant 0 : index
    %c0_175 = arith.constant 0 : index
    %210 = vector.load %arg3[%c17, %c0_174, %c0_175] : memref<45x128x128xbf16, #tpu.memory_space<vmem>>, vector<1x128x128xbf16>
    %211 = vector.shape_cast %210 : vector<1x128x128xbf16> to vector<128x128xbf16>
    %cst_176 = arith.constant dense<0.000000e+00> : vector<40x128xf32>
    %212 = tpu.matmul %209, %211, %cst_176 {dimension_numbers = #tpu.dot_dimension_numbers<[1], [0], [0], [1], [0, 0, 1, 1], [], []>} : vector<40x128xbf16>, vector<128x128xbf16>, vector<40x128xf32> -> vector<40x128xf32>
    %213 = arith.addf %207, %212 : vector<40x128xf32>
    %c9_177 = arith.constant 9 : index
    %c0_178 = arith.constant 0 : index
    %214 = vector.load %arg5[%c9_177, %c0_178] : memref<18x128xf32, #tpu.memory_space<vmem>>, vector<1x128xf32>
    %215 = vector.broadcast %214 : vector<1x128xf32> to vector<40x128xf32>
    %216 = arith.addf %213, %215 : vector<40x128xf32>
    %cst_179 = arith.constant 0.000000e+00 : f32
    %217 = vector.broadcast %cst_179 : f32 to vector<40x128xf32>
    %218 = arith.maximumf %216, %217 : vector<40x128xf32>
    %c4_180 = arith.constant 4 : index
    %c0_181 = arith.constant 0 : index
    %219 = vector.load %arg9[%c4_180, %c0_181] : memref<48x128xf32, #tpu.memory_space<vmem>>, vector<40x128xf32>
    tpu.vector_store %arg9[%c4_180, %c0_181], %218 {strides = array<i32>} : memref<48x128xf32, #tpu.memory_space<vmem>>, vector<40x128xf32>,
    %c4_182 = arith.constant 4 : index
    %c0_183 = arith.constant 0 : index
    %220 = vector.load %arg9[%c4_182, %c0_183] : memref<48x128xf32, #tpu.memory_space<vmem>>, vector<40x128xf32>
    %221 = arith.truncf %220 : vector<40x128xf32> to vector<40x128xbf16>
    %c18 = arith.constant 18 : index
    %c0_184 = arith.constant 0 : index
    %c0_185 = arith.constant 0 : index
    %222 = vector.load %arg3[%c18, %c0_184, %c0_185] : memref<45x128x128xbf16, #tpu.memory_space<vmem>>, vector<1x128x128xbf16>
    %223 = vector.shape_cast %222 : vector<1x128x128xbf16> to vector<128x128xbf16>
    %cst_186 = arith.constant dense<0.000000e+00> : vector<40x128xf32>
    %224 = tpu.matmul %221, %223, %cst_186 {dimension_numbers = #tpu.dot_dimension_numbers<[1], [0], [0], [1], [0, 0, 1, 1], [], []>} : vector<40x128xbf16>, vector<128x128xbf16>, vector<40x128xf32> -> vector<40x128xf32>
    %c10_187 = arith.constant 10 : index
    %c0_188 = arith.constant 0 : index
    %225 = vector.load %arg5[%c10_187, %c0_188] : memref<18x128xf32, #tpu.memory_space<vmem>>, vector<1x128xf32>
    %226 = vector.broadcast %225 : vector<1x128xf32> to vector<40x128xf32>
    %227 = arith.addf %224, %226 : vector<40x128xf32>
    %cst_189 = arith.constant 0.000000e+00 : f32
    %228 = vector.broadcast %cst_189 : f32 to vector<40x128xf32>
    %229 = arith.maximumf %227, %228 : vector<40x128xf32>
    %230 = arith.mulf %229, %37 : vector<40x128xf32>
    %c4_190 = arith.constant 4 : index
    %c0_191 = arith.constant 0 : index
    %231 = vector.load %arg10[%c4_190, %c0_191] : memref<48x128xf32, #tpu.memory_space<vmem>>, vector<40x128xf32>
    tpu.vector_store %arg10[%c4_190, %c0_191], %230 {strides = array<i32>} : memref<48x128xf32, #tpu.memory_space<vmem>>, vector<40x128xf32>,
    %c1_192 = arith.constant 1 : index
    %c0_193 = arith.constant 0 : index
    %232 = vector.load %arg10[%c1_192, %c0_193] : memref<48x128xf32, #tpu.memory_space<vmem>>, vector<40x128xf32>
    %233 = arith.truncf %232 : vector<40x128xf32> to vector<40x128xbf16>
    %c19 = arith.constant 19 : index
    %c0_194 = arith.constant 0 : index
    %c0_195 = arith.constant 0 : index
    %234 = vector.load %arg3[%c19, %c0_194, %c0_195] : memref<45x128x128xbf16, #tpu.memory_space<vmem>>, vector<1x128x128xbf16>
    %235 = vector.shape_cast %234 : vector<1x128x128xbf16> to vector<128x128xbf16>
    %cst_196 = arith.constant dense<0.000000e+00> : vector<40x128xf32>
    %236 = tpu.matmul %233, %235, %cst_196 {dimension_numbers = #tpu.dot_dimension_numbers<[1], [0], [0], [1], [0, 0, 1, 1], [], []>} : vector<40x128xbf16>, vector<128x128xbf16>, vector<40x128xf32> -> vector<40x128xf32>
    %c2_197 = arith.constant 2 : index
    %c0_198 = arith.constant 0 : index
    %237 = vector.load %arg10[%c2_197, %c0_198] : memref<48x128xf32, #tpu.memory_space<vmem>>, vector<40x128xf32>
    %238 = arith.truncf %237 : vector<40x128xf32> to vector<40x128xbf16>
    %c20_199 = arith.constant 20 : index
    %c0_200 = arith.constant 0 : index
    %c0_201 = arith.constant 0 : index
    %239 = vector.load %arg3[%c20_199, %c0_200, %c0_201] : memref<45x128x128xbf16, #tpu.memory_space<vmem>>, vector<1x128x128xbf16>
    %240 = vector.shape_cast %239 : vector<1x128x128xbf16> to vector<128x128xbf16>
    %cst_202 = arith.constant dense<0.000000e+00> : vector<40x128xf32>
    %241 = tpu.matmul %238, %240, %cst_202 {dimension_numbers = #tpu.dot_dimension_numbers<[1], [0], [0], [1], [0, 0, 1, 1], [], []>} : vector<40x128xbf16>, vector<128x128xbf16>, vector<40x128xf32> -> vector<40x128xf32>
    %242 = arith.addf %236, %241 : vector<40x128xf32>
    %c3_203 = arith.constant 3 : index
    %c0_204 = arith.constant 0 : index
    %243 = vector.load %arg10[%c3_203, %c0_204] : memref<48x128xf32, #tpu.memory_space<vmem>>, vector<40x128xf32>
    %244 = arith.truncf %243 : vector<40x128xf32> to vector<40x128xbf16>
    %c21 = arith.constant 21 : index
    %c0_205 = arith.constant 0 : index
    %c0_206 = arith.constant 0 : index
    %245 = vector.load %arg3[%c21, %c0_205, %c0_206] : memref<45x128x128xbf16, #tpu.memory_space<vmem>>, vector<1x128x128xbf16>
    %246 = vector.shape_cast %245 : vector<1x128x128xbf16> to vector<128x128xbf16>
    %cst_207 = arith.constant dense<0.000000e+00> : vector<40x128xf32>
    %247 = tpu.matmul %244, %246, %cst_207 {dimension_numbers = #tpu.dot_dimension_numbers<[1], [0], [0], [1], [0, 0, 1, 1], [], []>} : vector<40x128xbf16>, vector<128x128xbf16>, vector<40x128xf32> -> vector<40x128xf32>
    %248 = arith.addf %242, %247 : vector<40x128xf32>
    %c4_208 = arith.constant 4 : index
    %c0_209 = arith.constant 0 : index
    %249 = vector.load %arg10[%c4_208, %c0_209] : memref<48x128xf32, #tpu.memory_space<vmem>>, vector<40x128xf32>
    %250 = arith.truncf %249 : vector<40x128xf32> to vector<40x128xbf16>
    %c22 = arith.constant 22 : index
    %c0_210 = arith.constant 0 : index
    %c0_211 = arith.constant 0 : index
    %251 = vector.load %arg3[%c22, %c0_210, %c0_211] : memref<45x128x128xbf16, #tpu.memory_space<vmem>>, vector<1x128x128xbf16>
    %252 = vector.shape_cast %251 : vector<1x128x128xbf16> to vector<128x128xbf16>
    %cst_212 = arith.constant dense<0.000000e+00> : vector<40x128xf32>
    %253 = tpu.matmul %250, %252, %cst_212 {dimension_numbers = #tpu.dot_dimension_numbers<[1], [0], [0], [1], [0, 0, 1, 1], [], []>} : vector<40x128xbf16>, vector<128x128xbf16>, vector<40x128xf32> -> vector<40x128xf32>
    %254 = arith.addf %248, %253 : vector<40x128xf32>
    %c5_213 = arith.constant 5 : index
    %c0_214 = arith.constant 0 : index
    %255 = vector.load %arg10[%c5_213, %c0_214] : memref<48x128xf32, #tpu.memory_space<vmem>>, vector<40x128xf32>
    %256 = arith.truncf %255 : vector<40x128xf32> to vector<40x128xbf16>
    %c23 = arith.constant 23 : index
    %c0_215 = arith.constant 0 : index
    %c0_216 = arith.constant 0 : index
    %257 = vector.load %arg3[%c23, %c0_215, %c0_216] : memref<45x128x128xbf16, #tpu.memory_space<vmem>>, vector<1x128x128xbf16>
    %258 = vector.shape_cast %257 : vector<1x128x128xbf16> to vector<128x128xbf16>
    %cst_217 = arith.constant dense<0.000000e+00> : vector<40x128xf32>
    %259 = tpu.matmul %256, %258, %cst_217 {dimension_numbers = #tpu.dot_dimension_numbers<[1], [0], [0], [1], [0, 0, 1, 1], [], []>} : vector<40x128xbf16>, vector<128x128xbf16>, vector<40x128xf32> -> vector<40x128xf32>
    %260 = arith.addf %254, %259 : vector<40x128xf32>
    %c6_218 = arith.constant 6 : index
    %c0_219 = arith.constant 0 : index
    %261 = vector.load %arg10[%c6_218, %c0_219] : memref<48x128xf32, #tpu.memory_space<vmem>>, vector<40x128xf32>
    %262 = arith.truncf %261 : vector<40x128xf32> to vector<40x128xbf16>
    %c24 = arith.constant 24 : index
    %c0_220 = arith.constant 0 : index
    %c0_221 = arith.constant 0 : index
    %263 = vector.load %arg3[%c24, %c0_220, %c0_221] : memref<45x128x128xbf16, #tpu.memory_space<vmem>>, vector<1x128x128xbf16>
    %264 = vector.shape_cast %263 : vector<1x128x128xbf16> to vector<128x128xbf16>
    %cst_222 = arith.constant dense<0.000000e+00> : vector<40x128xf32>
    %265 = tpu.matmul %262, %264, %cst_222 {dimension_numbers = #tpu.dot_dimension_numbers<[1], [0], [0], [1], [0, 0, 1, 1], [], []>} : vector<40x128xbf16>, vector<128x128xbf16>, vector<40x128xf32> -> vector<40x128xf32>
    %266 = arith.addf %260, %265 : vector<40x128xf32>
    %c7_223 = arith.constant 7 : index
    %c0_224 = arith.constant 0 : index
    %267 = vector.load %arg10[%c7_223, %c0_224] : memref<48x128xf32, #tpu.memory_space<vmem>>, vector<40x128xf32>
    %268 = arith.truncf %267 : vector<40x128xf32> to vector<40x128xbf16>
    %c25 = arith.constant 25 : index
    %c0_225 = arith.constant 0 : index
    %c0_226 = arith.constant 0 : index
    %269 = vector.load %arg3[%c25, %c0_225, %c0_226] : memref<45x128x128xbf16, #tpu.memory_space<vmem>>, vector<1x128x128xbf16>
    %270 = vector.shape_cast %269 : vector<1x128x128xbf16> to vector<128x128xbf16>
    %cst_227 = arith.constant dense<0.000000e+00> : vector<40x128xf32>
    %271 = tpu.matmul %268, %270, %cst_227 {dimension_numbers = #tpu.dot_dimension_numbers<[1], [0], [0], [1], [0, 0, 1, 1], [], []>} : vector<40x128xbf16>, vector<128x128xbf16>, vector<40x128xf32> -> vector<40x128xf32>
    %272 = arith.addf %266, %271 : vector<40x128xf32>
    %c11_228 = arith.constant 11 : index
    %c0_229 = arith.constant 0 : index
    %273 = vector.load %arg5[%c11_228, %c0_229] : memref<18x128xf32, #tpu.memory_space<vmem>>, vector<1x128xf32>
    %274 = vector.broadcast %273 : vector<1x128xf32> to vector<40x128xf32>
    %275 = arith.addf %272, %274 : vector<40x128xf32>
    %cst_230 = arith.constant 0.000000e+00 : f32
    %276 = vector.broadcast %cst_230 : f32 to vector<40x128xf32>
    %277 = arith.maximumf %275, %276 : vector<40x128xf32>
    %c4_231 = arith.constant 4 : index
    %c256 = arith.constant 256 : index
    %278 = vector.load %arg8[%c4_231, %c256] : memref<48x512xf32, #tpu.memory_space<vmem>>, vector<40x128xf32>
    tpu.vector_store %arg8[%c4_231, %c256], %277 {strides = array<i32>} : memref<48x512xf32, #tpu.memory_space<vmem>>, vector<40x128xf32>,
    %c4_232 = arith.constant 4 : index
    %c256_233 = arith.constant 256 : index
    %279 = vector.load %arg8[%c4_232, %c256_233] : memref<48x512xf32, #tpu.memory_space<vmem>>, vector<40x128xf32>
    %280 = arith.truncf %279 : vector<40x128xf32> to vector<40x128xbf16>
    %c26 = arith.constant 26 : index
    %c0_234 = arith.constant 0 : index
    %c0_235 = arith.constant 0 : index
    %281 = vector.load %arg3[%c26, %c0_234, %c0_235] : memref<45x128x128xbf16, #tpu.memory_space<vmem>>, vector<1x128x128xbf16>
    %282 = vector.shape_cast %281 : vector<1x128x128xbf16> to vector<128x128xbf16>
    %cst_236 = arith.constant dense<0.000000e+00> : vector<40x128xf32>
    %283 = tpu.matmul %280, %282, %cst_236 {dimension_numbers = #tpu.dot_dimension_numbers<[1], [0], [0], [1], [0, 0, 1, 1], [], []>} : vector<40x128xbf16>, vector<128x128xbf16>, vector<40x128xf32> -> vector<40x128xf32>
    %c12_237 = arith.constant 12 : index
    %c0_238 = arith.constant 0 : index
    %284 = vector.load %arg5[%c12_237, %c0_238] : memref<18x128xf32, #tpu.memory_space<vmem>>, vector<1x128xf32>
    %285 = vector.broadcast %284 : vector<1x128xf32> to vector<40x128xf32>
    %286 = arith.addf %283, %285 : vector<40x128xf32>
    %cst_239 = arith.constant 0.000000e+00 : f32
    %287 = vector.broadcast %cst_239 : f32 to vector<40x128xf32>
    %288 = arith.maximumf %286, %287 : vector<40x128xf32>
    %c4_240 = arith.constant 4 : index
    %c0_241 = arith.constant 0 : index
    %289 = vector.load %arg9[%c4_240, %c0_241] : memref<48x128xf32, #tpu.memory_space<vmem>>, vector<40x128xf32>
    tpu.vector_store %arg9[%c4_240, %c0_241], %288 {strides = array<i32>} : memref<48x128xf32, #tpu.memory_space<vmem>>, vector<40x128xf32>,
    %c4_242 = arith.constant 4 : index
    %c0_243 = arith.constant 0 : index
    %290 = vector.load %arg9[%c4_242, %c0_243] : memref<48x128xf32, #tpu.memory_space<vmem>>, vector<40x128xf32>
    %291 = arith.truncf %290 : vector<40x128xf32> to vector<40x128xbf16>
    %c27 = arith.constant 27 : index
    %c0_244 = arith.constant 0 : index
    %c0_245 = arith.constant 0 : index
    %292 = vector.load %arg3[%c27, %c0_244, %c0_245] : memref<45x128x128xbf16, #tpu.memory_space<vmem>>, vector<1x128x128xbf16>
    %293 = vector.shape_cast %292 : vector<1x128x128xbf16> to vector<128x128xbf16>
    %cst_246 = arith.constant dense<0.000000e+00> : vector<40x128xf32>
    %294 = tpu.matmul %291, %293, %cst_246 {dimension_numbers = #tpu.dot_dimension_numbers<[1], [0], [0], [1], [0, 0, 1, 1], [], []>} : vector<40x128xbf16>, vector<128x128xbf16>, vector<40x128xf32> -> vector<40x128xf32>
    %c13_247 = arith.constant 13 : index
    %c0_248 = arith.constant 0 : index
    %295 = vector.load %arg5[%c13_247, %c0_248] : memref<18x128xf32, #tpu.memory_space<vmem>>, vector<1x128xf32>
    %296 = vector.broadcast %295 : vector<1x128xf32> to vector<40x128xf32>
    %297 = arith.addf %294, %296 : vector<40x128xf32>
    %cst_249 = arith.constant 0.000000e+00 : f32
    %298 = vector.broadcast %cst_249 : f32 to vector<40x128xf32>
    %299 = arith.maximumf %297, %298 : vector<40x128xf32>
    %300 = arith.mulf %299, %37 : vector<40x128xf32>
    %c4_250 = arith.constant 4 : index
    %c0_251 = arith.constant 0 : index
    %301 = vector.load %arg10[%c4_250, %c0_251] : memref<48x128xf32, #tpu.memory_space<vmem>>, vector<40x128xf32>
    tpu.vector_store %arg10[%c4_250, %c0_251], %300 {strides = array<i32>} : memref<48x128xf32, #tpu.memory_space<vmem>>, vector<40x128xf32>,
    %c1_252 = arith.constant 1 : index
    %c0_253 = arith.constant 0 : index
    %302 = vector.load %arg10[%c1_252, %c0_253] : memref<48x128xf32, #tpu.memory_space<vmem>>, vector<40x128xf32>
    %303 = arith.truncf %302 : vector<40x128xf32> to vector<40x128xbf16>
    %c28_254 = arith.constant 28 : index
    %c0_255 = arith.constant 0 : index
    %c0_256 = arith.constant 0 : index
    %304 = vector.load %arg3[%c28_254, %c0_255, %c0_256] : memref<45x128x128xbf16, #tpu.memory_space<vmem>>, vector<1x128x128xbf16>
    %305 = vector.shape_cast %304 : vector<1x128x128xbf16> to vector<128x128xbf16>
    %cst_257 = arith.constant dense<0.000000e+00> : vector<40x128xf32>
    %306 = tpu.matmul %303, %305, %cst_257 {dimension_numbers = #tpu.dot_dimension_numbers<[1], [0], [0], [1], [0, 0, 1, 1], [], []>} : vector<40x128xbf16>, vector<128x128xbf16>, vector<40x128xf32> -> vector<40x128xf32>
    %c2_258 = arith.constant 2 : index
    %c0_259 = arith.constant 0 : index
    %307 = vector.load %arg10[%c2_258, %c0_259] : memref<48x128xf32, #tpu.memory_space<vmem>>, vector<40x128xf32>
    %308 = arith.truncf %307 : vector<40x128xf32> to vector<40x128xbf16>
    %c29 = arith.constant 29 : index
    %c0_260 = arith.constant 0 : index
    %c0_261 = arith.constant 0 : index
    %309 = vector.load %arg3[%c29, %c0_260, %c0_261] : memref<45x128x128xbf16, #tpu.memory_space<vmem>>, vector<1x128x128xbf16>
    %310 = vector.shape_cast %309 : vector<1x128x128xbf16> to vector<128x128xbf16>
    %cst_262 = arith.constant dense<0.000000e+00> : vector<40x128xf32>
    %311 = tpu.matmul %308, %310, %cst_262 {dimension_numbers = #tpu.dot_dimension_numbers<[1], [0], [0], [1], [0, 0, 1, 1], [], []>} : vector<40x128xbf16>, vector<128x128xbf16>, vector<40x128xf32> -> vector<40x128xf32>
    %312 = arith.addf %306, %311 : vector<40x128xf32>
    %c3_263 = arith.constant 3 : index
    %c0_264 = arith.constant 0 : index
    %313 = vector.load %arg10[%c3_263, %c0_264] : memref<48x128xf32, #tpu.memory_space<vmem>>, vector<40x128xf32>
    %314 = arith.truncf %313 : vector<40x128xf32> to vector<40x128xbf16>
    %c30 = arith.constant 30 : index
    %c0_265 = arith.constant 0 : index
    %c0_266 = arith.constant 0 : index
    %315 = vector.load %arg3[%c30, %c0_265, %c0_266] : memref<45x128x128xbf16, #tpu.memory_space<vmem>>, vector<1x128x128xbf16>
    %316 = vector.shape_cast %315 : vector<1x128x128xbf16> to vector<128x128xbf16>
    %cst_267 = arith.constant dense<0.000000e+00> : vector<40x128xf32>
    %317 = tpu.matmul %314, %316, %cst_267 {dimension_numbers = #tpu.dot_dimension_numbers<[1], [0], [0], [1], [0, 0, 1, 1], [], []>} : vector<40x128xbf16>, vector<128x128xbf16>, vector<40x128xf32> -> vector<40x128xf32>
    %318 = arith.addf %312, %317 : vector<40x128xf32>
    %c4_268 = arith.constant 4 : index
    %c0_269 = arith.constant 0 : index
    %319 = vector.load %arg10[%c4_268, %c0_269] : memref<48x128xf32, #tpu.memory_space<vmem>>, vector<40x128xf32>
    %320 = arith.truncf %319 : vector<40x128xf32> to vector<40x128xbf16>
    %c31 = arith.constant 31 : index
    %c0_270 = arith.constant 0 : index
    %c0_271 = arith.constant 0 : index
    %321 = vector.load %arg3[%c31, %c0_270, %c0_271] : memref<45x128x128xbf16, #tpu.memory_space<vmem>>, vector<1x128x128xbf16>
    %322 = vector.shape_cast %321 : vector<1x128x128xbf16> to vector<128x128xbf16>
    %cst_272 = arith.constant dense<0.000000e+00> : vector<40x128xf32>
    %323 = tpu.matmul %320, %322, %cst_272 {dimension_numbers = #tpu.dot_dimension_numbers<[1], [0], [0], [1], [0, 0, 1, 1], [], []>} : vector<40x128xbf16>, vector<128x128xbf16>, vector<40x128xf32> -> vector<40x128xf32>
    %324 = arith.addf %318, %323 : vector<40x128xf32>
    %c5_273 = arith.constant 5 : index
    %c0_274 = arith.constant 0 : index
    %325 = vector.load %arg10[%c5_273, %c0_274] : memref<48x128xf32, #tpu.memory_space<vmem>>, vector<40x128xf32>
    %326 = arith.truncf %325 : vector<40x128xf32> to vector<40x128xbf16>
    %c32 = arith.constant 32 : index
    %c0_275 = arith.constant 0 : index
    %c0_276 = arith.constant 0 : index
    %327 = vector.load %arg3[%c32, %c0_275, %c0_276] : memref<45x128x128xbf16, #tpu.memory_space<vmem>>, vector<1x128x128xbf16>
    %328 = vector.shape_cast %327 : vector<1x128x128xbf16> to vector<128x128xbf16>
    %cst_277 = arith.constant dense<0.000000e+00> : vector<40x128xf32>
    %329 = tpu.matmul %326, %328, %cst_277 {dimension_numbers = #tpu.dot_dimension_numbers<[1], [0], [0], [1], [0, 0, 1, 1], [], []>} : vector<40x128xbf16>, vector<128x128xbf16>, vector<40x128xf32> -> vector<40x128xf32>
    %330 = arith.addf %324, %329 : vector<40x128xf32>
    %c6_278 = arith.constant 6 : index
    %c0_279 = arith.constant 0 : index
    %331 = vector.load %arg10[%c6_278, %c0_279] : memref<48x128xf32, #tpu.memory_space<vmem>>, vector<40x128xf32>
    %332 = arith.truncf %331 : vector<40x128xf32> to vector<40x128xbf16>
    %c33 = arith.constant 33 : index
    %c0_280 = arith.constant 0 : index
    %c0_281 = arith.constant 0 : index
    %333 = vector.load %arg3[%c33, %c0_280, %c0_281] : memref<45x128x128xbf16, #tpu.memory_space<vmem>>, vector<1x128x128xbf16>
    %334 = vector.shape_cast %333 : vector<1x128x128xbf16> to vector<128x128xbf16>
    %cst_282 = arith.constant dense<0.000000e+00> : vector<40x128xf32>
    %335 = tpu.matmul %332, %334, %cst_282 {dimension_numbers = #tpu.dot_dimension_numbers<[1], [0], [0], [1], [0, 0, 1, 1], [], []>} : vector<40x128xbf16>, vector<128x128xbf16>, vector<40x128xf32> -> vector<40x128xf32>
    %336 = arith.addf %330, %335 : vector<40x128xf32>
    %c7_283 = arith.constant 7 : index
    %c0_284 = arith.constant 0 : index
    %337 = vector.load %arg10[%c7_283, %c0_284] : memref<48x128xf32, #tpu.memory_space<vmem>>, vector<40x128xf32>
    %338 = arith.truncf %337 : vector<40x128xf32> to vector<40x128xbf16>
    %c34 = arith.constant 34 : index
    %c0_285 = arith.constant 0 : index
    %c0_286 = arith.constant 0 : index
    %339 = vector.load %arg3[%c34, %c0_285, %c0_286] : memref<45x128x128xbf16, #tpu.memory_space<vmem>>, vector<1x128x128xbf16>
    %340 = vector.shape_cast %339 : vector<1x128x128xbf16> to vector<128x128xbf16>
    %cst_287 = arith.constant dense<0.000000e+00> : vector<40x128xf32>
    %341 = tpu.matmul %338, %340, %cst_287 {dimension_numbers = #tpu.dot_dimension_numbers<[1], [0], [0], [1], [0, 0, 1, 1], [], []>} : vector<40x128xbf16>, vector<128x128xbf16>, vector<40x128xf32> -> vector<40x128xf32>
    %342 = arith.addf %336, %341 : vector<40x128xf32>
    %c14_288 = arith.constant 14 : index
    %c0_289 = arith.constant 0 : index
    %343 = vector.load %arg5[%c14_288, %c0_289] : memref<18x128xf32, #tpu.memory_space<vmem>>, vector<1x128xf32>
    %344 = vector.broadcast %343 : vector<1x128xf32> to vector<40x128xf32>
    %345 = arith.addf %342, %344 : vector<40x128xf32>
    %cst_290 = arith.constant 0.000000e+00 : f32
    %346 = vector.broadcast %cst_290 : f32 to vector<40x128xf32>
    %347 = arith.maximumf %345, %346 : vector<40x128xf32>
    %c4_291 = arith.constant 4 : index
    %c0_292 = arith.constant 0 : index
    %348 = vector.load %arg9[%c4_291, %c0_292] : memref<48x128xf32, #tpu.memory_space<vmem>>, vector<40x128xf32>
    tpu.vector_store %arg9[%c4_291, %c0_292], %347 {strides = array<i32>} : memref<48x128xf32, #tpu.memory_space<vmem>>, vector<40x128xf32>,
    %c4_293 = arith.constant 4 : index
    %c0_294 = arith.constant 0 : index
    %349 = vector.load %arg9[%c4_293, %c0_294] : memref<48x128xf32, #tpu.memory_space<vmem>>, vector<40x128xf32>
    %350 = arith.truncf %349 : vector<40x128xf32> to vector<40x128xbf16>
    %c35 = arith.constant 35 : index
    %c0_295 = arith.constant 0 : index
    %c0_296 = arith.constant 0 : index
    %351 = vector.load %arg3[%c35, %c0_295, %c0_296] : memref<45x128x128xbf16, #tpu.memory_space<vmem>>, vector<1x128x128xbf16>
    %352 = vector.shape_cast %351 : vector<1x128x128xbf16> to vector<128x128xbf16>
    %cst_297 = arith.constant dense<0.000000e+00> : vector<40x128xf32>
    %353 = tpu.matmul %350, %352, %cst_297 {dimension_numbers = #tpu.dot_dimension_numbers<[1], [0], [0], [1], [0, 0, 1, 1], [], []>} : vector<40x128xbf16>, vector<128x128xbf16>, vector<40x128xf32> -> vector<40x128xf32>
    %c15_298 = arith.constant 15 : index
    %c0_299 = arith.constant 0 : index
    %354 = vector.load %arg5[%c15_298, %c0_299] : memref<18x128xf32, #tpu.memory_space<vmem>>, vector<1x128xf32>
    %355 = vector.broadcast %354 : vector<1x128xf32> to vector<40x128xf32>
    %356 = arith.addf %353, %355 : vector<40x128xf32>
    %cst_300 = arith.constant 0.000000e+00 : f32
    %357 = vector.broadcast %cst_300 : f32 to vector<40x128xf32>
    %358 = arith.maximumf %356, %357 : vector<40x128xf32>
    %359 = arith.mulf %358, %37 : vector<40x128xf32>
    %c4_301 = arith.constant 4 : index
    %c0_302 = arith.constant 0 : index
    %360 = vector.load %arg10[%c4_301, %c0_302] : memref<48x128xf32, #tpu.memory_space<vmem>>, vector<40x128xf32>
    tpu.vector_store %arg10[%c4_301, %c0_302], %359 {strides = array<i32>} : memref<48x128xf32, #tpu.memory_space<vmem>>, vector<40x128xf32>,
    %c0_303 = arith.constant 0 : index
    %c0_304 = arith.constant 0 : index
    %361 = vector.load %arg10[%c0_303, %c0_304] : memref<48x128xf32, #tpu.memory_space<vmem>>, vector<40x128xf32>
    %362 = arith.truncf %361 : vector<40x128xf32> to vector<40x128xbf16>
    %c36 = arith.constant 36 : index
    %c0_305 = arith.constant 0 : index
    %c0_306 = arith.constant 0 : index
    %363 = vector.load %arg3[%c36, %c0_305, %c0_306] : memref<45x128x128xbf16, #tpu.memory_space<vmem>>, vector<1x128x128xbf16>
    %364 = vector.shape_cast %363 : vector<1x128x128xbf16> to vector<128x128xbf16>
    %cst_307 = arith.constant dense<0.000000e+00> : vector<40x128xf32>
    %365 = tpu.matmul %362, %364, %cst_307 {dimension_numbers = #tpu.dot_dimension_numbers<[1], [0], [0], [1], [0, 0, 1, 1], [], []>} : vector<40x128xbf16>, vector<128x128xbf16>, vector<40x128xf32> -> vector<40x128xf32>
    %c1_308 = arith.constant 1 : index
    %c0_309 = arith.constant 0 : index
    %366 = vector.load %arg10[%c1_308, %c0_309] : memref<48x128xf32, #tpu.memory_space<vmem>>, vector<40x128xf32>
    %367 = arith.truncf %366 : vector<40x128xf32> to vector<40x128xbf16>
    %c37 = arith.constant 37 : index
    %c0_310 = arith.constant 0 : index
    %c0_311 = arith.constant 0 : index
    %368 = vector.load %arg3[%c37, %c0_310, %c0_311] : memref<45x128x128xbf16, #tpu.memory_space<vmem>>, vector<1x128x128xbf16>
    %369 = vector.shape_cast %368 : vector<1x128x128xbf16> to vector<128x128xbf16>
    %cst_312 = arith.constant dense<0.000000e+00> : vector<40x128xf32>
    %370 = tpu.matmul %367, %369, %cst_312 {dimension_numbers = #tpu.dot_dimension_numbers<[1], [0], [0], [1], [0, 0, 1, 1], [], []>} : vector<40x128xbf16>, vector<128x128xbf16>, vector<40x128xf32> -> vector<40x128xf32>
    %371 = arith.addf %365, %370 : vector<40x128xf32>
    %c2_313 = arith.constant 2 : index
    %c0_314 = arith.constant 0 : index
    %372 = vector.load %arg10[%c2_313, %c0_314] : memref<48x128xf32, #tpu.memory_space<vmem>>, vector<40x128xf32>
    %373 = arith.truncf %372 : vector<40x128xf32> to vector<40x128xbf16>
    %c38 = arith.constant 38 : index
    %c0_315 = arith.constant 0 : index
    %c0_316 = arith.constant 0 : index
    %374 = vector.load %arg3[%c38, %c0_315, %c0_316] : memref<45x128x128xbf16, #tpu.memory_space<vmem>>, vector<1x128x128xbf16>
    %375 = vector.shape_cast %374 : vector<1x128x128xbf16> to vector<128x128xbf16>
    %cst_317 = arith.constant dense<0.000000e+00> : vector<40x128xf32>
    %376 = tpu.matmul %373, %375, %cst_317 {dimension_numbers = #tpu.dot_dimension_numbers<[1], [0], [0], [1], [0, 0, 1, 1], [], []>} : vector<40x128xbf16>, vector<128x128xbf16>, vector<40x128xf32> -> vector<40x128xf32>
    %377 = arith.addf %371, %376 : vector<40x128xf32>
    %c3_318 = arith.constant 3 : index
    %c0_319 = arith.constant 0 : index
    %378 = vector.load %arg10[%c3_318, %c0_319] : memref<48x128xf32, #tpu.memory_space<vmem>>, vector<40x128xf32>
    %379 = arith.truncf %378 : vector<40x128xf32> to vector<40x128xbf16>
    %c39 = arith.constant 39 : index
    %c0_320 = arith.constant 0 : index
    %c0_321 = arith.constant 0 : index
    %380 = vector.load %arg3[%c39, %c0_320, %c0_321] : memref<45x128x128xbf16, #tpu.memory_space<vmem>>, vector<1x128x128xbf16>
    %381 = vector.shape_cast %380 : vector<1x128x128xbf16> to vector<128x128xbf16>
    %cst_322 = arith.constant dense<0.000000e+00> : vector<40x128xf32>
    %382 = tpu.matmul %379, %381, %cst_322 {dimension_numbers = #tpu.dot_dimension_numbers<[1], [0], [0], [1], [0, 0, 1, 1], [], []>} : vector<40x128xbf16>, vector<128x128xbf16>, vector<40x128xf32> -> vector<40x128xf32>
    %383 = arith.addf %377, %382 : vector<40x128xf32>
    %c4_323 = arith.constant 4 : index
    %c0_324 = arith.constant 0 : index
    %384 = vector.load %arg10[%c4_323, %c0_324] : memref<48x128xf32, #tpu.memory_space<vmem>>, vector<40x128xf32>
    %385 = arith.truncf %384 : vector<40x128xf32> to vector<40x128xbf16>
    %c40 = arith.constant 40 : index
    %c0_325 = arith.constant 0 : index
    %c0_326 = arith.constant 0 : index
    %386 = vector.load %arg3[%c40, %c0_325, %c0_326] : memref<45x128x128xbf16, #tpu.memory_space<vmem>>, vector<1x128x128xbf16>
    %387 = vector.shape_cast %386 : vector<1x128x128xbf16> to vector<128x128xbf16>
    %cst_327 = arith.constant dense<0.000000e+00> : vector<40x128xf32>
    %388 = tpu.matmul %385, %387, %cst_327 {dimension_numbers = #tpu.dot_dimension_numbers<[1], [0], [0], [1], [0, 0, 1, 1], [], []>} : vector<40x128xbf16>, vector<128x128xbf16>, vector<40x128xf32> -> vector<40x128xf32>
    %389 = arith.addf %383, %388 : vector<40x128xf32>
    %c5_328 = arith.constant 5 : index
    %c0_329 = arith.constant 0 : index
    %390 = vector.load %arg10[%c5_328, %c0_329] : memref<48x128xf32, #tpu.memory_space<vmem>>, vector<40x128xf32>
    %391 = arith.truncf %390 : vector<40x128xf32> to vector<40x128xbf16>
    %c41 = arith.constant 41 : index
    %c0_330 = arith.constant 0 : index
    %c0_331 = arith.constant 0 : index
    %392 = vector.load %arg3[%c41, %c0_330, %c0_331] : memref<45x128x128xbf16, #tpu.memory_space<vmem>>, vector<1x128x128xbf16>
    %393 = vector.shape_cast %392 : vector<1x128x128xbf16> to vector<128x128xbf16>
    %cst_332 = arith.constant dense<0.000000e+00> : vector<40x128xf32>
    %394 = tpu.matmul %391, %393, %cst_332 {dimension_numbers = #tpu.dot_dimension_numbers<[1], [0], [0], [1], [0, 0, 1, 1], [], []>} : vector<40x128xbf16>, vector<128x128xbf16>, vector<40x128xf32> -> vector<40x128xf32>
    %395 = arith.addf %389, %394 : vector<40x128xf32>
    %c6_333 = arith.constant 6 : index
    %c0_334 = arith.constant 0 : index
    %396 = vector.load %arg10[%c6_333, %c0_334] : memref<48x128xf32, #tpu.memory_space<vmem>>, vector<40x128xf32>
    %397 = arith.truncf %396 : vector<40x128xf32> to vector<40x128xbf16>
    %c42 = arith.constant 42 : index
    %c0_335 = arith.constant 0 : index
    %c0_336 = arith.constant 0 : index
    %398 = vector.load %arg3[%c42, %c0_335, %c0_336] : memref<45x128x128xbf16, #tpu.memory_space<vmem>>, vector<1x128x128xbf16>
    %399 = vector.shape_cast %398 : vector<1x128x128xbf16> to vector<128x128xbf16>
    %cst_337 = arith.constant dense<0.000000e+00> : vector<40x128xf32>
    %400 = tpu.matmul %397, %399, %cst_337 {dimension_numbers = #tpu.dot_dimension_numbers<[1], [0], [0], [1], [0, 0, 1, 1], [], []>} : vector<40x128xbf16>, vector<128x128xbf16>, vector<40x128xf32> -> vector<40x128xf32>
    %401 = arith.addf %395, %400 : vector<40x128xf32>
    %c7_338 = arith.constant 7 : index
    %c0_339 = arith.constant 0 : index
    %402 = vector.load %arg10[%c7_338, %c0_339] : memref<48x128xf32, #tpu.memory_space<vmem>>, vector<40x128xf32>
    %403 = arith.truncf %402 : vector<40x128xf32> to vector<40x128xbf16>
    %c43 = arith.constant 43 : index
    %c0_340 = arith.constant 0 : index
    %c0_341 = arith.constant 0 : index
    %404 = vector.load %arg3[%c43, %c0_340, %c0_341] : memref<45x128x128xbf16, #tpu.memory_space<vmem>>, vector<1x128x128xbf16>
    %405 = vector.shape_cast %404 : vector<1x128x128xbf16> to vector<128x128xbf16>
    %cst_342 = arith.constant dense<0.000000e+00> : vector<40x128xf32>
    %406 = tpu.matmul %403, %405, %cst_342 {dimension_numbers = #tpu.dot_dimension_numbers<[1], [0], [0], [1], [0, 0, 1, 1], [], []>} : vector<40x128xbf16>, vector<128x128xbf16>, vector<40x128xf32> -> vector<40x128xf32>
    %407 = arith.addf %401, %406 : vector<40x128xf32>
    %c8_343 = arith.constant 8 : index
    %c0_344 = arith.constant 0 : index
    %408 = vector.load %arg10[%c8_343, %c0_344] : memref<48x128xf32, #tpu.memory_space<vmem>>, vector<40x128xf32>
    %409 = arith.truncf %408 : vector<40x128xf32> to vector<40x128xbf16>
    %c44_345 = arith.constant 44 : index
    %c0_346 = arith.constant 0 : index
    %c0_347 = arith.constant 0 : index
    %410 = vector.load %arg3[%c44_345, %c0_346, %c0_347] : memref<45x128x128xbf16, #tpu.memory_space<vmem>>, vector<1x128x128xbf16>
    %411 = vector.shape_cast %410 : vector<1x128x128xbf16> to vector<128x128xbf16>
    %cst_348 = arith.constant dense<0.000000e+00> : vector<40x128xf32>
    %412 = tpu.matmul %409, %411, %cst_348 {dimension_numbers = #tpu.dot_dimension_numbers<[1], [0], [0], [1], [0, 0, 1, 1], [], []>} : vector<40x128xbf16>, vector<128x128xbf16>, vector<40x128xf32> -> vector<40x128xf32>
    %413 = arith.addf %407, %412 : vector<40x128xf32>
    %c16_349 = arith.constant 16 : index
    %c0_350 = arith.constant 0 : index
    %414 = vector.load %arg5[%c16_349, %c0_350] : memref<18x128xf32, #tpu.memory_space<vmem>>, vector<1x128xf32>
    %415 = vector.broadcast %414 : vector<1x128xf32> to vector<40x128xf32>
    %416 = arith.addf %413, %415 : vector<40x128xf32>
    %cst_351 = arith.constant 0.000000e+00 : f32
    %417 = vector.broadcast %cst_351 : f32 to vector<40x128xf32>
    %418 = arith.maximumf %416, %417 : vector<40x128xf32>
    %c4_352 = arith.constant 4 : index
    %c384 = arith.constant 384 : index
    %419 = vector.load %arg8[%c4_352, %c384] : memref<48x512xf32, #tpu.memory_space<vmem>>, vector<40x128xf32>
    tpu.vector_store %arg8[%c4_352, %c384], %418 {strides = array<i32>} : memref<48x512xf32, #tpu.memory_space<vmem>>, vector<40x128xf32>,
    %c4_353 = arith.constant 4 : index
    %c0_354 = arith.constant 0 : index
    %420 = vector.load %arg8[%c4_353, %c0_354] : memref<48x512xf32, #tpu.memory_space<vmem>>, vector<40x512xf32>
    %421 = arith.truncf %420 : vector<40x512xf32> to vector<40x512xbf16>
    %c0_355 = arith.constant 0 : index
    %c0_356 = arith.constant 0 : index
    %422 = vector.load %arg4[%c0_355, %c0_356] : memref<512x128xbf16, #tpu.memory_space<vmem>>, vector<512x128xbf16>
    %cst_357 = arith.constant dense<0.000000e+00> : vector<40x128xf32>
    %423 = tpu.matmul %421, %422, %cst_357 {dimension_numbers = #tpu.dot_dimension_numbers<[1], [0], [0], [1], [0, 0, 1, 1], [], []>} : vector<40x512xbf16>, vector<512x128xbf16>, vector<40x128xf32> -> vector<40x128xf32>
    %c17_358 = arith.constant 17 : index
    %c0_359 = arith.constant 0 : index
    %424 = vector.load %arg5[%c17_358, %c0_359] : memref<18x128xf32, #tpu.memory_space<vmem>>, vector<1x128xf32>
    %425 = vector.broadcast %424 : vector<1x128xf32> to vector<40x128xf32>
    %426 = arith.addf %423, %425 : vector<40x128xf32>
    %cst_360 = arith.constant 0.000000e+00 : f32
    %427 = vector.broadcast %cst_360 : f32 to vector<40x128xf32>
    %428 = arith.maximumf %426, %427 : vector<40x128xf32>
    %c0_361 = arith.constant 0 : index
    %c0_362 = arith.constant 0 : index
    %429 = vector.load %arg11[%c0_361, %c0_362] : memref<40x128xf32, #tpu.memory_space<vmem>>, vector<40x128xf32>
    %430 = arith.addf %428, %429 : vector<40x128xf32>
    %cst_363 = arith.constant 0.000000e+00 : f32
    %431 = vector.broadcast %cst_363 : f32 to vector<40x128xf32>
    %432 = arith.maximumf %430, %431 : vector<40x128xf32>
    %433 = vector.extract_strided_slice %432 {offsets = [0, 0], sizes = [16, 128], strides = [1, 1]} : vector<40x128xf32> to vector<16x128xf32>
    %c0_364 = arith.constant 0 : index
    %c0_365 = arith.constant 0 : index
    %c0_366 = arith.constant 0 : index
    %434 = vector.load %arg6[%c0_364, %c0_365, %c0_366] : memref<2x16x128xf32, #tpu.memory_space<vmem>>, vector<1x16x128xf32>
    %435 = vector.shape_cast %434 : vector<1x16x128xf32> to vector<16x128xf32>
    %436 = vector.shape_cast %433 : vector<16x128xf32> to vector<1x16x128xf32>
    tpu.vector_store %arg6[%c0_364, %c0_365, %c0_366], %436 {strides = array<i32>} : memref<2x16x128xf32, #tpu.memory_space<vmem>>, vector<1x16x128xf32>,
    %437 = vector.extract_strided_slice %432 {offsets = [24, 0], sizes = [16, 128], strides = [1, 1]} : vector<40x128xf32> to vector<16x128xf32>
    %c1_367 = arith.constant 1 : index
    %c0_368 = arith.constant 0 : index
    %c0_369 = arith.constant 0 : index
    %438 = vector.load %arg6[%c1_367, %c0_368, %c0_369] : memref<2x16x128xf32, #tpu.memory_space<vmem>>, vector<1x16x128xf32>
    %439 = vector.shape_cast %438 : vector<1x16x128xf32> to vector<16x128xf32>
    %440 = vector.shape_cast %437 : vector<16x128xf32> to vector<1x16x128xf32>
    tpu.vector_store %arg6[%c1_367, %c0_368, %c0_369], %440 {strides = array<i32>} : memref<2x16x128xf32, #tpu.memory_space<vmem>>, vector<1x16x128xf32>,
    return
  }
  func.func @transform_0(%arg0: i32) -> (i32, i32, i32) {
    %c0_i32 = arith.constant 0 : i32
    %c0_i32_0 = arith.constant 0 : i32
    %c0_i32_1 = arith.constant 0 : i32
    return %arg0, %c0_i32, %c0_i32_0 : i32, i32, i32
  }
  func.func @transform_1(%arg0: i32) -> (i32, i32, i32) {
    %c0_i32 = arith.constant 0 : i32
    %c0_i32_0 = arith.constant 0 : i32
    %c0_i32_1 = arith.constant 0 : i32
    %c0_i32_2 = arith.constant 0 : i32
    return %c0_i32, %c0_i32_0, %c0_i32_1 : i32, i32, i32
  }
  func.func @transform_2(%arg0: i32) -> (i32, i32, i32) {
    %c0_i32 = arith.constant 0 : i32
    %c0_i32_0 = arith.constant 0 : i32
    %c0_i32_1 = arith.constant 0 : i32
    %c0_i32_2 = arith.constant 0 : i32
    return %c0_i32, %c0_i32_0, %c0_i32_1 : i32, i32, i32
  }
  func.func @transform_3(%arg0: i32) -> (i32, i32) {
    %c0_i32 = arith.constant 0 : i32
    %c0_i32_0 = arith.constant 0 : i32
    %c0_i32_1 = arith.constant 0 : i32
    return %c0_i32, %c0_i32_0 : i32, i32
  }
  func.func @transform_4(%arg0: i32) -> (i32, i32) {
    %c0_i32 = arith.constant 0 : i32
    %c0_i32_0 = arith.constant 0 : i32
    %c0_i32_1 = arith.constant 0 : i32
    return %c0_i32, %c0_i32_0 : i32, i32
  }
  func.func @transform_5(%arg0: i32) -> (i32, i32, i32) {
    %c0_i32 = arith.constant 0 : i32
    %c0_i32_0 = arith.constant 0 : i32
    %c0_i32_1 = arith.constant 0 : i32
    return %arg0, %c0_i32, %c0_i32_0 : i32, i32, i32
  }
}

</mosaic_0001>

<llo_original>
// kernel: tpu_custom_call.1
$region0: #{tpu_custom_call.1}
  #allocation0 [shape = 'u32[]', space=smem, size = 0x4, offset = 0x4, fixed_abs, tag = 'smem constant byte address 0x4 - core index']
  #allocation1 [shape = 'u32[72,128]{1,0:T(1,128)}', space=vmem, size = 0x9000, scoped, tag = 'internal scratch']
  #allocation2 [shape = 'f32[48,64]{1,0:T(8,128)}', space=vmem, size = 0x6000, scoped, tag = 'scratch operand']
  #allocation3 [shape = 'f32[48,512]{1,0:T(8,128)}', space=vmem, size = 0x18000, scoped, tag = 'scratch operand']
  #allocation4 [shape = 'f32[48,128]{1,0:T(8,128)}', space=vmem, size = 0x6000, scoped, tag = 'scratch operand']
  #allocation5 [shape = 'f32[48,128]{1,0:T(8,128)}', space=vmem, size = 0x6000, scoped, tag = 'scratch operand']
  #allocation6 [shape = 'f32[40,128]{1,0:T(8,128)}', space=vmem, size = 0x5000, scoped, tag = 'scratch operand']
  %s0 = inlined_call_operand.hbm [shape: bf16[2,16,64], index: 0, kind: input, shape index: {}]
  %s1 = inlined_call_operand.hbm [shape: bf16[3,64,256], index: 1, kind: input, shape index: {}]
  %s2 = inlined_call_operand.hbm [shape: bf16[45,128,128], index: 2, kind: input, shape index: {}]
  %s3 = inlined_call_operand.hbm [shape: bf16[512,128], index: 3, kind: input, shape index: {}]
  %s4 = inlined_call_operand.hbm [shape: f32[18,128], index: 4, kind: input, shape index: {}]
  %s5 = inlined_call_operand.hbm [shape: f32[2,16,128], index: 5, kind: output, shape index: {}]
  %s6 = sld [smem:[#allocation0]]
  $region50: #{tpu_custom_call.1} parent=0
    _
  %s8 = ssub.s32 1, %s6
  %s9 = scalar_select 0, %s8, %s6
  $region1: #{tpu_custom_call.1} parent=0
    #allocation7 [shape = 'u8[8192]{0}', space=vmem, size = 0x2000, scoped, tag = 'input window, operand 0, single buffered']
    #allocation8 [shape = 's32[1]{0}', space=sflag, size = 0x4, scoped, tag = 'scoped memory for tpu_custom_call.1']
    #allocation9 [shape = 's32[1]{0}', space=sflag, size = 0x4, scoped, tag = 'scoped memory for tpu_custom_call.1']
    #allocation10 [shape = 'u8[98304]{0}', space=vmem, size = 0x18000, scoped, tag = 'input window, operand 1, single buffered']
    #allocation11 [shape = 's32[1]{0}', space=sflag, size = 0x4, scoped, tag = 'scoped memory for tpu_custom_call.1']
    #allocation12 [shape = 'u8[1474560]{0}', space=vmem, size = 0x168000, scoped, tag = 'input window, operand 2, single buffered']
    #allocation13 [shape = 'u8[131072]{0}', space=vmem, size = 0x20000, scoped, tag = 'input window, operand 3, single buffered']
    #allocation14 [shape = 's32[1]{0}', space=sflag, size = 0x4, scoped, tag = 'scoped memory for tpu_custom_call.1']
    #allocation15 [shape = 'u8[12288]{0}', space=vmem, size = 0x3000, scoped, tag = 'input window, operand 4, single buffered']
    #allocation16 [shape = 'u8[16384]{0}', space=vmem, size = 0x4000, scoped, tag = 'output window, operand 0, single buffered']
    %10 = vsyncpa [#allocation8], 0
    %11 = vsyncpa [#allocation11], 0
    %12 = vsyncpa [#allocation14], 0
    %13 = vsyncpa [#allocation9], 0
    // Predicated region
    $region2: #{tpu_custom_call.1} parent=1 // pred_check
      _
    $region3: #{tpu_custom_call.1} parent=1 // pred_check_branch
      %15 = sbr.rel (0) target = $region5
    $region4: #{tpu_custom_call.1} parent=1 // pred_region
      %17 = vsyncadd [#allocation8], 0
      %s18 = sshll.u32 %s0, 4
      %s19 = int_to_ptr.hbm [resolvable:$true] %s18
      %s20 = sshll.u32 [#allocation7], 4
      %s21 = int_to_ptr.vmem [resolvable:$true] %s20
      %26 = dma.hbm_to_vmem [thread:$0]  %s19, 256, %s21, [#allocation8], 64, 64, 4
    $region5: #{tpu_custom_call.1} parent=1 // pred_fallthru
      _
    // Predicated region
    $region6: #{tpu_custom_call.1} parent=1 // pred_check
      _
    $region7: #{tpu_custom_call.1} parent=1 // pred_check_branch
      %28 = sbr.rel (0) target = $region9
    $region8: #{tpu_custom_call.1} parent=1 // pred_region
      %30 = vsyncadd [#allocation11], 0
      %s31 = sshll.u32 %s1, 4
      %s32 = int_to_ptr.hbm [resolvable:$true] %s31
      %s33 = sshll.u32 [#allocation10], 4
      %s34 = int_to_ptr.vmem [resolvable:$true] %s33
      %39 = dma.hbm_to_vmem [thread:$0]  %s32, 3072, %s34, [#allocation11], 128, 128, 8
    $region9: #{tpu_custom_call.1} parent=1 // pred_fallthru
      _
    // Predicated region
    $region10: #{tpu_custom_call.1} parent=1 // pred_check
      _
    $region11: #{tpu_custom_call.1} parent=1 // pred_check_branch
      %41 = sbr.rel (0) target = $region13
    $region12: #{tpu_custom_call.1} parent=1 // pred_region
      %43 = vsyncadd [#allocation11], 0
      %s44 = sshll.u32 %s2, 4
      %s45 = int_to_ptr.hbm [resolvable:$true] %s44
      %s46 = sshll.u32 [#allocation12], 4
      %s47 = int_to_ptr.vmem [resolvable:$true] %s46
      %52 = dma.hbm_to_vmem [thread:$0]  %s45, 46080, %s47, [#allocation11], 64, 64, 4
    $region13: #{tpu_custom_call.1} parent=1 // pred_fallthru
      _
    // Predicated region
    $region14: #{tpu_custom_call.1} parent=1 // pred_check
      _
    $region15: #{tpu_custom_call.1} parent=1 // pred_check_branch
      %54 = sbr.rel (0) target = $region17
    $region16: #{tpu_custom_call.1} parent=1 // pred_region
      %56 = vsyncadd [#allocation14], 0
      %s57 = sshll.u32 %s3, 4
      %s58 = int_to_ptr.hbm [resolvable:$true] %s57
      %s59 = sshll.u32 [#allocation13], 4
      %s60 = int_to_ptr.vmem [resolvable:$true] %s59
      %65 = dma.hbm_to_vmem [thread:$0]  %s58, 4096, %s60, [#allocation14], 64, 64, 4
    $region17: #{tpu_custom_call.1} parent=1 // pred_fallthru
      _
    // Predicated region
    $region18: #{tpu_custom_call.1} parent=1 // pred_check
      _
    $region19: #{tpu_custom_call.1} parent=1 // pred_check_branch
      %67 = sbr.rel (0) target = $region21
    $region20: #{tpu_custom_call.1} parent=1 // pred_region
      %69 = vsyncadd [#allocation14], 0
      %s70 = sshll.u32 %s4, 4
      %s71 = int_to_ptr.hbm [resolvable:$true] %s70
      %s72 = sshll.u32 [#allocation15], 4
      %s73 = int_to_ptr.vmem [resolvable:$true] %s72
      %78 = dma.hbm_to_vmem [thread:$0]  %s71, 384, %s73, [#allocation14], 128, 128, 8
    $region21: #{tpu_custom_call.1} parent=1 // pred_fallthru
      _
    // Predicated region
    $region22: #{tpu_custom_call.1} parent=1 // pred_check
      _
    $region23: #{tpu_custom_call.1} parent=1 // pred_check_branch
      %80 = sbr.rel (0) target = $region25
    $region24: #{tpu_custom_call.1} parent=1 // pred_region
      %82 = dma.done [#allocation8], 256
    $region25: #{tpu_custom_call.1} parent=1 // pred_fallthru
      _
    // Predicated region
    $region26: #{tpu_custom_call.1} parent=1 // pred_check
      _
    $region27: #{tpu_custom_call.1} parent=1 // pred_check_branch
      %84 = sbr.rel (0) target = $region29
    $region28: #{tpu_custom_call.1} parent=1 // pred_region
      %86 = dma.done [#allocation11], 3072
    $region29: #{tpu_custom_call.1} parent=1 // pred_fallthru
      _
    // Predicated region
    $region30: #{tpu_custom_call.1} parent=1 // pred_check
      _
    $region31: #{tpu_custom_call.1} parent=1 // pred_check_branch
      %88 = sbr.rel (0) target = $region33
    $region32: #{tpu_custom_call.1} parent=1 // pred_region
      %90 = dma.done [#allocation11], 46080
    $region33: #{tpu_custom_call.1} parent=1 // pred_fallthru
      _
    // Predicated region
    $region34: #{tpu_custom_call.1} parent=1 // pred_check
      _
    $region35: #{tpu_custom_call.1} parent=1 // pred_check_branch
      %92 = sbr.rel (0) target = $region37
    $region36: #{tpu_custom_call.1} parent=1 // pred_region
      %94 = dma.done [#allocation14], 4096
    $region37: #{tpu_custom_call.1} parent=1 // pred_fallthru
      _
    // Predicated region
    $region38: #{tpu_custom_call.1} parent=1 // pred_check
      _
    $region39: #{tpu_custom_call.1} parent=1 // pred_check_branch
      %96 = sbr.rel (0) target = $region41
    $region40: #{tpu_custom_call.1} parent=1 // pred_region
      %98 = dma.done [#allocation14], 384
    $region41: #{tpu_custom_call.1} parent=1 // pred_fallthru
      _
    %100 = vst [vmem:[#allocation5] sm:$0xf] 0.0
    %101 = vst [vmem:[#allocation5 + $0x2c] sm:$0xf] 0.0
    %102 = vst [vmem:[#allocation5 + $0x14] sm:$0xff] 0.0
    %vm103 = vcmask 519168
    %104 = vst.msk [vmem:[#allocation2] sm:$0xf] %vm103, 0.0
    %105 = vst.msk [vmem:[#allocation2 + $0x2c] sm:$0xf] %vm103, 0.0
    %vm106 = vcmask 523264
    %107 = vst.msk [vmem:[#allocation2 + $0x14] sm:$0xff] %vm106, 0.0
    %v108 = vld [vmem:[#allocation7] sm:$0xf]
    %v109 = vld [vmem:[#allocation7 + $0x4] sm:$0xf]
    %v110 = vunpack.c.l.bf16 %v108
    %v111 = vunpack.c.l.bf16 %v109
    %112 = vst.msk [vmem:[#allocation2 + $0x4] sm:$0xff] %vm106, %v110
    %113 = vst.msk [vmem:[#allocation2 + $0xc] sm:$0xff] %vm106, %v111
    %s114 = scalar_lea.vmem [#allocation7], 8
    %v115 = vld [vmem:[%s114] sm:$0xf]
    %v116 = vld [vmem:[%s114 + $0x4] sm:$0xf]
    %v117 = vunpack.c.l.bf16 %v115
    %v118 = vunpack.c.l.bf16 %v116
    %119 = vst.msk [vmem:[#allocation2 + $0x1c] sm:$0xff] %vm106, %v117
    %120 = vst.msk [vmem:[#allocation2 + $0x24] sm:$0xff] %vm106, %v118
    %v121 = vlaneseq
    %v122 = vshrl.u32 %v121, 7
    %v123 = vadd.s32 %v122, 8
    %v124 = vadd.s32 %v122, 16
    %v125 = vadd.s32 %v122, 24
    %v126 = vadd.s32 %v122, 32
    %v127 = vadd.s32 %v122, 4
    %v128 = vadd.s32 %v123, 4
    %v129 = vadd.s32 %v124, 4
    %v130 = vadd.s32 %v125, 4
    %v131 = vadd.s32 %v126, 4
    %vm132 = vcmp.ge.s32.totalorder %v127, 4
    %vm133 = vcmp.ge.s32.totalorder %v128, 4
    %vm134 = vcmp.ge.s32.totalorder %v129, 4
    %vm135 = vcmp.ge.s32.totalorder %v130, 4
    %vm136 = vcmp.ge.s32.totalorder %v131, 4
    %vm137 = vcmp.lt.s32.totalorder %v127, 20
    %vm138 = vcmp.lt.s32.totalorder %v128, 20
    %vm139 = vcmp.lt.s32.totalorder %v129, 20
    %vm140 = vcmp.lt.s32.totalorder %v130, 20
    %vm141 = vcmp.lt.s32.totalorder %v131, 20
    %vm142 = vmand %vm132, %vm137
    %vm143 = vmand %vm133, %vm138
    %vm144 = vmand %vm134, %vm139
    %vm145 = vmand %vm135, %vm140
    %vm146 = vmand %vm136, %vm141
    %vm147 = vcmp.ge.s32.totalorder %v127, 28
    %vm148 = vcmp.ge.s32.totalorder %v128, 28
    %vm149 = vcmp.ge.s32.totalorder %v129, 28
    %vm150 = vcmp.ge.s32.totalorder %v130, 28
    %vm151 = vcmp.ge.s32.totalorder %v131, 28
    %vm152 = vcmp.lt.s32.totalorder %v127, 44
    %vm153 = vcmp.lt.s32.totalorder %v128, 44
    %vm154 = vcmp.lt.s32.totalorder %v129, 44
    %vm155 = vcmp.lt.s32.totalorder %v130, 44
    %vm156 = vcmp.lt.s32.totalorder %v131, 44
    %vm157 = vmand %vm147, %vm152
    %vm158 = vmand %vm148, %vm153
    %vm159 = vmand %vm149, %vm154
    %vm160 = vmand %vm150, %vm155
    %vm161 = vmand %vm151, %vm156
    %vm162 = vmor %vm142, %vm157
    %vm163 = vmor %vm143, %vm158
    %vm164 = vmor %vm144, %vm159
    %vm165 = vmor %vm145, %vm160
    %vm166 = vmor %vm146, %vm161
    %v167 = vsel %vm162, 1, 0
    %v168 = vsel %vm163, 1, 0
    %v169 = vsel %vm164, 1, 0
    %v170 = vsel %vm165, 1, 0
    %v171 = vsel %vm166, 1, 0
    %v172 = vcvt.s32.f32 %v167
    %v173 = vcvt.s32.f32 %v168
    %v174 = vcvt.s32.f32 %v169
    %v175 = vcvt.s32.f32 %v170
    %v176 = vcvt.s32.f32 %v171
    %v177 = vld [vmem:[#allocation2 + $0x3] sm:$0xff]
    %v178 = vld [vmem:[#allocation2 + $0xb] sm:$0xff]
    %v179 = vld [vmem:[#allocation2 + $0x13] sm:$0xff]
    %v180 = vld [vmem:[#allocation2 + $0x1b] sm:$0xff]
    %v181 = vld [vmem:[#allocation2 + $0x23] sm:$0xff]
    %v182 = vpack.c.bf16 %v178, %v177
    %v183 = vpack.c.bf16 %v180, %v179
    %v184 = vpack.c.bf16 %v181, %v181
    %v185 = vld [vmem:[#allocation10] sm:$0xff]
    %v186 = vld [vmem:[#allocation10 + $0x8] sm:$0xff]
    %v187 = vld [vmem:[#allocation10 + $0x10] sm:$0xff]
    %v188 = vld [vmem:[#allocation10 + $0x18] sm:$0xff]
    %v189 = vld [vmem:[#allocation10 + $0x20] sm:$0xff]
    %v190 = vld [vmem:[#allocation10 + $0x28] sm:$0xff]
    %v191 = vld [vmem:[#allocation10 + $0x30] sm:$0xff]
    %v192 = vld [vmem:[#allocation10 + $0x38] sm:$0xff]
    %v193 = vld [vmem:[#allocation2 + $0x4] sm:$0xff]
    %v194 = vld [vmem:[#allocation2 + $0xc] sm:$0xff]
    %v195 = vld [vmem:[#allocation2 + $0x14] sm:$0xff]
    %v196 = vld [vmem:[#allocation2 + $0x1c] sm:$0xff]
    %v197 = vld [vmem:[#allocation2 + $0x24] sm:$0xff]
    %v198 = vpack.c.bf16 %v194, %v193
    %v199 = vpack.c.bf16 %v196, %v195
    %v200 = vpack.c.bf16 %v197, %v197
    %s201 = scalar_lea.vmem [#allocation10], 64
    %v202 = vld [vmem:[%s201] sm:$0xff]
    %v203 = vld [vmem:[%s201 + $0x8] sm:$0xff]
    %v204 = vld [vmem:[%s201 + $0x10] sm:$0xff]
    %v205 = vld [vmem:[%s201 + $0x18] sm:$0xff]
    %v206 = vld [vmem:[%s201 + $0x20] sm:$0xff]
    %v207 = vld [vmem:[%s201 + $0x28] sm:$0xff]
    %v208 = vld [vmem:[%s201 + $0x30] sm:$0xff]
    %v209 = vld [vmem:[%s201 + $0x38] sm:$0xff]
    %v218 = vunpack.c.l.b16 %v202
    %v219 = vunpack.c.h.b16 %v202
    %v220 = vunpack.c.l.b16 %v203
    %v221 = vunpack.c.h.b16 %v203
    %v222 = vunpack.c.l.b16 %v204
    %v223 = vunpack.c.h.b16 %v204
    %v224 = vunpack.c.l.b16 %v205
    %v225 = vunpack.c.h.b16 %v205
    %v226 = vunpack.c.l.b16 %v206
    %v227 = vunpack.c.h.b16 %v206
    %v228 = vunpack.c.l.b16 %v207
    %v229 = vunpack.c.h.b16 %v207
    %v230 = vunpack.c.l.b16 %v208
    %v231 = vunpack.c.h.b16 %v208
    %v232 = vunpack.c.l.b16 %v209
    %v233 = vunpack.c.h.b16 %v209
    %v234 = vpack.c.b16 %v220, %v218
    %v235 = vpack.c.b16 %v221, %v219
    %v236 = vpack.c.b16 %v224, %v222
    %v237 = vpack.c.b16 %v225, %v223
    %v238 = vpack.c.b16 %v228, %v226
    %v239 = vpack.c.b16 %v229, %v227
    %v240 = vpack.c.b16 %v232, %v230
    %v241 = vpack.c.b16 %v233, %v231
    %v251 = vsel %vm106, %v198, 0
    %v254 = vsel %vm106, %v199, 0
    %v257 = vsel %vm106, %v200, 0
    %259 = vmatpush.bf16.msra.mxu0 0
    %260 = vmatpush.bf16.msra.mxu0 0
    %261 = vmatpush.bf16.msra.mxu0 0
    %262 = vmatpush.bf16.msra.mxu0 0
    %263 = vmatpush.bf16.msra.mxu0 %v240
    %264 = vmatpush.bf16.msra.mxu0 %v238
    %265 = vmatpush.bf16.msra.mxu0 %v236
    %266 = vmatpush.bf16.msra.mxu0 %v234
    %267 = vmatmul.bf16.gmra.mxu0 %v251
    %v268 = vpop.f32.mrf.mxu0
    %v269 = vadd.f32 0.0, %v268
    %v270 = vpop.f32.mrf.mxu0
    %v271 = vadd.f32 0.0, %v270
    %272 = vmatmul.bf16.gmra.mxu0 %v254
    %v273 = vpop.f32.mrf.mxu0
    %v274 = vadd.f32 0.0, %v273
    %v275 = vpop.f32.mrf.mxu0
    %v276 = vadd.f32 0.0, %v275
    %277 = vmatmul.bf16.gmra.mxu0 %v257
    %v278 = vpop.f32.mrf.mxu0
    %v279 = vadd.f32 0.0, %v278
    %v280 = vpop.f32.mrf.mxu0
    %281 = vdwg.mxu0
    %282 = vmatpush.bf16.msra.mxu0 0
    %283 = vmatpush.bf16.msra.mxu0 0
    %284 = vmatpush.bf16.msra.mxu0 0
    %285 = vmatpush.bf16.msra.mxu0 0
    %286 = vmatpush.bf16.msra.mxu0 %v241
    %287 = vmatpush.bf16.msra.mxu0 %v239
    %288 = vmatpush.bf16.msra.mxu0 %v237
    %289 = vmatpush.bf16.msra.mxu0 %v235
    %290 = vmatmul.bf16.gmra.mxu0 %v251
    %v291 = vpop.f32.mrf.mxu0
    %v292 = vadd.f32 0.0, %v291
    %v293 = vpop.f32.mrf.mxu0
    %v294 = vadd.f32 0.0, %v293
    %295 = vmatmul.bf16.gmra.mxu0 %v254
    %v296 = vpop.f32.mrf.mxu0
    %v297 = vadd.f32 0.0, %v296
    %v298 = vpop.f32.mrf.mxu0
    %v299 = vadd.f32 0.0, %v298
    %300 = vmatmul.bf16.gmra.mxu0 %v257
    %v301 = vpop.f32.mrf.mxu0
    %v302 = vadd.f32 0.0, %v301
    %v303 = vpop.f32.mrf.mxu0
    %304 = vdwg.mxu0
    %v313 = vunpack.c.l.b16 %v185
    %v314 = vunpack.c.h.b16 %v185
    %v315 = vunpack.c.l.b16 %v186
    %v316 = vunpack.c.h.b16 %v186
    %v317 = vunpack.c.l.b16 %v187
    %v318 = vunpack.c.h.b16 %v187
    %v319 = vunpack.c.l.b16 %v188
    %v320 = vunpack.c.h.b16 %v188
    %v321 = vunpack.c.l.b16 %v189
    %v322 = vunpack.c.h.b16 %v189
    %v323 = vunpack.c.l.b16 %v190
    %v324 = vunpack.c.h.b16 %v190
    %v325 = vunpack.c.l.b16 %v191
    %v326 = vunpack.c.h.b16 %v191
    %v327 = vunpack.c.l.b16 %v192
    %v328 = vunpack.c.h.b16 %v192
    %v329 = vpack.c.b16 %v315, %v313
    %v330 = vpack.c.b16 %v316, %v314
    %v331 = vpack.c.b16 %v319, %v317
    %v332 = vpack.c.b16 %v320, %v318
    %v333 = vpack.c.b16 %v323, %v321
    %v334 = vpack.c.b16 %v324, %v322
    %v335 = vpack.c.b16 %v327, %v325
    %v336 = vpack.c.b16 %v328, %v326
    %v346 = vsel %vm106, %v182, 0
    %v349 = vsel %vm106, %v183, 0
    %v352 = vsel %vm106, %v184, 0
    %354 = vmatpush.bf16.msra.mxu0 0
    %355 = vmatpush.bf16.msra.mxu0 0
    %356 = vmatpush.bf16.msra.mxu0 0
    %357 = vmatpush.bf16.msra.mxu0 0
    %358 = vmatpush.bf16.msra.mxu0 %v335
    %359 = vmatpush.bf16.msra.mxu0 %v333
    %360 = vmatpush.bf16.msra.mxu0 %v331
    %361 = vmatpush.bf16.msra.mxu0 %v329
    %362 = vmatmul.bf16.gmra.mxu0 %v346
    %v363 = vpop.f32.mrf.mxu0
    %v364 = vadd.f32 %v269, %v363
    %v365 = vpop.f32.mrf.mxu0
    %v366 = vadd.f32 %v271, %v365
    %367 = vmatmul.bf16.gmra.mxu0 %v349
    %v368 = vpop.f32.mrf.mxu0
    %v369 = vadd.f32 %v274, %v368
    %v370 = vpop.f32.mrf.mxu0
    %v371 = vadd.f32 %v276, %v370
    %372 = vmatmul.bf16.gmra.mxu0 %v352
    %v373 = vpop.f32.mrf.mxu0
    %v374 = vadd.f32 %v279, %v373
    %v375 = vpop.f32.mrf.mxu0
    %376 = vdwg.mxu0
    %377 = vmatpush.bf16.msra.mxu0 0
    %378 = vmatpush.bf16.msra.mxu0 0
    %379 = vmatpush.bf16.msra.mxu0 0
    %380 = vmatpush.bf16.msra.mxu0 0
    %381 = vmatpush.bf16.msra.mxu0 %v336
    %382 = vmatpush.bf16.msra.mxu0 %v334
    %383 = vmatpush.bf16.msra.mxu0 %v332
    %384 = vmatpush.bf16.msra.mxu0 %v330
    %385 = vmatmul.bf16.gmra.mxu0 %v346
    %v386 = vpop.f32.mrf.mxu0
    %v387 = vadd.f32 %v292, %v386
    %v388 = vpop.f32.mrf.mxu0
    %v389 = vadd.f32 %v294, %v388
    %390 = vmatmul.bf16.gmra.mxu0 %v349
    %v391 = vpop.f32.mrf.mxu0
    %v392 = vadd.f32 %v297, %v391
    %v393 = vpop.f32.mrf.mxu0
    %v394 = vadd.f32 %v299, %v393
    %395 = vmatmul.bf16.gmra.mxu0 %v352
    %v396 = vpop.f32.mrf.mxu0
    %v397 = vadd.f32 %v302, %v396
    %v398 = vpop.f32.mrf.mxu0
    %399 = vdwg.mxu0
    %v400 = vld [vmem:[#allocation2 + $0x5] sm:$0xff]
    %v401 = vld [vmem:[#allocation2 + $0xd] sm:$0xff]
    %v402 = vld [vmem:[#allocation2 + $0x15] sm:$0xff]
    %v403 = vld [vmem:[#allocation2 + $0x1d] sm:$0xff]
    %v404 = vld [vmem:[#allocation2 + $0x25] sm:$0xff]
    %v405 = vpack.c.bf16 %v401, %v400
    %v406 = vpack.c.bf16 %v403, %v402
    %v407 = vpack.c.bf16 %v404, %v404
    %s408 = scalar_lea.vmem [#allocation10], 128
    %v409 = vld [vmem:[%s408] sm:$0xff]
    %v410 = vld [vmem:[%s408 + $0x8] sm:$0xff]
    %v411 = vld [vmem:[%s408 + $0x10] sm:$0xff]
    %v412 = vld [vmem:[%s408 + $0x18] sm:$0xff]
    %v413 = vld [vmem:[%s408 + $0x20] sm:$0xff]
    %v414 = vld [vmem:[%s408 + $0x28] sm:$0xff]
    %v415 = vld [vmem:[%s408 + $0x30] sm:$0xff]
    %v416 = vld [vmem:[%s408 + $0x38] sm:$0xff]
    %v425 = vunpack.c.l.b16 %v409
    %v426 = vunpack.c.h.b16 %v409
    %v427 = vunpack.c.l.b16 %v410
    %v428 = vunpack.c.h.b16 %v410
    %v429 = vunpack.c.l.b16 %v411
    %v430 = vunpack.c.h.b16 %v411
    %v431 = vunpack.c.l.b16 %v412
    %v432 = vunpack.c.h.b16 %v412
    %v433 = vunpack.c.l.b16 %v413
    %v434 = vunpack.c.h.b16 %v413
    %v435 = vunpack.c.l.b16 %v414
    %v436 = vunpack.c.h.b16 %v414
    %v437 = vunpack.c.l.b16 %v415
    %v438 = vunpack.c.h.b16 %v415
    %v439 = vunpack.c.l.b16 %v416
    %v440 = vunpack.c.h.b16 %v416
    %v441 = vpack.c.b16 %v427, %v425
    %v442 = vpack.c.b16 %v428, %v426
    %v443 = vpack.c.b16 %v431, %v429
    %v444 = vpack.c.b16 %v432, %v430
    %v445 = vpack.c.b16 %v435, %v433
    %v446 = vpack.c.b16 %v436, %v434
    %v447 = vpack.c.b16 %v439, %v437
    %v448 = vpack.c.b16 %v440, %v438
    %v458 = vsel %vm106, %v405, 0
    %v461 = vsel %vm106, %v406, 0
    %v464 = vsel %vm106, %v407, 0
    %466 = vmatpush.bf16.msra.mxu0 0
    %467 = vmatpush.bf16.msra.mxu0 0
    %468 = vmatpush.bf16.msra.mxu0 0
    %469 = vmatpush.bf16.msra.mxu0 0
    %470 = vmatpush.bf16.msra.mxu0 %v447
    %471 = vmatpush.bf16.msra.mxu0 %v445
    %472 = vmatpush.bf16.msra.mxu0 %v443
    %473 = vmatpush.bf16.msra.mxu0 %v441
    %474 = vmatmul.bf16.gmra.mxu0 %v458
    %v475 = vpop.f32.mrf.mxu0
    %v476 = vadd.f32 0.0, %v475
    %v477 = vpop.f32.mrf.mxu0
    %v478 = vadd.f32 0.0, %v477
    %479 = vmatmul.bf16.gmra.mxu0 %v461
    %v480 = vpop.f32.mrf.mxu0
    %v481 = vadd.f32 0.0, %v480
    %v482 = vpop.f32.mrf.mxu0
    %v483 = vadd.f32 0.0, %v482
    %484 = vmatmul.bf16.gmra.mxu0 %v464
    %v485 = vpop.f32.mrf.mxu0
    %v486 = vadd.f32 0.0, %v485
    %v487 = vpop.f32.mrf.mxu0
    %488 = vdwg.mxu0
    %489 = vmatpush.bf16.msra.mxu0 0
    %490 = vmatpush.bf16.msra.mxu0 0
    %491 = vmatpush.bf16.msra.mxu0 0
    %492 = vmatpush.bf16.msra.mxu0 0
    %493 = vmatpush.bf16.msra.mxu0 %v448
    %494 = vmatpush.bf16.msra.mxu0 %v446
    %495 = vmatpush.bf16.msra.mxu0 %v444
    %496 = vmatpush.bf16.msra.mxu0 %v442
    %497 = vmatmul.bf16.gmra.mxu0 %v458
    %v498 = vpop.f32.mrf.mxu0
    %v499 = vadd.f32 0.0, %v498
    %v500 = vpop.f32.mrf.mxu0
    %v501 = vadd.f32 0.0, %v500
    %502 = vmatmul.bf16.gmra.mxu0 %v461
    %v503 = vpop.f32.mrf.mxu0
    %v504 = vadd.f32 0.0, %v503
    %v505 = vpop.f32.mrf.mxu0
    %v506 = vadd.f32 0.0, %v505
    %507 = vmatmul.bf16.gmra.mxu0 %v464
    %v508 = vpop.f32.mrf.mxu0
    %v509 = vadd.f32 0.0, %v508
    %v510 = vpop.f32.mrf.mxu0
    %511 = vdwg.mxu0
    %v512 = vadd.f32 %v364, %v476
    %v513 = vadd.f32 %v387, %v499
    %v514 = vadd.f32 %v366, %v478
    %v515 = vadd.f32 %v389, %v501
    %v516 = vadd.f32 %v369, %v481
    %v517 = vadd.f32 %v392, %v504
    %v518 = vadd.f32 %v371, %v483
    %v519 = vadd.f32 %v394, %v506
    %v520 = vadd.f32 %v374, %v486
    %v521 = vadd.f32 %v397, %v509
    %v522 = vld [vmem:[#allocation15] sm:$0x1]
    %v523 = vperm.slane %v522, 0
    %v524 = vadd.f32 %v512, %v523
    %v525 = vadd.f32 %v514, %v523
    %v526 = vadd.f32 %v516, %v523
    %v527 = vadd.f32 %v518, %v523
    %v528 = vadd.f32 %v520, %v523
    %v529 = vmax.f32 %v524, 0.0
    %v530 = vmax.f32 %v525, 0.0
    %v531 = vmax.f32 %v526, 0.0
    %v532 = vmax.f32 %v527, 0.0
    %v533 = vmax.f32 %v528, 0.0
    %vm539 = vcmask 1043456
    %v540 = vrot.slane %v529, 4
    %v541 = vrot.slane %v530, 4
    %v542 = vsel %vm539, %v540, %v541
    %v543 = vrot.slane %v531, 4
    %v544 = vsel %vm539, %v541, %v543
    %v545 = vrot.slane %v532, 4
    %v546 = vsel %vm539, %v543, %v545
    %v547 = vrot.slane %v533, 4
    %v548 = vsel %vm539, %v545, %v547
    %555 = vst [vmem:[#allocation3] sm:$0xf0] %v540
    %556 = vst [vmem:[#allocation3 + $0x20] sm:$0xff] %v542
    %557 = vst [vmem:[#allocation3 + $0x40] sm:$0xff] %v544
    %558 = vst [vmem:[#allocation3 + $0x60] sm:$0xff] %v546
    %559 = vst [vmem:[#allocation3 + $0x80] sm:$0xff] %v548
    %560 = vst [vmem:[#allocation3 + $0xa0] sm:$0xf] %v547
    %v561 = vld [vmem:[#allocation15 + $0x1] sm:$0x1]
    %v562 = vperm.slane %v561, 0
    %v563 = vadd.f32 %v513, %v562
    %v564 = vadd.f32 %v515, %v562
    %v565 = vadd.f32 %v517, %v562
    %v566 = vadd.f32 %v519, %v562
    %v567 = vadd.f32 %v521, %v562
    %v568 = vmax.f32 %v563, 0.0
    %v569 = vmax.f32 %v564, 0.0
    %v570 = vmax.f32 %v565, 0.0
    %v571 = vmax.f32 %v566, 0.0
    %v572 = vmax.f32 %v567, 0.0
    %573 = vst [vmem:[#allocation6] sm:$0xff] %v568
    %574 = vst [vmem:[#allocation6 + $0x8] sm:$0xff] %v569
    %575 = vst [vmem:[#allocation6 + $0x10] sm:$0xff] %v570
    %576 = vst [vmem:[#allocation6 + $0x18] sm:$0xff] %v571
    %577 = vst [vmem:[#allocation6 + $0x20] sm:$0xff] %v572
    %v578 = vld [vmem:[#allocation3] sm:$0xf0]
    %v579 = vld [vmem:[#allocation3 + $0x20] sm:$0xff]
    %v580 = vld [vmem:[#allocation3 + $0x40] sm:$0xff]
    %v581 = vld [vmem:[#allocation3 + $0x60] sm:$0xff]
    %v582 = vld [vmem:[#allocation3 + $0x80] sm:$0xff]
    %v583 = vld [vmem:[#allocation3 + $0xa0] sm:$0xf]
    %v584 = vpack.c.bf16 %v579, %v578
    %v585 = vpack.c.bf16 %v581, %v580
    %v586 = vpack.c.bf16 %v583, %v582
    %v587 = vld [vmem:[#allocation12] sm:$0xf]
    %v588 = vld [vmem:[#allocation12 + $0x4] sm:$0xf]
    %v589 = vld [vmem:[#allocation12 + $0x8] sm:$0xf]
    %v590 = vld [vmem:[#allocation12 + $0xc] sm:$0xf]
    %v591 = vld [vmem:[#allocation12 + $0x10] sm:$0xf]
    %v592 = vld [vmem:[#allocation12 + $0x14] sm:$0xf]
    %v593 = vld [vmem:[#allocation12 + $0x18] sm:$0xf]
    %v594 = vld [vmem:[#allocation12 + $0x1c] sm:$0xf]
    %v595 = vld [vmem:[#allocation12 + $0x20] sm:$0xf]
    %v596 = vld [vmem:[#allocation12 + $0x24] sm:$0xf]
    %v597 = vld [vmem:[#allocation12 + $0x28] sm:$0xf]
    %v598 = vld [vmem:[#allocation12 + $0x2c] sm:$0xf]
    %v599 = vld [vmem:[#allocation12 + $0x30] sm:$0xf]
    %v600 = vld [vmem:[#allocation12 + $0x34] sm:$0xf]
    %v601 = vld [vmem:[#allocation12 + $0x38] sm:$0xf]
    %v602 = vld [vmem:[#allocation12 + $0x3c] sm:$0xf]
    %v603 = vld [vmem:[#allocation15 + $0x2] sm:$0x1]
    %v604 = vperm.slane %v603, 0
    %vm608 = vcmask 1045504
    %v609 = vrot.slane %v584, 2
    %v610 = vrot.slane %v585, 2
    %v611 = vsel %vm608, %v609, %v610
    %v612 = vrot.slane %v586, 2
    %v613 = vsel %vm608, %v610, %v612
    %v633 = vunpack.c.l.b16 %v587
    %v634 = vunpack.c.l.b16 %v588
    %v635 = vunpack.c.l.b16 %v589
    %v636 = vunpack.c.l.b16 %v590
    %v637 = vunpack.c.l.b16 %v591
    %v638 = vunpack.c.l.b16 %v592
    %v639 = vunpack.c.l.b16 %v593
    %v640 = vunpack.c.l.b16 %v594
    %v641 = vunpack.c.l.b16 %v595
    %v642 = vunpack.c.l.b16 %v596
    %v643 = vunpack.c.l.b16 %v597
    %v644 = vunpack.c.l.b16 %v598
    %v645 = vunpack.c.l.b16 %v599
    %v646 = vunpack.c.l.b16 %v600
    %v647 = vunpack.c.l.b16 %v601
    %v648 = vunpack.c.l.b16 %v602
    %v649 = vpack.c.b16 %v634, %v633
    %v650 = vpack.c.b16 %v636, %v635
    %v651 = vpack.c.b16 %v638, %v637
    %v652 = vpack.c.b16 %v640, %v639
    %v653 = vpack.c.b16 %v642, %v641
    %v654 = vpack.c.b16 %v644, %v643
    %v655 = vpack.c.b16 %v646, %v645
    %v656 = vpack.c.b16 %v648, %v647
    %665 = vmatpush.bf16.msra.mxu0 %v656
    %666 = vmatpush.bf16.msra.mxu0 %v655
    %667 = vmatpush.bf16.msra.mxu0 %v654
    %668 = vmatpush.bf16.msra.mxu0 %v653
    %669 = vmatpush.bf16.msra.mxu0 %v652
    %670 = vmatpush.bf16.msra.mxu0 %v651
    %671 = vmatpush.bf16.msra.mxu0 %v650
    %672 = vmatpush.bf16.msra.mxu0 %v649
    %673 = vmatmul.bf16.gmra.mxu0 %v611
    %v674 = vpop.f32.mrf.mxu0
    %v675 = vadd.f32 %v604, %v674
    %v676 = vpop.f32.mrf.mxu0
    %v677 = vadd.f32 %v604, %v676
    %678 = vmatmul.bf16.gmra.mxu0 %v613
    %v679 = vpop.f32.mrf.mxu0
    %v680 = vadd.f32 %v604, %v679
    %v681 = vpop.f32.mrf.mxu0
    %v682 = vadd.f32 %v604, %v681
    %683 = vmatmul.bf16.gmra.mxu0 %v612
    %v684 = vpop.f32.mrf.mxu0
    %v685 = vadd.f32 %v604, %v684
    %v686 = vpop.f32.mrf.mxu0
    %687 = vdwg.mxu0
    %v688 = vmax.f32 %v675, 0.0
    %v689 = vmax.f32 %v677, 0.0
    %v690 = vmax.f32 %v680, 0.0
    %v691 = vmax.f32 %v682, 0.0
    %v692 = vmax.f32 %v685, 0.0
    %693 = vst [vmem:[#allocation4 + $0x4] sm:$0xff] %v688
    %694 = vst [vmem:[#allocation4 + $0xc] sm:$0xff] %v689
    %695 = vst [vmem:[#allocation4 + $0x14] sm:$0xff] %v690
    %696 = vst [vmem:[#allocation4 + $0x1c] sm:$0xff] %v691
    %697 = vst [vmem:[#allocation4 + $0x24] sm:$0xff] %v692
    %v698 = vld [vmem:[#allocation4 + $0x4] sm:$0xff]
    %v699 = vld [vmem:[#allocation4 + $0xc] sm:$0xff]
    %v700 = vld [vmem:[#allocation4 + $0x14] sm:$0xff]
    %v701 = vld [vmem:[#allocation4 + $0x1c] sm:$0xff]
    %v702 = vld [vmem:[#allocation4 + $0x24] sm:$0xff]
    %v703 = vpack.c.bf16 %v699, %v698
    %v704 = vpack.c.bf16 %v701, %v700
    %v705 = vpack.c.bf16 %v702, %v702
    %s706 = scalar_lea.vmem [#allocation12], 64
    %v707 = vld [vmem:[%s706] sm:$0xf]
    %v708 = vld [vmem:[%s706 + $0x4] sm:$0xf]
    %v709 = vld [vmem:[%s706 + $0x8] sm:$0xf]
    %v710 = vld [vmem:[%s706 + $0xc] sm:$0xf]
    %v711 = vld [vmem:[%s706 + $0x10] sm:$0xf]
    %v712 = vld [vmem:[%s706 + $0x14] sm:$0xf]
    %v713 = vld [vmem:[%s706 + $0x18] sm:$0xf]
    %v714 = vld [vmem:[%s706 + $0x1c] sm:$0xf]
    %v715 = vld [vmem:[%s706 + $0x20] sm:$0xf]
    %v716 = vld [vmem:[%s706 + $0x24] sm:$0xf]
    %v717 = vld [vmem:[%s706 + $0x28] sm:$0xf]
    %v718 = vld [vmem:[%s706 + $0x2c] sm:$0xf]
    %v719 = vld [vmem:[%s706 + $0x30] sm:$0xf]
    %v720 = vld [vmem:[%s706 + $0x34] sm:$0xf]
    %v721 = vld [vmem:[%s706 + $0x38] sm:$0xf]
    %v722 = vld [vmem:[%s706 + $0x3c] sm:$0xf]
    %v723 = vld [vmem:[#allocation15 + $0x3] sm:$0x1]
    %v724 = vperm.slane %v723, 0
    %v741 = vunpack.c.l.b16 %v707
    %v742 = vunpack.c.l.b16 %v708
    %v743 = vunpack.c.l.b16 %v709
    %v744 = vunpack.c.l.b16 %v710
    %v745 = vunpack.c.l.b16 %v711
    %v746 = vunpack.c.l.b16 %v712
    %v747 = vunpack.c.l.b16 %v713
    %v748 = vunpack.c.l.b16 %v714
    %v749 = vunpack.c.l.b16 %v715
    %v750 = vunpack.c.l.b16 %v716
    %v751 = vunpack.c.l.b16 %v717
    %v752 = vunpack.c.l.b16 %v718
    %v753 = vunpack.c.l.b16 %v719
    %v754 = vunpack.c.l.b16 %v720
    %v755 = vunpack.c.l.b16 %v721
    %v756 = vunpack.c.l.b16 %v722
    %v757 = vpack.c.b16 %v742, %v741
    %v758 = vpack.c.b16 %v744, %v743
    %v759 = vpack.c.b16 %v746, %v745
    %v760 = vpack.c.b16 %v748, %v747
    %v761 = vpack.c.b16 %v750, %v749
    %v762 = vpack.c.b16 %v752, %v751
    %v763 = vpack.c.b16 %v754, %v753
    %v764 = vpack.c.b16 %v756, %v755
    %773 = vmatpush.bf16.msra.mxu0 %v764
    %774 = vmatpush.bf16.msra.mxu0 %v763
    %775 = vmatpush.bf16.msra.mxu0 %v762
    %776 = vmatpush.bf16.msra.mxu0 %v761
    %777 = vmatpush.bf16.msra.mxu0 %v760
    %778 = vmatpush.bf16.msra.mxu0 %v759
    %779 = vmatpush.bf16.msra.mxu0 %v758
    %780 = vmatpush.bf16.msra.mxu0 %v757
    %781 = vmatmul.bf16.gmra.mxu0 %v703
    %v782 = vpop.f32.mrf.mxu0
    %v783 = vadd.f32 %v724, %v782
    %v784 = vpop.f32.mrf.mxu0
    %v785 = vadd.f32 %v724, %v784
    %786 = vmatmul.bf16.gmra.mxu0 %v704
    %v787 = vpop.f32.mrf.mxu0
    %v788 = vadd.f32 %v724, %v787
    %v789 = vpop.f32.mrf.mxu0
    %v790 = vadd.f32 %v724, %v789
    %791 = vmatmul.bf16.gmra.mxu0 %v705
    %v792 = vpop.f32.mrf.mxu0
    %v793 = vadd.f32 %v724, %v792
    %v794 = vpop.f32.mrf.mxu0
    %795 = vdwg.mxu0
    %v796 = vmax.f32 %v783, 0.0
    %v797 = vmax.f32 %v785, 0.0
    %v798 = vmax.f32 %v788, 0.0
    %v799 = vmax.f32 %v790, 0.0
    %v800 = vmax.f32 %v793, 0.0
    %v801 = vmul.f32 %v796, %v172
    %v802 = vmul.f32 %v797, %v173
    %v803 = vmul.f32 %v798, %v174
    %v804 = vmul.f32 %v799, %v175
    %v805 = vmul.f32 %v800, %v176
    %806 = vst [vmem:[#allocation5 + $0x4] sm:$0xff] %v801
    %807 = vst [vmem:[#allocation5 + $0xc] sm:$0xff] %v802
    %808 = vst [vmem:[#allocation5 + $0x14] sm:$0xff] %v803
    %809 = vst [vmem:[#allocation5 + $0x1c] sm:$0xff] %v804
    %810 = vst [vmem:[#allocation5 + $0x24] sm:$0xff] %v805
    %v811 = vld [vmem:[#allocation5 + $0x3] sm:$0xff]
    %v812 = vld [vmem:[#allocation5 + $0xb] sm:$0xff]
    %v813 = vld [vmem:[#allocation5 + $0x13] sm:$0xff]
    %v814 = vld [vmem:[#allocation5 + $0x1b] sm:$0xff]
    %v815 = vld [vmem:[#allocation5 + $0x23] sm:$0xff]
    %v816 = vpack.c.bf16 %v812, %v811
    %v817 = vpack.c.bf16 %v814, %v813
    %v818 = vpack.c.bf16 %v815, %v815
    %s819 = scalar_lea.vmem [#allocation12], 128
    %v820 = vld [vmem:[%s819] sm:$0xf]
    %v821 = vld [vmem:[%s819 + $0x4] sm:$0xf]
    %v822 = vld [vmem:[%s819 + $0x8] sm:$0xf]
    %v823 = vld [vmem:[%s819 + $0xc] sm:$0xf]
    %v824 = vld [vmem:[%s819 + $0x10] sm:$0xf]
    %v825 = vld [vmem:[%s819 + $0x14] sm:$0xf]
    %v826 = vld [vmem:[%s819 + $0x18] sm:$0xf]
    %v827 = vld [vmem:[%s819 + $0x1c] sm:$0xf]
    %v828 = vld [vmem:[%s819 + $0x20] sm:$0xf]
    %v829 = vld [vmem:[%s819 + $0x24] sm:$0xf]
    %v830 = vld [vmem:[%s819 + $0x28] sm:$0xf]
    %v831 = vld [vmem:[%s819 + $0x2c] sm:$0xf]
    %v832 = vld [vmem:[%s819 + $0x30] sm:$0xf]
    %v833 = vld [vmem:[%s819 + $0x34] sm:$0xf]
    %v834 = vld [vmem:[%s819 + $0x38] sm:$0xf]
    %v835 = vld [vmem:[%s819 + $0x3c] sm:$0xf]
    %v836 = vld [vmem:[#allocation5 + $0x4] sm:$0xff]
    %v837 = vld [vmem:[#allocation5 + $0xc] sm:$0xff]
    %v838 = vld [vmem:[#allocation5 + $0x14] sm:$0xff]
    %v839 = vld [vmem:[#allocation5 + $0x1c] sm:$0xff]
    %v840 = vld [vmem:[#allocation5 + $0x24] sm:$0xff]
    %v841 = vpack.c.bf16 %v837, %v836
    %v842 = vpack.c.bf16 %v839, %v838
    %v843 = vpack.c.bf16 %v840, %v840
    %s844 = scalar_lea.vmem [#allocation12], 192
    %v845 = vld [vmem:[%s844] sm:$0xf]
    %v846 = vld [vmem:[%s844 + $0x4] sm:$0xf]
    %v847 = vld [vmem:[%s844 + $0x8] sm:$0xf]
    %v848 = vld [vmem:[%s844 + $0xc] sm:$0xf]
    %v849 = vld [vmem:[%s844 + $0x10] sm:$0xf]
    %v850 = vld [vmem:[%s844 + $0x14] sm:$0xf]
    %v851 = vld [vmem:[%s844 + $0x18] sm:$0xf]
    %v852 = vld [vmem:[%s844 + $0x1c] sm:$0xf]
    %v853 = vld [vmem:[%s844 + $0x20] sm:$0xf]
    %v854 = vld [vmem:[%s844 + $0x24] sm:$0xf]
    %v855 = vld [vmem:[%s844 + $0x28] sm:$0xf]
    %v856 = vld [vmem:[%s844 + $0x2c] sm:$0xf]
    %v857 = vld [vmem:[%s844 + $0x30] sm:$0xf]
    %v858 = vld [vmem:[%s844 + $0x34] sm:$0xf]
    %v859 = vld [vmem:[%s844 + $0x38] sm:$0xf]
    %v860 = vld [vmem:[%s844 + $0x3c] sm:$0xf]
    %v877 = vunpack.c.l.b16 %v845
    %v878 = vunpack.c.l.b16 %v846
    %v879 = vunpack.c.l.b16 %v847
    %v880 = vunpack.c.l.b16 %v848
    %v881 = vunpack.c.l.b16 %v849
    %v882 = vunpack.c.l.b16 %v850
    %v883 = vunpack.c.l.b16 %v851
    %v884 = vunpack.c.l.b16 %v852
    %v885 = vunpack.c.l.b16 %v853
    %v886 = vunpack.c.l.b16 %v854
    %v887 = vunpack.c.l.b16 %v855
    %v888 = vunpack.c.l.b16 %v856
    %v889 = vunpack.c.l.b16 %v857
    %v890 = vunpack.c.l.b16 %v858
    %v891 = vunpack.c.l.b16 %v859
    %v892 = vunpack.c.l.b16 %v860
    %v893 = vpack.c.b16 %v878, %v877
    %v894 = vpack.c.b16 %v880, %v879
    %v895 = vpack.c.b16 %v882, %v881
    %v896 = vpack.c.b16 %v884, %v883
    %v897 = vpack.c.b16 %v886, %v885
    %v898 = vpack.c.b16 %v888, %v887
    %v899 = vpack.c.b16 %v890, %v889
    %v900 = vpack.c.b16 %v892, %v891
    %909 = vmatpush.bf16.msra.mxu0 %v900
    %910 = vmatpush.bf16.msra.mxu0 %v899
    %911 = vmatpush.bf16.msra.mxu0 %v898
    %912 = vmatpush.bf16.msra.mxu0 %v897
    %913 = vmatpush.bf16.msra.mxu0 %v896
    %914 = vmatpush.bf16.msra.mxu0 %v895
    %915 = vmatpush.bf16.msra.mxu0 %v894
    %916 = vmatpush.bf16.msra.mxu0 %v893
    %917 = vmatmul.bf16.gmra.mxu0 %v841
    %v918 = vpop.f32.mrf.mxu0
    %v919 = vadd.f32 0.0, %v918
    %v920 = vpop.f32.mrf.mxu0
    %v921 = vadd.f32 0.0, %v920
    %922 = vmatmul.bf16.gmra.mxu0 %v842
    %v923 = vpop.f32.mrf.mxu0
    %v924 = vadd.f32 0.0, %v923
    %v925 = vpop.f32.mrf.mxu0
    %v926 = vadd.f32 0.0, %v925
    %927 = vmatmul.bf16.gmra.mxu0 %v843
    %v928 = vpop.f32.mrf.mxu0
    %v929 = vadd.f32 0.0, %v928
    %v930 = vpop.f32.mrf.mxu0
    %931 = vdwg.mxu0
    %v948 = vunpack.c.l.b16 %v820
    %v949 = vunpack.c.l.b16 %v821
    %v950 = vunpack.c.l.b16 %v822
    %v951 = vunpack.c.l.b16 %v823
    %v952 = vunpack.c.l.b16 %v824
    %v953 = vunpack.c.l.b16 %v825
    %v954 = vunpack.c.l.b16 %v826
    %v955 = vunpack.c.l.b16 %v827
    %v956 = vunpack.c.l.b16 %v828
    %v957 = vunpack.c.l.b16 %v829
    %v958 = vunpack.c.l.b16 %v830
    %v959 = vunpack.c.l.b16 %v831
    %v960 = vunpack.c.l.b16 %v832
    %v961 = vunpack.c.l.b16 %v833
    %v962 = vunpack.c.l.b16 %v834
    %v963 = vunpack.c.l.b16 %v835
    %v964 = vpack.c.b16 %v949, %v948
    %v965 = vpack.c.b16 %v951, %v950
    %v966 = vpack.c.b16 %v953, %v952
    %v967 = vpack.c.b16 %v955, %v954
    %v968 = vpack.c.b16 %v957, %v956
    %v969 = vpack.c.b16 %v959, %v958
    %v970 = vpack.c.b16 %v961, %v960
    %v971 = vpack.c.b16 %v963, %v962
    %980 = vmatpush.bf16.msra.mxu0 %v971
    %981 = vmatpush.bf16.msra.mxu0 %v970
    %982 = vmatpush.bf16.msra.mxu0 %v969
    %983 = vmatpush.bf16.msra.mxu0 %v968
    %984 = vmatpush.bf16.msra.mxu0 %v967
    %985 = vmatpush.bf16.msra.mxu0 %v966
    %986 = vmatpush.bf16.msra.mxu0 %v965
    %987 = vmatpush.bf16.msra.mxu0 %v964
    %988 = vmatmul.bf16.gmra.mxu0 %v816
    %v989 = vpop.f32.mrf.mxu0
    %v990 = vadd.f32 %v919, %v989
    %v991 = vpop.f32.mrf.mxu0
    %v992 = vadd.f32 %v921, %v991
    %993 = vmatmul.bf16.gmra.mxu0 %v817
    %v994 = vpop.f32.mrf.mxu0
    %v995 = vadd.f32 %v924, %v994
    %v996 = vpop.f32.mrf.mxu0
    %v997 = vadd.f32 %v926, %v996
    %998 = vmatmul.bf16.gmra.mxu0 %v818
    %v999 = vpop.f32.mrf.mxu0
    %v1000 = vadd.f32 %v929, %v999
    %v1001 = vpop.f32.mrf.mxu0
    %1002 = vdwg.mxu0
    %v1003 = vld [vmem:[#allocation5 + $0x5] sm:$0xff]
    %v1004 = vld [vmem:[#allocation5 + $0xd] sm:$0xff]
    %v1005 = vld [vmem:[#allocation5 + $0x15] sm:$0xff]
    %v1006 = vld [vmem:[#allocation5 + $0x1d] sm:$0xff]
    %v1007 = vld [vmem:[#allocation5 + $0x25] sm:$0xff]
    %v1008 = vpack.c.bf16 %v1004, %v1003
    %v1009 = vpack.c.bf16 %v1006, %v1005
    %v1010 = vpack.c.bf16 %v1007, %v1007
    %s1011 = scalar_lea.vmem [#allocation12], 256
    %v1012 = vld [vmem:[%s1011] sm:$0xf]
    %v1013 = vld [vmem:[%s1011 + $0x4] sm:$0xf]
    %v1014 = vld [vmem:[%s1011 + $0x8] sm:$0xf]
    %v1015 = vld [vmem:[%s1011 + $0xc] sm:$0xf]
    %v1016 = vld [vmem:[%s1011 + $0x10] sm:$0xf]
    %v1017 = vld [vmem:[%s1011 + $0x14] sm:$0xf]
    %v1018 = vld [vmem:[%s1011 + $0x18] sm:$0xf]
    %v1019 = vld [vmem:[%s1011 + $0x1c] sm:$0xf]
    %v1020 = vld [vmem:[%s1011 + $0x20] sm:$0xf]
    %v1021 = vld [vmem:[%s1011 + $0x24] sm:$0xf]
    %v1022 = vld [vmem:[%s1011 + $0x28] sm:$0xf]
    %v1023 = vld [vmem:[%s1011 + $0x2c] sm:$0xf]
    %v1024 = vld [vmem:[%s1011 + $0x30] sm:$0xf]
    %v1025 = vld [vmem:[%s1011 + $0x34] sm:$0xf]
    %v1026 = vld [vmem:[%s1011 + $0x38] sm:$0xf]
    %v1027 = vld [vmem:[%s1011 + $0x3c] sm:$0xf]
    %v1044 = vunpack.c.l.b16 %v1012
    %v1045 = vunpack.c.l.b16 %v1013
    %v1046 = vunpack.c.l.b16 %v1014
    %v1047 = vunpack.c.l.b16 %v1015
    %v1048 = vunpack.c.l.b16 %v1016
    %v1049 = vunpack.c.l.b16 %v1017
    %v1050 = vunpack.c.l.b16 %v1018
    %v1051 = vunpack.c.l.b16 %v1019
    %v1052 = vunpack.c.l.b16 %v1020
    %v1053 = vunpack.c.l.b16 %v1021
    %v1054 = vunpack.c.l.b16 %v1022
    %v1055 = vunpack.c.l.b16 %v1023
    %v1056 = vunpack.c.l.b16 %v1024
    %v1057 = vunpack.c.l.b16 %v1025
    %v1058 = vunpack.c.l.b16 %v1026
    %v1059 = vunpack.c.l.b16 %v1027
    %v1060 = vpack.c.b16 %v1045, %v1044
    %v1061 = vpack.c.b16 %v1047, %v1046
    %v1062 = vpack.c.b16 %v1049, %v1048
    %v1063 = vpack.c.b16 %v1051, %v1050
    %v1064 = vpack.c.b16 %v1053, %v1052
    %v1065 = vpack.c.b16 %v1055, %v1054
    %v1066 = vpack.c.b16 %v1057, %v1056
    %v1067 = vpack.c.b16 %v1059, %v1058
    %1076 = vmatpush.bf16.msra.mxu0 %v1067
    %1077 = vmatpush.bf16.msra.mxu0 %v1066
    %1078 = vmatpush.bf16.msra.mxu0 %v1065
    %1079 = vmatpush.bf16.msra.mxu0 %v1064
    %1080 = vmatpush.bf16.msra.mxu0 %v1063
    %1081 = vmatpush.bf16.msra.mxu0 %v1062
    %1082 = vmatpush.bf16.msra.mxu0 %v1061
    %1083 = vmatpush.bf16.msra.mxu0 %v1060
    %1084 = vmatmul.bf16.gmra.mxu0 %v1008
    %v1085 = vpop.f32.mrf.mxu0
    %v1086 = vadd.f32 0.0, %v1085
    %v1087 = vpop.f32.mrf.mxu0
    %v1088 = vadd.f32 0.0, %v1087
    %1089 = vmatmul.bf16.gmra.mxu0 %v1009
    %v1090 = vpop.f32.mrf.mxu0
    %v1091 = vadd.f32 0.0, %v1090
    %v1092 = vpop.f32.mrf.mxu0
    %v1093 = vadd.f32 0.0, %v1092
    %1094 = vmatmul.bf16.gmra.mxu0 %v1010
    %v1095 = vpop.f32.mrf.mxu0
    %v1096 = vadd.f32 0.0, %v1095
    %v1097 = vpop.f32.mrf.mxu0
    %1098 = vdwg.mxu0
    %v1099 = vadd.f32 %v990, %v1086
    %v1100 = vadd.f32 %v992, %v1088
    %v1101 = vadd.f32 %v995, %v1091
    %v1102 = vadd.f32 %v997, %v1093
    %v1103 = vadd.f32 %v1000, %v1096
    %v1104 = vld [vmem:[#allocation15 + $0x4] sm:$0x1]
    %v1105 = vperm.slane %v1104, 0
    %v1106 = vadd.f32 %v1099, %v1105
    %v1107 = vadd.f32 %v1100, %v1105
    %v1108 = vadd.f32 %v1101, %v1105
    %v1109 = vadd.f32 %v1102, %v1105
    %v1110 = vadd.f32 %v1103, %v1105
    %v1111 = vmax.f32 %v1106, 0.0
    %v1112 = vmax.f32 %v1107, 0.0
    %v1113 = vmax.f32 %v1108, 0.0
    %v1114 = vmax.f32 %v1109, 0.0
    %v1115 = vmax.f32 %v1110, 0.0
    %1116 = vst [vmem:[#allocation4 + $0x4] sm:$0xff] %v1111
    %1117 = vst [vmem:[#allocation4 + $0xc] sm:$0xff] %v1112
    %1118 = vst [vmem:[#allocation4 + $0x14] sm:$0xff] %v1113
    %1119 = vst [vmem:[#allocation4 + $0x1c] sm:$0xff] %v1114
    %1120 = vst [vmem:[#allocation4 + $0x24] sm:$0xff] %v1115
    %v1121 = vld [vmem:[#allocation4 + $0x4] sm:$0xff]
    %v1122 = vld [vmem:[#allocation4 + $0xc] sm:$0xff]
    %v1123 = vld [vmem:[#allocation4 + $0x14] sm:$0xff]
    %v1124 = vld [vmem:[#allocation4 + $0x1c] sm:$0xff]
    %v1125 = vld [vmem:[#allocation4 + $0x24] sm:$0xff]
    %v1126 = vpack.c.bf16 %v1122, %v1121
    %v1127 = vpack.c.bf16 %v1124, %v1123
    %v1128 = vpack.c.bf16 %v1125, %v1125
    %s1129 = scalar_lea.vmem [#allocation12], 320
    %v1130 = vld [vmem:[%s1129] sm:$0xf]
    %v1131 = vld [vmem:[%s1129 + $0x4] sm:$0xf]
    %v1132 = vld [vmem:[%s1129 + $0x8] sm:$0xf]
    %v1133 = vld [vmem:[%s1129 + $0xc] sm:$0xf]
    %v1134 = vld [vmem:[%s1129 + $0x10] sm:$0xf]
    %v1135 = vld [vmem:[%s1129 + $0x14] sm:$0xf]
    %v1136 = vld [vmem:[%s1129 + $0x18] sm:$0xf]
    %v1137 = vld [vmem:[%s1129 + $0x1c] sm:$0xf]
    %v1138 = vld [vmem:[%s1129 + $0x20] sm:$0xf]
    %v1139 = vld [vmem:[%s1129 + $0x24] sm:$0xf]
    %v1140 = vld [vmem:[%s1129 + $0x28] sm:$0xf]
    %v1141 = vld [vmem:[%s1129 + $0x2c] sm:$0xf]
    %v1142 = vld [vmem:[%s1129 + $0x30] sm:$0xf]
    %v1143 = vld [vmem:[%s1129 + $0x34] sm:$0xf]
    %v1144 = vld [vmem:[%s1129 + $0x38] sm:$0xf]
    %v1145 = vld [vmem:[%s1129 + $0x3c] sm:$0xf]
    %v1146 = vld [vmem:[#allocation15 + $0x5] sm:$0x1]
    %v1147 = vperm.slane %v1146, 0
    %v1164 = vunpack.c.l.b16 %v1130
    %v1165 = vunpack.c.l.b16 %v1131
    %v1166 = vunpack.c.l.b16 %v1132
    %v1167 = vunpack.c.l.b16 %v1133
    %v1168 = vunpack.c.l.b16 %v1134
    %v1169 = vunpack.c.l.b16 %v1135
    %v1170 = vunpack.c.l.b16 %v1136
    %v1171 = vunpack.c.l.b16 %v1137
    %v1172 = vunpack.c.l.b16 %v1138
    %v1173 = vunpack.c.l.b16 %v1139
    %v1174 = vunpack.c.l.b16 %v1140
    %v1175 = vunpack.c.l.b16 %v1141
    %v1176 = vunpack.c.l.b16 %v1142
    %v1177 = vunpack.c.l.b16 %v1143
    %v1178 = vunpack.c.l.b16 %v1144
    %v1179 = vunpack.c.l.b16 %v1145
    %v1180 = vpack.c.b16 %v1165, %v1164
    %v1181 = vpack.c.b16 %v1167, %v1166
    %v1182 = vpack.c.b16 %v1169, %v1168
    %v1183 = vpack.c.b16 %v1171, %v1170
    %v1184 = vpack.c.b16 %v1173, %v1172
    %v1185 = vpack.c.b16 %v1175, %v1174
    %v1186 = vpack.c.b16 %v1177, %v1176
    %v1187 = vpack.c.b16 %v1179, %v1178
    %1196 = vmatpush.bf16.msra.mxu0 %v1187
    %1197 = vmatpush.bf16.msra.mxu0 %v1186
    %1198 = vmatpush.bf16.msra.mxu0 %v1185
    %1199 = vmatpush.bf16.msra.mxu0 %v1184
    %1200 = vmatpush.bf16.msra.mxu0 %v1183
    %1201 = vmatpush.bf16.msra.mxu0 %v1182
    %1202 = vmatpush.bf16.msra.mxu0 %v1181
    %1203 = vmatpush.bf16.msra.mxu0 %v1180
    %1204 = vmatmul.bf16.gmra.mxu0 %v1126
    %v1205 = vpop.f32.mrf.mxu0
    %v1206 = vadd.f32 %v1147, %v1205
    %v1207 = vpop.f32.mrf.mxu0
    %v1208 = vadd.f32 %v1147, %v1207
    %1209 = vmatmul.bf16.gmra.mxu0 %v1127
    %v1210 = vpop.f32.mrf.mxu0
    %v1211 = vadd.f32 %v1147, %v1210
    %v1212 = vpop.f32.mrf.mxu0
    %v1213 = vadd.f32 %v1147, %v1212
    %1214 = vmatmul.bf16.gmra.mxu0 %v1128
    %v1215 = vpop.f32.mrf.mxu0
    %v1216 = vadd.f32 %v1147, %v1215
    %v1217 = vpop.f32.mrf.mxu0
    %1218 = vdwg.mxu0
    %v1219 = vmax.f32 %v1206, 0.0
    %v1220 = vmax.f32 %v1208, 0.0
    %v1221 = vmax.f32 %v1211, 0.0
    %v1222 = vmax.f32 %v1213, 0.0
    %v1223 = vmax.f32 %v1216, 0.0
    %v1224 = vmul.f32 %v1219, %v172
    %v1225 = vmul.f32 %v1220, %v173
    %v1226 = vmul.f32 %v1221, %v174
    %v1227 = vmul.f32 %v1222, %v175
    %v1228 = vmul.f32 %v1223, %v176
    %1229 = vst [vmem:[#allocation5 + $0x4] sm:$0xff] %v1224
    %1230 = vst [vmem:[#allocation5 + $0xc] sm:$0xff] %v1225
    %1231 = vst [vmem:[#allocation5 + $0x14] sm:$0xff] %v1226
    %1232 = vst [vmem:[#allocation5 + $0x1c] sm:$0xff] %v1227
    %1233 = vst [vmem:[#allocation5 + $0x24] sm:$0xff] %v1228
    %v1234 = vld [vmem:[#allocation5 + $0x2] sm:$0xff]
    %v1235 = vld [vmem:[#allocation5 + $0xa] sm:$0xff]
    %v1236 = vld [vmem:[#allocation5 + $0x12] sm:$0xff]
    %v1237 = vld [vmem:[#allocation5 + $0x1a] sm:$0xff]
    %v1238 = vld [vmem:[#allocation5 + $0x22] sm:$0xff]
    %v1239 = vpack.c.bf16 %v1235, %v1234
    %v1240 = vpack.c.bf16 %v1237, %v1236
    %v1241 = vpack.c.bf16 %v1238, %v1238
    %s1242 = scalar_lea.vmem [#allocation12], 384
    %v1243 = vld [vmem:[%s1242] sm:$0xf]
    %v1244 = vld [vmem:[%s1242 + $0x4] sm:$0xf]
    %v1245 = vld [vmem:[%s1242 + $0x8] sm:$0xf]
    %v1246 = vld [vmem:[%s1242 + $0xc] sm:$0xf]
    %v1247 = vld [vmem:[%s1242 + $0x10] sm:$0xf]
    %v1248 = vld [vmem:[%s1242 + $0x14] sm:$0xf]
    %v1249 = vld [vmem:[%s1242 + $0x18] sm:$0xf]
    %v1250 = vld [vmem:[%s1242 + $0x1c] sm:$0xf]
    %v1251 = vld [vmem:[%s1242 + $0x20] sm:$0xf]
    %v1252 = vld [vmem:[%s1242 + $0x24] sm:$0xf]
    %v1253 = vld [vmem:[%s1242 + $0x28] sm:$0xf]
    %v1254 = vld [vmem:[%s1242 + $0x2c] sm:$0xf]
    %v1255 = vld [vmem:[%s1242 + $0x30] sm:$0xf]
    %v1256 = vld [vmem:[%s1242 + $0x34] sm:$0xf]
    %v1257 = vld [vmem:[%s1242 + $0x38] sm:$0xf]
    %v1258 = vld [vmem:[%s1242 + $0x3c] sm:$0xf]
    %v1259 = vld [vmem:[#allocation5 + $0x3] sm:$0xff]
    %v1260 = vld [vmem:[#allocation5 + $0xb] sm:$0xff]
    %v1261 = vld [vmem:[#allocation5 + $0x13] sm:$0xff]
    %v1262 = vld [vmem:[#allocation5 + $0x1b] sm:$0xff]
    %v1263 = vld [vmem:[#allocation5 + $0x23] sm:$0xff]
    %v1264 = vpack.c.bf16 %v1260, %v1259
    %v1265 = vpack.c.bf16 %v1262, %v1261
    %v1266 = vpack.c.bf16 %v1263, %v1263
    %s1267 = scalar_lea.vmem [#allocation12], 448
    %v1268 = vld [vmem:[%s1267] sm:$0xf]
    %v1269 = vld [vmem:[%s1267 + $0x4] sm:$0xf]
    %v1270 = vld [vmem:[%s1267 + $0x8] sm:$0xf]
    %v1271 = vld [vmem:[%s1267 + $0xc] sm:$0xf]
    %v1272 = vld [vmem:[%s1267 + $0x10] sm:$0xf]
    %v1273 = vld [vmem:[%s1267 + $0x14] sm:$0xf]
    %v1274 = vld [vmem:[%s1267 + $0x18] sm:$0xf]
    %v1275 = vld [vmem:[%s1267 + $0x1c] sm:$0xf]
    %v1276 = vld [vmem:[%s1267 + $0x20] sm:$0xf]
    %v1277 = vld [vmem:[%s1267 + $0x24] sm:$0xf]
    %v1278 = vld [vmem:[%s1267 + $0x28] sm:$0xf]
    %v1279 = vld [vmem:[%s1267 + $0x2c] sm:$0xf]
    %v1280 = vld [vmem:[%s1267 + $0x30] sm:$0xf]
    %v1281 = vld [vmem:[%s1267 + $0x34] sm:$0xf]
    %v1282 = vld [vmem:[%s1267 + $0x38] sm:$0xf]
    %v1283 = vld [vmem:[%s1267 + $0x3c] sm:$0xf]
    %v1300 = vunpack.c.l.b16 %v1268
    %v1301 = vunpack.c.l.b16 %v1269
    %v1302 = vunpack.c.l.b16 %v1270
    %v1303 = vunpack.c.l.b16 %v1271
    %v1304 = vunpack.c.l.b16 %v1272
    %v1305 = vunpack.c.l.b16 %v1273
    %v1306 = vunpack.c.l.b16 %v1274
    %v1307 = vunpack.c.l.b16 %v1275
    %v1308 = vunpack.c.l.b16 %v1276
    %v1309 = vunpack.c.l.b16 %v1277
    %v1310 = vunpack.c.l.b16 %v1278
    %v1311 = vunpack.c.l.b16 %v1279
    %v1312 = vunpack.c.l.b16 %v1280
    %v1313 = vunpack.c.l.b16 %v1281
    %v1314 = vunpack.c.l.b16 %v1282
    %v1315 = vunpack.c.l.b16 %v1283
    %v1316 = vpack.c.b16 %v1301, %v1300
    %v1317 = vpack.c.b16 %v1303, %v1302
    %v1318 = vpack.c.b16 %v1305, %v1304
    %v1319 = vpack.c.b16 %v1307, %v1306
    %v1320 = vpack.c.b16 %v1309, %v1308
    %v1321 = vpack.c.b16 %v1311, %v1310
    %v1322 = vpack.c.b16 %v1313, %v1312
    %v1323 = vpack.c.b16 %v1315, %v1314
    %1332 = vmatpush.bf16.msra.mxu0 %v1323
    %1333 = vmatpush.bf16.msra.mxu0 %v1322
    %1334 = vmatpush.bf16.msra.mxu0 %v1321
    %1335 = vmatpush.bf16.msra.mxu0 %v1320
    %1336 = vmatpush.bf16.msra.mxu0 %v1319
    %1337 = vmatpush.bf16.msra.mxu0 %v1318
    %1338 = vmatpush.bf16.msra.mxu0 %v1317
    %1339 = vmatpush.bf16.msra.mxu0 %v1316
    %1340 = vmatmul.bf16.gmra.mxu0 %v1264
    %v1341 = vpop.f32.mrf.mxu0
    %v1342 = vadd.f32 0.0, %v1341
    %v1343 = vpop.f32.mrf.mxu0
    %v1344 = vadd.f32 0.0, %v1343
    %1345 = vmatmul.bf16.gmra.mxu0 %v1265
    %v1346 = vpop.f32.mrf.mxu0
    %v1347 = vadd.f32 0.0, %v1346
    %v1348 = vpop.f32.mrf.mxu0
    %v1349 = vadd.f32 0.0, %v1348
    %1350 = vmatmul.bf16.gmra.mxu0 %v1266
    %v1351 = vpop.f32.mrf.mxu0
    %v1352 = vadd.f32 0.0, %v1351
    %v1353 = vpop.f32.mrf.mxu0
    %1354 = vdwg.mxu0
    %v1371 = vunpack.c.l.b16 %v1243
    %v1372 = vunpack.c.l.b16 %v1244
    %v1373 = vunpack.c.l.b16 %v1245
    %v1374 = vunpack.c.l.b16 %v1246
    %v1375 = vunpack.c.l.b16 %v1247
    %v1376 = vunpack.c.l.b16 %v1248
    %v1377 = vunpack.c.l.b16 %v1249
    %v1378 = vunpack.c.l.b16 %v1250
    %v1379 = vunpack.c.l.b16 %v1251
    %v1380 = vunpack.c.l.b16 %v1252
    %v1381 = vunpack.c.l.b16 %v1253
    %v1382 = vunpack.c.l.b16 %v1254
    %v1383 = vunpack.c.l.b16 %v1255
    %v1384 = vunpack.c.l.b16 %v1256
    %v1385 = vunpack.c.l.b16 %v1257
    %v1386 = vunpack.c.l.b16 %v1258
    %v1387 = vpack.c.b16 %v1372, %v1371
    %v1388 = vpack.c.b16 %v1374, %v1373
    %v1389 = vpack.c.b16 %v1376, %v1375
    %v1390 = vpack.c.b16 %v1378, %v1377
    %v1391 = vpack.c.b16 %v1380, %v1379
    %v1392 = vpack.c.b16 %v1382, %v1381
    %v1393 = vpack.c.b16 %v1384, %v1383
    %v1394 = vpack.c.b16 %v1386, %v1385
    %1403 = vmatpush.bf16.msra.mxu0 %v1394
    %1404 = vmatpush.bf16.msra.mxu0 %v1393
    %1405 = vmatpush.bf16.msra.mxu0 %v1392
    %1406 = vmatpush.bf16.msra.mxu0 %v1391
    %1407 = vmatpush.bf16.msra.mxu0 %v1390
    %1408 = vmatpush.bf16.msra.mxu0 %v1389
    %1409 = vmatpush.bf16.msra.mxu0 %v1388
    %1410 = vmatpush.bf16.msra.mxu0 %v1387
    %1411 = vmatmul.bf16.gmra.mxu0 %v1239
    %v1412 = vpop.f32.mrf.mxu0
    %v1413 = vadd.f32 %v1342, %v1412
    %v1414 = vpop.f32.mrf.mxu0
    %v1415 = vadd.f32 %v1344, %v1414
    %1416 = vmatmul.bf16.gmra.mxu0 %v1240
    %v1417 = vpop.f32.mrf.mxu0
    %v1418 = vadd.f32 %v1347, %v1417
    %v1419 = vpop.f32.mrf.mxu0
    %v1420 = vadd.f32 %v1349, %v1419
    %1421 = vmatmul.bf16.gmra.mxu0 %v1241
    %v1422 = vpop.f32.mrf.mxu0
    %v1423 = vadd.f32 %v1352, %v1422
    %v1424 = vpop.f32.mrf.mxu0
    %1425 = vdwg.mxu0
    %v1426 = vld [vmem:[#allocation5 + $0x4] sm:$0xff]
    %v1427 = vld [vmem:[#allocation5 + $0xc] sm:$0xff]
    %v1428 = vld [vmem:[#allocation5 + $0x14] sm:$0xff]
    %v1429 = vld [vmem:[#allocation5 + $0x1c] sm:$0xff]
    %v1430 = vld [vmem:[#allocation5 + $0x24] sm:$0xff]
    %v1431 = vpack.c.bf16 %v1427, %v1426
    %v1432 = vpack.c.bf16 %v1429, %v1428
    %v1433 = vpack.c.bf16 %v1430, %v1430
    %s1434 = scalar_lea.vmem [#allocation12], 512
    %v1435 = vld [vmem:[%s1434] sm:$0xf]
    %v1436 = vld [vmem:[%s1434 + $0x4] sm:$0xf]
    %v1437 = vld [vmem:[%s1434 + $0x8] sm:$0xf]
    %v1438 = vld [vmem:[%s1434 + $0xc] sm:$0xf]
    %v1439 = vld [vmem:[%s1434 + $0x10] sm:$0xf]
    %v1440 = vld [vmem:[%s1434 + $0x14] sm:$0xf]
    %v1441 = vld [vmem:[%s1434 + $0x18] sm:$0xf]
    %v1442 = vld [vmem:[%s1434 + $0x1c] sm:$0xf]
    %v1443 = vld [vmem:[%s1434 + $0x20] sm:$0xf]
    %v1444 = vld [vmem:[%s1434 + $0x24] sm:$0xf]
    %v1445 = vld [vmem:[%s1434 + $0x28] sm:$0xf]
    %v1446 = vld [vmem:[%s1434 + $0x2c] sm:$0xf]
    %v1447 = vld [vmem:[%s1434 + $0x30] sm:$0xf]
    %v1448 = vld [vmem:[%s1434 + $0x34] sm:$0xf]
    %v1449 = vld [vmem:[%s1434 + $0x38] sm:$0xf]
    %v1450 = vld [vmem:[%s1434 + $0x3c] sm:$0xf]
    %v1467 = vunpack.c.l.b16 %v1435
    %v1468 = vunpack.c.l.b16 %v1436
    %v1469 = vunpack.c.l.b16 %v1437
    %v1470 = vunpack.c.l.b16 %v1438
    %v1471 = vunpack.c.l.b16 %v1439
    %v1472 = vunpack.c.l.b16 %v1440
    %v1473 = vunpack.c.l.b16 %v1441
    %v1474 = vunpack.c.l.b16 %v1442
    %v1475 = vunpack.c.l.b16 %v1443
    %v1476 = vunpack.c.l.b16 %v1444
    %v1477 = vunpack.c.l.b16 %v1445
    %v1478 = vunpack.c.l.b16 %v1446
    %v1479 = vunpack.c.l.b16 %v1447
    %v1480 = vunpack.c.l.b16 %v1448
    %v1481 = vunpack.c.l.b16 %v1449
    %v1482 = vunpack.c.l.b16 %v1450
    %v1483 = vpack.c.b16 %v1468, %v1467
    %v1484 = vpack.c.b16 %v1470, %v1469
    %v1485 = vpack.c.b16 %v1472, %v1471
    %v1486 = vpack.c.b16 %v1474, %v1473
    %v1487 = vpack.c.b16 %v1476, %v1475
    %v1488 = vpack.c.b16 %v1478, %v1477
    %v1489 = vpack.c.b16 %v1480, %v1479
    %v1490 = vpack.c.b16 %v1482, %v1481
    %1499 = vmatpush.bf16.msra.mxu0 %v1490
    %1500 = vmatpush.bf16.msra.mxu0 %v1489
    %1501 = vmatpush.bf16.msra.mxu0 %v1488
    %1502 = vmatpush.bf16.msra.mxu0 %v1487
    %1503 = vmatpush.bf16.msra.mxu0 %v1486
    %1504 = vmatpush.bf16.msra.mxu0 %v1485
    %1505 = vmatpush.bf16.msra.mxu0 %v1484
    %1506 = vmatpush.bf16.msra.mxu0 %v1483
    %1507 = vmatmul.bf16.gmra.mxu0 %v1431
    %v1508 = vpop.f32.mrf.mxu0
    %v1509 = vadd.f32 0.0, %v1508
    %v1510 = vpop.f32.mrf.mxu0
    %v1511 = vadd.f32 0.0, %v1510
    %1512 = vmatmul.bf16.gmra.mxu0 %v1432
    %v1513 = vpop.f32.mrf.mxu0
    %v1514 = vadd.f32 0.0, %v1513
    %v1515 = vpop.f32.mrf.mxu0
    %v1516 = vadd.f32 0.0, %v1515
    %1517 = vmatmul.bf16.gmra.mxu0 %v1433
    %v1518 = vpop.f32.mrf.mxu0
    %v1519 = vadd.f32 0.0, %v1518
    %v1520 = vpop.f32.mrf.mxu0
    %1521 = vdwg.mxu0
    %v1522 = vadd.f32 %v1413, %v1509
    %v1523 = vadd.f32 %v1415, %v1511
    %v1524 = vadd.f32 %v1418, %v1514
    %v1525 = vadd.f32 %v1420, %v1516
    %v1526 = vadd.f32 %v1423, %v1519
    %v1527 = vld [vmem:[#allocation5 + $0x5] sm:$0xff]
    %v1528 = vld [vmem:[#allocation5 + $0xd] sm:$0xff]
    %v1529 = vld [vmem:[#allocation5 + $0x15] sm:$0xff]
    %v1530 = vld [vmem:[#allocation5 + $0x1d] sm:$0xff]
    %v1531 = vld [vmem:[#allocation5 + $0x25] sm:$0xff]
    %v1532 = vpack.c.bf16 %v1528, %v1527
    %v1533 = vpack.c.bf16 %v1530, %v1529
    %v1534 = vpack.c.bf16 %v1531, %v1531
    %s1535 = scalar_lea.vmem [#allocation12], 576
    %v1536 = vld [vmem:[%s1535] sm:$0xf]
    %v1537 = vld [vmem:[%s1535 + $0x4] sm:$0xf]
    %v1538 = vld [vmem:[%s1535 + $0x8] sm:$0xf]
    %v1539 = vld [vmem:[%s1535 + $0xc] sm:$0xf]
    %v1540 = vld [vmem:[%s1535 + $0x10] sm:$0xf]
    %v1541 = vld [vmem:[%s1535 + $0x14] sm:$0xf]
    %v1542 = vld [vmem:[%s1535 + $0x18] sm:$0xf]
    %v1543 = vld [vmem:[%s1535 + $0x1c] sm:$0xf]
    %v1544 = vld [vmem:[%s1535 + $0x20] sm:$0xf]
    %v1545 = vld [vmem:[%s1535 + $0x24] sm:$0xf]
    %v1546 = vld [vmem:[%s1535 + $0x28] sm:$0xf]
    %v1547 = vld [vmem:[%s1535 + $0x2c] sm:$0xf]
    %v1548 = vld [vmem:[%s1535 + $0x30] sm:$0xf]
    %v1549 = vld [vmem:[%s1535 + $0x34] sm:$0xf]
    %v1550 = vld [vmem:[%s1535 + $0x38] sm:$0xf]
    %v1551 = vld [vmem:[%s1535 + $0x3c] sm:$0xf]
    %v1568 = vunpack.c.l.b16 %v1536
    %v1569 = vunpack.c.l.b16 %v1537
    %v1570 = vunpack.c.l.b16 %v1538
    %v1571 = vunpack.c.l.b16 %v1539
    %v1572 = vunpack.c.l.b16 %v1540
    %v1573 = vunpack.c.l.b16 %v1541
    %v1574 = vunpack.c.l.b16 %v1542
    %v1575 = vunpack.c.l.b16 %v1543
    %v1576 = vunpack.c.l.b16 %v1544
    %v1577 = vunpack.c.l.b16 %v1545
    %v1578 = vunpack.c.l.b16 %v1546
    %v1579 = vunpack.c.l.b16 %v1547
    %v1580 = vunpack.c.l.b16 %v1548
    %v1581 = vunpack.c.l.b16 %v1549
    %v1582 = vunpack.c.l.b16 %v1550
    %v1583 = vunpack.c.l.b16 %v1551
    %v1584 = vpack.c.b16 %v1569, %v1568
    %v1585 = vpack.c.b16 %v1571, %v1570
    %v1586 = vpack.c.b16 %v1573, %v1572
    %v1587 = vpack.c.b16 %v1575, %v1574
    %v1588 = vpack.c.b16 %v1577, %v1576
    %v1589 = vpack.c.b16 %v1579, %v1578
    %v1590 = vpack.c.b16 %v1581, %v1580
    %v1591 = vpack.c.b16 %v1583, %v1582
    %1600 = vmatpush.bf16.msra.mxu0 %v1591
    %1601 = vmatpush.bf16.msra.mxu0 %v1590
    %1602 = vmatpush.bf16.msra.mxu0 %v1589
    %1603 = vmatpush.bf16.msra.mxu0 %v1588
    %1604 = vmatpush.bf16.msra.mxu0 %v1587
    %1605 = vmatpush.bf16.msra.mxu0 %v1586
    %1606 = vmatpush.bf16.msra.mxu0 %v1585
    %1607 = vmatpush.bf16.msra.mxu0 %v1584
    %1608 = vmatmul.bf16.gmra.mxu0 %v1532
    %v1609 = vpop.f32.mrf.mxu0
    %v1610 = vadd.f32 0.0, %v1609
    %v1611 = vpop.f32.mrf.mxu0
    %v1612 = vadd.f32 0.0, %v1611
    %1613 = vmatmul.bf16.gmra.mxu0 %v1533
    %v1614 = vpop.f32.mrf.mxu0
    %v1615 = vadd.f32 0.0, %v1614
    %v1616 = vpop.f32.mrf.mxu0
    %v1617 = vadd.f32 0.0, %v1616
    %1618 = vmatmul.bf16.gmra.mxu0 %v1534
    %v1619 = vpop.f32.mrf.mxu0
    %v1620 = vadd.f32 0.0, %v1619
    %v1621 = vpop.f32.mrf.mxu0
    %1622 = vdwg.mxu0
    %v1623 = vadd.f32 %v1522, %v1610
    %v1624 = vadd.f32 %v1523, %v1612
    %v1625 = vadd.f32 %v1524, %v1615
    %v1626 = vadd.f32 %v1525, %v1617
    %v1627 = vadd.f32 %v1526, %v1620
    %v1628 = vld [vmem:[#allocation5 + $0x6] sm:$0xff]
    %v1629 = vld [vmem:[#allocation5 + $0xe] sm:$0xff]
    %v1630 = vld [vmem:[#allocation5 + $0x16] sm:$0xff]
    %v1631 = vld [vmem:[#allocation5 + $0x1e] sm:$0xff]
    %v1632 = vld [vmem:[#allocation5 + $0x26] sm:$0xff]
    %v1633 = vpack.c.bf16 %v1629, %v1628
    %v1634 = vpack.c.bf16 %v1631, %v1630
    %v1635 = vpack.c.bf16 %v1632, %v1632
    %s1636 = scalar_lea.vmem [#allocation12], 640
    %v1637 = vld [vmem:[%s1636] sm:$0xf]
    %v1638 = vld [vmem:[%s1636 + $0x4] sm:$0xf]
    %v1639 = vld [vmem:[%s1636 + $0x8] sm:$0xf]
    %v1640 = vld [vmem:[%s1636 + $0xc] sm:$0xf]
    %v1641 = vld [vmem:[%s1636 + $0x10] sm:$0xf]
    %v1642 = vld [vmem:[%s1636 + $0x14] sm:$0xf]
    %v1643 = vld [vmem:[%s1636 + $0x18] sm:$0xf]
    %v1644 = vld [vmem:[%s1636 + $0x1c] sm:$0xf]
    %v1645 = vld [vmem:[%s1636 + $0x20] sm:$0xf]
    %v1646 = vld [vmem:[%s1636 + $0x24] sm:$0xf]
    %v1647 = vld [vmem:[%s1636 + $0x28] sm:$0xf]
    %v1648 = vld [vmem:[%s1636 + $0x2c] sm:$0xf]
    %v1649 = vld [vmem:[%s1636 + $0x30] sm:$0xf]
    %v1650 = vld [vmem:[%s1636 + $0x34] sm:$0xf]
    %v1651 = vld [vmem:[%s1636 + $0x38] sm:$0xf]
    %v1652 = vld [vmem:[%s1636 + $0x3c] sm:$0xf]
    %v1669 = vunpack.c.l.b16 %v1637
    %v1670 = vunpack.c.l.b16 %v1638
    %v1671 = vunpack.c.l.b16 %v1639
    %v1672 = vunpack.c.l.b16 %v1640
    %v1673 = vunpack.c.l.b16 %v1641
    %v1674 = vunpack.c.l.b16 %v1642
    %v1675 = vunpack.c.l.b16 %v1643
    %v1676 = vunpack.c.l.b16 %v1644
    %v1677 = vunpack.c.l.b16 %v1645
    %v1678 = vunpack.c.l.b16 %v1646
    %v1679 = vunpack.c.l.b16 %v1647
    %v1680 = vunpack.c.l.b16 %v1648
    %v1681 = vunpack.c.l.b16 %v1649
    %v1682 = vunpack.c.l.b16 %v1650
    %v1683 = vunpack.c.l.b16 %v1651
    %v1684 = vunpack.c.l.b16 %v1652
    %v1685 = vpack.c.b16 %v1670, %v1669
    %v1686 = vpack.c.b16 %v1672, %v1671
    %v1687 = vpack.c.b16 %v1674, %v1673
    %v1688 = vpack.c.b16 %v1676, %v1675
    %v1689 = vpack.c.b16 %v1678, %v1677
    %v1690 = vpack.c.b16 %v1680, %v1679
    %v1691 = vpack.c.b16 %v1682, %v1681
    %v1692 = vpack.c.b16 %v1684, %v1683
    %1701 = vmatpush.bf16.msra.mxu0 %v1692
    %1702 = vmatpush.bf16.msra.mxu0 %v1691
    %1703 = vmatpush.bf16.msra.mxu0 %v1690
    %1704 = vmatpush.bf16.msra.mxu0 %v1689
    %1705 = vmatpush.bf16.msra.mxu0 %v1688
    %1706 = vmatpush.bf16.msra.mxu0 %v1687
    %1707 = vmatpush.bf16.msra.mxu0 %v1686
    %1708 = vmatpush.bf16.msra.mxu0 %v1685
    %1709 = vmatmul.bf16.gmra.mxu0 %v1633
    %v1710 = vpop.f32.mrf.mxu0
    %v1711 = vadd.f32 0.0, %v1710
    %v1712 = vpop.f32.mrf.mxu0
    %v1713 = vadd.f32 0.0, %v1712
    %1714 = vmatmul.bf16.gmra.mxu0 %v1634
    %v1715 = vpop.f32.mrf.mxu0
    %v1716 = vadd.f32 0.0, %v1715
    %v1717 = vpop.f32.mrf.mxu0
    %v1718 = vadd.f32 0.0, %v1717
    %1719 = vmatmul.bf16.gmra.mxu0 %v1635
    %v1720 = vpop.f32.mrf.mxu0
    %v1721 = vadd.f32 0.0, %v1720
    %v1722 = vpop.f32.mrf.mxu0
    %1723 = vdwg.mxu0
    %v1724 = vadd.f32 %v1623, %v1711
    %v1725 = vadd.f32 %v1624, %v1713
    %v1726 = vadd.f32 %v1625, %v1716
    %v1727 = vadd.f32 %v1626, %v1718
    %v1728 = vadd.f32 %v1627, %v1721
    %v1729 = vld [vmem:[#allocation15 + $0x6] sm:$0x1]
    %v1730 = vperm.slane %v1729, 0
    %v1731 = vadd.f32 %v1724, %v1730
    %v1732 = vadd.f32 %v1725, %v1730
    %v1733 = vadd.f32 %v1726, %v1730
    %v1734 = vadd.f32 %v1727, %v1730
    %v1735 = vadd.f32 %v1728, %v1730
    %v1736 = vmax.f32 %v1731, 0.0
    %v1737 = vmax.f32 %v1732, 0.0
    %v1738 = vmax.f32 %v1733, 0.0
    %v1739 = vmax.f32 %v1734, 0.0
    %v1740 = vmax.f32 %v1735, 0.0
    %v1746 = vrot.slane %v1736, 4
    %v1747 = vrot.slane %v1737, 4
    %v1748 = vsel %vm539, %v1746, %v1747
    %v1749 = vrot.slane %v1738, 4
    %v1750 = vsel %vm539, %v1747, %v1749
    %v1751 = vrot.slane %v1739, 4
    %v1752 = vsel %vm539, %v1749, %v1751
    %v1753 = vrot.slane %v1740, 4
    %v1754 = vsel %vm539, %v1751, %v1753
    %1761 = vst [vmem:[#allocation3 + $0x8] sm:$0xf0] %v1746
    %1762 = vst [vmem:[#allocation3 + $0x28] sm:$0xff] %v1748
    %1763 = vst [vmem:[#allocation3 + $0x48] sm:$0xff] %v1750
    %1764 = vst [vmem:[#allocation3 + $0x68] sm:$0xff] %v1752
    %1765 = vst [vmem:[#allocation3 + $0x88] sm:$0xff] %v1754
    %1766 = vst [vmem:[#allocation3 + $0xa8] sm:$0xf] %v1753
    %v1767 = vld [vmem:[#allocation3 + $0x8] sm:$0xf0]
    %v1768 = vld [vmem:[#allocation3 + $0x28] sm:$0xff]
    %v1769 = vld [vmem:[#allocation3 + $0x48] sm:$0xff]
    %v1770 = vld [vmem:[#allocation3 + $0x68] sm:$0xff]
    %v1771 = vld [vmem:[#allocation3 + $0x88] sm:$0xff]
    %v1772 = vld [vmem:[#allocation3 + $0xa8] sm:$0xf]
    %v1773 = vpack.c.bf16 %v1768, %v1767
    %v1774 = vpack.c.bf16 %v1770, %v1769
    %v1775 = vpack.c.bf16 %v1772, %v1771
    %s1776 = scalar_lea.vmem [#allocation12], 704
    %v1777 = vld [vmem:[%s1776] sm:$0xf]
    %v1778 = vld [vmem:[%s1776 + $0x4] sm:$0xf]
    %v1779 = vld [vmem:[%s1776 + $0x8] sm:$0xf]
    %v1780 = vld [vmem:[%s1776 + $0xc] sm:$0xf]
    %v1781 = vld [vmem:[%s1776 + $0x10] sm:$0xf]
    %v1782 = vld [vmem:[%s1776 + $0x14] sm:$0xf]
    %v1783 = vld [vmem:[%s1776 + $0x18] sm:$0xf]
    %v1784 = vld [vmem:[%s1776 + $0x1c] sm:$0xf]
    %v1785 = vld [vmem:[%s1776 + $0x20] sm:$0xf]
    %v1786 = vld [vmem:[%s1776 + $0x24] sm:$0xf]
    %v1787 = vld [vmem:[%s1776 + $0x28] sm:$0xf]
    %v1788 = vld [vmem:[%s1776 + $0x2c] sm:$0xf]
    %v1789 = vld [vmem:[%s1776 + $0x30] sm:$0xf]
    %v1790 = vld [vmem:[%s1776 + $0x34] sm:$0xf]
    %v1791 = vld [vmem:[%s1776 + $0x38] sm:$0xf]
    %v1792 = vld [vmem:[%s1776 + $0x3c] sm:$0xf]
    %v1793 = vld [vmem:[#allocation15 + $0x7] sm:$0x1]
    %v1794 = vperm.slane %v1793, 0
    %v1798 = vrot.slane %v1773, 2
    %v1799 = vrot.slane %v1774, 2
    %v1800 = vsel %vm608, %v1798, %v1799
    %v1801 = vrot.slane %v1775, 2
    %v1802 = vsel %vm608, %v1799, %v1801
    %v1822 = vunpack.c.l.b16 %v1777
    %v1823 = vunpack.c.l.b16 %v1778
    %v1824 = vunpack.c.l.b16 %v1779
    %v1825 = vunpack.c.l.b16 %v1780
    %v1826 = vunpack.c.l.b16 %v1781
    %v1827 = vunpack.c.l.b16 %v1782
    %v1828 = vunpack.c.l.b16 %v1783
    %v1829 = vunpack.c.l.b16 %v1784
    %v1830 = vunpack.c.l.b16 %v1785
    %v1831 = vunpack.c.l.b16 %v1786
    %v1832 = vunpack.c.l.b16 %v1787
    %v1833 = vunpack.c.l.b16 %v1788
    %v1834 = vunpack.c.l.b16 %v1789
    %v1835 = vunpack.c.l.b16 %v1790
    %v1836 = vunpack.c.l.b16 %v1791
    %v1837 = vunpack.c.l.b16 %v1792
    %v1838 = vpack.c.b16 %v1823, %v1822
    %v1839 = vpack.c.b16 %v1825, %v1824
    %v1840 = vpack.c.b16 %v1827, %v1826
    %v1841 = vpack.c.b16 %v1829, %v1828
    %v1842 = vpack.c.b16 %v1831, %v1830
    %v1843 = vpack.c.b16 %v1833, %v1832
    %v1844 = vpack.c.b16 %v1835, %v1834
    %v1845 = vpack.c.b16 %v1837, %v1836
    %1854 = vmatpush.bf16.msra.mxu0 %v1845
    %1855 = vmatpush.bf16.msra.mxu0 %v1844
    %1856 = vmatpush.bf16.msra.mxu0 %v1843
    %1857 = vmatpush.bf16.msra.mxu0 %v1842
    %1858 = vmatpush.bf16.msra.mxu0 %v1841
    %1859 = vmatpush.bf16.msra.mxu0 %v1840
    %1860 = vmatpush.bf16.msra.mxu0 %v1839
    %1861 = vmatpush.bf16.msra.mxu0 %v1838
    %1862 = vmatmul.bf16.gmra.mxu0 %v1800
    %v1863 = vpop.f32.mrf.mxu0
    %v1864 = vadd.f32 %v1794, %v1863
    %v1865 = vpop.f32.mrf.mxu0
    %v1866 = vadd.f32 %v1794, %v1865
    %1867 = vmatmul.bf16.gmra.mxu0 %v1802
    %v1868 = vpop.f32.mrf.mxu0
    %v1869 = vadd.f32 %v1794, %v1868
    %v1870 = vpop.f32.mrf.mxu0
    %v1871 = vadd.f32 %v1794, %v1870
    %1872 = vmatmul.bf16.gmra.mxu0 %v1801
    %v1873 = vpop.f32.mrf.mxu0
    %v1874 = vadd.f32 %v1794, %v1873
    %v1875 = vpop.f32.mrf.mxu0
    %1876 = vdwg.mxu0
    %v1877 = vmax.f32 %v1864, 0.0
    %v1878 = vmax.f32 %v1866, 0.0
    %v1879 = vmax.f32 %v1869, 0.0
    %v1880 = vmax.f32 %v1871, 0.0
    %v1881 = vmax.f32 %v1874, 0.0
    %1882 = vst [vmem:[#allocation4 + $0x4] sm:$0xff] %v1877
    %1883 = vst [vmem:[#allocation4 + $0xc] sm:$0xff] %v1878
    %1884 = vst [vmem:[#allocation4 + $0x14] sm:$0xff] %v1879
    %1885 = vst [vmem:[#allocation4 + $0x1c] sm:$0xff] %v1880
    %1886 = vst [vmem:[#allocation4 + $0x24] sm:$0xff] %v1881
    %v1887 = vld [vmem:[#allocation4 + $0x4] sm:$0xff]
    %v1888 = vld [vmem:[#allocation4 + $0xc] sm:$0xff]
    %v1889 = vld [vmem:[#allocation4 + $0x14] sm:$0xff]
    %v1890 = vld [vmem:[#allocation4 + $0x1c] sm:$0xff]
    %v1891 = vld [vmem:[#allocation4 + $0x24] sm:$0xff]
    %v1892 = vpack.c.bf16 %v1888, %v1887
    %v1893 = vpack.c.bf16 %v1890, %v1889
    %v1894 = vpack.c.bf16 %v1891, %v1891
    %s1895 = scalar_lea.vmem [#allocation12], 768
    %v1896 = vld [vmem:[%s1895] sm:$0xf]
    %v1897 = vld [vmem:[%s1895 + $0x4] sm:$0xf]
    %v1898 = vld [vmem:[%s1895 + $0x8] sm:$0xf]
    %v1899 = vld [vmem:[%s1895 + $0xc] sm:$0xf]
    %v1900 = vld [vmem:[%s1895 + $0x10] sm:$0xf]
    %v1901 = vld [vmem:[%s1895 + $0x14] sm:$0xf]
    %v1902 = vld [vmem:[%s1895 + $0x18] sm:$0xf]
    %v1903 = vld [vmem:[%s1895 + $0x1c] sm:$0xf]
    %v1904 = vld [vmem:[%s1895 + $0x20] sm:$0xf]
    %v1905 = vld [vmem:[%s1895 + $0x24] sm:$0xf]
    %v1906 = vld [vmem:[%s1895 + $0x28] sm:$0xf]
    %v1907 = vld [vmem:[%s1895 + $0x2c] sm:$0xf]
    %v1908 = vld [vmem:[%s1895 + $0x30] sm:$0xf]
    %v1909 = vld [vmem:[%s1895 + $0x34] sm:$0xf]
    %v1910 = vld [vmem:[%s1895 + $0x38] sm:$0xf]
    %v1911 = vld [vmem:[%s1895 + $0x3c] sm:$0xf]
    %v1912 = vld [vmem:[#allocation15 + $0x8] sm:$0x1]
    %v1913 = vperm.slane %v1912, 0
    %v1930 = vunpack.c.l.b16 %v1896
    %v1931 = vunpack.c.l.b16 %v1897
    %v1932 = vunpack.c.l.b16 %v1898
    %v1933 = vunpack.c.l.b16 %v1899
    %v1934 = vunpack.c.l.b16 %v1900
    %v1935 = vunpack.c.l.b16 %v1901
    %v1936 = vunpack.c.l.b16 %v1902
    %v1937 = vunpack.c.l.b16 %v1903
    %v1938 = vunpack.c.l.b16 %v1904
    %v1939 = vunpack.c.l.b16 %v1905
    %v1940 = vunpack.c.l.b16 %v1906
    %v1941 = vunpack.c.l.b16 %v1907
    %v1942 = vunpack.c.l.b16 %v1908
    %v1943 = vunpack.c.l.b16 %v1909
    %v1944 = vunpack.c.l.b16 %v1910
    %v1945 = vunpack.c.l.b16 %v1911
    %v1946 = vpack.c.b16 %v1931, %v1930
    %v1947 = vpack.c.b16 %v1933, %v1932
    %v1948 = vpack.c.b16 %v1935, %v1934
    %v1949 = vpack.c.b16 %v1937, %v1936
    %v1950 = vpack.c.b16 %v1939, %v1938
    %v1951 = vpack.c.b16 %v1941, %v1940
    %v1952 = vpack.c.b16 %v1943, %v1942
    %v1953 = vpack.c.b16 %v1945, %v1944
    %1962 = vmatpush.bf16.msra.mxu0 %v1953
    %1963 = vmatpush.bf16.msra.mxu0 %v1952
    %1964 = vmatpush.bf16.msra.mxu0 %v1951
    %1965 = vmatpush.bf16.msra.mxu0 %v1950
    %1966 = vmatpush.bf16.msra.mxu0 %v1949
    %1967 = vmatpush.bf16.msra.mxu0 %v1948
    %1968 = vmatpush.bf16.msra.mxu0 %v1947
    %1969 = vmatpush.bf16.msra.mxu0 %v1946
    %1970 = vmatmul.bf16.gmra.mxu0 %v1892
    %v1971 = vpop.f32.mrf.mxu0
    %v1972 = vadd.f32 %v1913, %v1971
    %v1973 = vpop.f32.mrf.mxu0
    %v1974 = vadd.f32 %v1913, %v1973
    %1975 = vmatmul.bf16.gmra.mxu0 %v1893
    %v1976 = vpop.f32.mrf.mxu0
    %v1977 = vadd.f32 %v1913, %v1976
    %v1978 = vpop.f32.mrf.mxu0
    %v1979 = vadd.f32 %v1913, %v1978
    %1980 = vmatmul.bf16.gmra.mxu0 %v1894
    %v1981 = vpop.f32.mrf.mxu0
    %v1982 = vadd.f32 %v1913, %v1981
    %v1983 = vpop.f32.mrf.mxu0
    %1984 = vdwg.mxu0
    %v1985 = vmax.f32 %v1972, 0.0
    %v1986 = vmax.f32 %v1974, 0.0
    %v1987 = vmax.f32 %v1977, 0.0
    %v1988 = vmax.f32 %v1979, 0.0
    %v1989 = vmax.f32 %v1982, 0.0
    %v1990 = vmul.f32 %v1985, %v172
    %v1991 = vmul.f32 %v1986, %v173
    %v1992 = vmul.f32 %v1987, %v174
    %v1993 = vmul.f32 %v1988, %v175
    %v1994 = vmul.f32 %v1989, %v176
    %1995 = vst [vmem:[#allocation5 + $0x4] sm:$0xff] %v1990
    %1996 = vst [vmem:[#allocation5 + $0xc] sm:$0xff] %v1991
    %1997 = vst [vmem:[#allocation5 + $0x14] sm:$0xff] %v1992
    %1998 = vst [vmem:[#allocation5 + $0x1c] sm:$0xff] %v1993
    %1999 = vst [vmem:[#allocation5 + $0x24] sm:$0xff] %v1994
    %v2000 = vld [vmem:[#allocation5 + $0x2] sm:$0xff]
    %v2001 = vld [vmem:[#allocation5 + $0xa] sm:$0xff]
    %v2002 = vld [vmem:[#allocation5 + $0x12] sm:$0xff]
    %v2003 = vld [vmem:[#allocation5 + $0x1a] sm:$0xff]
    %v2004 = vld [vmem:[#allocation5 + $0x22] sm:$0xff]
    %v2005 = vpack.c.bf16 %v2001, %v2000
    %v2006 = vpack.c.bf16 %v2003, %v2002
    %v2007 = vpack.c.bf16 %v2004, %v2004
    %s2008 = scalar_lea.vmem [#allocation12], 832
    %v2009 = vld [vmem:[%s2008] sm:$0xf]
    %v2010 = vld [vmem:[%s2008 + $0x4] sm:$0xf]
    %v2011 = vld [vmem:[%s2008 + $0x8] sm:$0xf]
    %v2012 = vld [vmem:[%s2008 + $0xc] sm:$0xf]
    %v2013 = vld [vmem:[%s2008 + $0x10] sm:$0xf]
    %v2014 = vld [vmem:[%s2008 + $0x14] sm:$0xf]
    %v2015 = vld [vmem:[%s2008 + $0x18] sm:$0xf]
    %v2016 = vld [vmem:[%s2008 + $0x1c] sm:$0xf]
    %v2017 = vld [vmem:[%s2008 + $0x20] sm:$0xf]
    %v2018 = vld [vmem:[%s2008 + $0x24] sm:$0xf]
    %v2019 = vld [vmem:[%s2008 + $0x28] sm:$0xf]
    %v2020 = vld [vmem:[%s2008 + $0x2c] sm:$0xf]
    %v2021 = vld [vmem:[%s2008 + $0x30] sm:$0xf]
    %v2022 = vld [vmem:[%s2008 + $0x34] sm:$0xf]
    %v2023 = vld [vmem:[%s2008 + $0x38] sm:$0xf]
    %v2024 = vld [vmem:[%s2008 + $0x3c] sm:$0xf]
    %v2025 = vld [vmem:[#allocation5 + $0x3] sm:$0xff]
    %v2026 = vld [vmem:[#allocation5 + $0xb] sm:$0xff]
    %v2027 = vld [vmem:[#allocation5 + $0x13] sm:$0xff]
    %v2028 = vld [vmem:[#allocation5 + $0x1b] sm:$0xff]
    %v2029 = vld [vmem:[#allocation5 + $0x23] sm:$0xff]
    %v2030 = vpack.c.bf16 %v2026, %v2025
    %v2031 = vpack.c.bf16 %v2028, %v2027
    %v2032 = vpack.c.bf16 %v2029, %v2029
    %s2033 = scalar_lea.vmem [#allocation12], 896
    %v2034 = vld [vmem:[%s2033] sm:$0xf]
    %v2035 = vld [vmem:[%s2033 + $0x4] sm:$0xf]
    %v2036 = vld [vmem:[%s2033 + $0x8] sm:$0xf]
    %v2037 = vld [vmem:[%s2033 + $0xc] sm:$0xf]
    %v2038 = vld [vmem:[%s2033 + $0x10] sm:$0xf]
    %v2039 = vld [vmem:[%s2033 + $0x14] sm:$0xf]
    %v2040 = vld [vmem:[%s2033 + $0x18] sm:$0xf]
    %v2041 = vld [vmem:[%s2033 + $0x1c] sm:$0xf]
    %v2042 = vld [vmem:[%s2033 + $0x20] sm:$0xf]
    %v2043 = vld [vmem:[%s2033 + $0x24] sm:$0xf]
    %v2044 = vld [vmem:[%s2033 + $0x28] sm:$0xf]
    %v2045 = vld [vmem:[%s2033 + $0x2c] sm:$0xf]
    %v2046 = vld [vmem:[%s2033 + $0x30] sm:$0xf]
    %v2047 = vld [vmem:[%s2033 + $0x34] sm:$0xf]
    %v2048 = vld [vmem:[%s2033 + $0x38] sm:$0xf]
    %v2049 = vld [vmem:[%s2033 + $0x3c] sm:$0xf]
    %v2066 = vunpack.c.l.b16 %v2034
    %v2067 = vunpack.c.l.b16 %v2035
    %v2068 = vunpack.c.l.b16 %v2036
    %v2069 = vunpack.c.l.b16 %v2037
    %v2070 = vunpack.c.l.b16 %v2038
    %v2071 = vunpack.c.l.b16 %v2039
    %v2072 = vunpack.c.l.b16 %v2040
    %v2073 = vunpack.c.l.b16 %v2041
    %v2074 = vunpack.c.l.b16 %v2042
    %v2075 = vunpack.c.l.b16 %v2043
    %v2076 = vunpack.c.l.b16 %v2044
    %v2077 = vunpack.c.l.b16 %v2045
    %v2078 = vunpack.c.l.b16 %v2046
    %v2079 = vunpack.c.l.b16 %v2047
    %v2080 = vunpack.c.l.b16 %v2048
    %v2081 = vunpack.c.l.b16 %v2049
    %v2082 = vpack.c.b16 %v2067, %v2066
    %v2083 = vpack.c.b16 %v2069, %v2068
    %v2084 = vpack.c.b16 %v2071, %v2070
    %v2085 = vpack.c.b16 %v2073, %v2072
    %v2086 = vpack.c.b16 %v2075, %v2074
    %v2087 = vpack.c.b16 %v2077, %v2076
    %v2088 = vpack.c.b16 %v2079, %v2078
    %v2089 = vpack.c.b16 %v2081, %v2080
    %2098 = vmatpush.bf16.msra.mxu0 %v2089
    %2099 = vmatpush.bf16.msra.mxu0 %v2088
    %2100 = vmatpush.bf16.msra.mxu0 %v2087
    %2101 = vmatpush.bf16.msra.mxu0 %v2086
    %2102 = vmatpush.bf16.msra.mxu0 %v2085
    %2103 = vmatpush.bf16.msra.mxu0 %v2084
    %2104 = vmatpush.bf16.msra.mxu0 %v2083
    %2105 = vmatpush.bf16.msra.mxu0 %v2082
    %2106 = vmatmul.bf16.gmra.mxu0 %v2030
    %v2107 = vpop.f32.mrf.mxu0
    %v2108 = vadd.f32 0.0, %v2107
    %v2109 = vpop.f32.mrf.mxu0
    %v2110 = vadd.f32 0.0, %v2109
    %2111 = vmatmul.bf16.gmra.mxu0 %v2031
    %v2112 = vpop.f32.mrf.mxu0
    %v2113 = vadd.f32 0.0, %v2112
    %v2114 = vpop.f32.mrf.mxu0
    %v2115 = vadd.f32 0.0, %v2114
    %2116 = vmatmul.bf16.gmra.mxu0 %v2032
    %v2117 = vpop.f32.mrf.mxu0
    %v2118 = vadd.f32 0.0, %v2117
    %v2119 = vpop.f32.mrf.mxu0
    %2120 = vdwg.mxu0
    %v2137 = vunpack.c.l.b16 %v2009
    %v2138 = vunpack.c.l.b16 %v2010
    %v2139 = vunpack.c.l.b16 %v2011
    %v2140 = vunpack.c.l.b16 %v2012
    %v2141 = vunpack.c.l.b16 %v2013
    %v2142 = vunpack.c.l.b16 %v2014
    %v2143 = vunpack.c.l.b16 %v2015
    %v2144 = vunpack.c.l.b16 %v2016
    %v2145 = vunpack.c.l.b16 %v2017
    %v2146 = vunpack.c.l.b16 %v2018
    %v2147 = vunpack.c.l.b16 %v2019
    %v2148 = vunpack.c.l.b16 %v2020
    %v2149 = vunpack.c.l.b16 %v2021
    %v2150 = vunpack.c.l.b16 %v2022
    %v2151 = vunpack.c.l.b16 %v2023
    %v2152 = vunpack.c.l.b16 %v2024
    %v2153 = vpack.c.b16 %v2138, %v2137
    %v2154 = vpack.c.b16 %v2140, %v2139
    %v2155 = vpack.c.b16 %v2142, %v2141
    %v2156 = vpack.c.b16 %v2144, %v2143
    %v2157 = vpack.c.b16 %v2146, %v2145
    %v2158 = vpack.c.b16 %v2148, %v2147
    %v2159 = vpack.c.b16 %v2150, %v2149
    %v2160 = vpack.c.b16 %v2152, %v2151
    %2169 = vmatpush.bf16.msra.mxu0 %v2160
    %2170 = vmatpush.bf16.msra.mxu0 %v2159
    %2171 = vmatpush.bf16.msra.mxu0 %v2158
    %2172 = vmatpush.bf16.msra.mxu0 %v2157
    %2173 = vmatpush.bf16.msra.mxu0 %v2156
    %2174 = vmatpush.bf16.msra.mxu0 %v2155
    %2175 = vmatpush.bf16.msra.mxu0 %v2154
    %2176 = vmatpush.bf16.msra.mxu0 %v2153
    %2177 = vmatmul.bf16.gmra.mxu0 %v2005
    %v2178 = vpop.f32.mrf.mxu0
    %v2179 = vadd.f32 %v2108, %v2178
    %v2180 = vpop.f32.mrf.mxu0
    %v2181 = vadd.f32 %v2110, %v2180
    %2182 = vmatmul.bf16.gmra.mxu0 %v2006
    %v2183 = vpop.f32.mrf.mxu0
    %v2184 = vadd.f32 %v2113, %v2183
    %v2185 = vpop.f32.mrf.mxu0
    %v2186 = vadd.f32 %v2115, %v2185
    %2187 = vmatmul.bf16.gmra.mxu0 %v2007
    %v2188 = vpop.f32.mrf.mxu0
    %v2189 = vadd.f32 %v2118, %v2188
    %v2190 = vpop.f32.mrf.mxu0
    %2191 = vdwg.mxu0
    %v2192 = vld [vmem:[#allocation5 + $0x4] sm:$0xff]
    %v2193 = vld [vmem:[#allocation5 + $0xc] sm:$0xff]
    %v2194 = vld [vmem:[#allocation5 + $0x14] sm:$0xff]
    %v2195 = vld [vmem:[#allocation5 + $0x1c] sm:$0xff]
    %v2196 = vld [vmem:[#allocation5 + $0x24] sm:$0xff]
    %v2197 = vpack.c.bf16 %v2193, %v2192
    %v2198 = vpack.c.bf16 %v2195, %v2194
    %v2199 = vpack.c.bf16 %v2196, %v2196
    %s2200 = scalar_lea.vmem [#allocation12], 960
    %v2201 = vld [vmem:[%s2200] sm:$0xf]
    %v2202 = vld [vmem:[%s2200 + $0x4] sm:$0xf]
    %v2203 = vld [vmem:[%s2200 + $0x8] sm:$0xf]
    %v2204 = vld [vmem:[%s2200 + $0xc] sm:$0xf]
    %v2205 = vld [vmem:[%s2200 + $0x10] sm:$0xf]
    %v2206 = vld [vmem:[%s2200 + $0x14] sm:$0xf]
    %v2207 = vld [vmem:[%s2200 + $0x18] sm:$0xf]
    %v2208 = vld [vmem:[%s2200 + $0x1c] sm:$0xf]
    %v2209 = vld [vmem:[%s2200 + $0x20] sm:$0xf]
    %v2210 = vld [vmem:[%s2200 + $0x24] sm:$0xf]
    %v2211 = vld [vmem:[%s2200 + $0x28] sm:$0xf]
    %v2212 = vld [vmem:[%s2200 + $0x2c] sm:$0xf]
    %v2213 = vld [vmem:[%s2200 + $0x30] sm:$0xf]
    %v2214 = vld [vmem:[%s2200 + $0x34] sm:$0xf]
    %v2215 = vld [vmem:[%s2200 + $0x38] sm:$0xf]
    %v2216 = vld [vmem:[%s2200 + $0x3c] sm:$0xf]
    %v2233 = vunpack.c.l.b16 %v2201
    %v2234 = vunpack.c.l.b16 %v2202
    %v2235 = vunpack.c.l.b16 %v2203
    %v2236 = vunpack.c.l.b16 %v2204
    %v2237 = vunpack.c.l.b16 %v2205
    %v2238 = vunpack.c.l.b16 %v2206
    %v2239 = vunpack.c.l.b16 %v2207
    %v2240 = vunpack.c.l.b16 %v2208
    %v2241 = vunpack.c.l.b16 %v2209
    %v2242 = vunpack.c.l.b16 %v2210
    %v2243 = vunpack.c.l.b16 %v2211
    %v2244 = vunpack.c.l.b16 %v2212
    %v2245 = vunpack.c.l.b16 %v2213
    %v2246 = vunpack.c.l.b16 %v2214
    %v2247 = vunpack.c.l.b16 %v2215
    %v2248 = vunpack.c.l.b16 %v2216
    %v2249 = vpack.c.b16 %v2234, %v2233
    %v2250 = vpack.c.b16 %v2236, %v2235
    %v2251 = vpack.c.b16 %v2238, %v2237
    %v2252 = vpack.c.b16 %v2240, %v2239
    %v2253 = vpack.c.b16 %v2242, %v2241
    %v2254 = vpack.c.b16 %v2244, %v2243
    %v2255 = vpack.c.b16 %v2246, %v2245
    %v2256 = vpack.c.b16 %v2248, %v2247
    %2265 = vmatpush.bf16.msra.mxu0 %v2256
    %2266 = vmatpush.bf16.msra.mxu0 %v2255
    %2267 = vmatpush.bf16.msra.mxu0 %v2254
    %2268 = vmatpush.bf16.msra.mxu0 %v2253
    %2269 = vmatpush.bf16.msra.mxu0 %v2252
    %2270 = vmatpush.bf16.msra.mxu0 %v2251
    %2271 = vmatpush.bf16.msra.mxu0 %v2250
    %2272 = vmatpush.bf16.msra.mxu0 %v2249
    %2273 = vmatmul.bf16.gmra.mxu0 %v2197
    %v2274 = vpop.f32.mrf.mxu0
    %v2275 = vadd.f32 0.0, %v2274
    %v2276 = vpop.f32.mrf.mxu0
    %v2277 = vadd.f32 0.0, %v2276
    %2278 = vmatmul.bf16.gmra.mxu0 %v2198
    %v2279 = vpop.f32.mrf.mxu0
    %v2280 = vadd.f32 0.0, %v2279
    %v2281 = vpop.f32.mrf.mxu0
    %v2282 = vadd.f32 0.0, %v2281
    %2283 = vmatmul.bf16.gmra.mxu0 %v2199
    %v2284 = vpop.f32.mrf.mxu0
    %v2285 = vadd.f32 0.0, %v2284
    %v2286 = vpop.f32.mrf.mxu0
    %2287 = vdwg.mxu0
    %v2288 = vadd.f32 %v2179, %v2275
    %v2289 = vadd.f32 %v2181, %v2277
    %v2290 = vadd.f32 %v2184, %v2280
    %v2291 = vadd.f32 %v2186, %v2282
    %v2292 = vadd.f32 %v2189, %v2285
    %v2293 = vld [vmem:[#allocation5 + $0x5] sm:$0xff]
    %v2294 = vld [vmem:[#allocation5 + $0xd] sm:$0xff]
    %v2295 = vld [vmem:[#allocation5 + $0x15] sm:$0xff]
    %v2296 = vld [vmem:[#allocation5 + $0x1d] sm:$0xff]
    %v2297 = vld [vmem:[#allocation5 + $0x25] sm:$0xff]
    %v2298 = vpack.c.bf16 %v2294, %v2293
    %v2299 = vpack.c.bf16 %v2296, %v2295
    %v2300 = vpack.c.bf16 %v2297, %v2297
    %s2301 = scalar_lea.vmem [#allocation12], 1024
    %v2302 = vld [vmem:[%s2301] sm:$0xf]
    %v2303 = vld [vmem:[%s2301 + $0x4] sm:$0xf]
    %v2304 = vld [vmem:[%s2301 + $0x8] sm:$0xf]
    %v2305 = vld [vmem:[%s2301 + $0xc] sm:$0xf]
    %v2306 = vld [vmem:[%s2301 + $0x10] sm:$0xf]
    %v2307 = vld [vmem:[%s2301 + $0x14] sm:$0xf]
    %v2308 = vld [vmem:[%s2301 + $0x18] sm:$0xf]
    %v2309 = vld [vmem:[%s2301 + $0x1c] sm:$0xf]
    %v2310 = vld [vmem:[%s2301 + $0x20] sm:$0xf]
    %v2311 = vld [vmem:[%s2301 + $0x24] sm:$0xf]
    %v2312 = vld [vmem:[%s2301 + $0x28] sm:$0xf]
    %v2313 = vld [vmem:[%s2301 + $0x2c] sm:$0xf]
    %v2314 = vld [vmem:[%s2301 + $0x30] sm:$0xf]
    %v2315 = vld [vmem:[%s2301 + $0x34] sm:$0xf]
    %v2316 = vld [vmem:[%s2301 + $0x38] sm:$0xf]
    %v2317 = vld [vmem:[%s2301 + $0x3c] sm:$0xf]
    %v2334 = vunpack.c.l.b16 %v2302
    %v2335 = vunpack.c.l.b16 %v2303
    %v2336 = vunpack.c.l.b16 %v2304
    %v2337 = vunpack.c.l.b16 %v2305
    %v2338 = vunpack.c.l.b16 %v2306
    %v2339 = vunpack.c.l.b16 %v2307
    %v2340 = vunpack.c.l.b16 %v2308
    %v2341 = vunpack.c.l.b16 %v2309
    %v2342 = vunpack.c.l.b16 %v2310
    %v2343 = vunpack.c.l.b16 %v2311
    %v2344 = vunpack.c.l.b16 %v2312
    %v2345 = vunpack.c.l.b16 %v2313
    %v2346 = vunpack.c.l.b16 %v2314
    %v2347 = vunpack.c.l.b16 %v2315
    %v2348 = vunpack.c.l.b16 %v2316
    %v2349 = vunpack.c.l.b16 %v2317
    %v2350 = vpack.c.b16 %v2335, %v2334
    %v2351 = vpack.c.b16 %v2337, %v2336
    %v2352 = vpack.c.b16 %v2339, %v2338
    %v2353 = vpack.c.b16 %v2341, %v2340
    %v2354 = vpack.c.b16 %v2343, %v2342
    %v2355 = vpack.c.b16 %v2345, %v2344
    %v2356 = vpack.c.b16 %v2347, %v2346
    %v2357 = vpack.c.b16 %v2349, %v2348
    %2366 = vmatpush.bf16.msra.mxu0 %v2357
    %2367 = vmatpush.bf16.msra.mxu0 %v2356
    %2368 = vmatpush.bf16.msra.mxu0 %v2355
    %2369 = vmatpush.bf16.msra.mxu0 %v2354
    %2370 = vmatpush.bf16.msra.mxu0 %v2353
    %2371 = vmatpush.bf16.msra.mxu0 %v2352
    %2372 = vmatpush.bf16.msra.mxu0 %v2351
    %2373 = vmatpush.bf16.msra.mxu0 %v2350
    %2374 = vmatmul.bf16.gmra.mxu0 %v2298
    %v2375 = vpop.f32.mrf.mxu0
    %v2376 = vadd.f32 0.0, %v2375
    %v2377 = vpop.f32.mrf.mxu0
    %v2378 = vadd.f32 0.0, %v2377
    %2379 = vmatmul.bf16.gmra.mxu0 %v2299
    %v2380 = vpop.f32.mrf.mxu0
    %v2381 = vadd.f32 0.0, %v2380
    %v2382 = vpop.f32.mrf.mxu0
    %v2383 = vadd.f32 0.0, %v2382
    %2384 = vmatmul.bf16.gmra.mxu0 %v2300
    %v2385 = vpop.f32.mrf.mxu0
    %v2386 = vadd.f32 0.0, %v2385
    %v2387 = vpop.f32.mrf.mxu0
    %2388 = vdwg.mxu0
    %v2389 = vadd.f32 %v2288, %v2376
    %v2390 = vadd.f32 %v2289, %v2378
    %v2391 = vadd.f32 %v2290, %v2381
    %v2392 = vadd.f32 %v2291, %v2383
    %v2393 = vadd.f32 %v2292, %v2386
    %v2394 = vld [vmem:[#allocation5 + $0x6] sm:$0xff]
    %v2395 = vld [vmem:[#allocation5 + $0xe] sm:$0xff]
    %v2396 = vld [vmem:[#allocation5 + $0x16] sm:$0xff]
    %v2397 = vld [vmem:[#allocation5 + $0x1e] sm:$0xff]
    %v2398 = vld [vmem:[#allocation5 + $0x26] sm:$0xff]
    %v2399 = vpack.c.bf16 %v2395, %v2394
    %v2400 = vpack.c.bf16 %v2397, %v2396
    %v2401 = vpack.c.bf16 %v2398, %v2398
    %s2402 = scalar_lea.vmem [#allocation12], 1088
    %v2403 = vld [vmem:[%s2402] sm:$0xf]
    %v2404 = vld [vmem:[%s2402 + $0x4] sm:$0xf]
    %v2405 = vld [vmem:[%s2402 + $0x8] sm:$0xf]
    %v2406 = vld [vmem:[%s2402 + $0xc] sm:$0xf]
    %v2407 = vld [vmem:[%s2402 + $0x10] sm:$0xf]
    %v2408 = vld [vmem:[%s2402 + $0x14] sm:$0xf]
    %v2409 = vld [vmem:[%s2402 + $0x18] sm:$0xf]
    %v2410 = vld [vmem:[%s2402 + $0x1c] sm:$0xf]
    %v2411 = vld [vmem:[%s2402 + $0x20] sm:$0xf]
    %v2412 = vld [vmem:[%s2402 + $0x24] sm:$0xf]
    %v2413 = vld [vmem:[%s2402 + $0x28] sm:$0xf]
    %v2414 = vld [vmem:[%s2402 + $0x2c] sm:$0xf]
    %v2415 = vld [vmem:[%s2402 + $0x30] sm:$0xf]
    %v2416 = vld [vmem:[%s2402 + $0x34] sm:$0xf]
    %v2417 = vld [vmem:[%s2402 + $0x38] sm:$0xf]
    %v2418 = vld [vmem:[%s2402 + $0x3c] sm:$0xf]
    %v2435 = vunpack.c.l.b16 %v2403
    %v2436 = vunpack.c.l.b16 %v2404
    %v2437 = vunpack.c.l.b16 %v2405
    %v2438 = vunpack.c.l.b16 %v2406
    %v2439 = vunpack.c.l.b16 %v2407
    %v2440 = vunpack.c.l.b16 %v2408
    %v2441 = vunpack.c.l.b16 %v2409
    %v2442 = vunpack.c.l.b16 %v2410
    %v2443 = vunpack.c.l.b16 %v2411
    %v2444 = vunpack.c.l.b16 %v2412
    %v2445 = vunpack.c.l.b16 %v2413
    %v2446 = vunpack.c.l.b16 %v2414
    %v2447 = vunpack.c.l.b16 %v2415
    %v2448 = vunpack.c.l.b16 %v2416
    %v2449 = vunpack.c.l.b16 %v2417
    %v2450 = vunpack.c.l.b16 %v2418
    %v2451 = vpack.c.b16 %v2436, %v2435
    %v2452 = vpack.c.b16 %v2438, %v2437
    %v2453 = vpack.c.b16 %v2440, %v2439
    %v2454 = vpack.c.b16 %v2442, %v2441
    %v2455 = vpack.c.b16 %v2444, %v2443
    %v2456 = vpack.c.b16 %v2446, %v2445
    %v2457 = vpack.c.b16 %v2448, %v2447
    %v2458 = vpack.c.b16 %v2450, %v2449
    %2467 = vmatpush.bf16.msra.mxu0 %v2458
    %2468 = vmatpush.bf16.msra.mxu0 %v2457
    %2469 = vmatpush.bf16.msra.mxu0 %v2456
    %2470 = vmatpush.bf16.msra.mxu0 %v2455
    %2471 = vmatpush.bf16.msra.mxu0 %v2454
    %2472 = vmatpush.bf16.msra.mxu0 %v2453
    %2473 = vmatpush.bf16.msra.mxu0 %v2452
    %2474 = vmatpush.bf16.msra.mxu0 %v2451
    %2475 = vmatmul.bf16.gmra.mxu0 %v2399
    %v2476 = vpop.f32.mrf.mxu0
    %v2477 = vadd.f32 0.0, %v2476
    %v2478 = vpop.f32.mrf.mxu0
    %v2479 = vadd.f32 0.0, %v2478
    %2480 = vmatmul.bf16.gmra.mxu0 %v2400
    %v2481 = vpop.f32.mrf.mxu0
    %v2482 = vadd.f32 0.0, %v2481
    %v2483 = vpop.f32.mrf.mxu0
    %v2484 = vadd.f32 0.0, %v2483
    %2485 = vmatmul.bf16.gmra.mxu0 %v2401
    %v2486 = vpop.f32.mrf.mxu0
    %v2487 = vadd.f32 0.0, %v2486
    %v2488 = vpop.f32.mrf.mxu0
    %2489 = vdwg.mxu0
    %v2490 = vadd.f32 %v2389, %v2477
    %v2491 = vadd.f32 %v2390, %v2479
    %v2492 = vadd.f32 %v2391, %v2482
    %v2493 = vadd.f32 %v2392, %v2484
    %v2494 = vadd.f32 %v2393, %v2487
    %v2495 = vld [vmem:[#allocation15 + $0x9] sm:$0x1]
    %v2496 = vperm.slane %v2495, 0
    %v2497 = vadd.f32 %v2490, %v2496
    %v2498 = vadd.f32 %v2491, %v2496
    %v2499 = vadd.f32 %v2492, %v2496
    %v2500 = vadd.f32 %v2493, %v2496
    %v2501 = vadd.f32 %v2494, %v2496
    %v2502 = vmax.f32 %v2497, 0.0
    %v2503 = vmax.f32 %v2498, 0.0
    %v2504 = vmax.f32 %v2499, 0.0
    %v2505 = vmax.f32 %v2500, 0.0
    %v2506 = vmax.f32 %v2501, 0.0
    %2507 = vst [vmem:[#allocation4 + $0x4] sm:$0xff] %v2502
    %2508 = vst [vmem:[#allocation4 + $0xc] sm:$0xff] %v2503
    %2509 = vst [vmem:[#allocation4 + $0x14] sm:$0xff] %v2504
    %2510 = vst [vmem:[#allocation4 + $0x1c] sm:$0xff] %v2505
    %2511 = vst [vmem:[#allocation4 + $0x24] sm:$0xff] %v2506
    %v2512 = vld [vmem:[#allocation4 + $0x4] sm:$0xff]
    %v2513 = vld [vmem:[#allocation4 + $0xc] sm:$0xff]
    %v2514 = vld [vmem:[#allocation4 + $0x14] sm:$0xff]
    %v2515 = vld [vmem:[#allocation4 + $0x1c] sm:$0xff]
    %v2516 = vld [vmem:[#allocation4 + $0x24] sm:$0xff]
    %v2517 = vpack.c.bf16 %v2513, %v2512
    %v2518 = vpack.c.bf16 %v2515, %v2514
    %v2519 = vpack.c.bf16 %v2516, %v2516
    %s2520 = scalar_lea.vmem [#allocation12], 1152
    %v2521 = vld [vmem:[%s2520] sm:$0xf]
    %v2522 = vld [vmem:[%s2520 + $0x4] sm:$0xf]
    %v2523 = vld [vmem:[%s2520 + $0x8] sm:$0xf]
    %v2524 = vld [vmem:[%s2520 + $0xc] sm:$0xf]
    %v2525 = vld [vmem:[%s2520 + $0x10] sm:$0xf]
    %v2526 = vld [vmem:[%s2520 + $0x14] sm:$0xf]
    %v2527 = vld [vmem:[%s2520 + $0x18] sm:$0xf]
    %v2528 = vld [vmem:[%s2520 + $0x1c] sm:$0xf]
    %v2529 = vld [vmem:[%s2520 + $0x20] sm:$0xf]
    %v2530 = vld [vmem:[%s2520 + $0x24] sm:$0xf]
    %v2531 = vld [vmem:[%s2520 + $0x28] sm:$0xf]
    %v2532 = vld [vmem:[%s2520 + $0x2c] sm:$0xf]
    %v2533 = vld [vmem:[%s2520 + $0x30] sm:$0xf]
    %v2534 = vld [vmem:[%s2520 + $0x34] sm:$0xf]
    %v2535 = vld [vmem:[%s2520 + $0x38] sm:$0xf]
    %v2536 = vld [vmem:[%s2520 + $0x3c] sm:$0xf]
    %v2537 = vld [vmem:[#allocation15 + $0xa] sm:$0x1]
    %v2538 = vperm.slane %v2537, 0
    %v2555 = vunpack.c.l.b16 %v2521
    %v2556 = vunpack.c.l.b16 %v2522
    %v2557 = vunpack.c.l.b16 %v2523
    %v2558 = vunpack.c.l.b16 %v2524
    %v2559 = vunpack.c.l.b16 %v2525
    %v2560 = vunpack.c.l.b16 %v2526
    %v2561 = vunpack.c.l.b16 %v2527
    %v2562 = vunpack.c.l.b16 %v2528
    %v2563 = vunpack.c.l.b16 %v2529
    %v2564 = vunpack.c.l.b16 %v2530
    %v2565 = vunpack.c.l.b16 %v2531
    %v2566 = vunpack.c.l.b16 %v2532
    %v2567 = vunpack.c.l.b16 %v2533
    %v2568 = vunpack.c.l.b16 %v2534
    %v2569 = vunpack.c.l.b16 %v2535
    %v2570 = vunpack.c.l.b16 %v2536
    %v2571 = vpack.c.b16 %v2556, %v2555
    %v2572 = vpack.c.b16 %v2558, %v2557
    %v2573 = vpack.c.b16 %v2560, %v2559
    %v2574 = vpack.c.b16 %v2562, %v2561
    %v2575 = vpack.c.b16 %v2564, %v2563
    %v2576 = vpack.c.b16 %v2566, %v2565
    %v2577 = vpack.c.b16 %v2568, %v2567
    %v2578 = vpack.c.b16 %v2570, %v2569
    %2587 = vmatpush.bf16.msra.mxu0 %v2578
    %2588 = vmatpush.bf16.msra.mxu0 %v2577
    %2589 = vmatpush.bf16.msra.mxu0 %v2576
    %2590 = vmatpush.bf16.msra.mxu0 %v2575
    %2591 = vmatpush.bf16.msra.mxu0 %v2574
    %2592 = vmatpush.bf16.msra.mxu0 %v2573
    %2593 = vmatpush.bf16.msra.mxu0 %v2572
    %2594 = vmatpush.bf16.msra.mxu0 %v2571
    %2595 = vmatmul.bf16.gmra.mxu0 %v2517
    %v2596 = vpop.f32.mrf.mxu0
    %v2597 = vadd.f32 %v2538, %v2596
    %v2598 = vpop.f32.mrf.mxu0
    %v2599 = vadd.f32 %v2538, %v2598
    %2600 = vmatmul.bf16.gmra.mxu0 %v2518
    %v2601 = vpop.f32.mrf.mxu0
    %v2602 = vadd.f32 %v2538, %v2601
    %v2603 = vpop.f32.mrf.mxu0
    %v2604 = vadd.f32 %v2538, %v2603
    %2605 = vmatmul.bf16.gmra.mxu0 %v2519
    %v2606 = vpop.f32.mrf.mxu0
    %v2607 = vadd.f32 %v2538, %v2606
    %v2608 = vpop.f32.mrf.mxu0
    %2609 = vdwg.mxu0
    %v2610 = vmax.f32 %v2597, 0.0
    %v2611 = vmax.f32 %v2599, 0.0
    %v2612 = vmax.f32 %v2602, 0.0
    %v2613 = vmax.f32 %v2604, 0.0
    %v2614 = vmax.f32 %v2607, 0.0
    %v2615 = vmul.f32 %v2610, %v172
    %v2616 = vmul.f32 %v2611, %v173
    %v2617 = vmul.f32 %v2612, %v174
    %v2618 = vmul.f32 %v2613, %v175
    %v2619 = vmul.f32 %v2614, %v176
    %2620 = vst [vmem:[#allocation5 + $0x4] sm:$0xff] %v2615
    %2621 = vst [vmem:[#allocation5 + $0xc] sm:$0xff] %v2616
    %2622 = vst [vmem:[#allocation5 + $0x14] sm:$0xff] %v2617
    %2623 = vst [vmem:[#allocation5 + $0x1c] sm:$0xff] %v2618
    %2624 = vst [vmem:[#allocation5 + $0x24] sm:$0xff] %v2619
    %v2625 = vld [vmem:[#allocation5 + $0x1] sm:$0xff]
    %v2626 = vld [vmem:[#allocation5 + $0x9] sm:$0xff]
    %v2627 = vld [vmem:[#allocation5 + $0x11] sm:$0xff]
    %v2628 = vld [vmem:[#allocation5 + $0x19] sm:$0xff]
    %v2629 = vld [vmem:[#allocation5 + $0x21] sm:$0xff]
    %v2630 = vpack.c.bf16 %v2626, %v2625
    %v2631 = vpack.c.bf16 %v2628, %v2627
    %v2632 = vpack.c.bf16 %v2629, %v2629
    %s2633 = scalar_lea.vmem [#allocation12], 1216
    %v2634 = vld [vmem:[%s2633] sm:$0xf]
    %v2635 = vld [vmem:[%s2633 + $0x4] sm:$0xf]
    %v2636 = vld [vmem:[%s2633 + $0x8] sm:$0xf]
    %v2637 = vld [vmem:[%s2633 + $0xc] sm:$0xf]
    %v2638 = vld [vmem:[%s2633 + $0x10] sm:$0xf]
    %v2639 = vld [vmem:[%s2633 + $0x14] sm:$0xf]
    %v2640 = vld [vmem:[%s2633 + $0x18] sm:$0xf]
    %v2641 = vld [vmem:[%s2633 + $0x1c] sm:$0xf]
    %v2642 = vld [vmem:[%s2633 + $0x20] sm:$0xf]
    %v2643 = vld [vmem:[%s2633 + $0x24] sm:$0xf]
    %v2644 = vld [vmem:[%s2633 + $0x28] sm:$0xf]
    %v2645 = vld [vmem:[%s2633 + $0x2c] sm:$0xf]
    %v2646 = vld [vmem:[%s2633 + $0x30] sm:$0xf]
    %v2647 = vld [vmem:[%s2633 + $0x34] sm:$0xf]
    %v2648 = vld [vmem:[%s2633 + $0x38] sm:$0xf]
    %v2649 = vld [vmem:[%s2633 + $0x3c] sm:$0xf]
    %v2650 = vld [vmem:[#allocation5 + $0x2] sm:$0xff]
    %v2651 = vld [vmem:[#allocation5 + $0xa] sm:$0xff]
    %v2652 = vld [vmem:[#allocation5 + $0x12] sm:$0xff]
    %v2653 = vld [vmem:[#allocation5 + $0x1a] sm:$0xff]
    %v2654 = vld [vmem:[#allocation5 + $0x22] sm:$0xff]
    %v2655 = vpack.c.bf16 %v2651, %v2650
    %v2656 = vpack.c.bf16 %v2653, %v2652
    %v2657 = vpack.c.bf16 %v2654, %v2654
    %s2658 = scalar_lea.vmem [#allocation12], 1280
    %v2659 = vld [vmem:[%s2658] sm:$0xf]
    %v2660 = vld [vmem:[%s2658 + $0x4] sm:$0xf]
    %v2661 = vld [vmem:[%s2658 + $0x8] sm:$0xf]
    %v2662 = vld [vmem:[%s2658 + $0xc] sm:$0xf]
    %v2663 = vld [vmem:[%s2658 + $0x10] sm:$0xf]
    %v2664 = vld [vmem:[%s2658 + $0x14] sm:$0xf]
    %v2665 = vld [vmem:[%s2658 + $0x18] sm:$0xf]
    %v2666 = vld [vmem:[%s2658 + $0x1c] sm:$0xf]
    %v2667 = vld [vmem:[%s2658 + $0x20] sm:$0xf]
    %v2668 = vld [vmem:[%s2658 + $0x24] sm:$0xf]
    %v2669 = vld [vmem:[%s2658 + $0x28] sm:$0xf]
    %v2670 = vld [vmem:[%s2658 + $0x2c] sm:$0xf]
    %v2671 = vld [vmem:[%s2658 + $0x30] sm:$0xf]
    %v2672 = vld [vmem:[%s2658 + $0x34] sm:$0xf]
    %v2673 = vld [vmem:[%s2658 + $0x38] sm:$0xf]
    %v2674 = vld [vmem:[%s2658 + $0x3c] sm:$0xf]
    %v2691 = vunpack.c.l.b16 %v2659
    %v2692 = vunpack.c.l.b16 %v2660
    %v2693 = vunpack.c.l.b16 %v2661
    %v2694 = vunpack.c.l.b16 %v2662
    %v2695 = vunpack.c.l.b16 %v2663
    %v2696 = vunpack.c.l.b16 %v2664
    %v2697 = vunpack.c.l.b16 %v2665
    %v2698 = vunpack.c.l.b16 %v2666
    %v2699 = vunpack.c.l.b16 %v2667
    %v2700 = vunpack.c.l.b16 %v2668
    %v2701 = vunpack.c.l.b16 %v2669
    %v2702 = vunpack.c.l.b16 %v2670
    %v2703 = vunpack.c.l.b16 %v2671
    %v2704 = vunpack.c.l.b16 %v2672
    %v2705 = vunpack.c.l.b16 %v2673
    %v2706 = vunpack.c.l.b16 %v2674
    %v2707 = vpack.c.b16 %v2692, %v2691
    %v2708 = vpack.c.b16 %v2694, %v2693
    %v2709 = vpack.c.b16 %v2696, %v2695
    %v2710 = vpack.c.b16 %v2698, %v2697
    %v2711 = vpack.c.b16 %v2700, %v2699
    %v2712 = vpack.c.b16 %v2702, %v2701
    %v2713 = vpack.c.b16 %v2704, %v2703
    %v2714 = vpack.c.b16 %v2706, %v2705
    %2723 = vmatpush.bf16.msra.mxu0 %v2714
    %2724 = vmatpush.bf16.msra.mxu0 %v2713
    %2725 = vmatpush.bf16.msra.mxu0 %v2712
    %2726 = vmatpush.bf16.msra.mxu0 %v2711
    %2727 = vmatpush.bf16.msra.mxu0 %v2710
    %2728 = vmatpush.bf16.msra.mxu0 %v2709
    %2729 = vmatpush.bf16.msra.mxu0 %v2708
    %2730 = vmatpush.bf16.msra.mxu0 %v2707
    %2731 = vmatmul.bf16.gmra.mxu0 %v2655
    %v2732 = vpop.f32.mrf.mxu0
    %v2733 = vadd.f32 0.0, %v2732
    %v2734 = vpop.f32.mrf.mxu0
    %v2735 = vadd.f32 0.0, %v2734
    %2736 = vmatmul.bf16.gmra.mxu0 %v2656
    %v2737 = vpop.f32.mrf.mxu0
    %v2738 = vadd.f32 0.0, %v2737
    %v2739 = vpop.f32.mrf.mxu0
    %v2740 = vadd.f32 0.0, %v2739
    %2741 = vmatmul.bf16.gmra.mxu0 %v2657
    %v2742 = vpop.f32.mrf.mxu0
    %v2743 = vadd.f32 0.0, %v2742
    %v2744 = vpop.f32.mrf.mxu0
    %2745 = vdwg.mxu0
    %v2762 = vunpack.c.l.b16 %v2634
    %v2763 = vunpack.c.l.b16 %v2635
    %v2764 = vunpack.c.l.b16 %v2636
    %v2765 = vunpack.c.l.b16 %v2637
    %v2766 = vunpack.c.l.b16 %v2638
    %v2767 = vunpack.c.l.b16 %v2639
    %v2768 = vunpack.c.l.b16 %v2640
    %v2769 = vunpack.c.l.b16 %v2641
    %v2770 = vunpack.c.l.b16 %v2642
    %v2771 = vunpack.c.l.b16 %v2643
    %v2772 = vunpack.c.l.b16 %v2644
    %v2773 = vunpack.c.l.b16 %v2645
    %v2774 = vunpack.c.l.b16 %v2646
    %v2775 = vunpack.c.l.b16 %v2647
    %v2776 = vunpack.c.l.b16 %v2648
    %v2777 = vunpack.c.l.b16 %v2649
    %v2778 = vpack.c.b16 %v2763, %v2762
    %v2779 = vpack.c.b16 %v2765, %v2764
    %v2780 = vpack.c.b16 %v2767, %v2766
    %v2781 = vpack.c.b16 %v2769, %v2768
    %v2782 = vpack.c.b16 %v2771, %v2770
    %v2783 = vpack.c.b16 %v2773, %v2772
    %v2784 = vpack.c.b16 %v2775, %v2774
    %v2785 = vpack.c.b16 %v2777, %v2776
    %2794 = vmatpush.bf16.msra.mxu0 %v2785
    %2795 = vmatpush.bf16.msra.mxu0 %v2784
    %2796 = vmatpush.bf16.msra.mxu0 %v2783
    %2797 = vmatpush.bf16.msra.mxu0 %v2782
    %2798 = vmatpush.bf16.msra.mxu0 %v2781
    %2799 = vmatpush.bf16.msra.mxu0 %v2780
    %2800 = vmatpush.bf16.msra.mxu0 %v2779
    %2801 = vmatpush.bf16.msra.mxu0 %v2778
    %2802 = vmatmul.bf16.gmra.mxu0 %v2630
    %v2803 = vpop.f32.mrf.mxu0
    %v2804 = vadd.f32 %v2733, %v2803
    %v2805 = vpop.f32.mrf.mxu0
    %v2806 = vadd.f32 %v2735, %v2805
    %2807 = vmatmul.bf16.gmra.mxu0 %v2631
    %v2808 = vpop.f32.mrf.mxu0
    %v2809 = vadd.f32 %v2738, %v2808
    %v2810 = vpop.f32.mrf.mxu0
    %v2811 = vadd.f32 %v2740, %v2810
    %2812 = vmatmul.bf16.gmra.mxu0 %v2632
    %v2813 = vpop.f32.mrf.mxu0
    %v2814 = vadd.f32 %v2743, %v2813
    %v2815 = vpop.f32.mrf.mxu0
    %2816 = vdwg.mxu0
    %v2817 = vld [vmem:[#allocation5 + $0x3] sm:$0xff]
    %v2818 = vld [vmem:[#allocation5 + $0xb] sm:$0xff]
    %v2819 = vld [vmem:[#allocation5 + $0x13] sm:$0xff]
    %v2820 = vld [vmem:[#allocation5 + $0x1b] sm:$0xff]
    %v2821 = vld [vmem:[#allocation5 + $0x23] sm:$0xff]
    %v2822 = vpack.c.bf16 %v2818, %v2817
    %v2823 = vpack.c.bf16 %v2820, %v2819
    %v2824 = vpack.c.bf16 %v2821, %v2821
    %s2825 = scalar_lea.vmem [#allocation12], 1344
    %v2826 = vld [vmem:[%s2825] sm:$0xf]
    %v2827 = vld [vmem:[%s2825 + $0x4] sm:$0xf]
    %v2828 = vld [vmem:[%s2825 + $0x8] sm:$0xf]
    %v2829 = vld [vmem:[%s2825 + $0xc] sm:$0xf]
    %v2830 = vld [vmem:[%s2825 + $0x10] sm:$0xf]
    %v2831 = vld [vmem:[%s2825 + $0x14] sm:$0xf]
    %v2832 = vld [vmem:[%s2825 + $0x18] sm:$0xf]
    %v2833 = vld [vmem:[%s2825 + $0x1c] sm:$0xf]
    %v2834 = vld [vmem:[%s2825 + $0x20] sm:$0xf]
    %v2835 = vld [vmem:[%s2825 + $0x24] sm:$0xf]
    %v2836 = vld [vmem:[%s2825 + $0x28] sm:$0xf]
    %v2837 = vld [vmem:[%s2825 + $0x2c] sm:$0xf]
    %v2838 = vld [vmem:[%s2825 + $0x30] sm:$0xf]
    %v2839 = vld [vmem:[%s2825 + $0x34] sm:$0xf]
    %v2840 = vld [vmem:[%s2825 + $0x38] sm:$0xf]
    %v2841 = vld [vmem:[%s2825 + $0x3c] sm:$0xf]
    %v2858 = vunpack.c.l.b16 %v2826
    %v2859 = vunpack.c.l.b16 %v2827
    %v2860 = vunpack.c.l.b16 %v2828
    %v2861 = vunpack.c.l.b16 %v2829
    %v2862 = vunpack.c.l.b16 %v2830
    %v2863 = vunpack.c.l.b16 %v2831
    %v2864 = vunpack.c.l.b16 %v2832
    %v2865 = vunpack.c.l.b16 %v2833
    %v2866 = vunpack.c.l.b16 %v2834
    %v2867 = vunpack.c.l.b16 %v2835
    %v2868 = vunpack.c.l.b16 %v2836
    %v2869 = vunpack.c.l.b16 %v2837
    %v2870 = vunpack.c.l.b16 %v2838
    %v2871 = vunpack.c.l.b16 %v2839
    %v2872 = vunpack.c.l.b16 %v2840
    %v2873 = vunpack.c.l.b16 %v2841
    %v2874 = vpack.c.b16 %v2859, %v2858
    %v2875 = vpack.c.b16 %v2861, %v2860
    %v2876 = vpack.c.b16 %v2863, %v2862
    %v2877 = vpack.c.b16 %v2865, %v2864
    %v2878 = vpack.c.b16 %v2867, %v2866
    %v2879 = vpack.c.b16 %v2869, %v2868
    %v2880 = vpack.c.b16 %v2871, %v2870
    %v2881 = vpack.c.b16 %v2873, %v2872
    %2890 = vmatpush.bf16.msra.mxu0 %v2881
    %2891 = vmatpush.bf16.msra.mxu0 %v2880
    %2892 = vmatpush.bf16.msra.mxu0 %v2879
    %2893 = vmatpush.bf16.msra.mxu0 %v2878
    %2894 = vmatpush.bf16.msra.mxu0 %v2877
    %2895 = vmatpush.bf16.msra.mxu0 %v2876
    %2896 = vmatpush.bf16.msra.mxu0 %v2875
    %2897 = vmatpush.bf16.msra.mxu0 %v2874
    %2898 = vmatmul.bf16.gmra.mxu0 %v2822
    %v2899 = vpop.f32.mrf.mxu0
    %v2900 = vadd.f32 0.0, %v2899
    %v2901 = vpop.f32.mrf.mxu0
    %v2902 = vadd.f32 0.0, %v2901
    %2903 = vmatmul.bf16.gmra.mxu0 %v2823
    %v2904 = vpop.f32.mrf.mxu0
    %v2905 = vadd.f32 0.0, %v2904
    %v2906 = vpop.f32.mrf.mxu0
    %v2907 = vadd.f32 0.0, %v2906
    %2908 = vmatmul.bf16.gmra.mxu0 %v2824
    %v2909 = vpop.f32.mrf.mxu0
    %v2910 = vadd.f32 0.0, %v2909
    %v2911 = vpop.f32.mrf.mxu0
    %2912 = vdwg.mxu0
    %v2913 = vadd.f32 %v2804, %v2900
    %v2914 = vadd.f32 %v2806, %v2902
    %v2915 = vadd.f32 %v2809, %v2905
    %v2916 = vadd.f32 %v2811, %v2907
    %v2917 = vadd.f32 %v2814, %v2910
    %v2918 = vld [vmem:[#allocation5 + $0x4] sm:$0xff]
    %v2919 = vld [vmem:[#allocation5 + $0xc] sm:$0xff]
    %v2920 = vld [vmem:[#allocation5 + $0x14] sm:$0xff]
    %v2921 = vld [vmem:[#allocation5 + $0x1c] sm:$0xff]
    %v2922 = vld [vmem:[#allocation5 + $0x24] sm:$0xff]
    %v2923 = vpack.c.bf16 %v2919, %v2918
    %v2924 = vpack.c.bf16 %v2921, %v2920
    %v2925 = vpack.c.bf16 %v2922, %v2922
    %s2926 = scalar_lea.vmem [#allocation12], 1408
    %v2927 = vld [vmem:[%s2926] sm:$0xf]
    %v2928 = vld [vmem:[%s2926 + $0x4] sm:$0xf]
    %v2929 = vld [vmem:[%s2926 + $0x8] sm:$0xf]
    %v2930 = vld [vmem:[%s2926 + $0xc] sm:$0xf]
    %v2931 = vld [vmem:[%s2926 + $0x10] sm:$0xf]
    %v2932 = vld [vmem:[%s2926 + $0x14] sm:$0xf]
    %v2933 = vld [vmem:[%s2926 + $0x18] sm:$0xf]
    %v2934 = vld [vmem:[%s2926 + $0x1c] sm:$0xf]
    %v2935 = vld [vmem:[%s2926 + $0x20] sm:$0xf]
    %v2936 = vld [vmem:[%s2926 + $0x24] sm:$0xf]
    %v2937 = vld [vmem:[%s2926 + $0x28] sm:$0xf]
    %v2938 = vld [vmem:[%s2926 + $0x2c] sm:$0xf]
    %v2939 = vld [vmem:[%s2926 + $0x30] sm:$0xf]
    %v2940 = vld [vmem:[%s2926 + $0x34] sm:$0xf]
    %v2941 = vld [vmem:[%s2926 + $0x38] sm:$0xf]
    %v2942 = vld [vmem:[%s2926 + $0x3c] sm:$0xf]
    %v2959 = vunpack.c.l.b16 %v2927
    %v2960 = vunpack.c.l.b16 %v2928
    %v2961 = vunpack.c.l.b16 %v2929
    %v2962 = vunpack.c.l.b16 %v2930
    %v2963 = vunpack.c.l.b16 %v2931
    %v2964 = vunpack.c.l.b16 %v2932
    %v2965 = vunpack.c.l.b16 %v2933
    %v2966 = vunpack.c.l.b16 %v2934
    %v2967 = vunpack.c.l.b16 %v2935
    %v2968 = vunpack.c.l.b16 %v2936
    %v2969 = vunpack.c.l.b16 %v2937
    %v2970 = vunpack.c.l.b16 %v2938
    %v2971 = vunpack.c.l.b16 %v2939
    %v2972 = vunpack.c.l.b16 %v2940
    %v2973 = vunpack.c.l.b16 %v2941
    %v2974 = vunpack.c.l.b16 %v2942
    %v2975 = vpack.c.b16 %v2960, %v2959
    %v2976 = vpack.c.b16 %v2962, %v2961
    %v2977 = vpack.c.b16 %v2964, %v2963
    %v2978 = vpack.c.b16 %v2966, %v2965
    %v2979 = vpack.c.b16 %v2968, %v2967
    %v2980 = vpack.c.b16 %v2970, %v2969
    %v2981 = vpack.c.b16 %v2972, %v2971
    %v2982 = vpack.c.b16 %v2974, %v2973
    %2991 = vmatpush.bf16.msra.mxu0 %v2982
    %2992 = vmatpush.bf16.msra.mxu0 %v2981
    %2993 = vmatpush.bf16.msra.mxu0 %v2980
    %2994 = vmatpush.bf16.msra.mxu0 %v2979
    %2995 = vmatpush.bf16.msra.mxu0 %v2978
    %2996 = vmatpush.bf16.msra.mxu0 %v2977
    %2997 = vmatpush.bf16.msra.mxu0 %v2976
    %2998 = vmatpush.bf16.msra.mxu0 %v2975
    %2999 = vmatmul.bf16.gmra.mxu0 %v2923
    %v3000 = vpop.f32.mrf.mxu0
    %v3001 = vadd.f32 0.0, %v3000
    %v3002 = vpop.f32.mrf.mxu0
    %v3003 = vadd.f32 0.0, %v3002
    %3004 = vmatmul.bf16.gmra.mxu0 %v2924
    %v3005 = vpop.f32.mrf.mxu0
    %v3006 = vadd.f32 0.0, %v3005
    %v3007 = vpop.f32.mrf.mxu0
    %v3008 = vadd.f32 0.0, %v3007
    %3009 = vmatmul.bf16.gmra.mxu0 %v2925
    %v3010 = vpop.f32.mrf.mxu0
    %v3011 = vadd.f32 0.0, %v3010
    %v3012 = vpop.f32.mrf.mxu0
    %3013 = vdwg.mxu0
    %v3014 = vadd.f32 %v2913, %v3001
    %v3015 = vadd.f32 %v2914, %v3003
    %v3016 = vadd.f32 %v2915, %v3006
    %v3017 = vadd.f32 %v2916, %v3008
    %v3018 = vadd.f32 %v2917, %v3011
    %v3019 = vld [vmem:[#allocation5 + $0x5] sm:$0xff]
    %v3020 = vld [vmem:[#allocation5 + $0xd] sm:$0xff]
    %v3021 = vld [vmem:[#allocation5 + $0x15] sm:$0xff]
    %v3022 = vld [vmem:[#allocation5 + $0x1d] sm:$0xff]
    %v3023 = vld [vmem:[#allocation5 + $0x25] sm:$0xff]
    %v3024 = vpack.c.bf16 %v3020, %v3019
    %v3025 = vpack.c.bf16 %v3022, %v3021
    %v3026 = vpack.c.bf16 %v3023, %v3023
    %s3027 = scalar_lea.vmem [#allocation12], 1472
    %v3028 = vld [vmem:[%s3027] sm:$0xf]
    %v3029 = vld [vmem:[%s3027 + $0x4] sm:$0xf]
    %v3030 = vld [vmem:[%s3027 + $0x8] sm:$0xf]
    %v3031 = vld [vmem:[%s3027 + $0xc] sm:$0xf]
    %v3032 = vld [vmem:[%s3027 + $0x10] sm:$0xf]
    %v3033 = vld [vmem:[%s3027 + $0x14] sm:$0xf]
    %v3034 = vld [vmem:[%s3027 + $0x18] sm:$0xf]
    %v3035 = vld [vmem:[%s3027 + $0x1c] sm:$0xf]
    %v3036 = vld [vmem:[%s3027 + $0x20] sm:$0xf]
    %v3037 = vld [vmem:[%s3027 + $0x24] sm:$0xf]
    %v3038 = vld [vmem:[%s3027 + $0x28] sm:$0xf]
    %v3039 = vld [vmem:[%s3027 + $0x2c] sm:$0xf]
    %v3040 = vld [vmem:[%s3027 + $0x30] sm:$0xf]
    %v3041 = vld [vmem:[%s3027 + $0x34] sm:$0xf]
    %v3042 = vld [vmem:[%s3027 + $0x38] sm:$0xf]
    %v3043 = vld [vmem:[%s3027 + $0x3c] sm:$0xf]
    %v3060 = vunpack.c.l.b16 %v3028
    %v3061 = vunpack.c.l.b16 %v3029
    %v3062 = vunpack.c.l.b16 %v3030
    %v3063 = vunpack.c.l.b16 %v3031
    %v3064 = vunpack.c.l.b16 %v3032
    %v3065 = vunpack.c.l.b16 %v3033
    %v3066 = vunpack.c.l.b16 %v3034
    %v3067 = vunpack.c.l.b16 %v3035
    %v3068 = vunpack.c.l.b16 %v3036
    %v3069 = vunpack.c.l.b16 %v3037
    %v3070 = vunpack.c.l.b16 %v3038
    %v3071 = vunpack.c.l.b16 %v3039
    %v3072 = vunpack.c.l.b16 %v3040
    %v3073 = vunpack.c.l.b16 %v3041
    %v3074 = vunpack.c.l.b16 %v3042
    %v3075 = vunpack.c.l.b16 %v3043
    %v3076 = vpack.c.b16 %v3061, %v3060
    %v3077 = vpack.c.b16 %v3063, %v3062
    %v3078 = vpack.c.b16 %v3065, %v3064
    %v3079 = vpack.c.b16 %v3067, %v3066
    %v3080 = vpack.c.b16 %v3069, %v3068
    %v3081 = vpack.c.b16 %v3071, %v3070
    %v3082 = vpack.c.b16 %v3073, %v3072
    %v3083 = vpack.c.b16 %v3075, %v3074
    %3092 = vmatpush.bf16.msra.mxu0 %v3083
    %3093 = vmatpush.bf16.msra.mxu0 %v3082
    %3094 = vmatpush.bf16.msra.mxu0 %v3081
    %3095 = vmatpush.bf16.msra.mxu0 %v3080
    %3096 = vmatpush.bf16.msra.mxu0 %v3079
    %3097 = vmatpush.bf16.msra.mxu0 %v3078
    %3098 = vmatpush.bf16.msra.mxu0 %v3077
    %3099 = vmatpush.bf16.msra.mxu0 %v3076
    %3100 = vmatmul.bf16.gmra.mxu0 %v3024
    %v3101 = vpop.f32.mrf.mxu0
    %v3102 = vadd.f32 0.0, %v3101
    %v3103 = vpop.f32.mrf.mxu0
    %v3104 = vadd.f32 0.0, %v3103
    %3105 = vmatmul.bf16.gmra.mxu0 %v3025
    %v3106 = vpop.f32.mrf.mxu0
    %v3107 = vadd.f32 0.0, %v3106
    %v3108 = vpop.f32.mrf.mxu0
    %v3109 = vadd.f32 0.0, %v3108
    %3110 = vmatmul.bf16.gmra.mxu0 %v3026
    %v3111 = vpop.f32.mrf.mxu0
    %v3112 = vadd.f32 0.0, %v3111
    %v3113 = vpop.f32.mrf.mxu0
    %3114 = vdwg.mxu0
    %v3115 = vadd.f32 %v3014, %v3102
    %v3116 = vadd.f32 %v3015, %v3104
    %v3117 = vadd.f32 %v3016, %v3107
    %v3118 = vadd.f32 %v3017, %v3109
    %v3119 = vadd.f32 %v3018, %v3112
    %v3120 = vld [vmem:[#allocation5 + $0x6] sm:$0xff]
    %v3121 = vld [vmem:[#allocation5 + $0xe] sm:$0xff]
    %v3122 = vld [vmem:[#allocation5 + $0x16] sm:$0xff]
    %v3123 = vld [vmem:[#allocation5 + $0x1e] sm:$0xff]
    %v3124 = vld [vmem:[#allocation5 + $0x26] sm:$0xff]
    %v3125 = vpack.c.bf16 %v3121, %v3120
    %v3126 = vpack.c.bf16 %v3123, %v3122
    %v3127 = vpack.c.bf16 %v3124, %v3124
    %s3128 = scalar_lea.vmem [#allocation12], 1536
    %v3129 = vld [vmem:[%s3128] sm:$0xf]
    %v3130 = vld [vmem:[%s3128 + $0x4] sm:$0xf]
    %v3131 = vld [vmem:[%s3128 + $0x8] sm:$0xf]
    %v3132 = vld [vmem:[%s3128 + $0xc] sm:$0xf]
    %v3133 = vld [vmem:[%s3128 + $0x10] sm:$0xf]
    %v3134 = vld [vmem:[%s3128 + $0x14] sm:$0xf]
    %v3135 = vld [vmem:[%s3128 + $0x18] sm:$0xf]
    %v3136 = vld [vmem:[%s3128 + $0x1c] sm:$0xf]
    %v3137 = vld [vmem:[%s3128 + $0x20] sm:$0xf]
    %v3138 = vld [vmem:[%s3128 + $0x24] sm:$0xf]
    %v3139 = vld [vmem:[%s3128 + $0x28] sm:$0xf]
    %v3140 = vld [vmem:[%s3128 + $0x2c] sm:$0xf]
    %v3141 = vld [vmem:[%s3128 + $0x30] sm:$0xf]
    %v3142 = vld [vmem:[%s3128 + $0x34] sm:$0xf]
    %v3143 = vld [vmem:[%s3128 + $0x38] sm:$0xf]
    %v3144 = vld [vmem:[%s3128 + $0x3c] sm:$0xf]
    %v3161 = vunpack.c.l.b16 %v3129
    %v3162 = vunpack.c.l.b16 %v3130
    %v3163 = vunpack.c.l.b16 %v3131
    %v3164 = vunpack.c.l.b16 %v3132
    %v3165 = vunpack.c.l.b16 %v3133
    %v3166 = vunpack.c.l.b16 %v3134
    %v3167 = vunpack.c.l.b16 %v3135
    %v3168 = vunpack.c.l.b16 %v3136
    %v3169 = vunpack.c.l.b16 %v3137
    %v3170 = vunpack.c.l.b16 %v3138
    %v3171 = vunpack.c.l.b16 %v3139
    %v3172 = vunpack.c.l.b16 %v3140
    %v3173 = vunpack.c.l.b16 %v3141
    %v3174 = vunpack.c.l.b16 %v3142
    %v3175 = vunpack.c.l.b16 %v3143
    %v3176 = vunpack.c.l.b16 %v3144
    %v3177 = vpack.c.b16 %v3162, %v3161
    %v3178 = vpack.c.b16 %v3164, %v3163
    %v3179 = vpack.c.b16 %v3166, %v3165
    %v3180 = vpack.c.b16 %v3168, %v3167
    %v3181 = vpack.c.b16 %v3170, %v3169
    %v3182 = vpack.c.b16 %v3172, %v3171
    %v3183 = vpack.c.b16 %v3174, %v3173
    %v3184 = vpack.c.b16 %v3176, %v3175
    %3193 = vmatpush.bf16.msra.mxu0 %v3184
    %3194 = vmatpush.bf16.msra.mxu0 %v3183
    %3195 = vmatpush.bf16.msra.mxu0 %v3182
    %3196 = vmatpush.bf16.msra.mxu0 %v3181
    %3197 = vmatpush.bf16.msra.mxu0 %v3180
    %3198 = vmatpush.bf16.msra.mxu0 %v3179
    %3199 = vmatpush.bf16.msra.mxu0 %v3178
    %3200 = vmatpush.bf16.msra.mxu0 %v3177
    %3201 = vmatmul.bf16.gmra.mxu0 %v3125
    %v3202 = vpop.f32.mrf.mxu0
    %v3203 = vadd.f32 0.0, %v3202
    %v3204 = vpop.f32.mrf.mxu0
    %v3205 = vadd.f32 0.0, %v3204
    %3206 = vmatmul.bf16.gmra.mxu0 %v3126
    %v3207 = vpop.f32.mrf.mxu0
    %v3208 = vadd.f32 0.0, %v3207
    %v3209 = vpop.f32.mrf.mxu0
    %v3210 = vadd.f32 0.0, %v3209
    %3211 = vmatmul.bf16.gmra.mxu0 %v3127
    %v3212 = vpop.f32.mrf.mxu0
    %v3213 = vadd.f32 0.0, %v3212
    %v3214 = vpop.f32.mrf.mxu0
    %3215 = vdwg.mxu0
    %v3216 = vadd.f32 %v3115, %v3203
    %v3217 = vadd.f32 %v3116, %v3205
    %v3218 = vadd.f32 %v3117, %v3208
    %v3219 = vadd.f32 %v3118, %v3210
    %v3220 = vadd.f32 %v3119, %v3213
    %v3221 = vld [vmem:[#allocation5 + $0x7] sm:$0xff]
    %v3222 = vld [vmem:[#allocation5 + $0xf] sm:$0xff]
    %v3223 = vld [vmem:[#allocation5 + $0x17] sm:$0xff]
    %v3224 = vld [vmem:[#allocation5 + $0x1f] sm:$0xff]
    %v3225 = vld [vmem:[#allocation5 + $0x27] sm:$0xff]
    %v3226 = vpack.c.bf16 %v3222, %v3221
    %v3227 = vpack.c.bf16 %v3224, %v3223
    %v3228 = vpack.c.bf16 %v3225, %v3225
    %s3229 = scalar_lea.vmem [#allocation12], 1600
    %v3230 = vld [vmem:[%s3229] sm:$0xf]
    %v3231 = vld [vmem:[%s3229 + $0x4] sm:$0xf]
    %v3232 = vld [vmem:[%s3229 + $0x8] sm:$0xf]
    %v3233 = vld [vmem:[%s3229 + $0xc] sm:$0xf]
    %v3234 = vld [vmem:[%s3229 + $0x10] sm:$0xf]
    %v3235 = vld [vmem:[%s3229 + $0x14] sm:$0xf]
    %v3236 = vld [vmem:[%s3229 + $0x18] sm:$0xf]
    %v3237 = vld [vmem:[%s3229 + $0x1c] sm:$0xf]
    %v3238 = vld [vmem:[%s3229 + $0x20] sm:$0xf]
    %v3239 = vld [vmem:[%s3229 + $0x24] sm:$0xf]
    %v3240 = vld [vmem:[%s3229 + $0x28] sm:$0xf]
    %v3241 = vld [vmem:[%s3229 + $0x2c] sm:$0xf]
    %v3242 = vld [vmem:[%s3229 + $0x30] sm:$0xf]
    %v3243 = vld [vmem:[%s3229 + $0x34] sm:$0xf]
    %v3244 = vld [vmem:[%s3229 + $0x38] sm:$0xf]
    %v3245 = vld [vmem:[%s3229 + $0x3c] sm:$0xf]
    %v3262 = vunpack.c.l.b16 %v3230
    %v3263 = vunpack.c.l.b16 %v3231
    %v3264 = vunpack.c.l.b16 %v3232
    %v3265 = vunpack.c.l.b16 %v3233
    %v3266 = vunpack.c.l.b16 %v3234
    %v3267 = vunpack.c.l.b16 %v3235
    %v3268 = vunpack.c.l.b16 %v3236
    %v3269 = vunpack.c.l.b16 %v3237
    %v3270 = vunpack.c.l.b16 %v3238
    %v3271 = vunpack.c.l.b16 %v3239
    %v3272 = vunpack.c.l.b16 %v3240
    %v3273 = vunpack.c.l.b16 %v3241
    %v3274 = vunpack.c.l.b16 %v3242
    %v3275 = vunpack.c.l.b16 %v3243
    %v3276 = vunpack.c.l.b16 %v3244
    %v3277 = vunpack.c.l.b16 %v3245
    %v3278 = vpack.c.b16 %v3263, %v3262
    %v3279 = vpack.c.b16 %v3265, %v3264
    %v3280 = vpack.c.b16 %v3267, %v3266
    %v3281 = vpack.c.b16 %v3269, %v3268
    %v3282 = vpack.c.b16 %v3271, %v3270
    %v3283 = vpack.c.b16 %v3273, %v3272
    %v3284 = vpack.c.b16 %v3275, %v3274
    %v3285 = vpack.c.b16 %v3277, %v3276
    %3294 = vmatpush.bf16.msra.mxu0 %v3285
    %3295 = vmatpush.bf16.msra.mxu0 %v3284
    %3296 = vmatpush.bf16.msra.mxu0 %v3283
    %3297 = vmatpush.bf16.msra.mxu0 %v3282
    %3298 = vmatpush.bf16.msra.mxu0 %v3281
    %3299 = vmatpush.bf16.msra.mxu0 %v3280
    %3300 = vmatpush.bf16.msra.mxu0 %v3279
    %3301 = vmatpush.bf16.msra.mxu0 %v3278
    %3302 = vmatmul.bf16.gmra.mxu0 %v3226
    %v3303 = vpop.f32.mrf.mxu0
    %v3304 = vadd.f32 0.0, %v3303
    %v3305 = vpop.f32.mrf.mxu0
    %v3306 = vadd.f32 0.0, %v3305
    %3307 = vmatmul.bf16.gmra.mxu0 %v3227
    %v3308 = vpop.f32.mrf.mxu0
    %v3309 = vadd.f32 0.0, %v3308
    %v3310 = vpop.f32.mrf.mxu0
    %v3311 = vadd.f32 0.0, %v3310
    %3312 = vmatmul.bf16.gmra.mxu0 %v3228
    %v3313 = vpop.f32.mrf.mxu0
    %v3314 = vadd.f32 0.0, %v3313
    %v3315 = vpop.f32.mrf.mxu0
    %3316 = vdwg.mxu0
    %v3317 = vadd.f32 %v3216, %v3304
    %v3318 = vadd.f32 %v3217, %v3306
    %v3319 = vadd.f32 %v3218, %v3309
    %v3320 = vadd.f32 %v3219, %v3311
    %v3321 = vadd.f32 %v3220, %v3314
    %v3322 = vld [vmem:[#allocation15 + $0xb] sm:$0x1]
    %v3323 = vperm.slane %v3322, 0
    %v3324 = vadd.f32 %v3317, %v3323
    %v3325 = vadd.f32 %v3318, %v3323
    %v3326 = vadd.f32 %v3319, %v3323
    %v3327 = vadd.f32 %v3320, %v3323
    %v3328 = vadd.f32 %v3321, %v3323
    %v3329 = vmax.f32 %v3324, 0.0
    %v3330 = vmax.f32 %v3325, 0.0
    %v3331 = vmax.f32 %v3326, 0.0
    %v3332 = vmax.f32 %v3327, 0.0
    %v3333 = vmax.f32 %v3328, 0.0
    %v3339 = vrot.slane %v3329, 4
    %v3340 = vrot.slane %v3330, 4
    %v3341 = vsel %vm539, %v3339, %v3340
    %v3342 = vrot.slane %v3331, 4
    %v3343 = vsel %vm539, %v3340, %v3342
    %v3344 = vrot.slane %v3332, 4
    %v3345 = vsel %vm539, %v3342, %v3344
    %v3346 = vrot.slane %v3333, 4
    %v3347 = vsel %vm539, %v3344, %v3346
    %3354 = vst [vmem:[#allocation3 + $0x10] sm:$0xf0] %v3339
    %3355 = vst [vmem:[#allocation3 + $0x30] sm:$0xff] %v3341
    %3356 = vst [vmem:[#allocation3 + $0x50] sm:$0xff] %v3343
    %3357 = vst [vmem:[#allocation3 + $0x70] sm:$0xff] %v3345
    %3358 = vst [vmem:[#allocation3 + $0x90] sm:$0xff] %v3347
    %3359 = vst [vmem:[#allocation3 + $0xb0] sm:$0xf] %v3346
    %v3360 = vld [vmem:[#allocation3 + $0x10] sm:$0xf0]
    %v3361 = vld [vmem:[#allocation3 + $0x30] sm:$0xff]
    %v3362 = vld [vmem:[#allocation3 + $0x50] sm:$0xff]
    %v3363 = vld [vmem:[#allocation3 + $0x70] sm:$0xff]
    %v3364 = vld [vmem:[#allocation3 + $0x90] sm:$0xff]
    %v3365 = vld [vmem:[#allocation3 + $0xb0] sm:$0xf]
    %v3366 = vpack.c.bf16 %v3361, %v3360
    %v3367 = vpack.c.bf16 %v3363, %v3362
    %v3368 = vpack.c.bf16 %v3365, %v3364
    %s3369 = scalar_lea.vmem [#allocation12], 1664
    %v3370 = vld [vmem:[%s3369] sm:$0xf]
    %v3371 = vld [vmem:[%s3369 + $0x4] sm:$0xf]
    %v3372 = vld [vmem:[%s3369 + $0x8] sm:$0xf]
    %v3373 = vld [vmem:[%s3369 + $0xc] sm:$0xf]
    %v3374 = vld [vmem:[%s3369 + $0x10] sm:$0xf]
    %v3375 = vld [vmem:[%s3369 + $0x14] sm:$0xf]
    %v3376 = vld [vmem:[%s3369 + $0x18] sm:$0xf]
    %v3377 = vld [vmem:[%s3369 + $0x1c] sm:$0xf]
    %v3378 = vld [vmem:[%s3369 + $0x20] sm:$0xf]
    %v3379 = vld [vmem:[%s3369 + $0x24] sm:$0xf]
    %v3380 = vld [vmem:[%s3369 + $0x28] sm:$0xf]
    %v3381 = vld [vmem:[%s3369 + $0x2c] sm:$0xf]
    %v3382 = vld [vmem:[%s3369 + $0x30] sm:$0xf]
    %v3383 = vld [vmem:[%s3369 + $0x34] sm:$0xf]
    %v3384 = vld [vmem:[%s3369 + $0x38] sm:$0xf]
    %v3385 = vld [vmem:[%s3369 + $0x3c] sm:$0xf]
    %v3386 = vld [vmem:[#allocation15 + $0xc] sm:$0x1]
    %v3387 = vperm.slane %v3386, 0
    %v3391 = vrot.slane %v3366, 2
    %v3392 = vrot.slane %v3367, 2
    %v3393 = vsel %vm608, %v3391, %v3392
    %v3394 = vrot.slane %v3368, 2
    %v3395 = vsel %vm608, %v3392, %v3394
    %v3415 = vunpack.c.l.b16 %v3370
    %v3416 = vunpack.c.l.b16 %v3371
    %v3417 = vunpack.c.l.b16 %v3372
    %v3418 = vunpack.c.l.b16 %v3373
    %v3419 = vunpack.c.l.b16 %v3374
    %v3420 = vunpack.c.l.b16 %v3375
    %v3421 = vunpack.c.l.b16 %v3376
    %v3422 = vunpack.c.l.b16 %v3377
    %v3423 = vunpack.c.l.b16 %v3378
    %v3424 = vunpack.c.l.b16 %v3379
    %v3425 = vunpack.c.l.b16 %v3380
    %v3426 = vunpack.c.l.b16 %v3381
    %v3427 = vunpack.c.l.b16 %v3382
    %v3428 = vunpack.c.l.b16 %v3383
    %v3429 = vunpack.c.l.b16 %v3384
    %v3430 = vunpack.c.l.b16 %v3385
    %v3431 = vpack.c.b16 %v3416, %v3415
    %v3432 = vpack.c.b16 %v3418, %v3417
    %v3433 = vpack.c.b16 %v3420, %v3419
    %v3434 = vpack.c.b16 %v3422, %v3421
    %v3435 = vpack.c.b16 %v3424, %v3423
    %v3436 = vpack.c.b16 %v3426, %v3425
    %v3437 = vpack.c.b16 %v3428, %v3427
    %v3438 = vpack.c.b16 %v3430, %v3429
    %3447 = vmatpush.bf16.msra.mxu0 %v3438
    %3448 = vmatpush.bf16.msra.mxu0 %v3437
    %3449 = vmatpush.bf16.msra.mxu0 %v3436
    %3450 = vmatpush.bf16.msra.mxu0 %v3435
    %3451 = vmatpush.bf16.msra.mxu0 %v3434
    %3452 = vmatpush.bf16.msra.mxu0 %v3433
    %3453 = vmatpush.bf16.msra.mxu0 %v3432
    %3454 = vmatpush.bf16.msra.mxu0 %v3431
    %3455 = vmatmul.bf16.gmra.mxu0 %v3393
    %v3456 = vpop.f32.mrf.mxu0
    %v3457 = vadd.f32 %v3387, %v3456
    %v3458 = vpop.f32.mrf.mxu0
    %v3459 = vadd.f32 %v3387, %v3458
    %3460 = vmatmul.bf16.gmra.mxu0 %v3395
    %v3461 = vpop.f32.mrf.mxu0
    %v3462 = vadd.f32 %v3387, %v3461
    %v3463 = vpop.f32.mrf.mxu0
    %v3464 = vadd.f32 %v3387, %v3463
    %3465 = vmatmul.bf16.gmra.mxu0 %v3394
    %v3466 = vpop.f32.mrf.mxu0
    %v3467 = vadd.f32 %v3387, %v3466
    %v3468 = vpop.f32.mrf.mxu0
    %3469 = vdwg.mxu0
    %v3470 = vmax.f32 %v3457, 0.0
    %v3471 = vmax.f32 %v3459, 0.0
    %v3472 = vmax.f32 %v3462, 0.0
    %v3473 = vmax.f32 %v3464, 0.0
    %v3474 = vmax.f32 %v3467, 0.0
    %3475 = vst [vmem:[#allocation4 + $0x4] sm:$0xff] %v3470
    %3476 = vst [vmem:[#allocation4 + $0xc] sm:$0xff] %v3471
    %3477 = vst [vmem:[#allocation4 + $0x14] sm:$0xff] %v3472
    %3478 = vst [vmem:[#allocation4 + $0x1c] sm:$0xff] %v3473
    %3479 = vst [vmem:[#allocation4 + $0x24] sm:$0xff] %v3474
    %v3480 = vld [vmem:[#allocation4 + $0x4] sm:$0xff]
    %v3481 = vld [vmem:[#allocation4 + $0xc] sm:$0xff]
    %v3482 = vld [vmem:[#allocation4 + $0x14] sm:$0xff]
    %v3483 = vld [vmem:[#allocation4 + $0x1c] sm:$0xff]
    %v3484 = vld [vmem:[#allocation4 + $0x24] sm:$0xff]
    %v3485 = vpack.c.bf16 %v3481, %v3480
    %v3486 = vpack.c.bf16 %v3483, %v3482
    %v3487 = vpack.c.bf16 %v3484, %v3484
    %s3488 = scalar_lea.vmem [#allocation12], 1728
    %v3489 = vld [vmem:[%s3488] sm:$0xf]
    %v3490 = vld [vmem:[%s3488 + $0x4] sm:$0xf]
    %v3491 = vld [vmem:[%s3488 + $0x8] sm:$0xf]
    %v3492 = vld [vmem:[%s3488 + $0xc] sm:$0xf]
    %v3493 = vld [vmem:[%s3488 + $0x10] sm:$0xf]
    %v3494 = vld [vmem:[%s3488 + $0x14] sm:$0xf]
    %v3495 = vld [vmem:[%s3488 + $0x18] sm:$0xf]
    %v3496 = vld [vmem:[%s3488 + $0x1c] sm:$0xf]
    %v3497 = vld [vmem:[%s3488 + $0x20] sm:$0xf]
    %v3498 = vld [vmem:[%s3488 + $0x24] sm:$0xf]
    %v3499 = vld [vmem:[%s3488 + $0x28] sm:$0xf]
    %v3500 = vld [vmem:[%s3488 + $0x2c] sm:$0xf]
    %v3501 = vld [vmem:[%s3488 + $0x30] sm:$0xf]
    %v3502 = vld [vmem:[%s3488 + $0x34] sm:$0xf]
    %v3503 = vld [vmem:[%s3488 + $0x38] sm:$0xf]
    %v3504 = vld [vmem:[%s3488 + $0x3c] sm:$0xf]
    %v3505 = vld [vmem:[#allocation15 + $0xd] sm:$0x1]
    %v3506 = vperm.slane %v3505, 0
    %v3523 = vunpack.c.l.b16 %v3489
    %v3524 = vunpack.c.l.b16 %v3490
    %v3525 = vunpack.c.l.b16 %v3491
    %v3526 = vunpack.c.l.b16 %v3492
    %v3527 = vunpack.c.l.b16 %v3493
    %v3528 = vunpack.c.l.b16 %v3494
    %v3529 = vunpack.c.l.b16 %v3495
    %v3530 = vunpack.c.l.b16 %v3496
    %v3531 = vunpack.c.l.b16 %v3497
    %v3532 = vunpack.c.l.b16 %v3498
    %v3533 = vunpack.c.l.b16 %v3499
    %v3534 = vunpack.c.l.b16 %v3500
    %v3535 = vunpack.c.l.b16 %v3501
    %v3536 = vunpack.c.l.b16 %v3502
    %v3537 = vunpack.c.l.b16 %v3503
    %v3538 = vunpack.c.l.b16 %v3504
    %v3539 = vpack.c.b16 %v3524, %v3523
    %v3540 = vpack.c.b16 %v3526, %v3525
    %v3541 = vpack.c.b16 %v3528, %v3527
    %v3542 = vpack.c.b16 %v3530, %v3529
    %v3543 = vpack.c.b16 %v3532, %v3531
    %v3544 = vpack.c.b16 %v3534, %v3533
    %v3545 = vpack.c.b16 %v3536, %v3535
    %v3546 = vpack.c.b16 %v3538, %v3537
    %3555 = vmatpush.bf16.msra.mxu0 %v3546
    %3556 = vmatpush.bf16.msra.mxu0 %v3545
    %3557 = vmatpush.bf16.msra.mxu0 %v3544
    %3558 = vmatpush.bf16.msra.mxu0 %v3543
    %3559 = vmatpush.bf16.msra.mxu0 %v3542
    %3560 = vmatpush.bf16.msra.mxu0 %v3541
    %3561 = vmatpush.bf16.msra.mxu0 %v3540
    %3562 = vmatpush.bf16.msra.mxu0 %v3539
    %3563 = vmatmul.bf16.gmra.mxu0 %v3485
    %v3564 = vpop.f32.mrf.mxu0
    %v3565 = vadd.f32 %v3506, %v3564
    %v3566 = vpop.f32.mrf.mxu0
    %v3567 = vadd.f32 %v3506, %v3566
    %3568 = vmatmul.bf16.gmra.mxu0 %v3486
    %v3569 = vpop.f32.mrf.mxu0
    %v3570 = vadd.f32 %v3506, %v3569
    %v3571 = vpop.f32.mrf.mxu0
    %v3572 = vadd.f32 %v3506, %v3571
    %3573 = vmatmul.bf16.gmra.mxu0 %v3487
    %v3574 = vpop.f32.mrf.mxu0
    %v3575 = vadd.f32 %v3506, %v3574
    %v3576 = vpop.f32.mrf.mxu0
    %3577 = vdwg.mxu0
    %v3578 = vmax.f32 %v3565, 0.0
    %v3579 = vmax.f32 %v3567, 0.0
    %v3580 = vmax.f32 %v3570, 0.0
    %v3581 = vmax.f32 %v3572, 0.0
    %v3582 = vmax.f32 %v3575, 0.0
    %v3583 = vmul.f32 %v3578, %v172
    %v3584 = vmul.f32 %v3579, %v173
    %v3585 = vmul.f32 %v3580, %v174
    %v3586 = vmul.f32 %v3581, %v175
    %v3587 = vmul.f32 %v3582, %v176
    %3588 = vst [vmem:[#allocation5 + $0x4] sm:$0xff] %v3583
    %3589 = vst [vmem:[#allocation5 + $0xc] sm:$0xff] %v3584
    %3590 = vst [vmem:[#allocation5 + $0x14] sm:$0xff] %v3585
    %3591 = vst [vmem:[#allocation5 + $0x1c] sm:$0xff] %v3586
    %3592 = vst [vmem:[#allocation5 + $0x24] sm:$0xff] %v3587
    %v3593 = vld [vmem:[#allocation5 + $0x1] sm:$0xff]
    %v3594 = vld [vmem:[#allocation5 + $0x9] sm:$0xff]
    %v3595 = vld [vmem:[#allocation5 + $0x11] sm:$0xff]
    %v3596 = vld [vmem:[#allocation5 + $0x19] sm:$0xff]
    %v3597 = vld [vmem:[#allocation5 + $0x21] sm:$0xff]
    %v3598 = vpack.c.bf16 %v3594, %v3593
    %v3599 = vpack.c.bf16 %v3596, %v3595
    %v3600 = vpack.c.bf16 %v3597, %v3597
    %s3601 = scalar_lea.vmem [#allocation12], 1792
    %v3602 = vld [vmem:[%s3601] sm:$0xf]
    %v3603 = vld [vmem:[%s3601 + $0x4] sm:$0xf]
    %v3604 = vld [vmem:[%s3601 + $0x8] sm:$0xf]
    %v3605 = vld [vmem:[%s3601 + $0xc] sm:$0xf]
    %v3606 = vld [vmem:[%s3601 + $0x10] sm:$0xf]
    %v3607 = vld [vmem:[%s3601 + $0x14] sm:$0xf]
    %v3608 = vld [vmem:[%s3601 + $0x18] sm:$0xf]
    %v3609 = vld [vmem:[%s3601 + $0x1c] sm:$0xf]
    %v3610 = vld [vmem:[%s3601 + $0x20] sm:$0xf]
    %v3611 = vld [vmem:[%s3601 + $0x24] sm:$0xf]
    %v3612 = vld [vmem:[%s3601 + $0x28] sm:$0xf]
    %v3613 = vld [vmem:[%s3601 + $0x2c] sm:$0xf]
    %v3614 = vld [vmem:[%s3601 + $0x30] sm:$0xf]
    %v3615 = vld [vmem:[%s3601 + $0x34] sm:$0xf]
    %v3616 = vld [vmem:[%s3601 + $0x38] sm:$0xf]
    %v3617 = vld [vmem:[%s3601 + $0x3c] sm:$0xf]
    %v3618 = vld [vmem:[#allocation5 + $0x2] sm:$0xff]
    %v3619 = vld [vmem:[#allocation5 + $0xa] sm:$0xff]
    %v3620 = vld [vmem:[#allocation5 + $0x12] sm:$0xff]
    %v3621 = vld [vmem:[#allocation5 + $0x1a] sm:$0xff]
    %v3622 = vld [vmem:[#allocation5 + $0x22] sm:$0xff]
    %v3623 = vpack.c.bf16 %v3619, %v3618
    %v3624 = vpack.c.bf16 %v3621, %v3620
    %v3625 = vpack.c.bf16 %v3622, %v3622
    %s3626 = scalar_lea.vmem [#allocation12], 1856
    %v3627 = vld [vmem:[%s3626] sm:$0xf]
    %v3628 = vld [vmem:[%s3626 + $0x4] sm:$0xf]
    %v3629 = vld [vmem:[%s3626 + $0x8] sm:$0xf]
    %v3630 = vld [vmem:[%s3626 + $0xc] sm:$0xf]
    %v3631 = vld [vmem:[%s3626 + $0x10] sm:$0xf]
    %v3632 = vld [vmem:[%s3626 + $0x14] sm:$0xf]
    %v3633 = vld [vmem:[%s3626 + $0x18] sm:$0xf]
    %v3634 = vld [vmem:[%s3626 + $0x1c] sm:$0xf]
    %v3635 = vld [vmem:[%s3626 + $0x20] sm:$0xf]
    %v3636 = vld [vmem:[%s3626 + $0x24] sm:$0xf]
    %v3637 = vld [vmem:[%s3626 + $0x28] sm:$0xf]
    %v3638 = vld [vmem:[%s3626 + $0x2c] sm:$0xf]
    %v3639 = vld [vmem:[%s3626 + $0x30] sm:$0xf]
    %v3640 = vld [vmem:[%s3626 + $0x34] sm:$0xf]
    %v3641 = vld [vmem:[%s3626 + $0x38] sm:$0xf]
    %v3642 = vld [vmem:[%s3626 + $0x3c] sm:$0xf]
    %v3659 = vunpack.c.l.b16 %v3627
    %v3660 = vunpack.c.l.b16 %v3628
    %v3661 = vunpack.c.l.b16 %v3629
    %v3662 = vunpack.c.l.b16 %v3630
    %v3663 = vunpack.c.l.b16 %v3631
    %v3664 = vunpack.c.l.b16 %v3632
    %v3665 = vunpack.c.l.b16 %v3633
    %v3666 = vunpack.c.l.b16 %v3634
    %v3667 = vunpack.c.l.b16 %v3635
    %v3668 = vunpack.c.l.b16 %v3636
    %v3669 = vunpack.c.l.b16 %v3637
    %v3670 = vunpack.c.l.b16 %v3638
    %v3671 = vunpack.c.l.b16 %v3639
    %v3672 = vunpack.c.l.b16 %v3640
    %v3673 = vunpack.c.l.b16 %v3641
    %v3674 = vunpack.c.l.b16 %v3642
    %v3675 = vpack.c.b16 %v3660, %v3659
    %v3676 = vpack.c.b16 %v3662, %v3661
    %v3677 = vpack.c.b16 %v3664, %v3663
    %v3678 = vpack.c.b16 %v3666, %v3665
    %v3679 = vpack.c.b16 %v3668, %v3667
    %v3680 = vpack.c.b16 %v3670, %v3669
    %v3681 = vpack.c.b16 %v3672, %v3671
    %v3682 = vpack.c.b16 %v3674, %v3673
    %3691 = vmatpush.bf16.msra.mxu0 %v3682
    %3692 = vmatpush.bf16.msra.mxu0 %v3681
    %3693 = vmatpush.bf16.msra.mxu0 %v3680
    %3694 = vmatpush.bf16.msra.mxu0 %v3679
    %3695 = vmatpush.bf16.msra.mxu0 %v3678
    %3696 = vmatpush.bf16.msra.mxu0 %v3677
    %3697 = vmatpush.bf16.msra.mxu0 %v3676
    %3698 = vmatpush.bf16.msra.mxu0 %v3675
    %3699 = vmatmul.bf16.gmra.mxu0 %v3623
    %v3700 = vpop.f32.mrf.mxu0
    %v3701 = vadd.f32 0.0, %v3700
    %v3702 = vpop.f32.mrf.mxu0
    %v3703 = vadd.f32 0.0, %v3702
    %3704 = vmatmul.bf16.gmra.mxu0 %v3624
    %v3705 = vpop.f32.mrf.mxu0
    %v3706 = vadd.f32 0.0, %v3705
    %v3707 = vpop.f32.mrf.mxu0
    %v3708 = vadd.f32 0.0, %v3707
    %3709 = vmatmul.bf16.gmra.mxu0 %v3625
    %v3710 = vpop.f32.mrf.mxu0
    %v3711 = vadd.f32 0.0, %v3710
    %v3712 = vpop.f32.mrf.mxu0
    %3713 = vdwg.mxu0
    %v3730 = vunpack.c.l.b16 %v3602
    %v3731 = vunpack.c.l.b16 %v3603
    %v3732 = vunpack.c.l.b16 %v3604
    %v3733 = vunpack.c.l.b16 %v3605
    %v3734 = vunpack.c.l.b16 %v3606
    %v3735 = vunpack.c.l.b16 %v3607
    %v3736 = vunpack.c.l.b16 %v3608
    %v3737 = vunpack.c.l.b16 %v3609
    %v3738 = vunpack.c.l.b16 %v3610
    %v3739 = vunpack.c.l.b16 %v3611
    %v3740 = vunpack.c.l.b16 %v3612
    %v3741 = vunpack.c.l.b16 %v3613
    %v3742 = vunpack.c.l.b16 %v3614
    %v3743 = vunpack.c.l.b16 %v3615
    %v3744 = vunpack.c.l.b16 %v3616
    %v3745 = vunpack.c.l.b16 %v3617
    %v3746 = vpack.c.b16 %v3731, %v3730
    %v3747 = vpack.c.b16 %v3733, %v3732
    %v3748 = vpack.c.b16 %v3735, %v3734
    %v3749 = vpack.c.b16 %v3737, %v3736
    %v3750 = vpack.c.b16 %v3739, %v3738
    %v3751 = vpack.c.b16 %v3741, %v3740
    %v3752 = vpack.c.b16 %v3743, %v3742
    %v3753 = vpack.c.b16 %v3745, %v3744
    %3762 = vmatpush.bf16.msra.mxu0 %v3753
    %3763 = vmatpush.bf16.msra.mxu0 %v3752
    %3764 = vmatpush.bf16.msra.mxu0 %v3751
    %3765 = vmatpush.bf16.msra.mxu0 %v3750
    %3766 = vmatpush.bf16.msra.mxu0 %v3749
    %3767 = vmatpush.bf16.msra.mxu0 %v3748
    %3768 = vmatpush.bf16.msra.mxu0 %v3747
    %3769 = vmatpush.bf16.msra.mxu0 %v3746
    %3770 = vmatmul.bf16.gmra.mxu0 %v3598
    %v3771 = vpop.f32.mrf.mxu0
    %v3772 = vadd.f32 %v3701, %v3771
    %v3773 = vpop.f32.mrf.mxu0
    %v3774 = vadd.f32 %v3703, %v3773
    %3775 = vmatmul.bf16.gmra.mxu0 %v3599
    %v3776 = vpop.f32.mrf.mxu0
    %v3777 = vadd.f32 %v3706, %v3776
    %v3778 = vpop.f32.mrf.mxu0
    %v3779 = vadd.f32 %v3708, %v3778
    %3780 = vmatmul.bf16.gmra.mxu0 %v3600
    %v3781 = vpop.f32.mrf.mxu0
    %v3782 = vadd.f32 %v3711, %v3781
    %v3783 = vpop.f32.mrf.mxu0
    %3784 = vdwg.mxu0
    %v3785 = vld [vmem:[#allocation5 + $0x3] sm:$0xff]
    %v3786 = vld [vmem:[#allocation5 + $0xb] sm:$0xff]
    %v3787 = vld [vmem:[#allocation5 + $0x13] sm:$0xff]
    %v3788 = vld [vmem:[#allocation5 + $0x1b] sm:$0xff]
    %v3789 = vld [vmem:[#allocation5 + $0x23] sm:$0xff]
    %v3790 = vpack.c.bf16 %v3786, %v3785
    %v3791 = vpack.c.bf16 %v3788, %v3787
    %v3792 = vpack.c.bf16 %v3789, %v3789
    %s3793 = scalar_lea.vmem [#allocation12], 1920
    %v3794 = vld [vmem:[%s3793] sm:$0xf]
    %v3795 = vld [vmem:[%s3793 + $0x4] sm:$0xf]
    %v3796 = vld [vmem:[%s3793 + $0x8] sm:$0xf]
    %v3797 = vld [vmem:[%s3793 + $0xc] sm:$0xf]
    %v3798 = vld [vmem:[%s3793 + $0x10] sm:$0xf]
    %v3799 = vld [vmem:[%s3793 + $0x14] sm:$0xf]
    %v3800 = vld [vmem:[%s3793 + $0x18] sm:$0xf]
    %v3801 = vld [vmem:[%s3793 + $0x1c] sm:$0xf]
    %v3802 = vld [vmem:[%s3793 + $0x20] sm:$0xf]
    %v3803 = vld [vmem:[%s3793 + $0x24] sm:$0xf]
    %v3804 = vld [vmem:[%s3793 + $0x28] sm:$0xf]
    %v3805 = vld [vmem:[%s3793 + $0x2c] sm:$0xf]
    %v3806 = vld [vmem:[%s3793 + $0x30] sm:$0xf]
    %v3807 = vld [vmem:[%s3793 + $0x34] sm:$0xf]
    %v3808 = vld [vmem:[%s3793 + $0x38] sm:$0xf]
    %v3809 = vld [vmem:[%s3793 + $0x3c] sm:$0xf]
    %v3826 = vunpack.c.l.b16 %v3794
    %v3827 = vunpack.c.l.b16 %v3795
    %v3828 = vunpack.c.l.b16 %v3796
    %v3829 = vunpack.c.l.b16 %v3797
    %v3830 = vunpack.c.l.b16 %v3798
    %v3831 = vunpack.c.l.b16 %v3799
    %v3832 = vunpack.c.l.b16 %v3800
    %v3833 = vunpack.c.l.b16 %v3801
    %v3834 = vunpack.c.l.b16 %v3802
    %v3835 = vunpack.c.l.b16 %v3803
    %v3836 = vunpack.c.l.b16 %v3804
    %v3837 = vunpack.c.l.b16 %v3805
    %v3838 = vunpack.c.l.b16 %v3806
    %v3839 = vunpack.c.l.b16 %v3807
    %v3840 = vunpack.c.l.b16 %v3808
    %v3841 = vunpack.c.l.b16 %v3809
    %v3842 = vpack.c.b16 %v3827, %v3826
    %v3843 = vpack.c.b16 %v3829, %v3828
    %v3844 = vpack.c.b16 %v3831, %v3830
    %v3845 = vpack.c.b16 %v3833, %v3832
    %v3846 = vpack.c.b16 %v3835, %v3834
    %v3847 = vpack.c.b16 %v3837, %v3836
    %v3848 = vpack.c.b16 %v3839, %v3838
    %v3849 = vpack.c.b16 %v3841, %v3840
    %3858 = vmatpush.bf16.msra.mxu0 %v3849
    %3859 = vmatpush.bf16.msra.mxu0 %v3848
    %3860 = vmatpush.bf16.msra.mxu0 %v3847
    %3861 = vmatpush.bf16.msra.mxu0 %v3846
    %3862 = vmatpush.bf16.msra.mxu0 %v3845
    %3863 = vmatpush.bf16.msra.mxu0 %v3844
    %3864 = vmatpush.bf16.msra.mxu0 %v3843
    %3865 = vmatpush.bf16.msra.mxu0 %v3842
    %3866 = vmatmul.bf16.gmra.mxu0 %v3790
    %v3867 = vpop.f32.mrf.mxu0
    %v3868 = vadd.f32 0.0, %v3867
    %v3869 = vpop.f32.mrf.mxu0
    %v3870 = vadd.f32 0.0, %v3869
    %3871 = vmatmul.bf16.gmra.mxu0 %v3791
    %v3872 = vpop.f32.mrf.mxu0
    %v3873 = vadd.f32 0.0, %v3872
    %v3874 = vpop.f32.mrf.mxu0
    %v3875 = vadd.f32 0.0, %v3874
    %3876 = vmatmul.bf16.gmra.mxu0 %v3792
    %v3877 = vpop.f32.mrf.mxu0
    %v3878 = vadd.f32 0.0, %v3877
    %v3879 = vpop.f32.mrf.mxu0
    %3880 = vdwg.mxu0
    %v3881 = vadd.f32 %v3772, %v3868
    %v3882 = vadd.f32 %v3774, %v3870
    %v3883 = vadd.f32 %v3777, %v3873
    %v3884 = vadd.f32 %v3779, %v3875
    %v3885 = vadd.f32 %v3782, %v3878
    %v3886 = vld [vmem:[#allocation5 + $0x4] sm:$0xff]
    %v3887 = vld [vmem:[#allocation5 + $0xc] sm:$0xff]
    %v3888 = vld [vmem:[#allocation5 + $0x14] sm:$0xff]
    %v3889 = vld [vmem:[#allocation5 + $0x1c] sm:$0xff]
    %v3890 = vld [vmem:[#allocation5 + $0x24] sm:$0xff]
    %v3891 = vpack.c.bf16 %v3887, %v3886
    %v3892 = vpack.c.bf16 %v3889, %v3888
    %v3893 = vpack.c.bf16 %v3890, %v3890
    %s3894 = scalar_lea.vmem [#allocation12], 1984
    %v3895 = vld [vmem:[%s3894] sm:$0xf]
    %v3896 = vld [vmem:[%s3894 + $0x4] sm:$0xf]
    %v3897 = vld [vmem:[%s3894 + $0x8] sm:$0xf]
    %v3898 = vld [vmem:[%s3894 + $0xc] sm:$0xf]
    %v3899 = vld [vmem:[%s3894 + $0x10] sm:$0xf]
    %v3900 = vld [vmem:[%s3894 + $0x14] sm:$0xf]
    %v3901 = vld [vmem:[%s3894 + $0x18] sm:$0xf]
    %v3902 = vld [vmem:[%s3894 + $0x1c] sm:$0xf]
    %v3903 = vld [vmem:[%s3894 + $0x20] sm:$0xf]
    %v3904 = vld [vmem:[%s3894 + $0x24] sm:$0xf]
    %v3905 = vld [vmem:[%s3894 + $0x28] sm:$0xf]
    %v3906 = vld [vmem:[%s3894 + $0x2c] sm:$0xf]
    %v3907 = vld [vmem:[%s3894 + $0x30] sm:$0xf]
    %v3908 = vld [vmem:[%s3894 + $0x34] sm:$0xf]
    %v3909 = vld [vmem:[%s3894 + $0x38] sm:$0xf]
    %v3910 = vld [vmem:[%s3894 + $0x3c] sm:$0xf]
    %v3927 = vunpack.c.l.b16 %v3895
    %v3928 = vunpack.c.l.b16 %v3896
    %v3929 = vunpack.c.l.b16 %v3897
    %v3930 = vunpack.c.l.b16 %v3898
    %v3931 = vunpack.c.l.b16 %v3899
    %v3932 = vunpack.c.l.b16 %v3900
    %v3933 = vunpack.c.l.b16 %v3901
    %v3934 = vunpack.c.l.b16 %v3902
    %v3935 = vunpack.c.l.b16 %v3903
    %v3936 = vunpack.c.l.b16 %v3904
    %v3937 = vunpack.c.l.b16 %v3905
    %v3938 = vunpack.c.l.b16 %v3906
    %v3939 = vunpack.c.l.b16 %v3907
    %v3940 = vunpack.c.l.b16 %v3908
    %v3941 = vunpack.c.l.b16 %v3909
    %v3942 = vunpack.c.l.b16 %v3910
    %v3943 = vpack.c.b16 %v3928, %v3927
    %v3944 = vpack.c.b16 %v3930, %v3929
    %v3945 = vpack.c.b16 %v3932, %v3931
    %v3946 = vpack.c.b16 %v3934, %v3933
    %v3947 = vpack.c.b16 %v3936, %v3935
    %v3948 = vpack.c.b16 %v3938, %v3937
    %v3949 = vpack.c.b16 %v3940, %v3939
    %v3950 = vpack.c.b16 %v3942, %v3941
    %3959 = vmatpush.bf16.msra.mxu0 %v3950
    %3960 = vmatpush.bf16.msra.mxu0 %v3949
    %3961 = vmatpush.bf16.msra.mxu0 %v3948
    %3962 = vmatpush.bf16.msra.mxu0 %v3947
    %3963 = vmatpush.bf16.msra.mxu0 %v3946
    %3964 = vmatpush.bf16.msra.mxu0 %v3945
    %3965 = vmatpush.bf16.msra.mxu0 %v3944
    %3966 = vmatpush.bf16.msra.mxu0 %v3943
    %3967 = vmatmul.bf16.gmra.mxu0 %v3891
    %v3968 = vpop.f32.mrf.mxu0
    %v3969 = vadd.f32 0.0, %v3968
    %v3970 = vpop.f32.mrf.mxu0
    %v3971 = vadd.f32 0.0, %v3970
    %3972 = vmatmul.bf16.gmra.mxu0 %v3892
    %v3973 = vpop.f32.mrf.mxu0
    %v3974 = vadd.f32 0.0, %v3973
    %v3975 = vpop.f32.mrf.mxu0
    %v3976 = vadd.f32 0.0, %v3975
    %3977 = vmatmul.bf16.gmra.mxu0 %v3893
    %v3978 = vpop.f32.mrf.mxu0
    %v3979 = vadd.f32 0.0, %v3978
    %v3980 = vpop.f32.mrf.mxu0
    %3981 = vdwg.mxu0
    %v3982 = vadd.f32 %v3881, %v3969
    %v3983 = vadd.f32 %v3882, %v3971
    %v3984 = vadd.f32 %v3883, %v3974
    %v3985 = vadd.f32 %v3884, %v3976
    %v3986 = vadd.f32 %v3885, %v3979
    %v3987 = vld [vmem:[#allocation5 + $0x5] sm:$0xff]
    %v3988 = vld [vmem:[#allocation5 + $0xd] sm:$0xff]
    %v3989 = vld [vmem:[#allocation5 + $0x15] sm:$0xff]
    %v3990 = vld [vmem:[#allocation5 + $0x1d] sm:$0xff]
    %v3991 = vld [vmem:[#allocation5 + $0x25] sm:$0xff]
    %v3992 = vpack.c.bf16 %v3988, %v3987
    %v3993 = vpack.c.bf16 %v3990, %v3989
    %v3994 = vpack.c.bf16 %v3991, %v3991
    %s3995 = scalar_lea.vmem [#allocation12], 2048
    %v3996 = vld [vmem:[%s3995] sm:$0xf]
    %v3997 = vld [vmem:[%s3995 + $0x4] sm:$0xf]
    %v3998 = vld [vmem:[%s3995 + $0x8] sm:$0xf]
    %v3999 = vld [vmem:[%s3995 + $0xc] sm:$0xf]
    %v4000 = vld [vmem:[%s3995 + $0x10] sm:$0xf]
    %v4001 = vld [vmem:[%s3995 + $0x14] sm:$0xf]
    %v4002 = vld [vmem:[%s3995 + $0x18] sm:$0xf]
    %v4003 = vld [vmem:[%s3995 + $0x1c] sm:$0xf]
    %v4004 = vld [vmem:[%s3995 + $0x20] sm:$0xf]
    %v4005 = vld [vmem:[%s3995 + $0x24] sm:$0xf]
    %v4006 = vld [vmem:[%s3995 + $0x28] sm:$0xf]
    %v4007 = vld [vmem:[%s3995 + $0x2c] sm:$0xf]
    %v4008 = vld [vmem:[%s3995 + $0x30] sm:$0xf]
    %v4009 = vld [vmem:[%s3995 + $0x34] sm:$0xf]
    %v4010 = vld [vmem:[%s3995 + $0x38] sm:$0xf]
    %v4011 = vld [vmem:[%s3995 + $0x3c] sm:$0xf]
    %v4028 = vunpack.c.l.b16 %v3996
    %v4029 = vunpack.c.l.b16 %v3997
    %v4030 = vunpack.c.l.b16 %v3998
    %v4031 = vunpack.c.l.b16 %v3999
    %v4032 = vunpack.c.l.b16 %v4000
    %v4033 = vunpack.c.l.b16 %v4001
    %v4034 = vunpack.c.l.b16 %v4002
    %v4035 = vunpack.c.l.b16 %v4003
    %v4036 = vunpack.c.l.b16 %v4004
    %v4037 = vunpack.c.l.b16 %v4005
    %v4038 = vunpack.c.l.b16 %v4006
    %v4039 = vunpack.c.l.b16 %v4007
    %v4040 = vunpack.c.l.b16 %v4008
    %v4041 = vunpack.c.l.b16 %v4009
    %v4042 = vunpack.c.l.b16 %v4010
    %v4043 = vunpack.c.l.b16 %v4011
    %v4044 = vpack.c.b16 %v4029, %v4028
    %v4045 = vpack.c.b16 %v4031, %v4030
    %v4046 = vpack.c.b16 %v4033, %v4032
    %v4047 = vpack.c.b16 %v4035, %v4034
    %v4048 = vpack.c.b16 %v4037, %v4036
    %v4049 = vpack.c.b16 %v4039, %v4038
    %v4050 = vpack.c.b16 %v4041, %v4040
    %v4051 = vpack.c.b16 %v4043, %v4042
    %4060 = vmatpush.bf16.msra.mxu0 %v4051
    %4061 = vmatpush.bf16.msra.mxu0 %v4050
    %4062 = vmatpush.bf16.msra.mxu0 %v4049
    %4063 = vmatpush.bf16.msra.mxu0 %v4048
    %4064 = vmatpush.bf16.msra.mxu0 %v4047
    %4065 = vmatpush.bf16.msra.mxu0 %v4046
    %4066 = vmatpush.bf16.msra.mxu0 %v4045
    %4067 = vmatpush.bf16.msra.mxu0 %v4044
    %4068 = vmatmul.bf16.gmra.mxu0 %v3992
    %v4069 = vpop.f32.mrf.mxu0
    %v4070 = vadd.f32 0.0, %v4069
    %v4071 = vpop.f32.mrf.mxu0
    %v4072 = vadd.f32 0.0, %v4071
    %4073 = vmatmul.bf16.gmra.mxu0 %v3993
    %v4074 = vpop.f32.mrf.mxu0
    %v4075 = vadd.f32 0.0, %v4074
    %v4076 = vpop.f32.mrf.mxu0
    %v4077 = vadd.f32 0.0, %v4076
    %4078 = vmatmul.bf16.gmra.mxu0 %v3994
    %v4079 = vpop.f32.mrf.mxu0
    %v4080 = vadd.f32 0.0, %v4079
    %v4081 = vpop.f32.mrf.mxu0
    %4082 = vdwg.mxu0
    %v4083 = vadd.f32 %v3982, %v4070
    %v4084 = vadd.f32 %v3983, %v4072
    %v4085 = vadd.f32 %v3984, %v4075
    %v4086 = vadd.f32 %v3985, %v4077
    %v4087 = vadd.f32 %v3986, %v4080
    %v4088 = vld [vmem:[#allocation5 + $0x6] sm:$0xff]
    %v4089 = vld [vmem:[#allocation5 + $0xe] sm:$0xff]
    %v4090 = vld [vmem:[#allocation5 + $0x16] sm:$0xff]
    %v4091 = vld [vmem:[#allocation5 + $0x1e] sm:$0xff]
    %v4092 = vld [vmem:[#allocation5 + $0x26] sm:$0xff]
    %v4093 = vpack.c.bf16 %v4089, %v4088
    %v4094 = vpack.c.bf16 %v4091, %v4090
    %v4095 = vpack.c.bf16 %v4092, %v4092
    %s4096 = scalar_lea.vmem [#allocation12], 2112
    %v4097 = vld [vmem:[%s4096] sm:$0xf]
    %v4098 = vld [vmem:[%s4096 + $0x4] sm:$0xf]
    %v4099 = vld [vmem:[%s4096 + $0x8] sm:$0xf]
    %v4100 = vld [vmem:[%s4096 + $0xc] sm:$0xf]
    %v4101 = vld [vmem:[%s4096 + $0x10] sm:$0xf]
    %v4102 = vld [vmem:[%s4096 + $0x14] sm:$0xf]
    %v4103 = vld [vmem:[%s4096 + $0x18] sm:$0xf]
    %v4104 = vld [vmem:[%s4096 + $0x1c] sm:$0xf]
    %v4105 = vld [vmem:[%s4096 + $0x20] sm:$0xf]
    %v4106 = vld [vmem:[%s4096 + $0x24] sm:$0xf]
    %v4107 = vld [vmem:[%s4096 + $0x28] sm:$0xf]
    %v4108 = vld [vmem:[%s4096 + $0x2c] sm:$0xf]
    %v4109 = vld [vmem:[%s4096 + $0x30] sm:$0xf]
    %v4110 = vld [vmem:[%s4096 + $0x34] sm:$0xf]
    %v4111 = vld [vmem:[%s4096 + $0x38] sm:$0xf]
    %v4112 = vld [vmem:[%s4096 + $0x3c] sm:$0xf]
    %v4129 = vunpack.c.l.b16 %v4097
    %v4130 = vunpack.c.l.b16 %v4098
    %v4131 = vunpack.c.l.b16 %v4099
    %v4132 = vunpack.c.l.b16 %v4100
    %v4133 = vunpack.c.l.b16 %v4101
    %v4134 = vunpack.c.l.b16 %v4102
    %v4135 = vunpack.c.l.b16 %v4103
    %v4136 = vunpack.c.l.b16 %v4104
    %v4137 = vunpack.c.l.b16 %v4105
    %v4138 = vunpack.c.l.b16 %v4106
    %v4139 = vunpack.c.l.b16 %v4107
    %v4140 = vunpack.c.l.b16 %v4108
    %v4141 = vunpack.c.l.b16 %v4109
    %v4142 = vunpack.c.l.b16 %v4110
    %v4143 = vunpack.c.l.b16 %v4111
    %v4144 = vunpack.c.l.b16 %v4112
    %v4145 = vpack.c.b16 %v4130, %v4129
    %v4146 = vpack.c.b16 %v4132, %v4131
    %v4147 = vpack.c.b16 %v4134, %v4133
    %v4148 = vpack.c.b16 %v4136, %v4135
    %v4149 = vpack.c.b16 %v4138, %v4137
    %v4150 = vpack.c.b16 %v4140, %v4139
    %v4151 = vpack.c.b16 %v4142, %v4141
    %v4152 = vpack.c.b16 %v4144, %v4143
    %4161 = vmatpush.bf16.msra.mxu0 %v4152
    %4162 = vmatpush.bf16.msra.mxu0 %v4151
    %4163 = vmatpush.bf16.msra.mxu0 %v4150
    %4164 = vmatpush.bf16.msra.mxu0 %v4149
    %4165 = vmatpush.bf16.msra.mxu0 %v4148
    %4166 = vmatpush.bf16.msra.mxu0 %v4147
    %4167 = vmatpush.bf16.msra.mxu0 %v4146
    %4168 = vmatpush.bf16.msra.mxu0 %v4145
    %4169 = vmatmul.bf16.gmra.mxu0 %v4093
    %v4170 = vpop.f32.mrf.mxu0
    %v4171 = vadd.f32 0.0, %v4170
    %v4172 = vpop.f32.mrf.mxu0
    %v4173 = vadd.f32 0.0, %v4172
    %4174 = vmatmul.bf16.gmra.mxu0 %v4094
    %v4175 = vpop.f32.mrf.mxu0
    %v4176 = vadd.f32 0.0, %v4175
    %v4177 = vpop.f32.mrf.mxu0
    %v4178 = vadd.f32 0.0, %v4177
    %4179 = vmatmul.bf16.gmra.mxu0 %v4095
    %v4180 = vpop.f32.mrf.mxu0
    %v4181 = vadd.f32 0.0, %v4180
    %v4182 = vpop.f32.mrf.mxu0
    %4183 = vdwg.mxu0
    %v4184 = vadd.f32 %v4083, %v4171
    %v4185 = vadd.f32 %v4084, %v4173
    %v4186 = vadd.f32 %v4085, %v4176
    %v4187 = vadd.f32 %v4086, %v4178
    %v4188 = vadd.f32 %v4087, %v4181
    %v4189 = vld [vmem:[#allocation5 + $0x7] sm:$0xff]
    %v4190 = vld [vmem:[#allocation5 + $0xf] sm:$0xff]
    %v4191 = vld [vmem:[#allocation5 + $0x17] sm:$0xff]
    %v4192 = vld [vmem:[#allocation5 + $0x1f] sm:$0xff]
    %v4193 = vld [vmem:[#allocation5 + $0x27] sm:$0xff]
    %v4194 = vpack.c.bf16 %v4190, %v4189
    %v4195 = vpack.c.bf16 %v4192, %v4191
    %v4196 = vpack.c.bf16 %v4193, %v4193
    %s4197 = scalar_lea.vmem [#allocation12], 2176
    %v4198 = vld [vmem:[%s4197] sm:$0xf]
    %v4199 = vld [vmem:[%s4197 + $0x4] sm:$0xf]
    %v4200 = vld [vmem:[%s4197 + $0x8] sm:$0xf]
    %v4201 = vld [vmem:[%s4197 + $0xc] sm:$0xf]
    %v4202 = vld [vmem:[%s4197 + $0x10] sm:$0xf]
    %v4203 = vld [vmem:[%s4197 + $0x14] sm:$0xf]
    %v4204 = vld [vmem:[%s4197 + $0x18] sm:$0xf]
    %v4205 = vld [vmem:[%s4197 + $0x1c] sm:$0xf]
    %v4206 = vld [vmem:[%s4197 + $0x20] sm:$0xf]
    %v4207 = vld [vmem:[%s4197 + $0x24] sm:$0xf]
    %v4208 = vld [vmem:[%s4197 + $0x28] sm:$0xf]
    %v4209 = vld [vmem:[%s4197 + $0x2c] sm:$0xf]
    %v4210 = vld [vmem:[%s4197 + $0x30] sm:$0xf]
    %v4211 = vld [vmem:[%s4197 + $0x34] sm:$0xf]
    %v4212 = vld [vmem:[%s4197 + $0x38] sm:$0xf]
    %v4213 = vld [vmem:[%s4197 + $0x3c] sm:$0xf]
    %v4230 = vunpack.c.l.b16 %v4198
    %v4231 = vunpack.c.l.b16 %v4199
    %v4232 = vunpack.c.l.b16 %v4200
    %v4233 = vunpack.c.l.b16 %v4201
    %v4234 = vunpack.c.l.b16 %v4202
    %v4235 = vunpack.c.l.b16 %v4203
    %v4236 = vunpack.c.l.b16 %v4204
    %v4237 = vunpack.c.l.b16 %v4205
    %v4238 = vunpack.c.l.b16 %v4206
    %v4239 = vunpack.c.l.b16 %v4207
    %v4240 = vunpack.c.l.b16 %v4208
    %v4241 = vunpack.c.l.b16 %v4209
    %v4242 = vunpack.c.l.b16 %v4210
    %v4243 = vunpack.c.l.b16 %v4211
    %v4244 = vunpack.c.l.b16 %v4212
    %v4245 = vunpack.c.l.b16 %v4213
    %v4246 = vpack.c.b16 %v4231, %v4230
    %v4247 = vpack.c.b16 %v4233, %v4232
    %v4248 = vpack.c.b16 %v4235, %v4234
    %v4249 = vpack.c.b16 %v4237, %v4236
    %v4250 = vpack.c.b16 %v4239, %v4238
    %v4251 = vpack.c.b16 %v4241, %v4240
    %v4252 = vpack.c.b16 %v4243, %v4242
    %v4253 = vpack.c.b16 %v4245, %v4244
    %4262 = vmatpush.bf16.msra.mxu0 %v4253
    %4263 = vmatpush.bf16.msra.mxu0 %v4252
    %4264 = vmatpush.bf16.msra.mxu0 %v4251
    %4265 = vmatpush.bf16.msra.mxu0 %v4250
    %4266 = vmatpush.bf16.msra.mxu0 %v4249
    %4267 = vmatpush.bf16.msra.mxu0 %v4248
    %4268 = vmatpush.bf16.msra.mxu0 %v4247
    %4269 = vmatpush.bf16.msra.mxu0 %v4246
    %4270 = vmatmul.bf16.gmra.mxu0 %v4194
    %v4271 = vpop.f32.mrf.mxu0
    %v4272 = vadd.f32 0.0, %v4271
    %v4273 = vpop.f32.mrf.mxu0
    %v4274 = vadd.f32 0.0, %v4273
    %4275 = vmatmul.bf16.gmra.mxu0 %v4195
    %v4276 = vpop.f32.mrf.mxu0
    %v4277 = vadd.f32 0.0, %v4276
    %v4278 = vpop.f32.mrf.mxu0
    %v4279 = vadd.f32 0.0, %v4278
    %4280 = vmatmul.bf16.gmra.mxu0 %v4196
    %v4281 = vpop.f32.mrf.mxu0
    %v4282 = vadd.f32 0.0, %v4281
    %v4283 = vpop.f32.mrf.mxu0
    %4284 = vdwg.mxu0
    %v4285 = vadd.f32 %v4184, %v4272
    %v4286 = vadd.f32 %v4185, %v4274
    %v4287 = vadd.f32 %v4186, %v4277
    %v4288 = vadd.f32 %v4187, %v4279
    %v4289 = vadd.f32 %v4188, %v4282
    %v4290 = vld [vmem:[#allocation15 + $0xe] sm:$0x1]
    %v4291 = vperm.slane %v4290, 0
    %v4292 = vadd.f32 %v4285, %v4291
    %v4293 = vadd.f32 %v4286, %v4291
    %v4294 = vadd.f32 %v4287, %v4291
    %v4295 = vadd.f32 %v4288, %v4291
    %v4296 = vadd.f32 %v4289, %v4291
    %v4297 = vmax.f32 %v4292, 0.0
    %v4298 = vmax.f32 %v4293, 0.0
    %v4299 = vmax.f32 %v4294, 0.0
    %v4300 = vmax.f32 %v4295, 0.0
    %v4301 = vmax.f32 %v4296, 0.0
    %4302 = vst [vmem:[#allocation4 + $0x4] sm:$0xff] %v4297
    %4303 = vst [vmem:[#allocation4 + $0xc] sm:$0xff] %v4298
    %4304 = vst [vmem:[#allocation4 + $0x14] sm:$0xff] %v4299
    %4305 = vst [vmem:[#allocation4 + $0x1c] sm:$0xff] %v4300
    %4306 = vst [vmem:[#allocation4 + $0x24] sm:$0xff] %v4301
    %v4307 = vld [vmem:[#allocation4 + $0x4] sm:$0xff]
    %v4308 = vld [vmem:[#allocation4 + $0xc] sm:$0xff]
    %v4309 = vld [vmem:[#allocation4 + $0x14] sm:$0xff]
    %v4310 = vld [vmem:[#allocation4 + $0x1c] sm:$0xff]
    %v4311 = vld [vmem:[#allocation4 + $0x24] sm:$0xff]
    %v4312 = vpack.c.bf16 %v4308, %v4307
    %v4313 = vpack.c.bf16 %v4310, %v4309
    %v4314 = vpack.c.bf16 %v4311, %v4311
    %s4315 = scalar_lea.vmem [#allocation12], 2240
    %v4316 = vld [vmem:[%s4315] sm:$0xf]
    %v4317 = vld [vmem:[%s4315 + $0x4] sm:$0xf]
    %v4318 = vld [vmem:[%s4315 + $0x8] sm:$0xf]
    %v4319 = vld [vmem:[%s4315 + $0xc] sm:$0xf]
    %v4320 = vld [vmem:[%s4315 + $0x10] sm:$0xf]
    %v4321 = vld [vmem:[%s4315 + $0x14] sm:$0xf]
    %v4322 = vld [vmem:[%s4315 + $0x18] sm:$0xf]
    %v4323 = vld [vmem:[%s4315 + $0x1c] sm:$0xf]
    %v4324 = vld [vmem:[%s4315 + $0x20] sm:$0xf]
    %v4325 = vld [vmem:[%s4315 + $0x24] sm:$0xf]
    %v4326 = vld [vmem:[%s4315 + $0x28] sm:$0xf]
    %v4327 = vld [vmem:[%s4315 + $0x2c] sm:$0xf]
    %v4328 = vld [vmem:[%s4315 + $0x30] sm:$0xf]
    %v4329 = vld [vmem:[%s4315 + $0x34] sm:$0xf]
    %v4330 = vld [vmem:[%s4315 + $0x38] sm:$0xf]
    %v4331 = vld [vmem:[%s4315 + $0x3c] sm:$0xf]
    %v4332 = vld [vmem:[#allocation15 + $0xf] sm:$0x1]
    %v4333 = vperm.slane %v4332, 0
    %v4350 = vunpack.c.l.b16 %v4316
    %v4351 = vunpack.c.l.b16 %v4317
    %v4352 = vunpack.c.l.b16 %v4318
    %v4353 = vunpack.c.l.b16 %v4319
    %v4354 = vunpack.c.l.b16 %v4320
    %v4355 = vunpack.c.l.b16 %v4321
    %v4356 = vunpack.c.l.b16 %v4322
    %v4357 = vunpack.c.l.b16 %v4323
    %v4358 = vunpack.c.l.b16 %v4324
    %v4359 = vunpack.c.l.b16 %v4325
    %v4360 = vunpack.c.l.b16 %v4326
    %v4361 = vunpack.c.l.b16 %v4327
    %v4362 = vunpack.c.l.b16 %v4328
    %v4363 = vunpack.c.l.b16 %v4329
    %v4364 = vunpack.c.l.b16 %v4330
    %v4365 = vunpack.c.l.b16 %v4331
    %v4366 = vpack.c.b16 %v4351, %v4350
    %v4367 = vpack.c.b16 %v4353, %v4352
    %v4368 = vpack.c.b16 %v4355, %v4354
    %v4369 = vpack.c.b16 %v4357, %v4356
    %v4370 = vpack.c.b16 %v4359, %v4358
    %v4371 = vpack.c.b16 %v4361, %v4360
    %v4372 = vpack.c.b16 %v4363, %v4362
    %v4373 = vpack.c.b16 %v4365, %v4364
    %4382 = vmatpush.bf16.msra.mxu0 %v4373
    %4383 = vmatpush.bf16.msra.mxu0 %v4372
    %4384 = vmatpush.bf16.msra.mxu0 %v4371
    %4385 = vmatpush.bf16.msra.mxu0 %v4370
    %4386 = vmatpush.bf16.msra.mxu0 %v4369
    %4387 = vmatpush.bf16.msra.mxu0 %v4368
    %4388 = vmatpush.bf16.msra.mxu0 %v4367
    %4389 = vmatpush.bf16.msra.mxu0 %v4366
    %4390 = vmatmul.bf16.gmra.mxu0 %v4312
    %v4391 = vpop.f32.mrf.mxu0
    %v4392 = vadd.f32 %v4333, %v4391
    %v4393 = vpop.f32.mrf.mxu0
    %v4394 = vadd.f32 %v4333, %v4393
    %4395 = vmatmul.bf16.gmra.mxu0 %v4313
    %v4396 = vpop.f32.mrf.mxu0
    %v4397 = vadd.f32 %v4333, %v4396
    %v4398 = vpop.f32.mrf.mxu0
    %v4399 = vadd.f32 %v4333, %v4398
    %4400 = vmatmul.bf16.gmra.mxu0 %v4314
    %v4401 = vpop.f32.mrf.mxu0
    %v4402 = vadd.f32 %v4333, %v4401
    %v4403 = vpop.f32.mrf.mxu0
    %4404 = vdwg.mxu0
    %v4405 = vmax.f32 %v4392, 0.0
    %v4406 = vmax.f32 %v4394, 0.0
    %v4407 = vmax.f32 %v4397, 0.0
    %v4408 = vmax.f32 %v4399, 0.0
    %v4409 = vmax.f32 %v4402, 0.0
    %v4410 = vmul.f32 %v4405, %v172
    %v4411 = vmul.f32 %v4406, %v173
    %v4412 = vmul.f32 %v4407, %v174
    %v4413 = vmul.f32 %v4408, %v175
    %v4414 = vmul.f32 %v4409, %v176
    %4415 = vst [vmem:[#allocation5 + $0x4] sm:$0xff] %v4410
    %4416 = vst [vmem:[#allocation5 + $0xc] sm:$0xff] %v4411
    %4417 = vst [vmem:[#allocation5 + $0x14] sm:$0xff] %v4412
    %4418 = vst [vmem:[#allocation5 + $0x1c] sm:$0xff] %v4413
    %4419 = vst [vmem:[#allocation5 + $0x24] sm:$0xff] %v4414
    %v4420 = vld [vmem:[#allocation5] sm:$0xff]
    %v4421 = vld [vmem:[#allocation5 + $0x8] sm:$0xff]
    %v4422 = vld [vmem:[#allocation5 + $0x10] sm:$0xff]
    %v4423 = vld [vmem:[#allocation5 + $0x18] sm:$0xff]
    %v4424 = vld [vmem:[#allocation5 + $0x20] sm:$0xff]
    %v4425 = vpack.c.bf16 %v4421, %v4420
    %v4426 = vpack.c.bf16 %v4423, %v4422
    %v4427 = vpack.c.bf16 %v4424, %v4424
    %s4428 = scalar_lea.vmem [#allocation12], 2304
    %v4429 = vld [vmem:[%s4428] sm:$0xf]
    %v4430 = vld [vmem:[%s4428 + $0x4] sm:$0xf]
    %v4431 = vld [vmem:[%s4428 + $0x8] sm:$0xf]
    %v4432 = vld [vmem:[%s4428 + $0xc] sm:$0xf]
    %v4433 = vld [vmem:[%s4428 + $0x10] sm:$0xf]
    %v4434 = vld [vmem:[%s4428 + $0x14] sm:$0xf]
    %v4435 = vld [vmem:[%s4428 + $0x18] sm:$0xf]
    %v4436 = vld [vmem:[%s4428 + $0x1c] sm:$0xf]
    %v4437 = vld [vmem:[%s4428 + $0x20] sm:$0xf]
    %v4438 = vld [vmem:[%s4428 + $0x24] sm:$0xf]
    %v4439 = vld [vmem:[%s4428 + $0x28] sm:$0xf]
    %v4440 = vld [vmem:[%s4428 + $0x2c] sm:$0xf]
    %v4441 = vld [vmem:[%s4428 + $0x30] sm:$0xf]
    %v4442 = vld [vmem:[%s4428 + $0x34] sm:$0xf]
    %v4443 = vld [vmem:[%s4428 + $0x38] sm:$0xf]
    %v4444 = vld [vmem:[%s4428 + $0x3c] sm:$0xf]
    %v4445 = vld [vmem:[#allocation5 + $0x1] sm:$0xff]
    %v4446 = vld [vmem:[#allocation5 + $0x9] sm:$0xff]
    %v4447 = vld [vmem:[#allocation5 + $0x11] sm:$0xff]
    %v4448 = vld [vmem:[#allocation5 + $0x19] sm:$0xff]
    %v4449 = vld [vmem:[#allocation5 + $0x21] sm:$0xff]
    %v4450 = vpack.c.bf16 %v4446, %v4445
    %v4451 = vpack.c.bf16 %v4448, %v4447
    %v4452 = vpack.c.bf16 %v4449, %v4449
    %s4453 = scalar_lea.vmem [#allocation12], 2368
    %v4454 = vld [vmem:[%s4453] sm:$0xf]
    %v4455 = vld [vmem:[%s4453 + $0x4] sm:$0xf]
    %v4456 = vld [vmem:[%s4453 + $0x8] sm:$0xf]
    %v4457 = vld [vmem:[%s4453 + $0xc] sm:$0xf]
    %v4458 = vld [vmem:[%s4453 + $0x10] sm:$0xf]
    %v4459 = vld [vmem:[%s4453 + $0x14] sm:$0xf]
    %v4460 = vld [vmem:[%s4453 + $0x18] sm:$0xf]
    %v4461 = vld [vmem:[%s4453 + $0x1c] sm:$0xf]
    %v4462 = vld [vmem:[%s4453 + $0x20] sm:$0xf]
    %v4463 = vld [vmem:[%s4453 + $0x24] sm:$0xf]
    %v4464 = vld [vmem:[%s4453 + $0x28] sm:$0xf]
    %v4465 = vld [vmem:[%s4453 + $0x2c] sm:$0xf]
    %v4466 = vld [vmem:[%s4453 + $0x30] sm:$0xf]
    %v4467 = vld [vmem:[%s4453 + $0x34] sm:$0xf]
    %v4468 = vld [vmem:[%s4453 + $0x38] sm:$0xf]
    %v4469 = vld [vmem:[%s4453 + $0x3c] sm:$0xf]
    %v4486 = vunpack.c.l.b16 %v4454
    %v4487 = vunpack.c.l.b16 %v4455
    %v4488 = vunpack.c.l.b16 %v4456
    %v4489 = vunpack.c.l.b16 %v4457
    %v4490 = vunpack.c.l.b16 %v4458
    %v4491 = vunpack.c.l.b16 %v4459
    %v4492 = vunpack.c.l.b16 %v4460
    %v4493 = vunpack.c.l.b16 %v4461
    %v4494 = vunpack.c.l.b16 %v4462
    %v4495 = vunpack.c.l.b16 %v4463
    %v4496 = vunpack.c.l.b16 %v4464
    %v4497 = vunpack.c.l.b16 %v4465
    %v4498 = vunpack.c.l.b16 %v4466
    %v4499 = vunpack.c.l.b16 %v4467
    %v4500 = vunpack.c.l.b16 %v4468
    %v4501 = vunpack.c.l.b16 %v4469
    %v4502 = vpack.c.b16 %v4487, %v4486
    %v4503 = vpack.c.b16 %v4489, %v4488
    %v4504 = vpack.c.b16 %v4491, %v4490
    %v4505 = vpack.c.b16 %v4493, %v4492
    %v4506 = vpack.c.b16 %v4495, %v4494
    %v4507 = vpack.c.b16 %v4497, %v4496
    %v4508 = vpack.c.b16 %v4499, %v4498
    %v4509 = vpack.c.b16 %v4501, %v4500
    %4518 = vmatpush.bf16.msra.mxu0 %v4509
    %4519 = vmatpush.bf16.msra.mxu0 %v4508
    %4520 = vmatpush.bf16.msra.mxu0 %v4507
    %4521 = vmatpush.bf16.msra.mxu0 %v4506
    %4522 = vmatpush.bf16.msra.mxu0 %v4505
    %4523 = vmatpush.bf16.msra.mxu0 %v4504
    %4524 = vmatpush.bf16.msra.mxu0 %v4503
    %4525 = vmatpush.bf16.msra.mxu0 %v4502
    %4526 = vmatmul.bf16.gmra.mxu0 %v4450
    %v4527 = vpop.f32.mrf.mxu0
    %v4528 = vadd.f32 0.0, %v4527
    %v4529 = vpop.f32.mrf.mxu0
    %v4530 = vadd.f32 0.0, %v4529
    %4531 = vmatmul.bf16.gmra.mxu0 %v4451
    %v4532 = vpop.f32.mrf.mxu0
    %v4533 = vadd.f32 0.0, %v4532
    %v4534 = vpop.f32.mrf.mxu0
    %v4535 = vadd.f32 0.0, %v4534
    %4536 = vmatmul.bf16.gmra.mxu0 %v4452
    %v4537 = vpop.f32.mrf.mxu0
    %v4538 = vadd.f32 0.0, %v4537
    %v4539 = vpop.f32.mrf.mxu0
    %4540 = vdwg.mxu0
    %v4557 = vunpack.c.l.b16 %v4429
    %v4558 = vunpack.c.l.b16 %v4430
    %v4559 = vunpack.c.l.b16 %v4431
    %v4560 = vunpack.c.l.b16 %v4432
    %v4561 = vunpack.c.l.b16 %v4433
    %v4562 = vunpack.c.l.b16 %v4434
    %v4563 = vunpack.c.l.b16 %v4435
    %v4564 = vunpack.c.l.b16 %v4436
    %v4565 = vunpack.c.l.b16 %v4437
    %v4566 = vunpack.c.l.b16 %v4438
    %v4567 = vunpack.c.l.b16 %v4439
    %v4568 = vunpack.c.l.b16 %v4440
    %v4569 = vunpack.c.l.b16 %v4441
    %v4570 = vunpack.c.l.b16 %v4442
    %v4571 = vunpack.c.l.b16 %v4443
    %v4572 = vunpack.c.l.b16 %v4444
    %v4573 = vpack.c.b16 %v4558, %v4557
    %v4574 = vpack.c.b16 %v4560, %v4559
    %v4575 = vpack.c.b16 %v4562, %v4561
    %v4576 = vpack.c.b16 %v4564, %v4563
    %v4577 = vpack.c.b16 %v4566, %v4565
    %v4578 = vpack.c.b16 %v4568, %v4567
    %v4579 = vpack.c.b16 %v4570, %v4569
    %v4580 = vpack.c.b16 %v4572, %v4571
    %4589 = vmatpush.bf16.msra.mxu0 %v4580
    %4590 = vmatpush.bf16.msra.mxu0 %v4579
    %4591 = vmatpush.bf16.msra.mxu0 %v4578
    %4592 = vmatpush.bf16.msra.mxu0 %v4577
    %4593 = vmatpush.bf16.msra.mxu0 %v4576
    %4594 = vmatpush.bf16.msra.mxu0 %v4575
    %4595 = vmatpush.bf16.msra.mxu0 %v4574
    %4596 = vmatpush.bf16.msra.mxu0 %v4573
    %4597 = vmatmul.bf16.gmra.mxu0 %v4425
    %v4598 = vpop.f32.mrf.mxu0
    %v4599 = vadd.f32 %v4528, %v4598
    %v4600 = vpop.f32.mrf.mxu0
    %v4601 = vadd.f32 %v4530, %v4600
    %4602 = vmatmul.bf16.gmra.mxu0 %v4426
    %v4603 = vpop.f32.mrf.mxu0
    %v4604 = vadd.f32 %v4533, %v4603
    %v4605 = vpop.f32.mrf.mxu0
    %v4606 = vadd.f32 %v4535, %v4605
    %4607 = vmatmul.bf16.gmra.mxu0 %v4427
    %v4608 = vpop.f32.mrf.mxu0
    %v4609 = vadd.f32 %v4538, %v4608
    %v4610 = vpop.f32.mrf.mxu0
    %4611 = vdwg.mxu0
    %v4612 = vld [vmem:[#allocation5 + $0x2] sm:$0xff]
    %v4613 = vld [vmem:[#allocation5 + $0xa] sm:$0xff]
    %v4614 = vld [vmem:[#allocation5 + $0x12] sm:$0xff]
    %v4615 = vld [vmem:[#allocation5 + $0x1a] sm:$0xff]
    %v4616 = vld [vmem:[#allocation5 + $0x22] sm:$0xff]
    %v4617 = vpack.c.bf16 %v4613, %v4612
    %v4618 = vpack.c.bf16 %v4615, %v4614
    %v4619 = vpack.c.bf16 %v4616, %v4616
    %s4620 = scalar_lea.vmem [#allocation12], 2432
    %v4621 = vld [vmem:[%s4620] sm:$0xf]
    %v4622 = vld [vmem:[%s4620 + $0x4] sm:$0xf]
    %v4623 = vld [vmem:[%s4620 + $0x8] sm:$0xf]
    %v4624 = vld [vmem:[%s4620 + $0xc] sm:$0xf]
    %v4625 = vld [vmem:[%s4620 + $0x10] sm:$0xf]
    %v4626 = vld [vmem:[%s4620 + $0x14] sm:$0xf]
    %v4627 = vld [vmem:[%s4620 + $0x18] sm:$0xf]
    %v4628 = vld [vmem:[%s4620 + $0x1c] sm:$0xf]
    %v4629 = vld [vmem:[%s4620 + $0x20] sm:$0xf]
    %v4630 = vld [vmem:[%s4620 + $0x24] sm:$0xf]
    %v4631 = vld [vmem:[%s4620 + $0x28] sm:$0xf]
    %v4632 = vld [vmem:[%s4620 + $0x2c] sm:$0xf]
    %v4633 = vld [vmem:[%s4620 + $0x30] sm:$0xf]
    %v4634 = vld [vmem:[%s4620 + $0x34] sm:$0xf]
    %v4635 = vld [vmem:[%s4620 + $0x38] sm:$0xf]
    %v4636 = vld [vmem:[%s4620 + $0x3c] sm:$0xf]
    %v4653 = vunpack.c.l.b16 %v4621
    %v4654 = vunpack.c.l.b16 %v4622
    %v4655 = vunpack.c.l.b16 %v4623
    %v4656 = vunpack.c.l.b16 %v4624
    %v4657 = vunpack.c.l.b16 %v4625
    %v4658 = vunpack.c.l.b16 %v4626
    %v4659 = vunpack.c.l.b16 %v4627
    %v4660 = vunpack.c.l.b16 %v4628
    %v4661 = vunpack.c.l.b16 %v4629
    %v4662 = vunpack.c.l.b16 %v4630
    %v4663 = vunpack.c.l.b16 %v4631
    %v4664 = vunpack.c.l.b16 %v4632
    %v4665 = vunpack.c.l.b16 %v4633
    %v4666 = vunpack.c.l.b16 %v4634
    %v4667 = vunpack.c.l.b16 %v4635
    %v4668 = vunpack.c.l.b16 %v4636
    %v4669 = vpack.c.b16 %v4654, %v4653
    %v4670 = vpack.c.b16 %v4656, %v4655
    %v4671 = vpack.c.b16 %v4658, %v4657
    %v4672 = vpack.c.b16 %v4660, %v4659
    %v4673 = vpack.c.b16 %v4662, %v4661
    %v4674 = vpack.c.b16 %v4664, %v4663
    %v4675 = vpack.c.b16 %v4666, %v4665
    %v4676 = vpack.c.b16 %v4668, %v4667
    %4685 = vmatpush.bf16.msra.mxu0 %v4676
    %4686 = vmatpush.bf16.msra.mxu0 %v4675
    %4687 = vmatpush.bf16.msra.mxu0 %v4674
    %4688 = vmatpush.bf16.msra.mxu0 %v4673
    %4689 = vmatpush.bf16.msra.mxu0 %v4672
    %4690 = vmatpush.bf16.msra.mxu0 %v4671
    %4691 = vmatpush.bf16.msra.mxu0 %v4670
    %4692 = vmatpush.bf16.msra.mxu0 %v4669
    %4693 = vmatmul.bf16.gmra.mxu0 %v4617
    %v4694 = vpop.f32.mrf.mxu0
    %v4695 = vadd.f32 0.0, %v4694
    %v4696 = vpop.f32.mrf.mxu0
    %v4697 = vadd.f32 0.0, %v4696
    %4698 = vmatmul.bf16.gmra.mxu0 %v4618
    %v4699 = vpop.f32.mrf.mxu0
    %v4700 = vadd.f32 0.0, %v4699
    %v4701 = vpop.f32.mrf.mxu0
    %v4702 = vadd.f32 0.0, %v4701
    %4703 = vmatmul.bf16.gmra.mxu0 %v4619
    %v4704 = vpop.f32.mrf.mxu0
    %v4705 = vadd.f32 0.0, %v4704
    %v4706 = vpop.f32.mrf.mxu0
    %4707 = vdwg.mxu0
    %v4708 = vadd.f32 %v4599, %v4695
    %v4709 = vadd.f32 %v4601, %v4697
    %v4710 = vadd.f32 %v4604, %v4700
    %v4711 = vadd.f32 %v4606, %v4702
    %v4712 = vadd.f32 %v4609, %v4705
    %v4713 = vld [vmem:[#allocation5 + $0x3] sm:$0xff]
    %v4714 = vld [vmem:[#allocation5 + $0xb] sm:$0xff]
    %v4715 = vld [vmem:[#allocation5 + $0x13] sm:$0xff]
    %v4716 = vld [vmem:[#allocation5 + $0x1b] sm:$0xff]
    %v4717 = vld [vmem:[#allocation5 + $0x23] sm:$0xff]
    %v4718 = vpack.c.bf16 %v4714, %v4713
    %v4719 = vpack.c.bf16 %v4716, %v4715
    %v4720 = vpack.c.bf16 %v4717, %v4717
    %s4721 = scalar_lea.vmem [#allocation12], 2496
    %v4722 = vld [vmem:[%s4721] sm:$0xf]
    %v4723 = vld [vmem:[%s4721 + $0x4] sm:$0xf]
    %v4724 = vld [vmem:[%s4721 + $0x8] sm:$0xf]
    %v4725 = vld [vmem:[%s4721 + $0xc] sm:$0xf]
    %v4726 = vld [vmem:[%s4721 + $0x10] sm:$0xf]
    %v4727 = vld [vmem:[%s4721 + $0x14] sm:$0xf]
    %v4728 = vld [vmem:[%s4721 + $0x18] sm:$0xf]
    %v4729 = vld [vmem:[%s4721 + $0x1c] sm:$0xf]
    %v4730 = vld [vmem:[%s4721 + $0x20] sm:$0xf]
    %v4731 = vld [vmem:[%s4721 + $0x24] sm:$0xf]
    %v4732 = vld [vmem:[%s4721 + $0x28] sm:$0xf]
    %v4733 = vld [vmem:[%s4721 + $0x2c] sm:$0xf]
    %v4734 = vld [vmem:[%s4721 + $0x30] sm:$0xf]
    %v4735 = vld [vmem:[%s4721 + $0x34] sm:$0xf]
    %v4736 = vld [vmem:[%s4721 + $0x38] sm:$0xf]
    %v4737 = vld [vmem:[%s4721 + $0x3c] sm:$0xf]
    %v4754 = vunpack.c.l.b16 %v4722
    %v4755 = vunpack.c.l.b16 %v4723
    %v4756 = vunpack.c.l.b16 %v4724
    %v4757 = vunpack.c.l.b16 %v4725
    %v4758 = vunpack.c.l.b16 %v4726
    %v4759 = vunpack.c.l.b16 %v4727
    %v4760 = vunpack.c.l.b16 %v4728
    %v4761 = vunpack.c.l.b16 %v4729
    %v4762 = vunpack.c.l.b16 %v4730
    %v4763 = vunpack.c.l.b16 %v4731
    %v4764 = vunpack.c.l.b16 %v4732
    %v4765 = vunpack.c.l.b16 %v4733
    %v4766 = vunpack.c.l.b16 %v4734
    %v4767 = vunpack.c.l.b16 %v4735
    %v4768 = vunpack.c.l.b16 %v4736
    %v4769 = vunpack.c.l.b16 %v4737
    %v4770 = vpack.c.b16 %v4755, %v4754
    %v4771 = vpack.c.b16 %v4757, %v4756
    %v4772 = vpack.c.b16 %v4759, %v4758
    %v4773 = vpack.c.b16 %v4761, %v4760
    %v4774 = vpack.c.b16 %v4763, %v4762
    %v4775 = vpack.c.b16 %v4765, %v4764
    %v4776 = vpack.c.b16 %v4767, %v4766
    %v4777 = vpack.c.b16 %v4769, %v4768
    %4786 = vmatpush.bf16.msra.mxu0 %v4777
    %4787 = vmatpush.bf16.msra.mxu0 %v4776
    %4788 = vmatpush.bf16.msra.mxu0 %v4775
    %4789 = vmatpush.bf16.msra.mxu0 %v4774
    %4790 = vmatpush.bf16.msra.mxu0 %v4773
    %4791 = vmatpush.bf16.msra.mxu0 %v4772
    %4792 = vmatpush.bf16.msra.mxu0 %v4771
    %4793 = vmatpush.bf16.msra.mxu0 %v4770
    %4794 = vmatmul.bf16.gmra.mxu0 %v4718
    %v4795 = vpop.f32.mrf.mxu0
    %v4796 = vadd.f32 0.0, %v4795
    %v4797 = vpop.f32.mrf.mxu0
    %v4798 = vadd.f32 0.0, %v4797
    %4799 = vmatmul.bf16.gmra.mxu0 %v4719
    %v4800 = vpop.f32.mrf.mxu0
    %v4801 = vadd.f32 0.0, %v4800
    %v4802 = vpop.f32.mrf.mxu0
    %v4803 = vadd.f32 0.0, %v4802
    %4804 = vmatmul.bf16.gmra.mxu0 %v4720
    %v4805 = vpop.f32.mrf.mxu0
    %v4806 = vadd.f32 0.0, %v4805
    %v4807 = vpop.f32.mrf.mxu0
    %4808 = vdwg.mxu0
    %v4809 = vadd.f32 %v4708, %v4796
    %v4810 = vadd.f32 %v4709, %v4798
    %v4811 = vadd.f32 %v4710, %v4801
    %v4812 = vadd.f32 %v4711, %v4803
    %v4813 = vadd.f32 %v4712, %v4806
    %v4814 = vld [vmem:[#allocation5 + $0x4] sm:$0xff]
    %v4815 = vld [vmem:[#allocation5 + $0xc] sm:$0xff]
    %v4816 = vld [vmem:[#allocation5 + $0x14] sm:$0xff]
    %v4817 = vld [vmem:[#allocation5 + $0x1c] sm:$0xff]
    %v4818 = vld [vmem:[#allocation5 + $0x24] sm:$0xff]
    %v4819 = vpack.c.bf16 %v4815, %v4814
    %v4820 = vpack.c.bf16 %v4817, %v4816
    %v4821 = vpack.c.bf16 %v4818, %v4818
    %s4822 = scalar_lea.vmem [#allocation12], 2560
    %v4823 = vld [vmem:[%s4822] sm:$0xf]
    %v4824 = vld [vmem:[%s4822 + $0x4] sm:$0xf]
    %v4825 = vld [vmem:[%s4822 + $0x8] sm:$0xf]
    %v4826 = vld [vmem:[%s4822 + $0xc] sm:$0xf]
    %v4827 = vld [vmem:[%s4822 + $0x10] sm:$0xf]
    %v4828 = vld [vmem:[%s4822 + $0x14] sm:$0xf]
    %v4829 = vld [vmem:[%s4822 + $0x18] sm:$0xf]
    %v4830 = vld [vmem:[%s4822 + $0x1c] sm:$0xf]
    %v4831 = vld [vmem:[%s4822 + $0x20] sm:$0xf]
    %v4832 = vld [vmem:[%s4822 + $0x24] sm:$0xf]
    %v4833 = vld [vmem:[%s4822 + $0x28] sm:$0xf]
    %v4834 = vld [vmem:[%s4822 + $0x2c] sm:$0xf]
    %v4835 = vld [vmem:[%s4822 + $0x30] sm:$0xf]
    %v4836 = vld [vmem:[%s4822 + $0x34] sm:$0xf]
    %v4837 = vld [vmem:[%s4822 + $0x38] sm:$0xf]
    %v4838 = vld [vmem:[%s4822 + $0x3c] sm:$0xf]
    %v4855 = vunpack.c.l.b16 %v4823
    %v4856 = vunpack.c.l.b16 %v4824
    %v4857 = vunpack.c.l.b16 %v4825
    %v4858 = vunpack.c.l.b16 %v4826
    %v4859 = vunpack.c.l.b16 %v4827
    %v4860 = vunpack.c.l.b16 %v4828
    %v4861 = vunpack.c.l.b16 %v4829
    %v4862 = vunpack.c.l.b16 %v4830
    %v4863 = vunpack.c.l.b16 %v4831
    %v4864 = vunpack.c.l.b16 %v4832
    %v4865 = vunpack.c.l.b16 %v4833
    %v4866 = vunpack.c.l.b16 %v4834
    %v4867 = vunpack.c.l.b16 %v4835
    %v4868 = vunpack.c.l.b16 %v4836
    %v4869 = vunpack.c.l.b16 %v4837
    %v4870 = vunpack.c.l.b16 %v4838
    %v4871 = vpack.c.b16 %v4856, %v4855
    %v4872 = vpack.c.b16 %v4858, %v4857
    %v4873 = vpack.c.b16 %v4860, %v4859
    %v4874 = vpack.c.b16 %v4862, %v4861
    %v4875 = vpack.c.b16 %v4864, %v4863
    %v4876 = vpack.c.b16 %v4866, %v4865
    %v4877 = vpack.c.b16 %v4868, %v4867
    %v4878 = vpack.c.b16 %v4870, %v4869
    %4887 = vmatpush.bf16.msra.mxu0 %v4878
    %4888 = vmatpush.bf16.msra.mxu0 %v4877
    %4889 = vmatpush.bf16.msra.mxu0 %v4876
    %4890 = vmatpush.bf16.msra.mxu0 %v4875
    %4891 = vmatpush.bf16.msra.mxu0 %v4874
    %4892 = vmatpush.bf16.msra.mxu0 %v4873
    %4893 = vmatpush.bf16.msra.mxu0 %v4872
    %4894 = vmatpush.bf16.msra.mxu0 %v4871
    %4895 = vmatmul.bf16.gmra.mxu0 %v4819
    %v4896 = vpop.f32.mrf.mxu0
    %v4897 = vadd.f32 0.0, %v4896
    %v4898 = vpop.f32.mrf.mxu0
    %v4899 = vadd.f32 0.0, %v4898
    %4900 = vmatmul.bf16.gmra.mxu0 %v4820
    %v4901 = vpop.f32.mrf.mxu0
    %v4902 = vadd.f32 0.0, %v4901
    %v4903 = vpop.f32.mrf.mxu0
    %v4904 = vadd.f32 0.0, %v4903
    %4905 = vmatmul.bf16.gmra.mxu0 %v4821
    %v4906 = vpop.f32.mrf.mxu0
    %v4907 = vadd.f32 0.0, %v4906
    %v4908 = vpop.f32.mrf.mxu0
    %4909 = vdwg.mxu0
    %v4910 = vadd.f32 %v4809, %v4897
    %v4911 = vadd.f32 %v4810, %v4899
    %v4912 = vadd.f32 %v4811, %v4902
    %v4913 = vadd.f32 %v4812, %v4904
    %v4914 = vadd.f32 %v4813, %v4907
    %v4915 = vld [vmem:[#allocation5 + $0x5] sm:$0xff]
    %v4916 = vld [vmem:[#allocation5 + $0xd] sm:$0xff]
    %v4917 = vld [vmem:[#allocation5 + $0x15] sm:$0xff]
    %v4918 = vld [vmem:[#allocation5 + $0x1d] sm:$0xff]
    %v4919 = vld [vmem:[#allocation5 + $0x25] sm:$0xff]
    %v4920 = vpack.c.bf16 %v4916, %v4915
    %v4921 = vpack.c.bf16 %v4918, %v4917
    %v4922 = vpack.c.bf16 %v4919, %v4919
    %s4923 = scalar_lea.vmem [#allocation12], 2624
    %v4924 = vld [vmem:[%s4923] sm:$0xf]
    %v4925 = vld [vmem:[%s4923 + $0x4] sm:$0xf]
    %v4926 = vld [vmem:[%s4923 + $0x8] sm:$0xf]
    %v4927 = vld [vmem:[%s4923 + $0xc] sm:$0xf]
    %v4928 = vld [vmem:[%s4923 + $0x10] sm:$0xf]
    %v4929 = vld [vmem:[%s4923 + $0x14] sm:$0xf]
    %v4930 = vld [vmem:[%s4923 + $0x18] sm:$0xf]
    %v4931 = vld [vmem:[%s4923 + $0x1c] sm:$0xf]
    %v4932 = vld [vmem:[%s4923 + $0x20] sm:$0xf]
    %v4933 = vld [vmem:[%s4923 + $0x24] sm:$0xf]
    %v4934 = vld [vmem:[%s4923 + $0x28] sm:$0xf]
    %v4935 = vld [vmem:[%s4923 + $0x2c] sm:$0xf]
    %v4936 = vld [vmem:[%s4923 + $0x30] sm:$0xf]
    %v4937 = vld [vmem:[%s4923 + $0x34] sm:$0xf]
    %v4938 = vld [vmem:[%s4923 + $0x38] sm:$0xf]
    %v4939 = vld [vmem:[%s4923 + $0x3c] sm:$0xf]
    %v4956 = vunpack.c.l.b16 %v4924
    %v4957 = vunpack.c.l.b16 %v4925
    %v4958 = vunpack.c.l.b16 %v4926
    %v4959 = vunpack.c.l.b16 %v4927
    %v4960 = vunpack.c.l.b16 %v4928
    %v4961 = vunpack.c.l.b16 %v4929
    %v4962 = vunpack.c.l.b16 %v4930
    %v4963 = vunpack.c.l.b16 %v4931
    %v4964 = vunpack.c.l.b16 %v4932
    %v4965 = vunpack.c.l.b16 %v4933
    %v4966 = vunpack.c.l.b16 %v4934
    %v4967 = vunpack.c.l.b16 %v4935
    %v4968 = vunpack.c.l.b16 %v4936
    %v4969 = vunpack.c.l.b16 %v4937
    %v4970 = vunpack.c.l.b16 %v4938
    %v4971 = vunpack.c.l.b16 %v4939
    %v4972 = vpack.c.b16 %v4957, %v4956
    %v4973 = vpack.c.b16 %v4959, %v4958
    %v4974 = vpack.c.b16 %v4961, %v4960
    %v4975 = vpack.c.b16 %v4963, %v4962
    %v4976 = vpack.c.b16 %v4965, %v4964
    %v4977 = vpack.c.b16 %v4967, %v4966
    %v4978 = vpack.c.b16 %v4969, %v4968
    %v4979 = vpack.c.b16 %v4971, %v4970
    %4988 = vmatpush.bf16.msra.mxu0 %v4979
    %4989 = vmatpush.bf16.msra.mxu0 %v4978
    %4990 = vmatpush.bf16.msra.mxu0 %v4977
    %4991 = vmatpush.bf16.msra.mxu0 %v4976
    %4992 = vmatpush.bf16.msra.mxu0 %v4975
    %4993 = vmatpush.bf16.msra.mxu0 %v4974
    %4994 = vmatpush.bf16.msra.mxu0 %v4973
    %4995 = vmatpush.bf16.msra.mxu0 %v4972
    %4996 = vmatmul.bf16.gmra.mxu0 %v4920
    %v4997 = vpop.f32.mrf.mxu0
    %v4998 = vadd.f32 0.0, %v4997
    %v4999 = vpop.f32.mrf.mxu0
    %v5000 = vadd.f32 0.0, %v4999
    %5001 = vmatmul.bf16.gmra.mxu0 %v4921
    %v5002 = vpop.f32.mrf.mxu0
    %v5003 = vadd.f32 0.0, %v5002
    %v5004 = vpop.f32.mrf.mxu0
    %v5005 = vadd.f32 0.0, %v5004
    %5006 = vmatmul.bf16.gmra.mxu0 %v4922
    %v5007 = vpop.f32.mrf.mxu0
    %v5008 = vadd.f32 0.0, %v5007
    %v5009 = vpop.f32.mrf.mxu0
    %5010 = vdwg.mxu0
    %v5011 = vadd.f32 %v4910, %v4998
    %v5012 = vadd.f32 %v4911, %v5000
    %v5013 = vadd.f32 %v4912, %v5003
    %v5014 = vadd.f32 %v4913, %v5005
    %v5015 = vadd.f32 %v4914, %v5008
    %v5016 = vld [vmem:[#allocation5 + $0x6] sm:$0xff]
    %v5017 = vld [vmem:[#allocation5 + $0xe] sm:$0xff]
    %v5018 = vld [vmem:[#allocation5 + $0x16] sm:$0xff]
    %v5019 = vld [vmem:[#allocation5 + $0x1e] sm:$0xff]
    %v5020 = vld [vmem:[#allocation5 + $0x26] sm:$0xff]
    %v5021 = vpack.c.bf16 %v5017, %v5016
    %v5022 = vpack.c.bf16 %v5019, %v5018
    %v5023 = vpack.c.bf16 %v5020, %v5020
    %s5024 = scalar_lea.vmem [#allocation12], 2688
    %v5025 = vld [vmem:[%s5024] sm:$0xf]
    %v5026 = vld [vmem:[%s5024 + $0x4] sm:$0xf]
    %v5027 = vld [vmem:[%s5024 + $0x8] sm:$0xf]
    %v5028 = vld [vmem:[%s5024 + $0xc] sm:$0xf]
    %v5029 = vld [vmem:[%s5024 + $0x10] sm:$0xf]
    %v5030 = vld [vmem:[%s5024 + $0x14] sm:$0xf]
    %v5031 = vld [vmem:[%s5024 + $0x18] sm:$0xf]
    %v5032 = vld [vmem:[%s5024 + $0x1c] sm:$0xf]
    %v5033 = vld [vmem:[%s5024 + $0x20] sm:$0xf]
    %v5034 = vld [vmem:[%s5024 + $0x24] sm:$0xf]
    %v5035 = vld [vmem:[%s5024 + $0x28] sm:$0xf]
    %v5036 = vld [vmem:[%s5024 + $0x2c] sm:$0xf]
    %v5037 = vld [vmem:[%s5024 + $0x30] sm:$0xf]
    %v5038 = vld [vmem:[%s5024 + $0x34] sm:$0xf]
    %v5039 = vld [vmem:[%s5024 + $0x38] sm:$0xf]
    %v5040 = vld [vmem:[%s5024 + $0x3c] sm:$0xf]
    %v5057 = vunpack.c.l.b16 %v5025
    %v5058 = vunpack.c.l.b16 %v5026
    %v5059 = vunpack.c.l.b16 %v5027
    %v5060 = vunpack.c.l.b16 %v5028
    %v5061 = vunpack.c.l.b16 %v5029
    %v5062 = vunpack.c.l.b16 %v5030
    %v5063 = vunpack.c.l.b16 %v5031
    %v5064 = vunpack.c.l.b16 %v5032
    %v5065 = vunpack.c.l.b16 %v5033
    %v5066 = vunpack.c.l.b16 %v5034
    %v5067 = vunpack.c.l.b16 %v5035
    %v5068 = vunpack.c.l.b16 %v5036
    %v5069 = vunpack.c.l.b16 %v5037
    %v5070 = vunpack.c.l.b16 %v5038
    %v5071 = vunpack.c.l.b16 %v5039
    %v5072 = vunpack.c.l.b16 %v5040
    %v5073 = vpack.c.b16 %v5058, %v5057
    %v5074 = vpack.c.b16 %v5060, %v5059
    %v5075 = vpack.c.b16 %v5062, %v5061
    %v5076 = vpack.c.b16 %v5064, %v5063
    %v5077 = vpack.c.b16 %v5066, %v5065
    %v5078 = vpack.c.b16 %v5068, %v5067
    %v5079 = vpack.c.b16 %v5070, %v5069
    %v5080 = vpack.c.b16 %v5072, %v5071
    %5089 = vmatpush.bf16.msra.mxu0 %v5080
    %5090 = vmatpush.bf16.msra.mxu0 %v5079
    %5091 = vmatpush.bf16.msra.mxu0 %v5078
    %5092 = vmatpush.bf16.msra.mxu0 %v5077
    %5093 = vmatpush.bf16.msra.mxu0 %v5076
    %5094 = vmatpush.bf16.msra.mxu0 %v5075
    %5095 = vmatpush.bf16.msra.mxu0 %v5074
    %5096 = vmatpush.bf16.msra.mxu0 %v5073
    %5097 = vmatmul.bf16.gmra.mxu0 %v5021
    %v5098 = vpop.f32.mrf.mxu0
    %v5099 = vadd.f32 0.0, %v5098
    %v5100 = vpop.f32.mrf.mxu0
    %v5101 = vadd.f32 0.0, %v5100
    %5102 = vmatmul.bf16.gmra.mxu0 %v5022
    %v5103 = vpop.f32.mrf.mxu0
    %v5104 = vadd.f32 0.0, %v5103
    %v5105 = vpop.f32.mrf.mxu0
    %v5106 = vadd.f32 0.0, %v5105
    %5107 = vmatmul.bf16.gmra.mxu0 %v5023
    %v5108 = vpop.f32.mrf.mxu0
    %v5109 = vadd.f32 0.0, %v5108
    %v5110 = vpop.f32.mrf.mxu0
    %5111 = vdwg.mxu0
    %v5112 = vadd.f32 %v5011, %v5099
    %v5113 = vadd.f32 %v5012, %v5101
    %v5114 = vadd.f32 %v5013, %v5104
    %v5115 = vadd.f32 %v5014, %v5106
    %v5116 = vadd.f32 %v5015, %v5109
    %v5117 = vld [vmem:[#allocation5 + $0x7] sm:$0xff]
    %v5118 = vld [vmem:[#allocation5 + $0xf] sm:$0xff]
    %v5119 = vld [vmem:[#allocation5 + $0x17] sm:$0xff]
    %v5120 = vld [vmem:[#allocation5 + $0x1f] sm:$0xff]
    %v5121 = vld [vmem:[#allocation5 + $0x27] sm:$0xff]
    %v5122 = vpack.c.bf16 %v5118, %v5117
    %v5123 = vpack.c.bf16 %v5120, %v5119
    %v5124 = vpack.c.bf16 %v5121, %v5121
    %s5125 = scalar_lea.vmem [#allocation12], 2752
    %v5126 = vld [vmem:[%s5125] sm:$0xf]
    %v5127 = vld [vmem:[%s5125 + $0x4] sm:$0xf]
    %v5128 = vld [vmem:[%s5125 + $0x8] sm:$0xf]
    %v5129 = vld [vmem:[%s5125 + $0xc] sm:$0xf]
    %v5130 = vld [vmem:[%s5125 + $0x10] sm:$0xf]
    %v5131 = vld [vmem:[%s5125 + $0x14] sm:$0xf]
    %v5132 = vld [vmem:[%s5125 + $0x18] sm:$0xf]
    %v5133 = vld [vmem:[%s5125 + $0x1c] sm:$0xf]
    %v5134 = vld [vmem:[%s5125 + $0x20] sm:$0xf]
    %v5135 = vld [vmem:[%s5125 + $0x24] sm:$0xf]
    %v5136 = vld [vmem:[%s5125 + $0x28] sm:$0xf]
    %v5137 = vld [vmem:[%s5125 + $0x2c] sm:$0xf]
    %v5138 = vld [vmem:[%s5125 + $0x30] sm:$0xf]
    %v5139 = vld [vmem:[%s5125 + $0x34] sm:$0xf]
    %v5140 = vld [vmem:[%s5125 + $0x38] sm:$0xf]
    %v5141 = vld [vmem:[%s5125 + $0x3c] sm:$0xf]
    %v5158 = vunpack.c.l.b16 %v5126
    %v5159 = vunpack.c.l.b16 %v5127
    %v5160 = vunpack.c.l.b16 %v5128
    %v5161 = vunpack.c.l.b16 %v5129
    %v5162 = vunpack.c.l.b16 %v5130
    %v5163 = vunpack.c.l.b16 %v5131
    %v5164 = vunpack.c.l.b16 %v5132
    %v5165 = vunpack.c.l.b16 %v5133
    %v5166 = vunpack.c.l.b16 %v5134
    %v5167 = vunpack.c.l.b16 %v5135
    %v5168 = vunpack.c.l.b16 %v5136
    %v5169 = vunpack.c.l.b16 %v5137
    %v5170 = vunpack.c.l.b16 %v5138
    %v5171 = vunpack.c.l.b16 %v5139
    %v5172 = vunpack.c.l.b16 %v5140
    %v5173 = vunpack.c.l.b16 %v5141
    %v5174 = vpack.c.b16 %v5159, %v5158
    %v5175 = vpack.c.b16 %v5161, %v5160
    %v5176 = vpack.c.b16 %v5163, %v5162
    %v5177 = vpack.c.b16 %v5165, %v5164
    %v5178 = vpack.c.b16 %v5167, %v5166
    %v5179 = vpack.c.b16 %v5169, %v5168
    %v5180 = vpack.c.b16 %v5171, %v5170
    %v5181 = vpack.c.b16 %v5173, %v5172
    %5190 = vmatpush.bf16.msra.mxu0 %v5181
    %5191 = vmatpush.bf16.msra.mxu0 %v5180
    %5192 = vmatpush.bf16.msra.mxu0 %v5179
    %5193 = vmatpush.bf16.msra.mxu0 %v5178
    %5194 = vmatpush.bf16.msra.mxu0 %v5177
    %5195 = vmatpush.bf16.msra.mxu0 %v5176
    %5196 = vmatpush.bf16.msra.mxu0 %v5175
    %5197 = vmatpush.bf16.msra.mxu0 %v5174
    %5198 = vmatmul.bf16.gmra.mxu0 %v5122
    %v5199 = vpop.f32.mrf.mxu0
    %v5200 = vadd.f32 0.0, %v5199
    %v5201 = vpop.f32.mrf.mxu0
    %v5202 = vadd.f32 0.0, %v5201
    %5203 = vmatmul.bf16.gmra.mxu0 %v5123
    %v5204 = vpop.f32.mrf.mxu0
    %v5205 = vadd.f32 0.0, %v5204
    %v5206 = vpop.f32.mrf.mxu0
    %v5207 = vadd.f32 0.0, %v5206
    %5208 = vmatmul.bf16.gmra.mxu0 %v5124
    %v5209 = vpop.f32.mrf.mxu0
    %v5210 = vadd.f32 0.0, %v5209
    %v5211 = vpop.f32.mrf.mxu0
    %5212 = vdwg.mxu0
    %v5213 = vadd.f32 %v5112, %v5200
    %v5214 = vadd.f32 %v5113, %v5202
    %v5215 = vadd.f32 %v5114, %v5205
    %v5216 = vadd.f32 %v5115, %v5207
    %v5217 = vadd.f32 %v5116, %v5210
    %v5218 = vld [vmem:[#allocation5 + $0x8] sm:$0xff]
    %v5219 = vld [vmem:[#allocation5 + $0x10] sm:$0xff]
    %v5220 = vld [vmem:[#allocation5 + $0x18] sm:$0xff]
    %v5221 = vld [vmem:[#allocation5 + $0x20] sm:$0xff]
    %v5222 = vld [vmem:[#allocation5 + $0x28] sm:$0xff]
    %v5223 = vpack.c.bf16 %v5219, %v5218
    %v5224 = vpack.c.bf16 %v5221, %v5220
    %v5225 = vpack.c.bf16 %v5222, %v5222
    %s5226 = scalar_lea.vmem [#allocation12], 2816
    %v5227 = vld [vmem:[%s5226] sm:$0xf]
    %v5228 = vld [vmem:[%s5226 + $0x4] sm:$0xf]
    %v5229 = vld [vmem:[%s5226 + $0x8] sm:$0xf]
    %v5230 = vld [vmem:[%s5226 + $0xc] sm:$0xf]
    %v5231 = vld [vmem:[%s5226 + $0x10] sm:$0xf]
    %v5232 = vld [vmem:[%s5226 + $0x14] sm:$0xf]
    %v5233 = vld [vmem:[%s5226 + $0x18] sm:$0xf]
    %v5234 = vld [vmem:[%s5226 + $0x1c] sm:$0xf]
    %v5235 = vld [vmem:[%s5226 + $0x20] sm:$0xf]
    %v5236 = vld [vmem:[%s5226 + $0x24] sm:$0xf]
    %v5237 = vld [vmem:[%s5226 + $0x28] sm:$0xf]
    %v5238 = vld [vmem:[%s5226 + $0x2c] sm:$0xf]
    %v5239 = vld [vmem:[%s5226 + $0x30] sm:$0xf]
    %v5240 = vld [vmem:[%s5226 + $0x34] sm:$0xf]
    %v5241 = vld [vmem:[%s5226 + $0x38] sm:$0xf]
    %v5242 = vld [vmem:[%s5226 + $0x3c] sm:$0xf]
    %v5259 = vunpack.c.l.b16 %v5227
    %v5260 = vunpack.c.l.b16 %v5228
    %v5261 = vunpack.c.l.b16 %v5229
    %v5262 = vunpack.c.l.b16 %v5230
    %v5263 = vunpack.c.l.b16 %v5231
    %v5264 = vunpack.c.l.b16 %v5232
    %v5265 = vunpack.c.l.b16 %v5233
    %v5266 = vunpack.c.l.b16 %v5234
    %v5267 = vunpack.c.l.b16 %v5235
    %v5268 = vunpack.c.l.b16 %v5236
    %v5269 = vunpack.c.l.b16 %v5237
    %v5270 = vunpack.c.l.b16 %v5238
    %v5271 = vunpack.c.l.b16 %v5239
    %v5272 = vunpack.c.l.b16 %v5240
    %v5273 = vunpack.c.l.b16 %v5241
    %v5274 = vunpack.c.l.b16 %v5242
    %v5275 = vpack.c.b16 %v5260, %v5259
    %v5276 = vpack.c.b16 %v5262, %v5261
    %v5277 = vpack.c.b16 %v5264, %v5263
    %v5278 = vpack.c.b16 %v5266, %v5265
    %v5279 = vpack.c.b16 %v5268, %v5267
    %v5280 = vpack.c.b16 %v5270, %v5269
    %v5281 = vpack.c.b16 %v5272, %v5271
    %v5282 = vpack.c.b16 %v5274, %v5273
    %5291 = vmatpush.bf16.msra.mxu0 %v5282
    %5292 = vmatpush.bf16.msra.mxu0 %v5281
    %5293 = vmatpush.bf16.msra.mxu0 %v5280
    %5294 = vmatpush.bf16.msra.mxu0 %v5279
    %5295 = vmatpush.bf16.msra.mxu0 %v5278
    %5296 = vmatpush.bf16.msra.mxu0 %v5277
    %5297 = vmatpush.bf16.msra.mxu0 %v5276
    %5298 = vmatpush.bf16.msra.mxu0 %v5275
    %5299 = vmatmul.bf16.gmra.mxu0 %v5223
    %v5300 = vpop.f32.mrf.mxu0
    %v5301 = vadd.f32 0.0, %v5300
    %v5302 = vpop.f32.mrf.mxu0
    %v5303 = vadd.f32 0.0, %v5302
    %5304 = vmatmul.bf16.gmra.mxu0 %v5224
    %v5305 = vpop.f32.mrf.mxu0
    %v5306 = vadd.f32 0.0, %v5305
    %v5307 = vpop.f32.mrf.mxu0
    %v5308 = vadd.f32 0.0, %v5307
    %5309 = vmatmul.bf16.gmra.mxu0 %v5225
    %v5310 = vpop.f32.mrf.mxu0
    %v5311 = vadd.f32 0.0, %v5310
    %v5312 = vpop.f32.mrf.mxu0
    %5313 = vdwg.mxu0
    %v5314 = vadd.f32 %v5213, %v5301
    %v5315 = vadd.f32 %v5214, %v5303
    %v5316 = vadd.f32 %v5215, %v5306
    %v5317 = vadd.f32 %v5216, %v5308
    %v5318 = vadd.f32 %v5217, %v5311
    %v5319 = vld [vmem:[#allocation15 + $0x10] sm:$0x1]
    %v5320 = vperm.slane %v5319, 0
    %v5321 = vadd.f32 %v5314, %v5320
    %v5322 = vadd.f32 %v5315, %v5320
    %v5323 = vadd.f32 %v5316, %v5320
    %v5324 = vadd.f32 %v5317, %v5320
    %v5325 = vadd.f32 %v5318, %v5320
    %v5326 = vmax.f32 %v5321, 0.0
    %v5327 = vmax.f32 %v5322, 0.0
    %v5328 = vmax.f32 %v5323, 0.0
    %v5329 = vmax.f32 %v5324, 0.0
    %v5330 = vmax.f32 %v5325, 0.0
    %v5336 = vrot.slane %v5326, 4
    %v5337 = vrot.slane %v5327, 4
    %v5338 = vsel %vm539, %v5336, %v5337
    %v5339 = vrot.slane %v5328, 4
    %v5340 = vsel %vm539, %v5337, %v5339
    %v5341 = vrot.slane %v5329, 4
    %v5342 = vsel %vm539, %v5339, %v5341
    %v5343 = vrot.slane %v5330, 4
    %v5344 = vsel %vm539, %v5341, %v5343
    %5351 = vst [vmem:[#allocation3 + $0x18] sm:$0xf0] %v5336
    %5352 = vst [vmem:[#allocation3 + $0x38] sm:$0xff] %v5338
    %5353 = vst [vmem:[#allocation3 + $0x58] sm:$0xff] %v5340
    %5354 = vst [vmem:[#allocation3 + $0x78] sm:$0xff] %v5342
    %5355 = vst [vmem:[#allocation3 + $0x98] sm:$0xff] %v5344
    %5356 = vst [vmem:[#allocation3 + $0xb8] sm:$0xf] %v5343
    %v5357 = vld [vmem:[#allocation3] sm:$0xf0]
    %v5358 = vld [vmem:[#allocation3 + $0x8] sm:$0xf0]
    %v5359 = vld [vmem:[#allocation3 + $0x10] sm:$0xf0]
    %v5360 = vld [vmem:[#allocation3 + $0x18] sm:$0xf0]
    %v5361 = vld [vmem:[#allocation3 + $0x20] sm:$0xff]
    %v5362 = vld [vmem:[#allocation3 + $0x28] sm:$0xff]
    %v5363 = vld [vmem:[#allocation3 + $0x30] sm:$0xff]
    %v5364 = vld [vmem:[#allocation3 + $0x38] sm:$0xff]
    %v5365 = vld [vmem:[#allocation3 + $0x40] sm:$0xff]
    %v5366 = vld [vmem:[#allocation3 + $0x48] sm:$0xff]
    %v5367 = vld [vmem:[#allocation3 + $0x50] sm:$0xff]
    %v5368 = vld [vmem:[#allocation3 + $0x58] sm:$0xff]
    %v5369 = vld [vmem:[#allocation3 + $0x60] sm:$0xff]
    %v5370 = vld [vmem:[#allocation3 + $0x68] sm:$0xff]
    %v5371 = vld [vmem:[#allocation3 + $0x70] sm:$0xff]
    %v5372 = vld [vmem:[#allocation3 + $0x78] sm:$0xff]
    %v5373 = vld [vmem:[#allocation3 + $0x80] sm:$0xff]
    %v5374 = vld [vmem:[#allocation3 + $0x88] sm:$0xff]
    %v5375 = vld [vmem:[#allocation3 + $0x90] sm:$0xff]
    %v5376 = vld [vmem:[#allocation3 + $0x98] sm:$0xff]
    %v5377 = vld [vmem:[#allocation3 + $0xa0] sm:$0xf]
    %v5378 = vld [vmem:[#allocation3 + $0xa8] sm:$0xf]
    %v5379 = vld [vmem:[#allocation3 + $0xb0] sm:$0xf]
    %v5380 = vld [vmem:[#allocation3 + $0xb8] sm:$0xf]
    %v5381 = vpack.c.bf16 %v5361, %v5357
    %v5382 = vpack.c.bf16 %v5362, %v5358
    %v5383 = vpack.c.bf16 %v5363, %v5359
    %v5384 = vpack.c.bf16 %v5364, %v5360
    %v5385 = vpack.c.bf16 %v5369, %v5365
    %v5386 = vpack.c.bf16 %v5370, %v5366
    %v5387 = vpack.c.bf16 %v5371, %v5367
    %v5388 = vpack.c.bf16 %v5372, %v5368
    %v5389 = vpack.c.bf16 %v5377, %v5373
    %v5390 = vpack.c.bf16 %v5378, %v5374
    %v5391 = vpack.c.bf16 %v5379, %v5375
    %v5392 = vpack.c.bf16 %v5380, %v5376
    %v5393 = vld [vmem:[#allocation13] sm:$0xf]
    %v5394 = vld [vmem:[#allocation13 + $0x4] sm:$0xf]
    %v5395 = vld [vmem:[#allocation13 + $0x8] sm:$0xf]
    %v5396 = vld [vmem:[#allocation13 + $0xc] sm:$0xf]
    %v5397 = vld [vmem:[#allocation13 + $0x10] sm:$0xf]
    %v5398 = vld [vmem:[#allocation13 + $0x14] sm:$0xf]
    %v5399 = vld [vmem:[#allocation13 + $0x18] sm:$0xf]
    %v5400 = vld [vmem:[#allocation13 + $0x1c] sm:$0xf]
    %v5401 = vld [vmem:[#allocation13 + $0x20] sm:$0xf]
    %v5402 = vld [vmem:[#allocation13 + $0x24] sm:$0xf]
    %v5403 = vld [vmem:[#allocation13 + $0x28] sm:$0xf]
    %v5404 = vld [vmem:[#allocation13 + $0x2c] sm:$0xf]
    %v5405 = vld [vmem:[#allocation13 + $0x30] sm:$0xf]
    %v5406 = vld [vmem:[#allocation13 + $0x34] sm:$0xf]
    %v5407 = vld [vmem:[#allocation13 + $0x38] sm:$0xf]
    %v5408 = vld [vmem:[#allocation13 + $0x3c] sm:$0xf]
    %v5409 = vld [vmem:[#allocation13 + $0x40] sm:$0xf]
    %v5410 = vld [vmem:[#allocation13 + $0x44] sm:$0xf]
    %v5411 = vld [vmem:[#allocation13 + $0x48] sm:$0xf]
    %v5412 = vld [vmem:[#allocation13 + $0x4c] sm:$0xf]
    %v5413 = vld [vmem:[#allocation13 + $0x50] sm:$0xf]
    %v5414 = vld [vmem:[#allocation13 + $0x54] sm:$0xf]
    %v5415 = vld [vmem:[#allocation13 + $0x58] sm:$0xf]
    %v5416 = vld [vmem:[#allocation13 + $0x5c] sm:$0xf]
    %v5417 = vld [vmem:[#allocation13 + $0x60] sm:$0xf]
    %v5418 = vld [vmem:[#allocation13 + $0x64] sm:$0xf]
    %v5419 = vld [vmem:[#allocation13 + $0x68] sm:$0xf]
    %v5420 = vld [vmem:[#allocation13 + $0x6c] sm:$0xf]
    %v5421 = vld [vmem:[#allocation13 + $0x70] sm:$0xf]
    %v5422 = vld [vmem:[#allocation13 + $0x74] sm:$0xf]
    %v5423 = vld [vmem:[#allocation13 + $0x78] sm:$0xf]
    %v5424 = vld [vmem:[#allocation13 + $0x7c] sm:$0xf]
    %v5425 = vld [vmem:[#allocation13 + $0x80] sm:$0xf]
    %v5426 = vld [vmem:[#allocation13 + $0x84] sm:$0xf]
    %v5427 = vld [vmem:[#allocation13 + $0x88] sm:$0xf]
    %v5428 = vld [vmem:[#allocation13 + $0x8c] sm:$0xf]
    %v5429 = vld [vmem:[#allocation13 + $0x90] sm:$0xf]
    %v5430 = vld [vmem:[#allocation13 + $0x94] sm:$0xf]
    %v5431 = vld [vmem:[#allocation13 + $0x98] sm:$0xf]
    %v5432 = vld [vmem:[#allocation13 + $0x9c] sm:$0xf]
    %v5433 = vld [vmem:[#allocation13 + $0xa0] sm:$0xf]
    %v5434 = vld [vmem:[#allocation13 + $0xa4] sm:$0xf]
    %v5435 = vld [vmem:[#allocation13 + $0xa8] sm:$0xf]
    %v5436 = vld [vmem:[#allocation13 + $0xac] sm:$0xf]
    %v5437 = vld [vmem:[#allocation13 + $0xb0] sm:$0xf]
    %v5438 = vld [vmem:[#allocation13 + $0xb4] sm:$0xf]
    %v5439 = vld [vmem:[#allocation13 + $0xb8] sm:$0xf]
    %v5440 = vld [vmem:[#allocation13 + $0xbc] sm:$0xf]
    %v5441 = vld [vmem:[#allocation13 + $0xc0] sm:$0xf]
    %v5442 = vld [vmem:[#allocation13 + $0xc4] sm:$0xf]
    %v5443 = vld [vmem:[#allocation13 + $0xc8] sm:$0xf]
    %v5444 = vld [vmem:[#allocation13 + $0xcc] sm:$0xf]
    %v5445 = vld [vmem:[#allocation13 + $0xd0] sm:$0xf]
    %v5446 = vld [vmem:[#allocation13 + $0xd4] sm:$0xf]
    %v5447 = vld [vmem:[#allocation13 + $0xd8] sm:$0xf]
    %v5448 = vld [vmem:[#allocation13 + $0xdc] sm:$0xf]
    %v5449 = vld [vmem:[#allocation13 + $0xe0] sm:$0xf]
    %v5450 = vld [vmem:[#allocation13 + $0xe4] sm:$0xf]
    %v5451 = vld [vmem:[#allocation13 + $0xe8] sm:$0xf]
    %v5452 = vld [vmem:[#allocation13 + $0xec] sm:$0xf]
    %v5453 = vld [vmem:[#allocation13 + $0xf0] sm:$0xf]
    %v5454 = vld [vmem:[#allocation13 + $0xf4] sm:$0xf]
    %v5455 = vld [vmem:[#allocation13 + $0xf8] sm:$0xf]
    %v5456 = vld [vmem:[#allocation13 + $0xfc] sm:$0xf]
    %v5457 = vld [vmem:[#allocation15 + $0x11] sm:$0x1]
    %v5458 = vperm.slane %v5457, 0
    %v5471 = vrot.slane %v5381, 2
    %v5472 = vrot.slane %v5385, 2
    %v5473 = vsel %vm608, %v5471, %v5472
    %v5474 = vrot.slane %v5382, 2
    %v5475 = vrot.slane %v5386, 2
    %v5476 = vsel %vm608, %v5474, %v5475
    %v5477 = vrot.slane %v5383, 2
    %v5478 = vrot.slane %v5387, 2
    %v5479 = vsel %vm608, %v5477, %v5478
    %v5480 = vrot.slane %v5384, 2
    %v5481 = vrot.slane %v5388, 2
    %v5482 = vsel %vm608, %v5480, %v5481
    %v5483 = vrot.slane %v5389, 2
    %v5484 = vsel %vm608, %v5472, %v5483
    %v5485 = vrot.slane %v5390, 2
    %v5486 = vsel %vm608, %v5475, %v5485
    %v5487 = vrot.slane %v5391, 2
    %v5488 = vsel %vm608, %v5478, %v5487
    %v5489 = vrot.slane %v5392, 2
    %v5490 = vsel %vm608, %v5481, %v5489
    %v5567 = vunpack.c.l.b16 %v5393
    %v5568 = vunpack.c.l.b16 %v5394
    %v5569 = vunpack.c.l.b16 %v5395
    %v5570 = vunpack.c.l.b16 %v5396
    %v5571 = vunpack.c.l.b16 %v5397
    %v5572 = vunpack.c.l.b16 %v5398
    %v5573 = vunpack.c.l.b16 %v5399
    %v5574 = vunpack.c.l.b16 %v5400
    %v5575 = vunpack.c.l.b16 %v5401
    %v5576 = vunpack.c.l.b16 %v5402
    %v5577 = vunpack.c.l.b16 %v5403
    %v5578 = vunpack.c.l.b16 %v5404
    %v5579 = vunpack.c.l.b16 %v5405
    %v5580 = vunpack.c.l.b16 %v5406
    %v5581 = vunpack.c.l.b16 %v5407
    %v5582 = vunpack.c.l.b16 %v5408
    %v5583 = vunpack.c.l.b16 %v5409
    %v5584 = vunpack.c.l.b16 %v5410
    %v5585 = vunpack.c.l.b16 %v5411
    %v5586 = vunpack.c.l.b16 %v5412
    %v5587 = vunpack.c.l.b16 %v5413
    %v5588 = vunpack.c.l.b16 %v5414
    %v5589 = vunpack.c.l.b16 %v5415
    %v5590 = vunpack.c.l.b16 %v5416
    %v5591 = vunpack.c.l.b16 %v5417
    %v5592 = vunpack.c.l.b16 %v5418
    %v5593 = vunpack.c.l.b16 %v5419
    %v5594 = vunpack.c.l.b16 %v5420
    %v5595 = vunpack.c.l.b16 %v5421
    %v5596 = vunpack.c.l.b16 %v5422
    %v5597 = vunpack.c.l.b16 %v5423
    %v5598 = vunpack.c.l.b16 %v5424
    %v5599 = vunpack.c.l.b16 %v5425
    %v5600 = vunpack.c.l.b16 %v5426
    %v5601 = vunpack.c.l.b16 %v5427
    %v5602 = vunpack.c.l.b16 %v5428
    %v5603 = vunpack.c.l.b16 %v5429
    %v5604 = vunpack.c.l.b16 %v5430
    %v5605 = vunpack.c.l.b16 %v5431
    %v5606 = vunpack.c.l.b16 %v5432
    %v5607 = vunpack.c.l.b16 %v5433
    %v5608 = vunpack.c.l.b16 %v5434
    %v5609 = vunpack.c.l.b16 %v5435
    %v5610 = vunpack.c.l.b16 %v5436
    %v5611 = vunpack.c.l.b16 %v5437
    %v5612 = vunpack.c.l.b16 %v5438
    %v5613 = vunpack.c.l.b16 %v5439
    %v5614 = vunpack.c.l.b16 %v5440
    %v5615 = vunpack.c.l.b16 %v5441
    %v5616 = vunpack.c.l.b16 %v5442
    %v5617 = vunpack.c.l.b16 %v5443
    %v5618 = vunpack.c.l.b16 %v5444
    %v5619 = vunpack.c.l.b16 %v5445
    %v5620 = vunpack.c.l.b16 %v5446
    %v5621 = vunpack.c.l.b16 %v5447
    %v5622 = vunpack.c.l.b16 %v5448
    %v5623 = vunpack.c.l.b16 %v5449
    %v5624 = vunpack.c.l.b16 %v5450
    %v5625 = vunpack.c.l.b16 %v5451
    %v5626 = vunpack.c.l.b16 %v5452
    %v5627 = vunpack.c.l.b16 %v5453
    %v5628 = vunpack.c.l.b16 %v5454
    %v5629 = vunpack.c.l.b16 %v5455
    %v5630 = vunpack.c.l.b16 %v5456
    %v5631 = vpack.c.b16 %v5568, %v5567
    %v5632 = vpack.c.b16 %v5570, %v5569
    %v5633 = vpack.c.b16 %v5572, %v5571
    %v5634 = vpack.c.b16 %v5574, %v5573
    %v5635 = vpack.c.b16 %v5576, %v5575
    %v5636 = vpack.c.b16 %v5578, %v5577
    %v5637 = vpack.c.b16 %v5580, %v5579
    %v5638 = vpack.c.b16 %v5582, %v5581
    %v5639 = vpack.c.b16 %v5584, %v5583
    %v5640 = vpack.c.b16 %v5586, %v5585
    %v5641 = vpack.c.b16 %v5588, %v5587
    %v5642 = vpack.c.b16 %v5590, %v5589
    %v5643 = vpack.c.b16 %v5592, %v5591
    %v5644 = vpack.c.b16 %v5594, %v5593
    %v5645 = vpack.c.b16 %v5596, %v5595
    %v5646 = vpack.c.b16 %v5598, %v5597
    %v5647 = vpack.c.b16 %v5600, %v5599
    %v5648 = vpack.c.b16 %v5602, %v5601
    %v5649 = vpack.c.b16 %v5604, %v5603
    %v5650 = vpack.c.b16 %v5606, %v5605
    %v5651 = vpack.c.b16 %v5608, %v5607
    %v5652 = vpack.c.b16 %v5610, %v5609
    %v5653 = vpack.c.b16 %v5612, %v5611
    %v5654 = vpack.c.b16 %v5614, %v5613
    %v5655 = vpack.c.b16 %v5616, %v5615
    %v5656 = vpack.c.b16 %v5618, %v5617
    %v5657 = vpack.c.b16 %v5620, %v5619
    %v5658 = vpack.c.b16 %v5622, %v5621
    %v5659 = vpack.c.b16 %v5624, %v5623
    %v5660 = vpack.c.b16 %v5626, %v5625
    %v5661 = vpack.c.b16 %v5628, %v5627
    %v5662 = vpack.c.b16 %v5630, %v5629
    %5695 = vmatpush.bf16.msra.mxu0 %v5638
    %5696 = vmatpush.bf16.msra.mxu0 %v5637
    %5697 = vmatpush.bf16.msra.mxu0 %v5636
    %5698 = vmatpush.bf16.msra.mxu0 %v5635
    %5699 = vmatpush.bf16.msra.mxu0 %v5634
    %5700 = vmatpush.bf16.msra.mxu0 %v5633
    %5701 = vmatpush.bf16.msra.mxu0 %v5632
    %5702 = vmatpush.bf16.msra.mxu0 %v5631
    %5703 = vmatmul.bf16.gmra.mxu0 %v5473
    %v5704 = vpop.f32.mrf.mxu0
    %v5705 = vadd.f32 %v5458, %v5704
    %v5706 = vpop.f32.mrf.mxu0
    %v5707 = vadd.f32 %v5458, %v5706
    %5708 = vmatmul.bf16.gmra.mxu0 %v5484
    %v5709 = vpop.f32.mrf.mxu0
    %v5710 = vpop.f32.mrf.mxu0
    %v5711 = vadd.f32 %v5458, %v5710
    %5712 = vmatmul.bf16.gmra.mxu0 %v5483
    %v5713 = vpop.f32.mrf.mxu0
    %v5714 = vadd.f32 %v5458, %v5713
    %v5715 = vpop.f32.mrf.mxu0
    %5716 = vdwg.mxu0
    %5717 = vmatpush.bf16.msra.mxu0 %v5646
    %5718 = vmatpush.bf16.msra.mxu0 %v5645
    %5719 = vmatpush.bf16.msra.mxu0 %v5644
    %5720 = vmatpush.bf16.msra.mxu0 %v5643
    %5721 = vmatpush.bf16.msra.mxu0 %v5642
    %5722 = vmatpush.bf16.msra.mxu0 %v5641
    %5723 = vmatpush.bf16.msra.mxu0 %v5640
    %5724 = vmatpush.bf16.msra.mxu0 %v5639
    %5725 = vmatmul.bf16.gmra.mxu0 %v5476
    %v5726 = vpop.f32.mrf.mxu0
    %v5727 = vadd.f32 %v5705, %v5726
    %v5728 = vpop.f32.mrf.mxu0
    %v5729 = vadd.f32 %v5707, %v5728
    %5730 = vmatmul.bf16.gmra.mxu0 %v5486
    %v5731 = vpop.f32.mrf.mxu0
    %v5732 = vpop.f32.mrf.mxu0
    %v5733 = vadd.f32 %v5711, %v5732
    %5734 = vmatmul.bf16.gmra.mxu0 %v5485
    %v5735 = vpop.f32.mrf.mxu0
    %v5736 = vadd.f32 %v5714, %v5735
    %v5737 = vpop.f32.mrf.mxu0
    %5738 = vdwg.mxu0
    %5739 = vmatpush.bf16.msra.mxu0 %v5654
    %5740 = vmatpush.bf16.msra.mxu0 %v5653
    %5741 = vmatpush.bf16.msra.mxu0 %v5652
    %5742 = vmatpush.bf16.msra.mxu0 %v5651
    %5743 = vmatpush.bf16.msra.mxu0 %v5650
    %5744 = vmatpush.bf16.msra.mxu0 %v5649
    %5745 = vmatpush.bf16.msra.mxu0 %v5648
    %5746 = vmatpush.bf16.msra.mxu0 %v5647
    %5747 = vmatmul.bf16.gmra.mxu0 %v5479
    %v5748 = vpop.f32.mrf.mxu0
    %v5749 = vadd.f32 %v5727, %v5748
    %v5750 = vpop.f32.mrf.mxu0
    %v5751 = vadd.f32 %v5729, %v5750
    %5752 = vmatmul.bf16.gmra.mxu0 %v5488
    %v5753 = vpop.f32.mrf.mxu0
    %v5754 = vpop.f32.mrf.mxu0
    %v5755 = vadd.f32 %v5733, %v5754
    %5756 = vmatmul.bf16.gmra.mxu0 %v5487
    %v5757 = vpop.f32.mrf.mxu0
    %v5758 = vadd.f32 %v5736, %v5757
    %v5759 = vpop.f32.mrf.mxu0
    %5760 = vdwg.mxu0
    %5761 = vmatpush.bf16.msra.mxu0 %v5662
    %5762 = vmatpush.bf16.msra.mxu0 %v5661
    %5763 = vmatpush.bf16.msra.mxu0 %v5660
    %5764 = vmatpush.bf16.msra.mxu0 %v5659
    %5765 = vmatpush.bf16.msra.mxu0 %v5658
    %5766 = vmatpush.bf16.msra.mxu0 %v5657
    %5767 = vmatpush.bf16.msra.mxu0 %v5656
    %5768 = vmatpush.bf16.msra.mxu0 %v5655
    %5769 = vmatmul.bf16.gmra.mxu0 %v5482
    %v5770 = vpop.f32.mrf.mxu0
    %v5771 = vadd.f32 %v5749, %v5770
    %v5772 = vpop.f32.mrf.mxu0
    %v5773 = vadd.f32 %v5751, %v5772
    %5774 = vmatmul.bf16.gmra.mxu0 %v5490
    %v5775 = vpop.f32.mrf.mxu0
    %v5776 = vpop.f32.mrf.mxu0
    %v5777 = vadd.f32 %v5755, %v5776
    %5778 = vmatmul.bf16.gmra.mxu0 %v5489
    %v5779 = vpop.f32.mrf.mxu0
    %v5780 = vadd.f32 %v5758, %v5779
    %v5781 = vpop.f32.mrf.mxu0
    %5782 = vdwg.mxu0
    %v5783 = vmax.f32 %v5771, 0.0
    %v5784 = vmax.f32 %v5773, 0.0
    %v5785 = vmax.f32 %v5777, 0.0
    %v5786 = vmax.f32 %v5780, 0.0
    %v5787 = vld [vmem:[#allocation6] sm:$0xff]
    %v5788 = vld [vmem:[#allocation6 + $0x8] sm:$0xff]
    %v5789 = vld [vmem:[#allocation6 + $0x18] sm:$0xff]
    %v5790 = vld [vmem:[#allocation6 + $0x20] sm:$0xff]
    %v5791 = vadd.f32 %v5783, %v5787
    %v5792 = vadd.f32 %v5784, %v5788
    %v5793 = vadd.f32 %v5785, %v5789
    %v5794 = vadd.f32 %v5786, %v5790
    %v5795 = vmax.f32 %v5791, 0.0
    %v5796 = vmax.f32 %v5792, 0.0
    %v5797 = vmax.f32 %v5793, 0.0
    %v5798 = vmax.f32 %v5794, 0.0
    %5799 = vst [vmem:[#allocation16] sm:$0xff] %v5795
    %5800 = vst [vmem:[#allocation16 + $0x8] sm:$0xff] %v5796
    %s5801 = scalar_lea.vmem [#allocation16], 16
    %5802 = vst [vmem:[%s5801] sm:$0xff] %v5797
    %5803 = vst [vmem:[%s5801 + $0x8] sm:$0xff] %v5798
    // Predicated region
    $region42: #{tpu_custom_call.1} parent=1 // pred_check
      _
    $region43: #{tpu_custom_call.1} parent=1 // pred_check_branch
      %5805 = sbr.rel (0) target = $region45
    $region44: #{tpu_custom_call.1} parent=1 // pred_region
      %5807 = vsyncadd [#allocation9], 0
      %s5808 = sshll.u32 [#allocation16], 4
      %s5809 = int_to_ptr.vmem [resolvable:$true] %s5808
      %s5810 = sshll.u32 %s5, 4
      %s5811 = int_to_ptr.hbm [resolvable:$true] %s5810
      %5816 = dma.vmem_to_hbm [thread:$0]  %s5809, 512, %s5811, [#allocation9], 128, 128, 8
    $region45: #{tpu_custom_call.1} parent=1 // pred_fallthru
      _
    // Predicated region
    $region46: #{tpu_custom_call.1} parent=1 // pred_check
      _
    $region47: #{tpu_custom_call.1} parent=1 // pred_check_branch
      %5818 = sbr.rel (0) target = $region49
    $region48: #{tpu_custom_call.1} parent=1 // pred_region
      %5820 = dma.done [#allocation9], 512
    $region49: #{tpu_custom_call.1} parent=1 // pred_fallthru
      _
    %5821 = vsyncpa [#allocation8], 1
    %5822 = vsyncpa [#allocation11], 1
    %5823 = vsyncpa [#allocation14], 1
    %5824 = vsyncpa [#allocation9], 1

</llo_original>
